<compile_context>
chip_gen: v6e
topology: v6e:2x2x1
jax: 0.10.0
libtpu: 0.0.40
codegen_flags: <defaults>
</compile_context>

<pallas_src>
import functools

import jax
import jax.numpy as jnp
from jax import lax
from jax.experimental import pallas as pl
from jax.experimental.pallas import tpu as pltpu


def _dms_kernel(a_ref, b_ref, out_ref, row_ref, *, frame_num):
    # a_ref:   (F, tA, D) bf16 -- normalized query features, frame-major
    # b_ref:   (F, D, tB) bf16 -- normalized gallery features, per-frame K x N
    # out_ref: (tA, tB) f32
    # row_ref: VMEM (F, tA, tB) f32 -- DP row state; row_ref[j-1] == si[:, :, i, j]
    F = frame_num
    tA = a_ref.shape[1]
    tB = b_ref.shape[2]
    zero = jnp.zeros((tA, tB), jnp.float32)

    for i in range(1, F + 1):
        xn = a_ref[i - 1]                                     # (tA, D) bf16
        left = zero                                           # si[:, :, i,   j-1]
        diag = zero                                           # si[:, :, i-1, j-1]
        for j in range(1, F + 1):
            # si[:, :, i-1, j]; row 0 of si is implicit zeros.
            up = zero if i == 1 else row_ref[j - 1]
            # Cosine similarity block, consumed directly (no strip scratch).
            local = jnp.dot(xn, b_ref[j - 1],
                            preferred_element_type=jnp.float32)  # (tA, tB) f32
            steps = float(max(i, j))
            keep = (steps - 1.0) / steps
            add = 1.0 / steps
            # push(v) = (v*(s-1)+local)/s is monotone in v -> max commutes with it.
            best = jnp.maximum(jnp.maximum(up, left), diag)
            cur = best * keep + local * add
            row_ref[j - 1] = cur
            diag = up
            left = cur

    out_ref[...] = row_ref[F - 1].astype(out_ref.dtype)      # si[:, :, -1, -1]


def _round_up(x, m):
    return ((x + m - 1) // m) * m


def _normalize_bf16(x):
    # torch.nn.functional.normalize(v.tanh()): v / max(||v||, 1e-12)
    #   == tanh(v) * rsqrt(max(||tanh(v)||^2, 1e-24))
    x = jnp.tanh(x.astype(jnp.float32))
    ss = jnp.sum(x * x, axis=-1, keepdims=True)
    return (x * lax.rsqrt(jnp.maximum(ss, 1e-24))).astype(jnp.bfloat16)


def dynamic_max_similarity(a, b, frame_num):
    """a: (A, frame_num, D), b: (B, frame_num, D) -> (A, B) float32."""
    A, F, D = a.shape
    B, Fb, Db = b.shape
    assert F == frame_num and Fb == frame_num and Db == D

    # One-shot preprocessing (hoisted out of the kernel): normalized bf16 features,
    # query frame-major (F, A, D), gallery transposed lane-dense (F, D, B).
    a_n = jnp.transpose(_normalize_bf16(a), (1, 0, 2))        # (F, A, D)
    b_n = jnp.transpose(_normalize_bf16(b), (1, 2, 0))        # (F, D, B)

    # Sublane-aligned query tile (kept at 64 for vreg pressure), lane-dense
    # 128-wide gallery tile.
    tA = min(64, _round_up(A, 8))
    tB = 128
    A_p = _round_up(A, tA)
    B_p = _round_up(B, tB)

    # Zero padding is numerically safe: padded (already-normalized) rows are exactly
    # zero, every (a, b) output entry depends only on its own pair, and the padded
    # rows/cols are sliced off afterwards.
    if A_p != A:
        a_n = jnp.pad(a_n, ((0, 0), (0, A_p - A), (0, 0)))
    if B_p != B:
        b_n = jnp.pad(b_n, ((0, 0), (0, 0), (0, B_p - B)))

    grid = (A_p // tA, B_p // tB)

    cost = pl.CostEstimate(
        flops=int(2 * A_p * B_p * F * F * D + 5 * A_p * B_p * F * F),
        transcendentals=0,
        bytes_accessed=int(
            A_p * F * D * 2 * (B_p // tB)     # query tiles (re-fetched per bi)
            + B_p * F * D * 2 * (A_p // tA)   # gallery tiles (re-fetched per ai)
            + A_p * B_p * 4),                 # output
    )

    out = pl.pallas_call(
        functools.partial(_dms_kernel, frame_num=frame_num),
        out_shape=jax.ShapeDtypeStruct((A_p, B_p), jnp.float32),
        grid_spec=pltpu.PrefetchScalarGridSpec(
            num_scalar_prefetch=0,
            grid=grid,
            in_specs=[
                pl.BlockSpec((F, tA, D), lambda ai, bi: (0, ai, 0)),
                pl.BlockSpec((F, D, tB), lambda ai, bi: (0, 0, bi)),
            ],
            out_specs=pl.BlockSpec((tA, tB), lambda ai, bi: (ai, bi)),
            scratch_shapes=[
                pltpu.VMEM((F, tA, tB), jnp.float32),   # DP row state (f32: v5e-safe)
            ],
        ),
        compiler_params=pltpu.CompilerParams(
            dimension_semantics=("parallel", "parallel")),
        cost_estimate=cost,
    )(a_n, b_n)
    return out[:A, :B]


def _reference(a, b, frame_num):
    """Pure-JAX (f32) transcription of the PyTorch forward, for verification."""
    A, F, D = a.shape
    B = b.shape[0]
    x = jnp.tanh(a.reshape(-1, D))
    y = jnp.tanh(b.reshape(-1, D))
    xn = x / jnp.maximum(jnp.linalg.norm(x, axis=-1, keepdims=True), 1e-12)
    yn = y / jnp.maximum(jnp.linalg.norm(y, axis=-1, keepdims=True), 1e-12)
    sim = (xn @ yn.T).reshape(A, F, B, F).transpose(0, 2, 1, 3)
    si = jnp.zeros((A, B, frame_num + 1, frame_num + 1), jnp.float32)
    for i in range(1, frame_num + 1):
        for j in range(1, frame_num + 1):
            local = sim[:, :, i - 1, j - 1]
            s = float(max(i, j))
            opts = jnp.stack(
                [
                    (si[:, :, i - 1, j] * (s - 1.0) + local) / s,
                    (si[:, :, i, j - 1] * (s - 1.0) + local) / s,
                    (si[:, :, i - 1, j - 1] * (s - 1.0) + local) / s,
                ],
                axis=-1,
            )
            si = si.at[:, :, i, j].set(jnp.max(opts, axis=-1))
    return si[:, :, -1, -1]


if __name__ == "__main__":
    # Small deterministic shapes (non-multiples of the tile sizes to exercise padding):
    # A=6 query tracks, B=5 gallery tracks, frame_num=8 frames, D=32 features.
    A, B, FRAME_NUM, D = 6, 5, 8, 32

    key = jax.random.PRNGKey(0)
    ka, kb = jax.random.split(key)
    a = jax.random.normal(ka, (A, FRAME_NUM, D), dtype=jnp.float32)
    b = jax.random.normal(kb, (B, FRAME_NUM, D), dtype=jnp.float32)

    out = dynamic_max_similarity(a, b, FRAME_NUM)
    out = jax.block_until_ready(out)

    ref = _reference(a, b, FRAME_NUM)
    assert out.shape == (A, B)
    # Tolerance relaxed relative to the f32 reference because the kernel feeds the
    # MXU with bf16 operands (f32 accumulation).
    max_err = float(jnp.max(jnp.abs(out - ref)))
    assert max_err < 2e-2, (max_err, out, ref)

    print("KERNEL_OK")
</pallas_src>

<mosaic_0001>
module attributes {stable_mosaic.version = 11 : i64} {
  func.func @_dms_kernel(%arg0: i32, %arg1: i32, %arg2: memref<8x8x32xbf16, #tpu.memory_space<vmem>>, %arg3: memref<8x32x128xbf16, #tpu.memory_space<vmem>>, %arg4: memref<8x128xf32, #tpu.memory_space<vmem>>, %arg5: memref<8x8x128xf32, #tpu.memory_space<vmem>>) attributes {dimension_semantics = [#tpu.dimension_semantics<parallel>, #tpu.dimension_semantics<parallel>], iteration_bounds = array<i64: 1, 1>, scalar_prefetch = 0 : i64, scratch_operands = 1 : i64, tpu.core_type = #tpu.core_type<tc>, window_params = [{transform_indices = @transform_0, window_bounds = array<i64: 8, 8, 32>}, {transform_indices = @transform_1, window_bounds = array<i64: 8, 32, 128>}, {transform_indices = @transform_2, window_bounds = array<i64: 8, 128>}]} {
    %cst = arith.constant 0.000000e+00 : f32
    %0 = vector.broadcast %cst : f32 to vector<8x128xf32>
    %c0 = arith.constant 0 : index
    %c0_0 = arith.constant 0 : index
    %c0_1 = arith.constant 0 : index
    %1 = vector.load %arg2[%c0, %c0_0, %c0_1] : memref<8x8x32xbf16, #tpu.memory_space<vmem>>, vector<1x8x32xbf16>
    %2 = vector.shape_cast %1 : vector<1x8x32xbf16> to vector<8x32xbf16>
    %c0_2 = arith.constant 0 : index
    %c0_3 = arith.constant 0 : index
    %c0_4 = arith.constant 0 : index
    %3 = vector.load %arg3[%c0_2, %c0_3, %c0_4] : memref<8x32x128xbf16, #tpu.memory_space<vmem>>, vector<1x32x128xbf16>
    %4 = vector.shape_cast %3 : vector<1x32x128xbf16> to vector<32x128xbf16>
    %cst_5 = arith.constant dense<0.000000e+00> : vector<8x128xf32>
    %5 = tpu.matmul %2, %4, %cst_5 {dimension_numbers = #tpu.dot_dimension_numbers<[1], [0], [0], [1], [0, 0, 1, 1], [], []>} : vector<8x32xbf16>, vector<32x128xbf16>, vector<8x128xf32> -> vector<8x128xf32>
    %6 = arith.maximumf %0, %0 : vector<8x128xf32>
    %7 = arith.maximumf %6, %0 : vector<8x128xf32>
    %cst_6 = arith.constant 0.000000e+00 : f32
    %8 = vector.broadcast %cst_6 : f32 to vector<8x128xf32>
    %9 = arith.mulf %7, %8 : vector<8x128xf32>
    %cst_7 = arith.constant 1.000000e+00 : f32
    %10 = vector.broadcast %cst_7 : f32 to vector<8x128xf32>
    %11 = arith.mulf %5, %10 : vector<8x128xf32>
    %12 = arith.addf %9, %11 : vector<8x128xf32>
    %c0_8 = arith.constant 0 : index
    %c0_9 = arith.constant 0 : index
    %c0_10 = arith.constant 0 : index
    %13 = vector.load %arg5[%c0_8, %c0_9, %c0_10] : memref<8x8x128xf32, #tpu.memory_space<vmem>>, vector<1x8x128xf32>
    %14 = vector.shape_cast %13 : vector<1x8x128xf32> to vector<8x128xf32>
    %15 = vector.shape_cast %12 : vector<8x128xf32> to vector<1x8x128xf32>
    tpu.vector_store %arg5[%c0_8, %c0_9, %c0_10], %15 {strides = array<i32>} : memref<8x8x128xf32, #tpu.memory_space<vmem>>, vector<1x8x128xf32>,
    %c1 = arith.constant 1 : index
    %c0_11 = arith.constant 0 : index
    %c0_12 = arith.constant 0 : index
    %16 = vector.load %arg3[%c1, %c0_11, %c0_12] : memref<8x32x128xbf16, #tpu.memory_space<vmem>>, vector<1x32x128xbf16>
    %17 = vector.shape_cast %16 : vector<1x32x128xbf16> to vector<32x128xbf16>
    %cst_13 = arith.constant dense<0.000000e+00> : vector<8x128xf32>
    %18 = tpu.matmul %2, %17, %cst_13 {dimension_numbers = #tpu.dot_dimension_numbers<[1], [0], [0], [1], [0, 0, 1, 1], [], []>} : vector<8x32xbf16>, vector<32x128xbf16>, vector<8x128xf32> -> vector<8x128xf32>
    %19 = arith.maximumf %0, %12 : vector<8x128xf32>
    %20 = arith.maximumf %19, %0 : vector<8x128xf32>
    %cst_14 = arith.constant 5.000000e-01 : f32
    %21 = vector.broadcast %cst_14 : f32 to vector<8x128xf32>
    %22 = arith.mulf %20, %21 : vector<8x128xf32>
    %cst_15 = arith.constant 5.000000e-01 : f32
    %23 = vector.broadcast %cst_15 : f32 to vector<8x128xf32>
    %24 = arith.mulf %18, %23 : vector<8x128xf32>
    %25 = arith.addf %22, %24 : vector<8x128xf32>
    %c1_16 = arith.constant 1 : index
    %c0_17 = arith.constant 0 : index
    %c0_18 = arith.constant 0 : index
    %26 = vector.load %arg5[%c1_16, %c0_17, %c0_18] : memref<8x8x128xf32, #tpu.memory_space<vmem>>, vector<1x8x128xf32>
    %27 = vector.shape_cast %26 : vector<1x8x128xf32> to vector<8x128xf32>
    %28 = vector.shape_cast %25 : vector<8x128xf32> to vector<1x8x128xf32>
    tpu.vector_store %arg5[%c1_16, %c0_17, %c0_18], %28 {strides = array<i32>} : memref<8x8x128xf32, #tpu.memory_space<vmem>>, vector<1x8x128xf32>,
    %c2 = arith.constant 2 : index
    %c0_19 = arith.constant 0 : index
    %c0_20 = arith.constant 0 : index
    %29 = vector.load %arg3[%c2, %c0_19, %c0_20] : memref<8x32x128xbf16, #tpu.memory_space<vmem>>, vector<1x32x128xbf16>
    %30 = vector.shape_cast %29 : vector<1x32x128xbf16> to vector<32x128xbf16>
    %cst_21 = arith.constant dense<0.000000e+00> : vector<8x128xf32>
    %31 = tpu.matmul %2, %30, %cst_21 {dimension_numbers = #tpu.dot_dimension_numbers<[1], [0], [0], [1], [0, 0, 1, 1], [], []>} : vector<8x32xbf16>, vector<32x128xbf16>, vector<8x128xf32> -> vector<8x128xf32>
    %32 = arith.maximumf %0, %25 : vector<8x128xf32>
    %33 = arith.maximumf %32, %0 : vector<8x128xf32>
    %cst_22 = arith.constant 0.666666686 : f32
    %34 = vector.broadcast %cst_22 : f32 to vector<8x128xf32>
    %35 = arith.mulf %33, %34 : vector<8x128xf32>
    %cst_23 = arith.constant 0.333333343 : f32
    %36 = vector.broadcast %cst_23 : f32 to vector<8x128xf32>
    %37 = arith.mulf %31, %36 : vector<8x128xf32>
    %38 = arith.addf %35, %37 : vector<8x128xf32>
    %c2_24 = arith.constant 2 : index
    %c0_25 = arith.constant 0 : index
    %c0_26 = arith.constant 0 : index
    %39 = vector.load %arg5[%c2_24, %c0_25, %c0_26] : memref<8x8x128xf32, #tpu.memory_space<vmem>>, vector<1x8x128xf32>
    %40 = vector.shape_cast %39 : vector<1x8x128xf32> to vector<8x128xf32>
    %41 = vector.shape_cast %38 : vector<8x128xf32> to vector<1x8x128xf32>
    tpu.vector_store %arg5[%c2_24, %c0_25, %c0_26], %41 {strides = array<i32>} : memref<8x8x128xf32, #tpu.memory_space<vmem>>, vector<1x8x128xf32>,
    %c3 = arith.constant 3 : index
    %c0_27 = arith.constant 0 : index
    %c0_28 = arith.constant 0 : index
    %42 = vector.load %arg3[%c3, %c0_27, %c0_28] : memref<8x32x128xbf16, #tpu.memory_space<vmem>>, vector<1x32x128xbf16>
    %43 = vector.shape_cast %42 : vector<1x32x128xbf16> to vector<32x128xbf16>
    %cst_29 = arith.constant dense<0.000000e+00> : vector<8x128xf32>
    %44 = tpu.matmul %2, %43, %cst_29 {dimension_numbers = #tpu.dot_dimension_numbers<[1], [0], [0], [1], [0, 0, 1, 1], [], []>} : vector<8x32xbf16>, vector<32x128xbf16>, vector<8x128xf32> -> vector<8x128xf32>
    %45 = arith.maximumf %0, %38 : vector<8x128xf32>
    %46 = arith.maximumf %45, %0 : vector<8x128xf32>
    %cst_30 = arith.constant 7.500000e-01 : f32
    %47 = vector.broadcast %cst_30 : f32 to vector<8x128xf32>
    %48 = arith.mulf %46, %47 : vector<8x128xf32>
    %cst_31 = arith.constant 2.500000e-01 : f32
    %49 = vector.broadcast %cst_31 : f32 to vector<8x128xf32>
    %50 = arith.mulf %44, %49 : vector<8x128xf32>
    %51 = arith.addf %48, %50 : vector<8x128xf32>
    %c3_32 = arith.constant 3 : index
    %c0_33 = arith.constant 0 : index
    %c0_34 = arith.constant 0 : index
    %52 = vector.load %arg5[%c3_32, %c0_33, %c0_34] : memref<8x8x128xf32, #tpu.memory_space<vmem>>, vector<1x8x128xf32>
    %53 = vector.shape_cast %52 : vector<1x8x128xf32> to vector<8x128xf32>
    %54 = vector.shape_cast %51 : vector<8x128xf32> to vector<1x8x128xf32>
    tpu.vector_store %arg5[%c3_32, %c0_33, %c0_34], %54 {strides = array<i32>} : memref<8x8x128xf32, #tpu.memory_space<vmem>>, vector<1x8x128xf32>,
    %c4 = arith.constant 4 : index
    %c0_35 = arith.constant 0 : index
    %c0_36 = arith.constant 0 : index
    %55 = vector.load %arg3[%c4, %c0_35, %c0_36] : memref<8x32x128xbf16, #tpu.memory_space<vmem>>, vector<1x32x128xbf16>
    %56 = vector.shape_cast %55 : vector<1x32x128xbf16> to vector<32x128xbf16>
    %cst_37 = arith.constant dense<0.000000e+00> : vector<8x128xf32>
    %57 = tpu.matmul %2, %56, %cst_37 {dimension_numbers = #tpu.dot_dimension_numbers<[1], [0], [0], [1], [0, 0, 1, 1], [], []>} : vector<8x32xbf16>, vector<32x128xbf16>, vector<8x128xf32> -> vector<8x128xf32>
    %58 = arith.maximumf %0, %51 : vector<8x128xf32>
    %59 = arith.maximumf %58, %0 : vector<8x128xf32>
    %cst_38 = arith.constant 8.000000e-01 : f32
    %60 = vector.broadcast %cst_38 : f32 to vector<8x128xf32>
    %61 = arith.mulf %59, %60 : vector<8x128xf32>
    %cst_39 = arith.constant 2.000000e-01 : f32
    %62 = vector.broadcast %cst_39 : f32 to vector<8x128xf32>
    %63 = arith.mulf %57, %62 : vector<8x128xf32>
    %64 = arith.addf %61, %63 : vector<8x128xf32>
    %c4_40 = arith.constant 4 : index
    %c0_41 = arith.constant 0 : index
    %c0_42 = arith.constant 0 : index
    %65 = vector.load %arg5[%c4_40, %c0_41, %c0_42] : memref<8x8x128xf32, #tpu.memory_space<vmem>>, vector<1x8x128xf32>
    %66 = vector.shape_cast %65 : vector<1x8x128xf32> to vector<8x128xf32>
    %67 = vector.shape_cast %64 : vector<8x128xf32> to vector<1x8x128xf32>
    tpu.vector_store %arg5[%c4_40, %c0_41, %c0_42], %67 {strides = array<i32>} : memref<8x8x128xf32, #tpu.memory_space<vmem>>, vector<1x8x128xf32>,
    %c5 = arith.constant 5 : index
    %c0_43 = arith.constant 0 : index
    %c0_44 = arith.constant 0 : index
    %68 = vector.load %arg3[%c5, %c0_43, %c0_44] : memref<8x32x128xbf16, #tpu.memory_space<vmem>>, vector<1x32x128xbf16>
    %69 = vector.shape_cast %68 : vector<1x32x128xbf16> to vector<32x128xbf16>
    %cst_45 = arith.constant dense<0.000000e+00> : vector<8x128xf32>
    %70 = tpu.matmul %2, %69, %cst_45 {dimension_numbers = #tpu.dot_dimension_numbers<[1], [0], [0], [1], [0, 0, 1, 1], [], []>} : vector<8x32xbf16>, vector<32x128xbf16>, vector<8x128xf32> -> vector<8x128xf32>
    %71 = arith.maximumf %0, %64 : vector<8x128xf32>
    %72 = arith.maximumf %71, %0 : vector<8x128xf32>
    %cst_46 = arith.constant 0.833333313 : f32
    %73 = vector.broadcast %cst_46 : f32 to vector<8x128xf32>
    %74 = arith.mulf %72, %73 : vector<8x128xf32>
    %cst_47 = arith.constant 0.166666672 : f32
    %75 = vector.broadcast %cst_47 : f32 to vector<8x128xf32>
    %76 = arith.mulf %70, %75 : vector<8x128xf32>
    %77 = arith.addf %74, %76 : vector<8x128xf32>
    %c5_48 = arith.constant 5 : index
    %c0_49 = arith.constant 0 : index
    %c0_50 = arith.constant 0 : index
    %78 = vector.load %arg5[%c5_48, %c0_49, %c0_50] : memref<8x8x128xf32, #tpu.memory_space<vmem>>, vector<1x8x128xf32>
    %79 = vector.shape_cast %78 : vector<1x8x128xf32> to vector<8x128xf32>
    %80 = vector.shape_cast %77 : vector<8x128xf32> to vector<1x8x128xf32>
    tpu.vector_store %arg5[%c5_48, %c0_49, %c0_50], %80 {strides = array<i32>} : memref<8x8x128xf32, #tpu.memory_space<vmem>>, vector<1x8x128xf32>,
    %c6 = arith.constant 6 : index
    %c0_51 = arith.constant 0 : index
    %c0_52 = arith.constant 0 : index
    %81 = vector.load %arg3[%c6, %c0_51, %c0_52] : memref<8x32x128xbf16, #tpu.memory_space<vmem>>, vector<1x32x128xbf16>
    %82 = vector.shape_cast %81 : vector<1x32x128xbf16> to vector<32x128xbf16>
    %cst_53 = arith.constant dense<0.000000e+00> : vector<8x128xf32>
    %83 = tpu.matmul %2, %82, %cst_53 {dimension_numbers = #tpu.dot_dimension_numbers<[1], [0], [0], [1], [0, 0, 1, 1], [], []>} : vector<8x32xbf16>, vector<32x128xbf16>, vector<8x128xf32> -> vector<8x128xf32>
    %84 = arith.maximumf %0, %77 : vector<8x128xf32>
    %85 = arith.maximumf %84, %0 : vector<8x128xf32>
    %cst_54 = arith.constant 0.857142865 : f32
    %86 = vector.broadcast %cst_54 : f32 to vector<8x128xf32>
    %87 = arith.mulf %85, %86 : vector<8x128xf32>
    %cst_55 = arith.constant 0.142857149 : f32
    %88 = vector.broadcast %cst_55 : f32 to vector<8x128xf32>
    %89 = arith.mulf %83, %88 : vector<8x128xf32>
    %90 = arith.addf %87, %89 : vector<8x128xf32>
    %c6_56 = arith.constant 6 : index
    %c0_57 = arith.constant 0 : index
    %c0_58 = arith.constant 0 : index
    %91 = vector.load %arg5[%c6_56, %c0_57, %c0_58] : memref<8x8x128xf32, #tpu.memory_space<vmem>>, vector<1x8x128xf32>
    %92 = vector.shape_cast %91 : vector<1x8x128xf32> to vector<8x128xf32>
    %93 = vector.shape_cast %90 : vector<8x128xf32> to vector<1x8x128xf32>
    tpu.vector_store %arg5[%c6_56, %c0_57, %c0_58], %93 {strides = array<i32>} : memref<8x8x128xf32, #tpu.memory_space<vmem>>, vector<1x8x128xf32>,
    %c7 = arith.constant 7 : index
    %c0_59 = arith.constant 0 : index
    %c0_60 = arith.constant 0 : index
    %94 = vector.load %arg3[%c7, %c0_59, %c0_60] : memref<8x32x128xbf16, #tpu.memory_space<vmem>>, vector<1x32x128xbf16>
    %95 = vector.shape_cast %94 : vector<1x32x128xbf16> to vector<32x128xbf16>
    %cst_61 = arith.constant dense<0.000000e+00> : vector<8x128xf32>
    %96 = tpu.matmul %2, %95, %cst_61 {dimension_numbers = #tpu.dot_dimension_numbers<[1], [0], [0], [1], [0, 0, 1, 1], [], []>} : vector<8x32xbf16>, vector<32x128xbf16>, vector<8x128xf32> -> vector<8x128xf32>
    %97 = arith.maximumf %0, %90 : vector<8x128xf32>
    %98 = arith.maximumf %97, %0 : vector<8x128xf32>
    %cst_62 = arith.constant 8.750000e-01 : f32
    %99 = vector.broadcast %cst_62 : f32 to vector<8x128xf32>
    %100 = arith.mulf %98, %99 : vector<8x128xf32>
    %cst_63 = arith.constant 1.250000e-01 : f32
    %101 = vector.broadcast %cst_63 : f32 to vector<8x128xf32>
    %102 = arith.mulf %96, %101 : vector<8x128xf32>
    %103 = arith.addf %100, %102 : vector<8x128xf32>
    %c7_64 = arith.constant 7 : index
    %c0_65 = arith.constant 0 : index
    %c0_66 = arith.constant 0 : index
    %104 = vector.load %arg5[%c7_64, %c0_65, %c0_66] : memref<8x8x128xf32, #tpu.memory_space<vmem>>, vector<1x8x128xf32>
    %105 = vector.shape_cast %104 : vector<1x8x128xf32> to vector<8x128xf32>
    %106 = vector.shape_cast %103 : vector<8x128xf32> to vector<1x8x128xf32>
    tpu.vector_store %arg5[%c7_64, %c0_65, %c0_66], %106 {strides = array<i32>} : memref<8x8x128xf32, #tpu.memory_space<vmem>>, vector<1x8x128xf32>,
    %c1_67 = arith.constant 1 : index
    %c0_68 = arith.constant 0 : index
    %c0_69 = arith.constant 0 : index
    %107 = vector.load %arg2[%c1_67, %c0_68, %c0_69] : memref<8x8x32xbf16, #tpu.memory_space<vmem>>, vector<1x8x32xbf16>
    %108 = vector.shape_cast %107 : vector<1x8x32xbf16> to vector<8x32xbf16>
    %c0_70 = arith.constant 0 : index
    %c0_71 = arith.constant 0 : index
    %c0_72 = arith.constant 0 : index
    %109 = vector.load %arg5[%c0_70, %c0_71, %c0_72] : memref<8x8x128xf32, #tpu.memory_space<vmem>>, vector<1x8x128xf32>
    %110 = vector.shape_cast %109 : vector<1x8x128xf32> to vector<8x128xf32>
    %c0_73 = arith.constant 0 : index
    %c0_74 = arith.constant 0 : index
    %c0_75 = arith.constant 0 : index
    %111 = vector.load %arg3[%c0_73, %c0_74, %c0_75] : memref<8x32x128xbf16, #tpu.memory_space<vmem>>, vector<1x32x128xbf16>
    %112 = vector.shape_cast %111 : vector<1x32x128xbf16> to vector<32x128xbf16>
    %cst_76 = arith.constant dense<0.000000e+00> : vector<8x128xf32>
    %113 = tpu.matmul %108, %112, %cst_76 {dimension_numbers = #tpu.dot_dimension_numbers<[1], [0], [0], [1], [0, 0, 1, 1], [], []>} : vector<8x32xbf16>, vector<32x128xbf16>, vector<8x128xf32> -> vector<8x128xf32>
    %114 = arith.maximumf %110, %0 : vector<8x128xf32>
    %115 = arith.maximumf %114, %0 : vector<8x128xf32>
    %cst_77 = arith.constant 5.000000e-01 : f32
    %116 = vector.broadcast %cst_77 : f32 to vector<8x128xf32>
    %117 = arith.mulf %115, %116 : vector<8x128xf32>
    %cst_78 = arith.constant 5.000000e-01 : f32
    %118 = vector.broadcast %cst_78 : f32 to vector<8x128xf32>
    %119 = arith.mulf %113, %118 : vector<8x128xf32>
    %120 = arith.addf %117, %119 : vector<8x128xf32>
    %c0_79 = arith.constant 0 : index
    %c0_80 = arith.constant 0 : index
    %c0_81 = arith.constant 0 : index
    %121 = vector.load %arg5[%c0_79, %c0_80, %c0_81] : memref<8x8x128xf32, #tpu.memory_space<vmem>>, vector<1x8x128xf32>
    %122 = vector.shape_cast %121 : vector<1x8x128xf32> to vector<8x128xf32>
    %123 = vector.shape_cast %120 : vector<8x128xf32> to vector<1x8x128xf32>
    tpu.vector_store %arg5[%c0_79, %c0_80, %c0_81], %123 {strides = array<i32>} : memref<8x8x128xf32, #tpu.memory_space<vmem>>, vector<1x8x128xf32>,
    %c1_82 = arith.constant 1 : index
    %c0_83 = arith.constant 0 : index
    %c0_84 = arith.constant 0 : index
    %124 = vector.load %arg5[%c1_82, %c0_83, %c0_84] : memref<8x8x128xf32, #tpu.memory_space<vmem>>, vector<1x8x128xf32>
    %125 = vector.shape_cast %124 : vector<1x8x128xf32> to vector<8x128xf32>
    %c1_85 = arith.constant 1 : index
    %c0_86 = arith.constant 0 : index
    %c0_87 = arith.constant 0 : index
    %126 = vector.load %arg3[%c1_85, %c0_86, %c0_87] : memref<8x32x128xbf16, #tpu.memory_space<vmem>>, vector<1x32x128xbf16>
    %127 = vector.shape_cast %126 : vector<1x32x128xbf16> to vector<32x128xbf16>
    %cst_88 = arith.constant dense<0.000000e+00> : vector<8x128xf32>
    %128 = tpu.matmul %108, %127, %cst_88 {dimension_numbers = #tpu.dot_dimension_numbers<[1], [0], [0], [1], [0, 0, 1, 1], [], []>} : vector<8x32xbf16>, vector<32x128xbf16>, vector<8x128xf32> -> vector<8x128xf32>
    %129 = arith.maximumf %125, %120 : vector<8x128xf32>
    %130 = arith.maximumf %129, %110 : vector<8x128xf32>
    %cst_89 = arith.constant 5.000000e-01 : f32
    %131 = vector.broadcast %cst_89 : f32 to vector<8x128xf32>
    %132 = arith.mulf %130, %131 : vector<8x128xf32>
    %cst_90 = arith.constant 5.000000e-01 : f32
    %133 = vector.broadcast %cst_90 : f32 to vector<8x128xf32>
    %134 = arith.mulf %128, %133 : vector<8x128xf32>
    %135 = arith.addf %132, %134 : vector<8x128xf32>
    %c1_91 = arith.constant 1 : index
    %c0_92 = arith.constant 0 : index
    %c0_93 = arith.constant 0 : index
    %136 = vector.load %arg5[%c1_91, %c0_92, %c0_93] : memref<8x8x128xf32, #tpu.memory_space<vmem>>, vector<1x8x128xf32>
    %137 = vector.shape_cast %136 : vector<1x8x128xf32> to vector<8x128xf32>
    %138 = vector.shape_cast %135 : vector<8x128xf32> to vector<1x8x128xf32>
    tpu.vector_store %arg5[%c1_91, %c0_92, %c0_93], %138 {strides = array<i32>} : memref<8x8x128xf32, #tpu.memory_space<vmem>>, vector<1x8x128xf32>,
    %c2_94 = arith.constant 2 : index
    %c0_95 = arith.constant 0 : index
    %c0_96 = arith.constant 0 : index
    %139 = vector.load %arg5[%c2_94, %c0_95, %c0_96] : memref<8x8x128xf32, #tpu.memory_space<vmem>>, vector<1x8x128xf32>
    %140 = vector.shape_cast %139 : vector<1x8x128xf32> to vector<8x128xf32>
    %c2_97 = arith.constant 2 : index
    %c0_98 = arith.constant 0 : index
    %c0_99 = arith.constant 0 : index
    %141 = vector.load %arg3[%c2_97, %c0_98, %c0_99] : memref<8x32x128xbf16, #tpu.memory_space<vmem>>, vector<1x32x128xbf16>
    %142 = vector.shape_cast %141 : vector<1x32x128xbf16> to vector<32x128xbf16>
    %cst_100 = arith.constant dense<0.000000e+00> : vector<8x128xf32>
    %143 = tpu.matmul %108, %142, %cst_100 {dimension_numbers = #tpu.dot_dimension_numbers<[1], [0], [0], [1], [0, 0, 1, 1], [], []>} : vector<8x32xbf16>, vector<32x128xbf16>, vector<8x128xf32> -> vector<8x128xf32>
    %144 = arith.maximumf %140, %135 : vector<8x128xf32>
    %145 = arith.maximumf %144, %125 : vector<8x128xf32>
    %cst_101 = arith.constant 0.666666686 : f32
    %146 = vector.broadcast %cst_101 : f32 to vector<8x128xf32>
    %147 = arith.mulf %145, %146 : vector<8x128xf32>
    %cst_102 = arith.constant 0.333333343 : f32
    %148 = vector.broadcast %cst_102 : f32 to vector<8x128xf32>
    %149 = arith.mulf %143, %148 : vector<8x128xf32>
    %150 = arith.addf %147, %149 : vector<8x128xf32>
    %c2_103 = arith.constant 2 : index
    %c0_104 = arith.constant 0 : index
    %c0_105 = arith.constant 0 : index
    %151 = vector.load %arg5[%c2_103, %c0_104, %c0_105] : memref<8x8x128xf32, #tpu.memory_space<vmem>>, vector<1x8x128xf32>
    %152 = vector.shape_cast %151 : vector<1x8x128xf32> to vector<8x128xf32>
    %153 = vector.shape_cast %150 : vector<8x128xf32> to vector<1x8x128xf32>
    tpu.vector_store %arg5[%c2_103, %c0_104, %c0_105], %153 {strides = array<i32>} : memref<8x8x128xf32, #tpu.memory_space<vmem>>, vector<1x8x128xf32>,
    %c3_106 = arith.constant 3 : index
    %c0_107 = arith.constant 0 : index
    %c0_108 = arith.constant 0 : index
    %154 = vector.load %arg5[%c3_106, %c0_107, %c0_108] : memref<8x8x128xf32, #tpu.memory_space<vmem>>, vector<1x8x128xf32>
    %155 = vector.shape_cast %154 : vector<1x8x128xf32> to vector<8x128xf32>
    %c3_109 = arith.constant 3 : index
    %c0_110 = arith.constant 0 : index
    %c0_111 = arith.constant 0 : index
    %156 = vector.load %arg3[%c3_109, %c0_110, %c0_111] : memref<8x32x128xbf16, #tpu.memory_space<vmem>>, vector<1x32x128xbf16>
    %157 = vector.shape_cast %156 : vector<1x32x128xbf16> to vector<32x128xbf16>
    %cst_112 = arith.constant dense<0.000000e+00> : vector<8x128xf32>
    %158 = tpu.matmul %108, %157, %cst_112 {dimension_numbers = #tpu.dot_dimension_numbers<[1], [0], [0], [1], [0, 0, 1, 1], [], []>} : vector<8x32xbf16>, vector<32x128xbf16>, vector<8x128xf32> -> vector<8x128xf32>
    %159 = arith.maximumf %155, %150 : vector<8x128xf32>
    %160 = arith.maximumf %159, %140 : vector<8x128xf32>
    %cst_113 = arith.constant 7.500000e-01 : f32
    %161 = vector.broadcast %cst_113 : f32 to vector<8x128xf32>
    %162 = arith.mulf %160, %161 : vector<8x128xf32>
    %cst_114 = arith.constant 2.500000e-01 : f32
    %163 = vector.broadcast %cst_114 : f32 to vector<8x128xf32>
    %164 = arith.mulf %158, %163 : vector<8x128xf32>
    %165 = arith.addf %162, %164 : vector<8x128xf32>
    %c3_115 = arith.constant 3 : index
    %c0_116 = arith.constant 0 : index
    %c0_117 = arith.constant 0 : index
    %166 = vector.load %arg5[%c3_115, %c0_116, %c0_117] : memref<8x8x128xf32, #tpu.memory_space<vmem>>, vector<1x8x128xf32>
    %167 = vector.shape_cast %166 : vector<1x8x128xf32> to vector<8x128xf32>
    %168 = vector.shape_cast %165 : vector<8x128xf32> to vector<1x8x128xf32>
    tpu.vector_store %arg5[%c3_115, %c0_116, %c0_117], %168 {strides = array<i32>} : memref<8x8x128xf32, #tpu.memory_space<vmem>>, vector<1x8x128xf32>,
    %c4_118 = arith.constant 4 : index
    %c0_119 = arith.constant 0 : index
    %c0_120 = arith.constant 0 : index
    %169 = vector.load %arg5[%c4_118, %c0_119, %c0_120] : memref<8x8x128xf32, #tpu.memory_space<vmem>>, vector<1x8x128xf32>
    %170 = vector.shape_cast %169 : vector<1x8x128xf32> to vector<8x128xf32>
    %c4_121 = arith.constant 4 : index
    %c0_122 = arith.constant 0 : index
    %c0_123 = arith.constant 0 : index
    %171 = vector.load %arg3[%c4_121, %c0_122, %c0_123] : memref<8x32x128xbf16, #tpu.memory_space<vmem>>, vector<1x32x128xbf16>
    %172 = vector.shape_cast %171 : vector<1x32x128xbf16> to vector<32x128xbf16>
    %cst_124 = arith.constant dense<0.000000e+00> : vector<8x128xf32>
    %173 = tpu.matmul %108, %172, %cst_124 {dimension_numbers = #tpu.dot_dimension_numbers<[1], [0], [0], [1], [0, 0, 1, 1], [], []>} : vector<8x32xbf16>, vector<32x128xbf16>, vector<8x128xf32> -> vector<8x128xf32>
    %174 = arith.maximumf %170, %165 : vector<8x128xf32>
    %175 = arith.maximumf %174, %155 : vector<8x128xf32>
    %cst_125 = arith.constant 8.000000e-01 : f32
    %176 = vector.broadcast %cst_125 : f32 to vector<8x128xf32>
    %177 = arith.mulf %175, %176 : vector<8x128xf32>
    %cst_126 = arith.constant 2.000000e-01 : f32
    %178 = vector.broadcast %cst_126 : f32 to vector<8x128xf32>
    %179 = arith.mulf %173, %178 : vector<8x128xf32>
    %180 = arith.addf %177, %179 : vector<8x128xf32>
    %c4_127 = arith.constant 4 : index
    %c0_128 = arith.constant 0 : index
    %c0_129 = arith.constant 0 : index
    %181 = vector.load %arg5[%c4_127, %c0_128, %c0_129] : memref<8x8x128xf32, #tpu.memory_space<vmem>>, vector<1x8x128xf32>
    %182 = vector.shape_cast %181 : vector<1x8x128xf32> to vector<8x128xf32>
    %183 = vector.shape_cast %180 : vector<8x128xf32> to vector<1x8x128xf32>
    tpu.vector_store %arg5[%c4_127, %c0_128, %c0_129], %183 {strides = array<i32>} : memref<8x8x128xf32, #tpu.memory_space<vmem>>, vector<1x8x128xf32>,
    %c5_130 = arith.constant 5 : index
    %c0_131 = arith.constant 0 : index
    %c0_132 = arith.constant 0 : index
    %184 = vector.load %arg5[%c5_130, %c0_131, %c0_132] : memref<8x8x128xf32, #tpu.memory_space<vmem>>, vector<1x8x128xf32>
    %185 = vector.shape_cast %184 : vector<1x8x128xf32> to vector<8x128xf32>
    %c5_133 = arith.constant 5 : index
    %c0_134 = arith.constant 0 : index
    %c0_135 = arith.constant 0 : index
    %186 = vector.load %arg3[%c5_133, %c0_134, %c0_135] : memref<8x32x128xbf16, #tpu.memory_space<vmem>>, vector<1x32x128xbf16>
    %187 = vector.shape_cast %186 : vector<1x32x128xbf16> to vector<32x128xbf16>
    %cst_136 = arith.constant dense<0.000000e+00> : vector<8x128xf32>
    %188 = tpu.matmul %108, %187, %cst_136 {dimension_numbers = #tpu.dot_dimension_numbers<[1], [0], [0], [1], [0, 0, 1, 1], [], []>} : vector<8x32xbf16>, vector<32x128xbf16>, vector<8x128xf32> -> vector<8x128xf32>
    %189 = arith.maximumf %185, %180 : vector<8x128xf32>
    %190 = arith.maximumf %189, %170 : vector<8x128xf32>
    %cst_137 = arith.constant 0.833333313 : f32
    %191 = vector.broadcast %cst_137 : f32 to vector<8x128xf32>
    %192 = arith.mulf %190, %191 : vector<8x128xf32>
    %cst_138 = arith.constant 0.166666672 : f32
    %193 = vector.broadcast %cst_138 : f32 to vector<8x128xf32>
    %194 = arith.mulf %188, %193 : vector<8x128xf32>
    %195 = arith.addf %192, %194 : vector<8x128xf32>
    %c5_139 = arith.constant 5 : index
    %c0_140 = arith.constant 0 : index
    %c0_141 = arith.constant 0 : index
    %196 = vector.load %arg5[%c5_139, %c0_140, %c0_141] : memref<8x8x128xf32, #tpu.memory_space<vmem>>, vector<1x8x128xf32>
    %197 = vector.shape_cast %196 : vector<1x8x128xf32> to vector<8x128xf32>
    %198 = vector.shape_cast %195 : vector<8x128xf32> to vector<1x8x128xf32>
    tpu.vector_store %arg5[%c5_139, %c0_140, %c0_141], %198 {strides = array<i32>} : memref<8x8x128xf32, #tpu.memory_space<vmem>>, vector<1x8x128xf32>,
    %c6_142 = arith.constant 6 : index
    %c0_143 = arith.constant 0 : index
    %c0_144 = arith.constant 0 : index
    %199 = vector.load %arg5[%c6_142, %c0_143, %c0_144] : memref<8x8x128xf32, #tpu.memory_space<vmem>>, vector<1x8x128xf32>
    %200 = vector.shape_cast %199 : vector<1x8x128xf32> to vector<8x128xf32>
    %c6_145 = arith.constant 6 : index
    %c0_146 = arith.constant 0 : index
    %c0_147 = arith.constant 0 : index
    %201 = vector.load %arg3[%c6_145, %c0_146, %c0_147] : memref<8x32x128xbf16, #tpu.memory_space<vmem>>, vector<1x32x128xbf16>
    %202 = vector.shape_cast %201 : vector<1x32x128xbf16> to vector<32x128xbf16>
    %cst_148 = arith.constant dense<0.000000e+00> : vector<8x128xf32>
    %203 = tpu.matmul %108, %202, %cst_148 {dimension_numbers = #tpu.dot_dimension_numbers<[1], [0], [0], [1], [0, 0, 1, 1], [], []>} : vector<8x32xbf16>, vector<32x128xbf16>, vector<8x128xf32> -> vector<8x128xf32>
    %204 = arith.maximumf %200, %195 : vector<8x128xf32>
    %205 = arith.maximumf %204, %185 : vector<8x128xf32>
    %cst_149 = arith.constant 0.857142865 : f32
    %206 = vector.broadcast %cst_149 : f32 to vector<8x128xf32>
    %207 = arith.mulf %205, %206 : vector<8x128xf32>
    %cst_150 = arith.constant 0.142857149 : f32
    %208 = vector.broadcast %cst_150 : f32 to vector<8x128xf32>
    %209 = arith.mulf %203, %208 : vector<8x128xf32>
    %210 = arith.addf %207, %209 : vector<8x128xf32>
    %c6_151 = arith.constant 6 : index
    %c0_152 = arith.constant 0 : index
    %c0_153 = arith.constant 0 : index
    %211 = vector.load %arg5[%c6_151, %c0_152, %c0_153] : memref<8x8x128xf32, #tpu.memory_space<vmem>>, vector<1x8x128xf32>
    %212 = vector.shape_cast %211 : vector<1x8x128xf32> to vector<8x128xf32>
    %213 = vector.shape_cast %210 : vector<8x128xf32> to vector<1x8x128xf32>
    tpu.vector_store %arg5[%c6_151, %c0_152, %c0_153], %213 {strides = array<i32>} : memref<8x8x128xf32, #tpu.memory_space<vmem>>, vector<1x8x128xf32>,
    %c7_154 = arith.constant 7 : index
    %c0_155 = arith.constant 0 : index
    %c0_156 = arith.constant 0 : index
    %214 = vector.load %arg5[%c7_154, %c0_155, %c0_156] : memref<8x8x128xf32, #tpu.memory_space<vmem>>, vector<1x8x128xf32>
    %215 = vector.shape_cast %214 : vector<1x8x128xf32> to vector<8x128xf32>
    %c7_157 = arith.constant 7 : index
    %c0_158 = arith.constant 0 : index
    %c0_159 = arith.constant 0 : index
    %216 = vector.load %arg3[%c7_157, %c0_158, %c0_159] : memref<8x32x128xbf16, #tpu.memory_space<vmem>>, vector<1x32x128xbf16>
    %217 = vector.shape_cast %216 : vector<1x32x128xbf16> to vector<32x128xbf16>
    %cst_160 = arith.constant dense<0.000000e+00> : vector<8x128xf32>
    %218 = tpu.matmul %108, %217, %cst_160 {dimension_numbers = #tpu.dot_dimension_numbers<[1], [0], [0], [1], [0, 0, 1, 1], [], []>} : vector<8x32xbf16>, vector<32x128xbf16>, vector<8x128xf32> -> vector<8x128xf32>
    %219 = arith.maximumf %215, %210 : vector<8x128xf32>
    %220 = arith.maximumf %219, %200 : vector<8x128xf32>
    %cst_161 = arith.constant 8.750000e-01 : f32
    %221 = vector.broadcast %cst_161 : f32 to vector<8x128xf32>
    %222 = arith.mulf %220, %221 : vector<8x128xf32>
    %cst_162 = arith.constant 1.250000e-01 : f32
    %223 = vector.broadcast %cst_162 : f32 to vector<8x128xf32>
    %224 = arith.mulf %218, %223 : vector<8x128xf32>
    %225 = arith.addf %222, %224 : vector<8x128xf32>
    %c7_163 = arith.constant 7 : index
    %c0_164 = arith.constant 0 : index
    %c0_165 = arith.constant 0 : index
    %226 = vector.load %arg5[%c7_163, %c0_164, %c0_165] : memref<8x8x128xf32, #tpu.memory_space<vmem>>, vector<1x8x128xf32>
    %227 = vector.shape_cast %226 : vector<1x8x128xf32> to vector<8x128xf32>
    %228 = vector.shape_cast %225 : vector<8x128xf32> to vector<1x8x128xf32>
    tpu.vector_store %arg5[%c7_163, %c0_164, %c0_165], %228 {strides = array<i32>} : memref<8x8x128xf32, #tpu.memory_space<vmem>>, vector<1x8x128xf32>,
    %c2_166 = arith.constant 2 : index
    %c0_167 = arith.constant 0 : index
    %c0_168 = arith.constant 0 : index
    %229 = vector.load %arg2[%c2_166, %c0_167, %c0_168] : memref<8x8x32xbf16, #tpu.memory_space<vmem>>, vector<1x8x32xbf16>
    %230 = vector.shape_cast %229 : vector<1x8x32xbf16> to vector<8x32xbf16>
    %c0_169 = arith.constant 0 : index
    %c0_170 = arith.constant 0 : index
    %c0_171 = arith.constant 0 : index
    %231 = vector.load %arg5[%c0_169, %c0_170, %c0_171] : memref<8x8x128xf32, #tpu.memory_space<vmem>>, vector<1x8x128xf32>
    %232 = vector.shape_cast %231 : vector<1x8x128xf32> to vector<8x128xf32>
    %c0_172 = arith.constant 0 : index
    %c0_173 = arith.constant 0 : index
    %c0_174 = arith.constant 0 : index
    %233 = vector.load %arg3[%c0_172, %c0_173, %c0_174] : memref<8x32x128xbf16, #tpu.memory_space<vmem>>, vector<1x32x128xbf16>
    %234 = vector.shape_cast %233 : vector<1x32x128xbf16> to vector<32x128xbf16>
    %cst_175 = arith.constant dense<0.000000e+00> : vector<8x128xf32>
    %235 = tpu.matmul %230, %234, %cst_175 {dimension_numbers = #tpu.dot_dimension_numbers<[1], [0], [0], [1], [0, 0, 1, 1], [], []>} : vector<8x32xbf16>, vector<32x128xbf16>, vector<8x128xf32> -> vector<8x128xf32>
    %236 = arith.maximumf %232, %0 : vector<8x128xf32>
    %237 = arith.maximumf %236, %0 : vector<8x128xf32>
    %cst_176 = arith.constant 0.666666686 : f32
    %238 = vector.broadcast %cst_176 : f32 to vector<8x128xf32>
    %239 = arith.mulf %237, %238 : vector<8x128xf32>
    %cst_177 = arith.constant 0.333333343 : f32
    %240 = vector.broadcast %cst_177 : f32 to vector<8x128xf32>
    %241 = arith.mulf %235, %240 : vector<8x128xf32>
    %242 = arith.addf %239, %241 : vector<8x128xf32>
    %c0_178 = arith.constant 0 : index
    %c0_179 = arith.constant 0 : index
    %c0_180 = arith.constant 0 : index
    %243 = vector.load %arg5[%c0_178, %c0_179, %c0_180] : memref<8x8x128xf32, #tpu.memory_space<vmem>>, vector<1x8x128xf32>
    %244 = vector.shape_cast %243 : vector<1x8x128xf32> to vector<8x128xf32>
    %245 = vector.shape_cast %242 : vector<8x128xf32> to vector<1x8x128xf32>
    tpu.vector_store %arg5[%c0_178, %c0_179, %c0_180], %245 {strides = array<i32>} : memref<8x8x128xf32, #tpu.memory_space<vmem>>, vector<1x8x128xf32>,
    %c1_181 = arith.constant 1 : index
    %c0_182 = arith.constant 0 : index
    %c0_183 = arith.constant 0 : index
    %246 = vector.load %arg5[%c1_181, %c0_182, %c0_183] : memref<8x8x128xf32, #tpu.memory_space<vmem>>, vector<1x8x128xf32>
    %247 = vector.shape_cast %246 : vector<1x8x128xf32> to vector<8x128xf32>
    %c1_184 = arith.constant 1 : index
    %c0_185 = arith.constant 0 : index
    %c0_186 = arith.constant 0 : index
    %248 = vector.load %arg3[%c1_184, %c0_185, %c0_186] : memref<8x32x128xbf16, #tpu.memory_space<vmem>>, vector<1x32x128xbf16>
    %249 = vector.shape_cast %248 : vector<1x32x128xbf16> to vector<32x128xbf16>
    %cst_187 = arith.constant dense<0.000000e+00> : vector<8x128xf32>
    %250 = tpu.matmul %230, %249, %cst_187 {dimension_numbers = #tpu.dot_dimension_numbers<[1], [0], [0], [1], [0, 0, 1, 1], [], []>} : vector<8x32xbf16>, vector<32x128xbf16>, vector<8x128xf32> -> vector<8x128xf32>
    %251 = arith.maximumf %247, %242 : vector<8x128xf32>
    %252 = arith.maximumf %251, %232 : vector<8x128xf32>
    %cst_188 = arith.constant 0.666666686 : f32
    %253 = vector.broadcast %cst_188 : f32 to vector<8x128xf32>
    %254 = arith.mulf %252, %253 : vector<8x128xf32>
    %cst_189 = arith.constant 0.333333343 : f32
    %255 = vector.broadcast %cst_189 : f32 to vector<8x128xf32>
    %256 = arith.mulf %250, %255 : vector<8x128xf32>
    %257 = arith.addf %254, %256 : vector<8x128xf32>
    %c1_190 = arith.constant 1 : index
    %c0_191 = arith.constant 0 : index
    %c0_192 = arith.constant 0 : index
    %258 = vector.load %arg5[%c1_190, %c0_191, %c0_192] : memref<8x8x128xf32, #tpu.memory_space<vmem>>, vector<1x8x128xf32>
    %259 = vector.shape_cast %258 : vector<1x8x128xf32> to vector<8x128xf32>
    %260 = vector.shape_cast %257 : vector<8x128xf32> to vector<1x8x128xf32>
    tpu.vector_store %arg5[%c1_190, %c0_191, %c0_192], %260 {strides = array<i32>} : memref<8x8x128xf32, #tpu.memory_space<vmem>>, vector<1x8x128xf32>,
    %c2_193 = arith.constant 2 : index
    %c0_194 = arith.constant 0 : index
    %c0_195 = arith.constant 0 : index
    %261 = vector.load %arg5[%c2_193, %c0_194, %c0_195] : memref<8x8x128xf32, #tpu.memory_space<vmem>>, vector<1x8x128xf32>
    %262 = vector.shape_cast %261 : vector<1x8x128xf32> to vector<8x128xf32>
    %c2_196 = arith.constant 2 : index
    %c0_197 = arith.constant 0 : index
    %c0_198 = arith.constant 0 : index
    %263 = vector.load %arg3[%c2_196, %c0_197, %c0_198] : memref<8x32x128xbf16, #tpu.memory_space<vmem>>, vector<1x32x128xbf16>
    %264 = vector.shape_cast %263 : vector<1x32x128xbf16> to vector<32x128xbf16>
    %cst_199 = arith.constant dense<0.000000e+00> : vector<8x128xf32>
    %265 = tpu.matmul %230, %264, %cst_199 {dimension_numbers = #tpu.dot_dimension_numbers<[1], [0], [0], [1], [0, 0, 1, 1], [], []>} : vector<8x32xbf16>, vector<32x128xbf16>, vector<8x128xf32> -> vector<8x128xf32>
    %266 = arith.maximumf %262, %257 : vector<8x128xf32>
    %267 = arith.maximumf %266, %247 : vector<8x128xf32>
    %cst_200 = arith.constant 0.666666686 : f32
    %268 = vector.broadcast %cst_200 : f32 to vector<8x128xf32>
    %269 = arith.mulf %267, %268 : vector<8x128xf32>
    %cst_201 = arith.constant 0.333333343 : f32
    %270 = vector.broadcast %cst_201 : f32 to vector<8x128xf32>
    %271 = arith.mulf %265, %270 : vector<8x128xf32>
    %272 = arith.addf %269, %271 : vector<8x128xf32>
    %c2_202 = arith.constant 2 : index
    %c0_203 = arith.constant 0 : index
    %c0_204 = arith.constant 0 : index
    %273 = vector.load %arg5[%c2_202, %c0_203, %c0_204] : memref<8x8x128xf32, #tpu.memory_space<vmem>>, vector<1x8x128xf32>
    %274 = vector.shape_cast %273 : vector<1x8x128xf32> to vector<8x128xf32>
    %275 = vector.shape_cast %272 : vector<8x128xf32> to vector<1x8x128xf32>
    tpu.vector_store %arg5[%c2_202, %c0_203, %c0_204], %275 {strides = array<i32>} : memref<8x8x128xf32, #tpu.memory_space<vmem>>, vector<1x8x128xf32>,
    %c3_205 = arith.constant 3 : index
    %c0_206 = arith.constant 0 : index
    %c0_207 = arith.constant 0 : index
    %276 = vector.load %arg5[%c3_205, %c0_206, %c0_207] : memref<8x8x128xf32, #tpu.memory_space<vmem>>, vector<1x8x128xf32>
    %277 = vector.shape_cast %276 : vector<1x8x128xf32> to vector<8x128xf32>
    %c3_208 = arith.constant 3 : index
    %c0_209 = arith.constant 0 : index
    %c0_210 = arith.constant 0 : index
    %278 = vector.load %arg3[%c3_208, %c0_209, %c0_210] : memref<8x32x128xbf16, #tpu.memory_space<vmem>>, vector<1x32x128xbf16>
    %279 = vector.shape_cast %278 : vector<1x32x128xbf16> to vector<32x128xbf16>
    %cst_211 = arith.constant dense<0.000000e+00> : vector<8x128xf32>
    %280 = tpu.matmul %230, %279, %cst_211 {dimension_numbers = #tpu.dot_dimension_numbers<[1], [0], [0], [1], [0, 0, 1, 1], [], []>} : vector<8x32xbf16>, vector<32x128xbf16>, vector<8x128xf32> -> vector<8x128xf32>
    %281 = arith.maximumf %277, %272 : vector<8x128xf32>
    %282 = arith.maximumf %281, %262 : vector<8x128xf32>
    %cst_212 = arith.constant 7.500000e-01 : f32
    %283 = vector.broadcast %cst_212 : f32 to vector<8x128xf32>
    %284 = arith.mulf %282, %283 : vector<8x128xf32>
    %cst_213 = arith.constant 2.500000e-01 : f32
    %285 = vector.broadcast %cst_213 : f32 to vector<8x128xf32>
    %286 = arith.mulf %280, %285 : vector<8x128xf32>
    %287 = arith.addf %284, %286 : vector<8x128xf32>
    %c3_214 = arith.constant 3 : index
    %c0_215 = arith.constant 0 : index
    %c0_216 = arith.constant 0 : index
    %288 = vector.load %arg5[%c3_214, %c0_215, %c0_216] : memref<8x8x128xf32, #tpu.memory_space<vmem>>, vector<1x8x128xf32>
    %289 = vector.shape_cast %288 : vector<1x8x128xf32> to vector<8x128xf32>
    %290 = vector.shape_cast %287 : vector<8x128xf32> to vector<1x8x128xf32>
    tpu.vector_store %arg5[%c3_214, %c0_215, %c0_216], %290 {strides = array<i32>} : memref<8x8x128xf32, #tpu.memory_space<vmem>>, vector<1x8x128xf32>,
    %c4_217 = arith.constant 4 : index
    %c0_218 = arith.constant 0 : index
    %c0_219 = arith.constant 0 : index
    %291 = vector.load %arg5[%c4_217, %c0_218, %c0_219] : memref<8x8x128xf32, #tpu.memory_space<vmem>>, vector<1x8x128xf32>
    %292 = vector.shape_cast %291 : vector<1x8x128xf32> to vector<8x128xf32>
    %c4_220 = arith.constant 4 : index
    %c0_221 = arith.constant 0 : index
    %c0_222 = arith.constant 0 : index
    %293 = vector.load %arg3[%c4_220, %c0_221, %c0_222] : memref<8x32x128xbf16, #tpu.memory_space<vmem>>, vector<1x32x128xbf16>
    %294 = vector.shape_cast %293 : vector<1x32x128xbf16> to vector<32x128xbf16>
    %cst_223 = arith.constant dense<0.000000e+00> : vector<8x128xf32>
    %295 = tpu.matmul %230, %294, %cst_223 {dimension_numbers = #tpu.dot_dimension_numbers<[1], [0], [0], [1], [0, 0, 1, 1], [], []>} : vector<8x32xbf16>, vector<32x128xbf16>, vector<8x128xf32> -> vector<8x128xf32>
    %296 = arith.maximumf %292, %287 : vector<8x128xf32>
    %297 = arith.maximumf %296, %277 : vector<8x128xf32>
    %cst_224 = arith.constant 8.000000e-01 : f32
    %298 = vector.broadcast %cst_224 : f32 to vector<8x128xf32>
    %299 = arith.mulf %297, %298 : vector<8x128xf32>
    %cst_225 = arith.constant 2.000000e-01 : f32
    %300 = vector.broadcast %cst_225 : f32 to vector<8x128xf32>
    %301 = arith.mulf %295, %300 : vector<8x128xf32>
    %302 = arith.addf %299, %301 : vector<8x128xf32>
    %c4_226 = arith.constant 4 : index
    %c0_227 = arith.constant 0 : index
    %c0_228 = arith.constant 0 : index
    %303 = vector.load %arg5[%c4_226, %c0_227, %c0_228] : memref<8x8x128xf32, #tpu.memory_space<vmem>>, vector<1x8x128xf32>
    %304 = vector.shape_cast %303 : vector<1x8x128xf32> to vector<8x128xf32>
    %305 = vector.shape_cast %302 : vector<8x128xf32> to vector<1x8x128xf32>
    tpu.vector_store %arg5[%c4_226, %c0_227, %c0_228], %305 {strides = array<i32>} : memref<8x8x128xf32, #tpu.memory_space<vmem>>, vector<1x8x128xf32>,
    %c5_229 = arith.constant 5 : index
    %c0_230 = arith.constant 0 : index
    %c0_231 = arith.constant 0 : index
    %306 = vector.load %arg5[%c5_229, %c0_230, %c0_231] : memref<8x8x128xf32, #tpu.memory_space<vmem>>, vector<1x8x128xf32>
    %307 = vector.shape_cast %306 : vector<1x8x128xf32> to vector<8x128xf32>
    %c5_232 = arith.constant 5 : index
    %c0_233 = arith.constant 0 : index
    %c0_234 = arith.constant 0 : index
    %308 = vector.load %arg3[%c5_232, %c0_233, %c0_234] : memref<8x32x128xbf16, #tpu.memory_space<vmem>>, vector<1x32x128xbf16>
    %309 = vector.shape_cast %308 : vector<1x32x128xbf16> to vector<32x128xbf16>
    %cst_235 = arith.constant dense<0.000000e+00> : vector<8x128xf32>
    %310 = tpu.matmul %230, %309, %cst_235 {dimension_numbers = #tpu.dot_dimension_numbers<[1], [0], [0], [1], [0, 0, 1, 1], [], []>} : vector<8x32xbf16>, vector<32x128xbf16>, vector<8x128xf32> -> vector<8x128xf32>
    %311 = arith.maximumf %307, %302 : vector<8x128xf32>
    %312 = arith.maximumf %311, %292 : vector<8x128xf32>
    %cst_236 = arith.constant 0.833333313 : f32
    %313 = vector.broadcast %cst_236 : f32 to vector<8x128xf32>
    %314 = arith.mulf %312, %313 : vector<8x128xf32>
    %cst_237 = arith.constant 0.166666672 : f32
    %315 = vector.broadcast %cst_237 : f32 to vector<8x128xf32>
    %316 = arith.mulf %310, %315 : vector<8x128xf32>
    %317 = arith.addf %314, %316 : vector<8x128xf32>
    %c5_238 = arith.constant 5 : index
    %c0_239 = arith.constant 0 : index
    %c0_240 = arith.constant 0 : index
    %318 = vector.load %arg5[%c5_238, %c0_239, %c0_240] : memref<8x8x128xf32, #tpu.memory_space<vmem>>, vector<1x8x128xf32>
    %319 = vector.shape_cast %318 : vector<1x8x128xf32> to vector<8x128xf32>
    %320 = vector.shape_cast %317 : vector<8x128xf32> to vector<1x8x128xf32>
    tpu.vector_store %arg5[%c5_238, %c0_239, %c0_240], %320 {strides = array<i32>} : memref<8x8x128xf32, #tpu.memory_space<vmem>>, vector<1x8x128xf32>,
    %c6_241 = arith.constant 6 : index
    %c0_242 = arith.constant 0 : index
    %c0_243 = arith.constant 0 : index
    %321 = vector.load %arg5[%c6_241, %c0_242, %c0_243] : memref<8x8x128xf32, #tpu.memory_space<vmem>>, vector<1x8x128xf32>
    %322 = vector.shape_cast %321 : vector<1x8x128xf32> to vector<8x128xf32>
    %c6_244 = arith.constant 6 : index
    %c0_245 = arith.constant 0 : index
    %c0_246 = arith.constant 0 : index
    %323 = vector.load %arg3[%c6_244, %c0_245, %c0_246] : memref<8x32x128xbf16, #tpu.memory_space<vmem>>, vector<1x32x128xbf16>
    %324 = vector.shape_cast %323 : vector<1x32x128xbf16> to vector<32x128xbf16>
    %cst_247 = arith.constant dense<0.000000e+00> : vector<8x128xf32>
    %325 = tpu.matmul %230, %324, %cst_247 {dimension_numbers = #tpu.dot_dimension_numbers<[1], [0], [0], [1], [0, 0, 1, 1], [], []>} : vector<8x32xbf16>, vector<32x128xbf16>, vector<8x128xf32> -> vector<8x128xf32>
    %326 = arith.maximumf %322, %317 : vector<8x128xf32>
    %327 = arith.maximumf %326, %307 : vector<8x128xf32>
    %cst_248 = arith.constant 0.857142865 : f32
    %328 = vector.broadcast %cst_248 : f32 to vector<8x128xf32>
    %329 = arith.mulf %327, %328 : vector<8x128xf32>
    %cst_249 = arith.constant 0.142857149 : f32
    %330 = vector.broadcast %cst_249 : f32 to vector<8x128xf32>
    %331 = arith.mulf %325, %330 : vector<8x128xf32>
    %332 = arith.addf %329, %331 : vector<8x128xf32>
    %c6_250 = arith.constant 6 : index
    %c0_251 = arith.constant 0 : index
    %c0_252 = arith.constant 0 : index
    %333 = vector.load %arg5[%c6_250, %c0_251, %c0_252] : memref<8x8x128xf32, #tpu.memory_space<vmem>>, vector<1x8x128xf32>
    %334 = vector.shape_cast %333 : vector<1x8x128xf32> to vector<8x128xf32>
    %335 = vector.shape_cast %332 : vector<8x128xf32> to vector<1x8x128xf32>
    tpu.vector_store %arg5[%c6_250, %c0_251, %c0_252], %335 {strides = array<i32>} : memref<8x8x128xf32, #tpu.memory_space<vmem>>, vector<1x8x128xf32>,
    %c7_253 = arith.constant 7 : index
    %c0_254 = arith.constant 0 : index
    %c0_255 = arith.constant 0 : index
    %336 = vector.load %arg5[%c7_253, %c0_254, %c0_255] : memref<8x8x128xf32, #tpu.memory_space<vmem>>, vector<1x8x128xf32>
    %337 = vector.shape_cast %336 : vector<1x8x128xf32> to vector<8x128xf32>
    %c7_256 = arith.constant 7 : index
    %c0_257 = arith.constant 0 : index
    %c0_258 = arith.constant 0 : index
    %338 = vector.load %arg3[%c7_256, %c0_257, %c0_258] : memref<8x32x128xbf16, #tpu.memory_space<vmem>>, vector<1x32x128xbf16>
    %339 = vector.shape_cast %338 : vector<1x32x128xbf16> to vector<32x128xbf16>
    %cst_259 = arith.constant dense<0.000000e+00> : vector<8x128xf32>
    %340 = tpu.matmul %230, %339, %cst_259 {dimension_numbers = #tpu.dot_dimension_numbers<[1], [0], [0], [1], [0, 0, 1, 1], [], []>} : vector<8x32xbf16>, vector<32x128xbf16>, vector<8x128xf32> -> vector<8x128xf32>
    %341 = arith.maximumf %337, %332 : vector<8x128xf32>
    %342 = arith.maximumf %341, %322 : vector<8x128xf32>
    %cst_260 = arith.constant 8.750000e-01 : f32
    %343 = vector.broadcast %cst_260 : f32 to vector<8x128xf32>
    %344 = arith.mulf %342, %343 : vector<8x128xf32>
    %cst_261 = arith.constant 1.250000e-01 : f32
    %345 = vector.broadcast %cst_261 : f32 to vector<8x128xf32>
    %346 = arith.mulf %340, %345 : vector<8x128xf32>
    %347 = arith.addf %344, %346 : vector<8x128xf32>
    %c7_262 = arith.constant 7 : index
    %c0_263 = arith.constant 0 : index
    %c0_264 = arith.constant 0 : index
    %348 = vector.load %arg5[%c7_262, %c0_263, %c0_264] : memref<8x8x128xf32, #tpu.memory_space<vmem>>, vector<1x8x128xf32>
    %349 = vector.shape_cast %348 : vector<1x8x128xf32> to vector<8x128xf32>
    %350 = vector.shape_cast %347 : vector<8x128xf32> to vector<1x8x128xf32>
    tpu.vector_store %arg5[%c7_262, %c0_263, %c0_264], %350 {strides = array<i32>} : memref<8x8x128xf32, #tpu.memory_space<vmem>>, vector<1x8x128xf32>,
    %c3_265 = arith.constant 3 : index
    %c0_266 = arith.constant 0 : index
    %c0_267 = arith.constant 0 : index
    %351 = vector.load %arg2[%c3_265, %c0_266, %c0_267] : memref<8x8x32xbf16, #tpu.memory_space<vmem>>, vector<1x8x32xbf16>
    %352 = vector.shape_cast %351 : vector<1x8x32xbf16> to vector<8x32xbf16>
    %c0_268 = arith.constant 0 : index
    %c0_269 = arith.constant 0 : index
    %c0_270 = arith.constant 0 : index
    %353 = vector.load %arg5[%c0_268, %c0_269, %c0_270] : memref<8x8x128xf32, #tpu.memory_space<vmem>>, vector<1x8x128xf32>
    %354 = vector.shape_cast %353 : vector<1x8x128xf32> to vector<8x128xf32>
    %c0_271 = arith.constant 0 : index
    %c0_272 = arith.constant 0 : index
    %c0_273 = arith.constant 0 : index
    %355 = vector.load %arg3[%c0_271, %c0_272, %c0_273] : memref<8x32x128xbf16, #tpu.memory_space<vmem>>, vector<1x32x128xbf16>
    %356 = vector.shape_cast %355 : vector<1x32x128xbf16> to vector<32x128xbf16>
    %cst_274 = arith.constant dense<0.000000e+00> : vector<8x128xf32>
    %357 = tpu.matmul %352, %356, %cst_274 {dimension_numbers = #tpu.dot_dimension_numbers<[1], [0], [0], [1], [0, 0, 1, 1], [], []>} : vector<8x32xbf16>, vector<32x128xbf16>, vector<8x128xf32> -> vector<8x128xf32>
    %358 = arith.maximumf %354, %0 : vector<8x128xf32>
    %359 = arith.maximumf %358, %0 : vector<8x128xf32>
    %cst_275 = arith.constant 7.500000e-01 : f32
    %360 = vector.broadcast %cst_275 : f32 to vector<8x128xf32>
    %361 = arith.mulf %359, %360 : vector<8x128xf32>
    %cst_276 = arith.constant 2.500000e-01 : f32
    %362 = vector.broadcast %cst_276 : f32 to vector<8x128xf32>
    %363 = arith.mulf %357, %362 : vector<8x128xf32>
    %364 = arith.addf %361, %363 : vector<8x128xf32>
    %c0_277 = arith.constant 0 : index
    %c0_278 = arith.constant 0 : index
    %c0_279 = arith.constant 0 : index
    %365 = vector.load %arg5[%c0_277, %c0_278, %c0_279] : memref<8x8x128xf32, #tpu.memory_space<vmem>>, vector<1x8x128xf32>
    %366 = vector.shape_cast %365 : vector<1x8x128xf32> to vector<8x128xf32>
    %367 = vector.shape_cast %364 : vector<8x128xf32> to vector<1x8x128xf32>
    tpu.vector_store %arg5[%c0_277, %c0_278, %c0_279], %367 {strides = array<i32>} : memref<8x8x128xf32, #tpu.memory_space<vmem>>, vector<1x8x128xf32>,
    %c1_280 = arith.constant 1 : index
    %c0_281 = arith.constant 0 : index
    %c0_282 = arith.constant 0 : index
    %368 = vector.load %arg5[%c1_280, %c0_281, %c0_282] : memref<8x8x128xf32, #tpu.memory_space<vmem>>, vector<1x8x128xf32>
    %369 = vector.shape_cast %368 : vector<1x8x128xf32> to vector<8x128xf32>
    %c1_283 = arith.constant 1 : index
    %c0_284 = arith.constant 0 : index
    %c0_285 = arith.constant 0 : index
    %370 = vector.load %arg3[%c1_283, %c0_284, %c0_285] : memref<8x32x128xbf16, #tpu.memory_space<vmem>>, vector<1x32x128xbf16>
    %371 = vector.shape_cast %370 : vector<1x32x128xbf16> to vector<32x128xbf16>
    %cst_286 = arith.constant dense<0.000000e+00> : vector<8x128xf32>
    %372 = tpu.matmul %352, %371, %cst_286 {dimension_numbers = #tpu.dot_dimension_numbers<[1], [0], [0], [1], [0, 0, 1, 1], [], []>} : vector<8x32xbf16>, vector<32x128xbf16>, vector<8x128xf32> -> vector<8x128xf32>
    %373 = arith.maximumf %369, %364 : vector<8x128xf32>
    %374 = arith.maximumf %373, %354 : vector<8x128xf32>
    %cst_287 = arith.constant 7.500000e-01 : f32
    %375 = vector.broadcast %cst_287 : f32 to vector<8x128xf32>
    %376 = arith.mulf %374, %375 : vector<8x128xf32>
    %cst_288 = arith.constant 2.500000e-01 : f32
    %377 = vector.broadcast %cst_288 : f32 to vector<8x128xf32>
    %378 = arith.mulf %372, %377 : vector<8x128xf32>
    %379 = arith.addf %376, %378 : vector<8x128xf32>
    %c1_289 = arith.constant 1 : index
    %c0_290 = arith.constant 0 : index
    %c0_291 = arith.constant 0 : index
    %380 = vector.load %arg5[%c1_289, %c0_290, %c0_291] : memref<8x8x128xf32, #tpu.memory_space<vmem>>, vector<1x8x128xf32>
    %381 = vector.shape_cast %380 : vector<1x8x128xf32> to vector<8x128xf32>
    %382 = vector.shape_cast %379 : vector<8x128xf32> to vector<1x8x128xf32>
    tpu.vector_store %arg5[%c1_289, %c0_290, %c0_291], %382 {strides = array<i32>} : memref<8x8x128xf32, #tpu.memory_space<vmem>>, vector<1x8x128xf32>,
    %c2_292 = arith.constant 2 : index
    %c0_293 = arith.constant 0 : index
    %c0_294 = arith.constant 0 : index
    %383 = vector.load %arg5[%c2_292, %c0_293, %c0_294] : memref<8x8x128xf32, #tpu.memory_space<vmem>>, vector<1x8x128xf32>
    %384 = vector.shape_cast %383 : vector<1x8x128xf32> to vector<8x128xf32>
    %c2_295 = arith.constant 2 : index
    %c0_296 = arith.constant 0 : index
    %c0_297 = arith.constant 0 : index
    %385 = vector.load %arg3[%c2_295, %c0_296, %c0_297] : memref<8x32x128xbf16, #tpu.memory_space<vmem>>, vector<1x32x128xbf16>
    %386 = vector.shape_cast %385 : vector<1x32x128xbf16> to vector<32x128xbf16>
    %cst_298 = arith.constant dense<0.000000e+00> : vector<8x128xf32>
    %387 = tpu.matmul %352, %386, %cst_298 {dimension_numbers = #tpu.dot_dimension_numbers<[1], [0], [0], [1], [0, 0, 1, 1], [], []>} : vector<8x32xbf16>, vector<32x128xbf16>, vector<8x128xf32> -> vector<8x128xf32>
    %388 = arith.maximumf %384, %379 : vector<8x128xf32>
    %389 = arith.maximumf %388, %369 : vector<8x128xf32>
    %cst_299 = arith.constant 7.500000e-01 : f32
    %390 = vector.broadcast %cst_299 : f32 to vector<8x128xf32>
    %391 = arith.mulf %389, %390 : vector<8x128xf32>
    %cst_300 = arith.constant 2.500000e-01 : f32
    %392 = vector.broadcast %cst_300 : f32 to vector<8x128xf32>
    %393 = arith.mulf %387, %392 : vector<8x128xf32>
    %394 = arith.addf %391, %393 : vector<8x128xf32>
    %c2_301 = arith.constant 2 : index
    %c0_302 = arith.constant 0 : index
    %c0_303 = arith.constant 0 : index
    %395 = vector.load %arg5[%c2_301, %c0_302, %c0_303] : memref<8x8x128xf32, #tpu.memory_space<vmem>>, vector<1x8x128xf32>
    %396 = vector.shape_cast %395 : vector<1x8x128xf32> to vector<8x128xf32>
    %397 = vector.shape_cast %394 : vector<8x128xf32> to vector<1x8x128xf32>
    tpu.vector_store %arg5[%c2_301, %c0_302, %c0_303], %397 {strides = array<i32>} : memref<8x8x128xf32, #tpu.memory_space<vmem>>, vector<1x8x128xf32>,
    %c3_304 = arith.constant 3 : index
    %c0_305 = arith.constant 0 : index
    %c0_306 = arith.constant 0 : index
    %398 = vector.load %arg5[%c3_304, %c0_305, %c0_306] : memref<8x8x128xf32, #tpu.memory_space<vmem>>, vector<1x8x128xf32>
    %399 = vector.shape_cast %398 : vector<1x8x128xf32> to vector<8x128xf32>
    %c3_307 = arith.constant 3 : index
    %c0_308 = arith.constant 0 : index
    %c0_309 = arith.constant 0 : index
    %400 = vector.load %arg3[%c3_307, %c0_308, %c0_309] : memref<8x32x128xbf16, #tpu.memory_space<vmem>>, vector<1x32x128xbf16>
    %401 = vector.shape_cast %400 : vector<1x32x128xbf16> to vector<32x128xbf16>
    %cst_310 = arith.constant dense<0.000000e+00> : vector<8x128xf32>
    %402 = tpu.matmul %352, %401, %cst_310 {dimension_numbers = #tpu.dot_dimension_numbers<[1], [0], [0], [1], [0, 0, 1, 1], [], []>} : vector<8x32xbf16>, vector<32x128xbf16>, vector<8x128xf32> -> vector<8x128xf32>
    %403 = arith.maximumf %399, %394 : vector<8x128xf32>
    %404 = arith.maximumf %403, %384 : vector<8x128xf32>
    %cst_311 = arith.constant 7.500000e-01 : f32
    %405 = vector.broadcast %cst_311 : f32 to vector<8x128xf32>
    %406 = arith.mulf %404, %405 : vector<8x128xf32>
    %cst_312 = arith.constant 2.500000e-01 : f32
    %407 = vector.broadcast %cst_312 : f32 to vector<8x128xf32>
    %408 = arith.mulf %402, %407 : vector<8x128xf32>
    %409 = arith.addf %406, %408 : vector<8x128xf32>
    %c3_313 = arith.constant 3 : index
    %c0_314 = arith.constant 0 : index
    %c0_315 = arith.constant 0 : index
    %410 = vector.load %arg5[%c3_313, %c0_314, %c0_315] : memref<8x8x128xf32, #tpu.memory_space<vmem>>, vector<1x8x128xf32>
    %411 = vector.shape_cast %410 : vector<1x8x128xf32> to vector<8x128xf32>
    %412 = vector.shape_cast %409 : vector<8x128xf32> to vector<1x8x128xf32>
    tpu.vector_store %arg5[%c3_313, %c0_314, %c0_315], %412 {strides = array<i32>} : memref<8x8x128xf32, #tpu.memory_space<vmem>>, vector<1x8x128xf32>,
    %c4_316 = arith.constant 4 : index
    %c0_317 = arith.constant 0 : index
    %c0_318 = arith.constant 0 : index
    %413 = vector.load %arg5[%c4_316, %c0_317, %c0_318] : memref<8x8x128xf32, #tpu.memory_space<vmem>>, vector<1x8x128xf32>
    %414 = vector.shape_cast %413 : vector<1x8x128xf32> to vector<8x128xf32>
    %c4_319 = arith.constant 4 : index
    %c0_320 = arith.constant 0 : index
    %c0_321 = arith.constant 0 : index
    %415 = vector.load %arg3[%c4_319, %c0_320, %c0_321] : memref<8x32x128xbf16, #tpu.memory_space<vmem>>, vector<1x32x128xbf16>
    %416 = vector.shape_cast %415 : vector<1x32x128xbf16> to vector<32x128xbf16>
    %cst_322 = arith.constant dense<0.000000e+00> : vector<8x128xf32>
    %417 = tpu.matmul %352, %416, %cst_322 {dimension_numbers = #tpu.dot_dimension_numbers<[1], [0], [0], [1], [0, 0, 1, 1], [], []>} : vector<8x32xbf16>, vector<32x128xbf16>, vector<8x128xf32> -> vector<8x128xf32>
    %418 = arith.maximumf %414, %409 : vector<8x128xf32>
    %419 = arith.maximumf %418, %399 : vector<8x128xf32>
    %cst_323 = arith.constant 8.000000e-01 : f32
    %420 = vector.broadcast %cst_323 : f32 to vector<8x128xf32>
    %421 = arith.mulf %419, %420 : vector<8x128xf32>
    %cst_324 = arith.constant 2.000000e-01 : f32
    %422 = vector.broadcast %cst_324 : f32 to vector<8x128xf32>
    %423 = arith.mulf %417, %422 : vector<8x128xf32>
    %424 = arith.addf %421, %423 : vector<8x128xf32>
    %c4_325 = arith.constant 4 : index
    %c0_326 = arith.constant 0 : index
    %c0_327 = arith.constant 0 : index
    %425 = vector.load %arg5[%c4_325, %c0_326, %c0_327] : memref<8x8x128xf32, #tpu.memory_space<vmem>>, vector<1x8x128xf32>
    %426 = vector.shape_cast %425 : vector<1x8x128xf32> to vector<8x128xf32>
    %427 = vector.shape_cast %424 : vector<8x128xf32> to vector<1x8x128xf32>
    tpu.vector_store %arg5[%c4_325, %c0_326, %c0_327], %427 {strides = array<i32>} : memref<8x8x128xf32, #tpu.memory_space<vmem>>, vector<1x8x128xf32>,
    %c5_328 = arith.constant 5 : index
    %c0_329 = arith.constant 0 : index
    %c0_330 = arith.constant 0 : index
    %428 = vector.load %arg5[%c5_328, %c0_329, %c0_330] : memref<8x8x128xf32, #tpu.memory_space<vmem>>, vector<1x8x128xf32>
    %429 = vector.shape_cast %428 : vector<1x8x128xf32> to vector<8x128xf32>
    %c5_331 = arith.constant 5 : index
    %c0_332 = arith.constant 0 : index
    %c0_333 = arith.constant 0 : index
    %430 = vector.load %arg3[%c5_331, %c0_332, %c0_333] : memref<8x32x128xbf16, #tpu.memory_space<vmem>>, vector<1x32x128xbf16>
    %431 = vector.shape_cast %430 : vector<1x32x128xbf16> to vector<32x128xbf16>
    %cst_334 = arith.constant dense<0.000000e+00> : vector<8x128xf32>
    %432 = tpu.matmul %352, %431, %cst_334 {dimension_numbers = #tpu.dot_dimension_numbers<[1], [0], [0], [1], [0, 0, 1, 1], [], []>} : vector<8x32xbf16>, vector<32x128xbf16>, vector<8x128xf32> -> vector<8x128xf32>
    %433 = arith.maximumf %429, %424 : vector<8x128xf32>
    %434 = arith.maximumf %433, %414 : vector<8x128xf32>
    %cst_335 = arith.constant 0.833333313 : f32
    %435 = vector.broadcast %cst_335 : f32 to vector<8x128xf32>
    %436 = arith.mulf %434, %435 : vector<8x128xf32>
    %cst_336 = arith.constant 0.166666672 : f32
    %437 = vector.broadcast %cst_336 : f32 to vector<8x128xf32>
    %438 = arith.mulf %432, %437 : vector<8x128xf32>
    %439 = arith.addf %436, %438 : vector<8x128xf32>
    %c5_337 = arith.constant 5 : index
    %c0_338 = arith.constant 0 : index
    %c0_339 = arith.constant 0 : index
    %440 = vector.load %arg5[%c5_337, %c0_338, %c0_339] : memref<8x8x128xf32, #tpu.memory_space<vmem>>, vector<1x8x128xf32>
    %441 = vector.shape_cast %440 : vector<1x8x128xf32> to vector<8x128xf32>
    %442 = vector.shape_cast %439 : vector<8x128xf32> to vector<1x8x128xf32>
    tpu.vector_store %arg5[%c5_337, %c0_338, %c0_339], %442 {strides = array<i32>} : memref<8x8x128xf32, #tpu.memory_space<vmem>>, vector<1x8x128xf32>,
    %c6_340 = arith.constant 6 : index
    %c0_341 = arith.constant 0 : index
    %c0_342 = arith.constant 0 : index
    %443 = vector.load %arg5[%c6_340, %c0_341, %c0_342] : memref<8x8x128xf32, #tpu.memory_space<vmem>>, vector<1x8x128xf32>
    %444 = vector.shape_cast %443 : vector<1x8x128xf32> to vector<8x128xf32>
    %c6_343 = arith.constant 6 : index
    %c0_344 = arith.constant 0 : index
    %c0_345 = arith.constant 0 : index
    %445 = vector.load %arg3[%c6_343, %c0_344, %c0_345] : memref<8x32x128xbf16, #tpu.memory_space<vmem>>, vector<1x32x128xbf16>
    %446 = vector.shape_cast %445 : vector<1x32x128xbf16> to vector<32x128xbf16>
    %cst_346 = arith.constant dense<0.000000e+00> : vector<8x128xf32>
    %447 = tpu.matmul %352, %446, %cst_346 {dimension_numbers = #tpu.dot_dimension_numbers<[1], [0], [0], [1], [0, 0, 1, 1], [], []>} : vector<8x32xbf16>, vector<32x128xbf16>, vector<8x128xf32> -> vector<8x128xf32>
    %448 = arith.maximumf %444, %439 : vector<8x128xf32>
    %449 = arith.maximumf %448, %429 : vector<8x128xf32>
    %cst_347 = arith.constant 0.857142865 : f32
    %450 = vector.broadcast %cst_347 : f32 to vector<8x128xf32>
    %451 = arith.mulf %449, %450 : vector<8x128xf32>
    %cst_348 = arith.constant 0.142857149 : f32
    %452 = vector.broadcast %cst_348 : f32 to vector<8x128xf32>
    %453 = arith.mulf %447, %452 : vector<8x128xf32>
    %454 = arith.addf %451, %453 : vector<8x128xf32>
    %c6_349 = arith.constant 6 : index
    %c0_350 = arith.constant 0 : index
    %c0_351 = arith.constant 0 : index
    %455 = vector.load %arg5[%c6_349, %c0_350, %c0_351] : memref<8x8x128xf32, #tpu.memory_space<vmem>>, vector<1x8x128xf32>
    %456 = vector.shape_cast %455 : vector<1x8x128xf32> to vector<8x128xf32>
    %457 = vector.shape_cast %454 : vector<8x128xf32> to vector<1x8x128xf32>
    tpu.vector_store %arg5[%c6_349, %c0_350, %c0_351], %457 {strides = array<i32>} : memref<8x8x128xf32, #tpu.memory_space<vmem>>, vector<1x8x128xf32>,
    %c7_352 = arith.constant 7 : index
    %c0_353 = arith.constant 0 : index
    %c0_354 = arith.constant 0 : index
    %458 = vector.load %arg5[%c7_352, %c0_353, %c0_354] : memref<8x8x128xf32, #tpu.memory_space<vmem>>, vector<1x8x128xf32>
    %459 = vector.shape_cast %458 : vector<1x8x128xf32> to vector<8x128xf32>
    %c7_355 = arith.constant 7 : index
    %c0_356 = arith.constant 0 : index
    %c0_357 = arith.constant 0 : index
    %460 = vector.load %arg3[%c7_355, %c0_356, %c0_357] : memref<8x32x128xbf16, #tpu.memory_space<vmem>>, vector<1x32x128xbf16>
    %461 = vector.shape_cast %460 : vector<1x32x128xbf16> to vector<32x128xbf16>
    %cst_358 = arith.constant dense<0.000000e+00> : vector<8x128xf32>
    %462 = tpu.matmul %352, %461, %cst_358 {dimension_numbers = #tpu.dot_dimension_numbers<[1], [0], [0], [1], [0, 0, 1, 1], [], []>} : vector<8x32xbf16>, vector<32x128xbf16>, vector<8x128xf32> -> vector<8x128xf32>
    %463 = arith.maximumf %459, %454 : vector<8x128xf32>
    %464 = arith.maximumf %463, %444 : vector<8x128xf32>
    %cst_359 = arith.constant 8.750000e-01 : f32
    %465 = vector.broadcast %cst_359 : f32 to vector<8x128xf32>
    %466 = arith.mulf %464, %465 : vector<8x128xf32>
    %cst_360 = arith.constant 1.250000e-01 : f32
    %467 = vector.broadcast %cst_360 : f32 to vector<8x128xf32>
    %468 = arith.mulf %462, %467 : vector<8x128xf32>
    %469 = arith.addf %466, %468 : vector<8x128xf32>
    %c7_361 = arith.constant 7 : index
    %c0_362 = arith.constant 0 : index
    %c0_363 = arith.constant 0 : index
    %470 = vector.load %arg5[%c7_361, %c0_362, %c0_363] : memref<8x8x128xf32, #tpu.memory_space<vmem>>, vector<1x8x128xf32>
    %471 = vector.shape_cast %470 : vector<1x8x128xf32> to vector<8x128xf32>
    %472 = vector.shape_cast %469 : vector<8x128xf32> to vector<1x8x128xf32>
    tpu.vector_store %arg5[%c7_361, %c0_362, %c0_363], %472 {strides = array<i32>} : memref<8x8x128xf32, #tpu.memory_space<vmem>>, vector<1x8x128xf32>,
    %c4_364 = arith.constant 4 : index
    %c0_365 = arith.constant 0 : index
    %c0_366 = arith.constant 0 : index
    %473 = vector.load %arg2[%c4_364, %c0_365, %c0_366] : memref<8x8x32xbf16, #tpu.memory_space<vmem>>, vector<1x8x32xbf16>
    %474 = vector.shape_cast %473 : vector<1x8x32xbf16> to vector<8x32xbf16>
    %c0_367 = arith.constant 0 : index
    %c0_368 = arith.constant 0 : index
    %c0_369 = arith.constant 0 : index
    %475 = vector.load %arg5[%c0_367, %c0_368, %c0_369] : memref<8x8x128xf32, #tpu.memory_space<vmem>>, vector<1x8x128xf32>
    %476 = vector.shape_cast %475 : vector<1x8x128xf32> to vector<8x128xf32>
    %c0_370 = arith.constant 0 : index
    %c0_371 = arith.constant 0 : index
    %c0_372 = arith.constant 0 : index
    %477 = vector.load %arg3[%c0_370, %c0_371, %c0_372] : memref<8x32x128xbf16, #tpu.memory_space<vmem>>, vector<1x32x128xbf16>
    %478 = vector.shape_cast %477 : vector<1x32x128xbf16> to vector<32x128xbf16>
    %cst_373 = arith.constant dense<0.000000e+00> : vector<8x128xf32>
    %479 = tpu.matmul %474, %478, %cst_373 {dimension_numbers = #tpu.dot_dimension_numbers<[1], [0], [0], [1], [0, 0, 1, 1], [], []>} : vector<8x32xbf16>, vector<32x128xbf16>, vector<8x128xf32> -> vector<8x128xf32>
    %480 = arith.maximumf %476, %0 : vector<8x128xf32>
    %481 = arith.maximumf %480, %0 : vector<8x128xf32>
    %cst_374 = arith.constant 8.000000e-01 : f32
    %482 = vector.broadcast %cst_374 : f32 to vector<8x128xf32>
    %483 = arith.mulf %481, %482 : vector<8x128xf32>
    %cst_375 = arith.constant 2.000000e-01 : f32
    %484 = vector.broadcast %cst_375 : f32 to vector<8x128xf32>
    %485 = arith.mulf %479, %484 : vector<8x128xf32>
    %486 = arith.addf %483, %485 : vector<8x128xf32>
    %c0_376 = arith.constant 0 : index
    %c0_377 = arith.constant 0 : index
    %c0_378 = arith.constant 0 : index
    %487 = vector.load %arg5[%c0_376, %c0_377, %c0_378] : memref<8x8x128xf32, #tpu.memory_space<vmem>>, vector<1x8x128xf32>
    %488 = vector.shape_cast %487 : vector<1x8x128xf32> to vector<8x128xf32>
    %489 = vector.shape_cast %486 : vector<8x128xf32> to vector<1x8x128xf32>
    tpu.vector_store %arg5[%c0_376, %c0_377, %c0_378], %489 {strides = array<i32>} : memref<8x8x128xf32, #tpu.memory_space<vmem>>, vector<1x8x128xf32>,
    %c1_379 = arith.constant 1 : index
    %c0_380 = arith.constant 0 : index
    %c0_381 = arith.constant 0 : index
    %490 = vector.load %arg5[%c1_379, %c0_380, %c0_381] : memref<8x8x128xf32, #tpu.memory_space<vmem>>, vector<1x8x128xf32>
    %491 = vector.shape_cast %490 : vector<1x8x128xf32> to vector<8x128xf32>
    %c1_382 = arith.constant 1 : index
    %c0_383 = arith.constant 0 : index
    %c0_384 = arith.constant 0 : index
    %492 = vector.load %arg3[%c1_382, %c0_383, %c0_384] : memref<8x32x128xbf16, #tpu.memory_space<vmem>>, vector<1x32x128xbf16>
    %493 = vector.shape_cast %492 : vector<1x32x128xbf16> to vector<32x128xbf16>
    %cst_385 = arith.constant dense<0.000000e+00> : vector<8x128xf32>
    %494 = tpu.matmul %474, %493, %cst_385 {dimension_numbers = #tpu.dot_dimension_numbers<[1], [0], [0], [1], [0, 0, 1, 1], [], []>} : vector<8x32xbf16>, vector<32x128xbf16>, vector<8x128xf32> -> vector<8x128xf32>
    %495 = arith.maximumf %491, %486 : vector<8x128xf32>
    %496 = arith.maximumf %495, %476 : vector<8x128xf32>
    %cst_386 = arith.constant 8.000000e-01 : f32
    %497 = vector.broadcast %cst_386 : f32 to vector<8x128xf32>
    %498 = arith.mulf %496, %497 : vector<8x128xf32>
    %cst_387 = arith.constant 2.000000e-01 : f32
    %499 = vector.broadcast %cst_387 : f32 to vector<8x128xf32>
    %500 = arith.mulf %494, %499 : vector<8x128xf32>
    %501 = arith.addf %498, %500 : vector<8x128xf32>
    %c1_388 = arith.constant 1 : index
    %c0_389 = arith.constant 0 : index
    %c0_390 = arith.constant 0 : index
    %502 = vector.load %arg5[%c1_388, %c0_389, %c0_390] : memref<8x8x128xf32, #tpu.memory_space<vmem>>, vector<1x8x128xf32>
    %503 = vector.shape_cast %502 : vector<1x8x128xf32> to vector<8x128xf32>
    %504 = vector.shape_cast %501 : vector<8x128xf32> to vector<1x8x128xf32>
    tpu.vector_store %arg5[%c1_388, %c0_389, %c0_390], %504 {strides = array<i32>} : memref<8x8x128xf32, #tpu.memory_space<vmem>>, vector<1x8x128xf32>,
    %c2_391 = arith.constant 2 : index
    %c0_392 = arith.constant 0 : index
    %c0_393 = arith.constant 0 : index
    %505 = vector.load %arg5[%c2_391, %c0_392, %c0_393] : memref<8x8x128xf32, #tpu.memory_space<vmem>>, vector<1x8x128xf32>
    %506 = vector.shape_cast %505 : vector<1x8x128xf32> to vector<8x128xf32>
    %c2_394 = arith.constant 2 : index
    %c0_395 = arith.constant 0 : index
    %c0_396 = arith.constant 0 : index
    %507 = vector.load %arg3[%c2_394, %c0_395, %c0_396] : memref<8x32x128xbf16, #tpu.memory_space<vmem>>, vector<1x32x128xbf16>
    %508 = vector.shape_cast %507 : vector<1x32x128xbf16> to vector<32x128xbf16>
    %cst_397 = arith.constant dense<0.000000e+00> : vector<8x128xf32>
    %509 = tpu.matmul %474, %508, %cst_397 {dimension_numbers = #tpu.dot_dimension_numbers<[1], [0], [0], [1], [0, 0, 1, 1], [], []>} : vector<8x32xbf16>, vector<32x128xbf16>, vector<8x128xf32> -> vector<8x128xf32>
    %510 = arith.maximumf %506, %501 : vector<8x128xf32>
    %511 = arith.maximumf %510, %491 : vector<8x128xf32>
    %cst_398 = arith.constant 8.000000e-01 : f32
    %512 = vector.broadcast %cst_398 : f32 to vector<8x128xf32>
    %513 = arith.mulf %511, %512 : vector<8x128xf32>
    %cst_399 = arith.constant 2.000000e-01 : f32
    %514 = vector.broadcast %cst_399 : f32 to vector<8x128xf32>
    %515 = arith.mulf %509, %514 : vector<8x128xf32>
    %516 = arith.addf %513, %515 : vector<8x128xf32>
    %c2_400 = arith.constant 2 : index
    %c0_401 = arith.constant 0 : index
    %c0_402 = arith.constant 0 : index
    %517 = vector.load %arg5[%c2_400, %c0_401, %c0_402] : memref<8x8x128xf32, #tpu.memory_space<vmem>>, vector<1x8x128xf32>
    %518 = vector.shape_cast %517 : vector<1x8x128xf32> to vector<8x128xf32>
    %519 = vector.shape_cast %516 : vector<8x128xf32> to vector<1x8x128xf32>
    tpu.vector_store %arg5[%c2_400, %c0_401, %c0_402], %519 {strides = array<i32>} : memref<8x8x128xf32, #tpu.memory_space<vmem>>, vector<1x8x128xf32>,
    %c3_403 = arith.constant 3 : index
    %c0_404 = arith.constant 0 : index
    %c0_405 = arith.constant 0 : index
    %520 = vector.load %arg5[%c3_403, %c0_404, %c0_405] : memref<8x8x128xf32, #tpu.memory_space<vmem>>, vector<1x8x128xf32>
    %521 = vector.shape_cast %520 : vector<1x8x128xf32> to vector<8x128xf32>
    %c3_406 = arith.constant 3 : index
    %c0_407 = arith.constant 0 : index
    %c0_408 = arith.constant 0 : index
    %522 = vector.load %arg3[%c3_406, %c0_407, %c0_408] : memref<8x32x128xbf16, #tpu.memory_space<vmem>>, vector<1x32x128xbf16>
    %523 = vector.shape_cast %522 : vector<1x32x128xbf16> to vector<32x128xbf16>
    %cst_409 = arith.constant dense<0.000000e+00> : vector<8x128xf32>
    %524 = tpu.matmul %474, %523, %cst_409 {dimension_numbers = #tpu.dot_dimension_numbers<[1], [0], [0], [1], [0, 0, 1, 1], [], []>} : vector<8x32xbf16>, vector<32x128xbf16>, vector<8x128xf32> -> vector<8x128xf32>
    %525 = arith.maximumf %521, %516 : vector<8x128xf32>
    %526 = arith.maximumf %525, %506 : vector<8x128xf32>
    %cst_410 = arith.constant 8.000000e-01 : f32
    %527 = vector.broadcast %cst_410 : f32 to vector<8x128xf32>
    %528 = arith.mulf %526, %527 : vector<8x128xf32>
    %cst_411 = arith.constant 2.000000e-01 : f32
    %529 = vector.broadcast %cst_411 : f32 to vector<8x128xf32>
    %530 = arith.mulf %524, %529 : vector<8x128xf32>
    %531 = arith.addf %528, %530 : vector<8x128xf32>
    %c3_412 = arith.constant 3 : index
    %c0_413 = arith.constant 0 : index
    %c0_414 = arith.constant 0 : index
    %532 = vector.load %arg5[%c3_412, %c0_413, %c0_414] : memref<8x8x128xf32, #tpu.memory_space<vmem>>, vector<1x8x128xf32>
    %533 = vector.shape_cast %532 : vector<1x8x128xf32> to vector<8x128xf32>
    %534 = vector.shape_cast %531 : vector<8x128xf32> to vector<1x8x128xf32>
    tpu.vector_store %arg5[%c3_412, %c0_413, %c0_414], %534 {strides = array<i32>} : memref<8x8x128xf32, #tpu.memory_space<vmem>>, vector<1x8x128xf32>,
    %c4_415 = arith.constant 4 : index
    %c0_416 = arith.constant 0 : index
    %c0_417 = arith.constant 0 : index
    %535 = vector.load %arg5[%c4_415, %c0_416, %c0_417] : memref<8x8x128xf32, #tpu.memory_space<vmem>>, vector<1x8x128xf32>
    %536 = vector.shape_cast %535 : vector<1x8x128xf32> to vector<8x128xf32>
    %c4_418 = arith.constant 4 : index
    %c0_419 = arith.constant 0 : index
    %c0_420 = arith.constant 0 : index
    %537 = vector.load %arg3[%c4_418, %c0_419, %c0_420] : memref<8x32x128xbf16, #tpu.memory_space<vmem>>, vector<1x32x128xbf16>
    %538 = vector.shape_cast %537 : vector<1x32x128xbf16> to vector<32x128xbf16>
    %cst_421 = arith.constant dense<0.000000e+00> : vector<8x128xf32>
    %539 = tpu.matmul %474, %538, %cst_421 {dimension_numbers = #tpu.dot_dimension_numbers<[1], [0], [0], [1], [0, 0, 1, 1], [], []>} : vector<8x32xbf16>, vector<32x128xbf16>, vector<8x128xf32> -> vector<8x128xf32>
    %540 = arith.maximumf %536, %531 : vector<8x128xf32>
    %541 = arith.maximumf %540, %521 : vector<8x128xf32>
    %cst_422 = arith.constant 8.000000e-01 : f32
    %542 = vector.broadcast %cst_422 : f32 to vector<8x128xf32>
    %543 = arith.mulf %541, %542 : vector<8x128xf32>
    %cst_423 = arith.constant 2.000000e-01 : f32
    %544 = vector.broadcast %cst_423 : f32 to vector<8x128xf32>
    %545 = arith.mulf %539, %544 : vector<8x128xf32>
    %546 = arith.addf %543, %545 : vector<8x128xf32>
    %c4_424 = arith.constant 4 : index
    %c0_425 = arith.constant 0 : index
    %c0_426 = arith.constant 0 : index
    %547 = vector.load %arg5[%c4_424, %c0_425, %c0_426] : memref<8x8x128xf32, #tpu.memory_space<vmem>>, vector<1x8x128xf32>
    %548 = vector.shape_cast %547 : vector<1x8x128xf32> to vector<8x128xf32>
    %549 = vector.shape_cast %546 : vector<8x128xf32> to vector<1x8x128xf32>
    tpu.vector_store %arg5[%c4_424, %c0_425, %c0_426], %549 {strides = array<i32>} : memref<8x8x128xf32, #tpu.memory_space<vmem>>, vector<1x8x128xf32>,
    %c5_427 = arith.constant 5 : index
    %c0_428 = arith.constant 0 : index
    %c0_429 = arith.constant 0 : index
    %550 = vector.load %arg5[%c5_427, %c0_428, %c0_429] : memref<8x8x128xf32, #tpu.memory_space<vmem>>, vector<1x8x128xf32>
    %551 = vector.shape_cast %550 : vector<1x8x128xf32> to vector<8x128xf32>
    %c5_430 = arith.constant 5 : index
    %c0_431 = arith.constant 0 : index
    %c0_432 = arith.constant 0 : index
    %552 = vector.load %arg3[%c5_430, %c0_431, %c0_432] : memref<8x32x128xbf16, #tpu.memory_space<vmem>>, vector<1x32x128xbf16>
    %553 = vector.shape_cast %552 : vector<1x32x128xbf16> to vector<32x128xbf16>
    %cst_433 = arith.constant dense<0.000000e+00> : vector<8x128xf32>
    %554 = tpu.matmul %474, %553, %cst_433 {dimension_numbers = #tpu.dot_dimension_numbers<[1], [0], [0], [1], [0, 0, 1, 1], [], []>} : vector<8x32xbf16>, vector<32x128xbf16>, vector<8x128xf32> -> vector<8x128xf32>
    %555 = arith.maximumf %551, %546 : vector<8x128xf32>
    %556 = arith.maximumf %555, %536 : vector<8x128xf32>
    %cst_434 = arith.constant 0.833333313 : f32
    %557 = vector.broadcast %cst_434 : f32 to vector<8x128xf32>
    %558 = arith.mulf %556, %557 : vector<8x128xf32>
    %cst_435 = arith.constant 0.166666672 : f32
    %559 = vector.broadcast %cst_435 : f32 to vector<8x128xf32>
    %560 = arith.mulf %554, %559 : vector<8x128xf32>
    %561 = arith.addf %558, %560 : vector<8x128xf32>
    %c5_436 = arith.constant 5 : index
    %c0_437 = arith.constant 0 : index
    %c0_438 = arith.constant 0 : index
    %562 = vector.load %arg5[%c5_436, %c0_437, %c0_438] : memref<8x8x128xf32, #tpu.memory_space<vmem>>, vector<1x8x128xf32>
    %563 = vector.shape_cast %562 : vector<1x8x128xf32> to vector<8x128xf32>
    %564 = vector.shape_cast %561 : vector<8x128xf32> to vector<1x8x128xf32>
    tpu.vector_store %arg5[%c5_436, %c0_437, %c0_438], %564 {strides = array<i32>} : memref<8x8x128xf32, #tpu.memory_space<vmem>>, vector<1x8x128xf32>,
    %c6_439 = arith.constant 6 : index
    %c0_440 = arith.constant 0 : index
    %c0_441 = arith.constant 0 : index
    %565 = vector.load %arg5[%c6_439, %c0_440, %c0_441] : memref<8x8x128xf32, #tpu.memory_space<vmem>>, vector<1x8x128xf32>
    %566 = vector.shape_cast %565 : vector<1x8x128xf32> to vector<8x128xf32>
    %c6_442 = arith.constant 6 : index
    %c0_443 = arith.constant 0 : index
    %c0_444 = arith.constant 0 : index
    %567 = vector.load %arg3[%c6_442, %c0_443, %c0_444] : memref<8x32x128xbf16, #tpu.memory_space<vmem>>, vector<1x32x128xbf16>
    %568 = vector.shape_cast %567 : vector<1x32x128xbf16> to vector<32x128xbf16>
    %cst_445 = arith.constant dense<0.000000e+00> : vector<8x128xf32>
    %569 = tpu.matmul %474, %568, %cst_445 {dimension_numbers = #tpu.dot_dimension_numbers<[1], [0], [0], [1], [0, 0, 1, 1], [], []>} : vector<8x32xbf16>, vector<32x128xbf16>, vector<8x128xf32> -> vector<8x128xf32>
    %570 = arith.maximumf %566, %561 : vector<8x128xf32>
    %571 = arith.maximumf %570, %551 : vector<8x128xf32>
    %cst_446 = arith.constant 0.857142865 : f32
    %572 = vector.broadcast %cst_446 : f32 to vector<8x128xf32>
    %573 = arith.mulf %571, %572 : vector<8x128xf32>
    %cst_447 = arith.constant 0.142857149 : f32
    %574 = vector.broadcast %cst_447 : f32 to vector<8x128xf32>
    %575 = arith.mulf %569, %574 : vector<8x128xf32>
    %576 = arith.addf %573, %575 : vector<8x128xf32>
    %c6_448 = arith.constant 6 : index
    %c0_449 = arith.constant 0 : index
    %c0_450 = arith.constant 0 : index
    %577 = vector.load %arg5[%c6_448, %c0_449, %c0_450] : memref<8x8x128xf32, #tpu.memory_space<vmem>>, vector<1x8x128xf32>
    %578 = vector.shape_cast %577 : vector<1x8x128xf32> to vector<8x128xf32>
    %579 = vector.shape_cast %576 : vector<8x128xf32> to vector<1x8x128xf32>
    tpu.vector_store %arg5[%c6_448, %c0_449, %c0_450], %579 {strides = array<i32>} : memref<8x8x128xf32, #tpu.memory_space<vmem>>, vector<1x8x128xf32>,
    %c7_451 = arith.constant 7 : index
    %c0_452 = arith.constant 0 : index
    %c0_453 = arith.constant 0 : index
    %580 = vector.load %arg5[%c7_451, %c0_452, %c0_453] : memref<8x8x128xf32, #tpu.memory_space<vmem>>, vector<1x8x128xf32>
    %581 = vector.shape_cast %580 : vector<1x8x128xf32> to vector<8x128xf32>
    %c7_454 = arith.constant 7 : index
    %c0_455 = arith.constant 0 : index
    %c0_456 = arith.constant 0 : index
    %582 = vector.load %arg3[%c7_454, %c0_455, %c0_456] : memref<8x32x128xbf16, #tpu.memory_space<vmem>>, vector<1x32x128xbf16>
    %583 = vector.shape_cast %582 : vector<1x32x128xbf16> to vector<32x128xbf16>
    %cst_457 = arith.constant dense<0.000000e+00> : vector<8x128xf32>
    %584 = tpu.matmul %474, %583, %cst_457 {dimension_numbers = #tpu.dot_dimension_numbers<[1], [0], [0], [1], [0, 0, 1, 1], [], []>} : vector<8x32xbf16>, vector<32x128xbf16>, vector<8x128xf32> -> vector<8x128xf32>
    %585 = arith.maximumf %581, %576 : vector<8x128xf32>
    %586 = arith.maximumf %585, %566 : vector<8x128xf32>
    %cst_458 = arith.constant 8.750000e-01 : f32
    %587 = vector.broadcast %cst_458 : f32 to vector<8x128xf32>
    %588 = arith.mulf %586, %587 : vector<8x128xf32>
    %cst_459 = arith.constant 1.250000e-01 : f32
    %589 = vector.broadcast %cst_459 : f32 to vector<8x128xf32>
    %590 = arith.mulf %584, %589 : vector<8x128xf32>
    %591 = arith.addf %588, %590 : vector<8x128xf32>
    %c7_460 = arith.constant 7 : index
    %c0_461 = arith.constant 0 : index
    %c0_462 = arith.constant 0 : index
    %592 = vector.load %arg5[%c7_460, %c0_461, %c0_462] : memref<8x8x128xf32, #tpu.memory_space<vmem>>, vector<1x8x128xf32>
    %593 = vector.shape_cast %592 : vector<1x8x128xf32> to vector<8x128xf32>
    %594 = vector.shape_cast %591 : vector<8x128xf32> to vector<1x8x128xf32>
    tpu.vector_store %arg5[%c7_460, %c0_461, %c0_462], %594 {strides = array<i32>} : memref<8x8x128xf32, #tpu.memory_space<vmem>>, vector<1x8x128xf32>,
    %c5_463 = arith.constant 5 : index
    %c0_464 = arith.constant 0 : index
    %c0_465 = arith.constant 0 : index
    %595 = vector.load %arg2[%c5_463, %c0_464, %c0_465] : memref<8x8x32xbf16, #tpu.memory_space<vmem>>, vector<1x8x32xbf16>
    %596 = vector.shape_cast %595 : vector<1x8x32xbf16> to vector<8x32xbf16>
    %c0_466 = arith.constant 0 : index
    %c0_467 = arith.constant 0 : index
    %c0_468 = arith.constant 0 : index
    %597 = vector.load %arg5[%c0_466, %c0_467, %c0_468] : memref<8x8x128xf32, #tpu.memory_space<vmem>>, vector<1x8x128xf32>
    %598 = vector.shape_cast %597 : vector<1x8x128xf32> to vector<8x128xf32>
    %c0_469 = arith.constant 0 : index
    %c0_470 = arith.constant 0 : index
    %c0_471 = arith.constant 0 : index
    %599 = vector.load %arg3[%c0_469, %c0_470, %c0_471] : memref<8x32x128xbf16, #tpu.memory_space<vmem>>, vector<1x32x128xbf16>
    %600 = vector.shape_cast %599 : vector<1x32x128xbf16> to vector<32x128xbf16>
    %cst_472 = arith.constant dense<0.000000e+00> : vector<8x128xf32>
    %601 = tpu.matmul %596, %600, %cst_472 {dimension_numbers = #tpu.dot_dimension_numbers<[1], [0], [0], [1], [0, 0, 1, 1], [], []>} : vector<8x32xbf16>, vector<32x128xbf16>, vector<8x128xf32> -> vector<8x128xf32>
    %602 = arith.maximumf %598, %0 : vector<8x128xf32>
    %603 = arith.maximumf %602, %0 : vector<8x128xf32>
    %cst_473 = arith.constant 0.833333313 : f32
    %604 = vector.broadcast %cst_473 : f32 to vector<8x128xf32>
    %605 = arith.mulf %603, %604 : vector<8x128xf32>
    %cst_474 = arith.constant 0.166666672 : f32
    %606 = vector.broadcast %cst_474 : f32 to vector<8x128xf32>
    %607 = arith.mulf %601, %606 : vector<8x128xf32>
    %608 = arith.addf %605, %607 : vector<8x128xf32>
    %c0_475 = arith.constant 0 : index
    %c0_476 = arith.constant 0 : index
    %c0_477 = arith.constant 0 : index
    %609 = vector.load %arg5[%c0_475, %c0_476, %c0_477] : memref<8x8x128xf32, #tpu.memory_space<vmem>>, vector<1x8x128xf32>
    %610 = vector.shape_cast %609 : vector<1x8x128xf32> to vector<8x128xf32>
    %611 = vector.shape_cast %608 : vector<8x128xf32> to vector<1x8x128xf32>
    tpu.vector_store %arg5[%c0_475, %c0_476, %c0_477], %611 {strides = array<i32>} : memref<8x8x128xf32, #tpu.memory_space<vmem>>, vector<1x8x128xf32>,
    %c1_478 = arith.constant 1 : index
    %c0_479 = arith.constant 0 : index
    %c0_480 = arith.constant 0 : index
    %612 = vector.load %arg5[%c1_478, %c0_479, %c0_480] : memref<8x8x128xf32, #tpu.memory_space<vmem>>, vector<1x8x128xf32>
    %613 = vector.shape_cast %612 : vector<1x8x128xf32> to vector<8x128xf32>
    %c1_481 = arith.constant 1 : index
    %c0_482 = arith.constant 0 : index
    %c0_483 = arith.constant 0 : index
    %614 = vector.load %arg3[%c1_481, %c0_482, %c0_483] : memref<8x32x128xbf16, #tpu.memory_space<vmem>>, vector<1x32x128xbf16>
    %615 = vector.shape_cast %614 : vector<1x32x128xbf16> to vector<32x128xbf16>
    %cst_484 = arith.constant dense<0.000000e+00> : vector<8x128xf32>
    %616 = tpu.matmul %596, %615, %cst_484 {dimension_numbers = #tpu.dot_dimension_numbers<[1], [0], [0], [1], [0, 0, 1, 1], [], []>} : vector<8x32xbf16>, vector<32x128xbf16>, vector<8x128xf32> -> vector<8x128xf32>
    %617 = arith.maximumf %613, %608 : vector<8x128xf32>
    %618 = arith.maximumf %617, %598 : vector<8x128xf32>
    %cst_485 = arith.constant 0.833333313 : f32
    %619 = vector.broadcast %cst_485 : f32 to vector<8x128xf32>
    %620 = arith.mulf %618, %619 : vector<8x128xf32>
    %cst_486 = arith.constant 0.166666672 : f32
    %621 = vector.broadcast %cst_486 : f32 to vector<8x128xf32>
    %622 = arith.mulf %616, %621 : vector<8x128xf32>
    %623 = arith.addf %620, %622 : vector<8x128xf32>
    %c1_487 = arith.constant 1 : index
    %c0_488 = arith.constant 0 : index
    %c0_489 = arith.constant 0 : index
    %624 = vector.load %arg5[%c1_487, %c0_488, %c0_489] : memref<8x8x128xf32, #tpu.memory_space<vmem>>, vector<1x8x128xf32>
    %625 = vector.shape_cast %624 : vector<1x8x128xf32> to vector<8x128xf32>
    %626 = vector.shape_cast %623 : vector<8x128xf32> to vector<1x8x128xf32>
    tpu.vector_store %arg5[%c1_487, %c0_488, %c0_489], %626 {strides = array<i32>} : memref<8x8x128xf32, #tpu.memory_space<vmem>>, vector<1x8x128xf32>,
    %c2_490 = arith.constant 2 : index
    %c0_491 = arith.constant 0 : index
    %c0_492 = arith.constant 0 : index
    %627 = vector.load %arg5[%c2_490, %c0_491, %c0_492] : memref<8x8x128xf32, #tpu.memory_space<vmem>>, vector<1x8x128xf32>
    %628 = vector.shape_cast %627 : vector<1x8x128xf32> to vector<8x128xf32>
    %c2_493 = arith.constant 2 : index
    %c0_494 = arith.constant 0 : index
    %c0_495 = arith.constant 0 : index
    %629 = vector.load %arg3[%c2_493, %c0_494, %c0_495] : memref<8x32x128xbf16, #tpu.memory_space<vmem>>, vector<1x32x128xbf16>
    %630 = vector.shape_cast %629 : vector<1x32x128xbf16> to vector<32x128xbf16>
    %cst_496 = arith.constant dense<0.000000e+00> : vector<8x128xf32>
    %631 = tpu.matmul %596, %630, %cst_496 {dimension_numbers = #tpu.dot_dimension_numbers<[1], [0], [0], [1], [0, 0, 1, 1], [], []>} : vector<8x32xbf16>, vector<32x128xbf16>, vector<8x128xf32> -> vector<8x128xf32>
    %632 = arith.maximumf %628, %623 : vector<8x128xf32>
    %633 = arith.maximumf %632, %613 : vector<8x128xf32>
    %cst_497 = arith.constant 0.833333313 : f32
    %634 = vector.broadcast %cst_497 : f32 to vector<8x128xf32>
    %635 = arith.mulf %633, %634 : vector<8x128xf32>
    %cst_498 = arith.constant 0.166666672 : f32
    %636 = vector.broadcast %cst_498 : f32 to vector<8x128xf32>
    %637 = arith.mulf %631, %636 : vector<8x128xf32>
    %638 = arith.addf %635, %637 : vector<8x128xf32>
    %c2_499 = arith.constant 2 : index
    %c0_500 = arith.constant 0 : index
    %c0_501 = arith.constant 0 : index
    %639 = vector.load %arg5[%c2_499, %c0_500, %c0_501] : memref<8x8x128xf32, #tpu.memory_space<vmem>>, vector<1x8x128xf32>
    %640 = vector.shape_cast %639 : vector<1x8x128xf32> to vector<8x128xf32>
    %641 = vector.shape_cast %638 : vector<8x128xf32> to vector<1x8x128xf32>
    tpu.vector_store %arg5[%c2_499, %c0_500, %c0_501], %641 {strides = array<i32>} : memref<8x8x128xf32, #tpu.memory_space<vmem>>, vector<1x8x128xf32>,
    %c3_502 = arith.constant 3 : index
    %c0_503 = arith.constant 0 : index
    %c0_504 = arith.constant 0 : index
    %642 = vector.load %arg5[%c3_502, %c0_503, %c0_504] : memref<8x8x128xf32, #tpu.memory_space<vmem>>, vector<1x8x128xf32>
    %643 = vector.shape_cast %642 : vector<1x8x128xf32> to vector<8x128xf32>
    %c3_505 = arith.constant 3 : index
    %c0_506 = arith.constant 0 : index
    %c0_507 = arith.constant 0 : index
    %644 = vector.load %arg3[%c3_505, %c0_506, %c0_507] : memref<8x32x128xbf16, #tpu.memory_space<vmem>>, vector<1x32x128xbf16>
    %645 = vector.shape_cast %644 : vector<1x32x128xbf16> to vector<32x128xbf16>
    %cst_508 = arith.constant dense<0.000000e+00> : vector<8x128xf32>
    %646 = tpu.matmul %596, %645, %cst_508 {dimension_numbers = #tpu.dot_dimension_numbers<[1], [0], [0], [1], [0, 0, 1, 1], [], []>} : vector<8x32xbf16>, vector<32x128xbf16>, vector<8x128xf32> -> vector<8x128xf32>
    %647 = arith.maximumf %643, %638 : vector<8x128xf32>
    %648 = arith.maximumf %647, %628 : vector<8x128xf32>
    %cst_509 = arith.constant 0.833333313 : f32
    %649 = vector.broadcast %cst_509 : f32 to vector<8x128xf32>
    %650 = arith.mulf %648, %649 : vector<8x128xf32>
    %cst_510 = arith.constant 0.166666672 : f32
    %651 = vector.broadcast %cst_510 : f32 to vector<8x128xf32>
    %652 = arith.mulf %646, %651 : vector<8x128xf32>
    %653 = arith.addf %650, %652 : vector<8x128xf32>
    %c3_511 = arith.constant 3 : index
    %c0_512 = arith.constant 0 : index
    %c0_513 = arith.constant 0 : index
    %654 = vector.load %arg5[%c3_511, %c0_512, %c0_513] : memref<8x8x128xf32, #tpu.memory_space<vmem>>, vector<1x8x128xf32>
    %655 = vector.shape_cast %654 : vector<1x8x128xf32> to vector<8x128xf32>
    %656 = vector.shape_cast %653 : vector<8x128xf32> to vector<1x8x128xf32>
    tpu.vector_store %arg5[%c3_511, %c0_512, %c0_513], %656 {strides = array<i32>} : memref<8x8x128xf32, #tpu.memory_space<vmem>>, vector<1x8x128xf32>,
    %c4_514 = arith.constant 4 : index
    %c0_515 = arith.constant 0 : index
    %c0_516 = arith.constant 0 : index
    %657 = vector.load %arg5[%c4_514, %c0_515, %c0_516] : memref<8x8x128xf32, #tpu.memory_space<vmem>>, vector<1x8x128xf32>
    %658 = vector.shape_cast %657 : vector<1x8x128xf32> to vector<8x128xf32>
    %c4_517 = arith.constant 4 : index
    %c0_518 = arith.constant 0 : index
    %c0_519 = arith.constant 0 : index
    %659 = vector.load %arg3[%c4_517, %c0_518, %c0_519] : memref<8x32x128xbf16, #tpu.memory_space<vmem>>, vector<1x32x128xbf16>
    %660 = vector.shape_cast %659 : vector<1x32x128xbf16> to vector<32x128xbf16>
    %cst_520 = arith.constant dense<0.000000e+00> : vector<8x128xf32>
    %661 = tpu.matmul %596, %660, %cst_520 {dimension_numbers = #tpu.dot_dimension_numbers<[1], [0], [0], [1], [0, 0, 1, 1], [], []>} : vector<8x32xbf16>, vector<32x128xbf16>, vector<8x128xf32> -> vector<8x128xf32>
    %662 = arith.maximumf %658, %653 : vector<8x128xf32>
    %663 = arith.maximumf %662, %643 : vector<8x128xf32>
    %cst_521 = arith.constant 0.833333313 : f32
    %664 = vector.broadcast %cst_521 : f32 to vector<8x128xf32>
    %665 = arith.mulf %663, %664 : vector<8x128xf32>
    %cst_522 = arith.constant 0.166666672 : f32
    %666 = vector.broadcast %cst_522 : f32 to vector<8x128xf32>
    %667 = arith.mulf %661, %666 : vector<8x128xf32>
    %668 = arith.addf %665, %667 : vector<8x128xf32>
    %c4_523 = arith.constant 4 : index
    %c0_524 = arith.constant 0 : index
    %c0_525 = arith.constant 0 : index
    %669 = vector.load %arg5[%c4_523, %c0_524, %c0_525] : memref<8x8x128xf32, #tpu.memory_space<vmem>>, vector<1x8x128xf32>
    %670 = vector.shape_cast %669 : vector<1x8x128xf32> to vector<8x128xf32>
    %671 = vector.shape_cast %668 : vector<8x128xf32> to vector<1x8x128xf32>
    tpu.vector_store %arg5[%c4_523, %c0_524, %c0_525], %671 {strides = array<i32>} : memref<8x8x128xf32, #tpu.memory_space<vmem>>, vector<1x8x128xf32>,
    %c5_526 = arith.constant 5 : index
    %c0_527 = arith.constant 0 : index
    %c0_528 = arith.constant 0 : index
    %672 = vector.load %arg5[%c5_526, %c0_527, %c0_528] : memref<8x8x128xf32, #tpu.memory_space<vmem>>, vector<1x8x128xf32>
    %673 = vector.shape_cast %672 : vector<1x8x128xf32> to vector<8x128xf32>
    %c5_529 = arith.constant 5 : index
    %c0_530 = arith.constant 0 : index
    %c0_531 = arith.constant 0 : index
    %674 = vector.load %arg3[%c5_529, %c0_530, %c0_531] : memref<8x32x128xbf16, #tpu.memory_space<vmem>>, vector<1x32x128xbf16>
    %675 = vector.shape_cast %674 : vector<1x32x128xbf16> to vector<32x128xbf16>
    %cst_532 = arith.constant dense<0.000000e+00> : vector<8x128xf32>
    %676 = tpu.matmul %596, %675, %cst_532 {dimension_numbers = #tpu.dot_dimension_numbers<[1], [0], [0], [1], [0, 0, 1, 1], [], []>} : vector<8x32xbf16>, vector<32x128xbf16>, vector<8x128xf32> -> vector<8x128xf32>
    %677 = arith.maximumf %673, %668 : vector<8x128xf32>
    %678 = arith.maximumf %677, %658 : vector<8x128xf32>
    %cst_533 = arith.constant 0.833333313 : f32
    %679 = vector.broadcast %cst_533 : f32 to vector<8x128xf32>
    %680 = arith.mulf %678, %679 : vector<8x128xf32>
    %cst_534 = arith.constant 0.166666672 : f32
    %681 = vector.broadcast %cst_534 : f32 to vector<8x128xf32>
    %682 = arith.mulf %676, %681 : vector<8x128xf32>
    %683 = arith.addf %680, %682 : vector<8x128xf32>
    %c5_535 = arith.constant 5 : index
    %c0_536 = arith.constant 0 : index
    %c0_537 = arith.constant 0 : index
    %684 = vector.load %arg5[%c5_535, %c0_536, %c0_537] : memref<8x8x128xf32, #tpu.memory_space<vmem>>, vector<1x8x128xf32>
    %685 = vector.shape_cast %684 : vector<1x8x128xf32> to vector<8x128xf32>
    %686 = vector.shape_cast %683 : vector<8x128xf32> to vector<1x8x128xf32>
    tpu.vector_store %arg5[%c5_535, %c0_536, %c0_537], %686 {strides = array<i32>} : memref<8x8x128xf32, #tpu.memory_space<vmem>>, vector<1x8x128xf32>,
    %c6_538 = arith.constant 6 : index
    %c0_539 = arith.constant 0 : index
    %c0_540 = arith.constant 0 : index
    %687 = vector.load %arg5[%c6_538, %c0_539, %c0_540] : memref<8x8x128xf32, #tpu.memory_space<vmem>>, vector<1x8x128xf32>
    %688 = vector.shape_cast %687 : vector<1x8x128xf32> to vector<8x128xf32>
    %c6_541 = arith.constant 6 : index
    %c0_542 = arith.constant 0 : index
    %c0_543 = arith.constant 0 : index
    %689 = vector.load %arg3[%c6_541, %c0_542, %c0_543] : memref<8x32x128xbf16, #tpu.memory_space<vmem>>, vector<1x32x128xbf16>
    %690 = vector.shape_cast %689 : vector<1x32x128xbf16> to vector<32x128xbf16>
    %cst_544 = arith.constant dense<0.000000e+00> : vector<8x128xf32>
    %691 = tpu.matmul %596, %690, %cst_544 {dimension_numbers = #tpu.dot_dimension_numbers<[1], [0], [0], [1], [0, 0, 1, 1], [], []>} : vector<8x32xbf16>, vector<32x128xbf16>, vector<8x128xf32> -> vector<8x128xf32>
    %692 = arith.maximumf %688, %683 : vector<8x128xf32>
    %693 = arith.maximumf %692, %673 : vector<8x128xf32>
    %cst_545 = arith.constant 0.857142865 : f32
    %694 = vector.broadcast %cst_545 : f32 to vector<8x128xf32>
    %695 = arith.mulf %693, %694 : vector<8x128xf32>
    %cst_546 = arith.constant 0.142857149 : f32
    %696 = vector.broadcast %cst_546 : f32 to vector<8x128xf32>
    %697 = arith.mulf %691, %696 : vector<8x128xf32>
    %698 = arith.addf %695, %697 : vector<8x128xf32>
    %c6_547 = arith.constant 6 : index
    %c0_548 = arith.constant 0 : index
    %c0_549 = arith.constant 0 : index
    %699 = vector.load %arg5[%c6_547, %c0_548, %c0_549] : memref<8x8x128xf32, #tpu.memory_space<vmem>>, vector<1x8x128xf32>
    %700 = vector.shape_cast %699 : vector<1x8x128xf32> to vector<8x128xf32>
    %701 = vector.shape_cast %698 : vector<8x128xf32> to vector<1x8x128xf32>
    tpu.vector_store %arg5[%c6_547, %c0_548, %c0_549], %701 {strides = array<i32>} : memref<8x8x128xf32, #tpu.memory_space<vmem>>, vector<1x8x128xf32>,
    %c7_550 = arith.constant 7 : index
    %c0_551 = arith.constant 0 : index
    %c0_552 = arith.constant 0 : index
    %702 = vector.load %arg5[%c7_550, %c0_551, %c0_552] : memref<8x8x128xf32, #tpu.memory_space<vmem>>, vector<1x8x128xf32>
    %703 = vector.shape_cast %702 : vector<1x8x128xf32> to vector<8x128xf32>
    %c7_553 = arith.constant 7 : index
    %c0_554 = arith.constant 0 : index
    %c0_555 = arith.constant 0 : index
    %704 = vector.load %arg3[%c7_553, %c0_554, %c0_555] : memref<8x32x128xbf16, #tpu.memory_space<vmem>>, vector<1x32x128xbf16>
    %705 = vector.shape_cast %704 : vector<1x32x128xbf16> to vector<32x128xbf16>
    %cst_556 = arith.constant dense<0.000000e+00> : vector<8x128xf32>
    %706 = tpu.matmul %596, %705, %cst_556 {dimension_numbers = #tpu.dot_dimension_numbers<[1], [0], [0], [1], [0, 0, 1, 1], [], []>} : vector<8x32xbf16>, vector<32x128xbf16>, vector<8x128xf32> -> vector<8x128xf32>
    %707 = arith.maximumf %703, %698 : vector<8x128xf32>
    %708 = arith.maximumf %707, %688 : vector<8x128xf32>
    %cst_557 = arith.constant 8.750000e-01 : f32
    %709 = vector.broadcast %cst_557 : f32 to vector<8x128xf32>
    %710 = arith.mulf %708, %709 : vector<8x128xf32>
    %cst_558 = arith.constant 1.250000e-01 : f32
    %711 = vector.broadcast %cst_558 : f32 to vector<8x128xf32>
    %712 = arith.mulf %706, %711 : vector<8x128xf32>
    %713 = arith.addf %710, %712 : vector<8x128xf32>
    %c7_559 = arith.constant 7 : index
    %c0_560 = arith.constant 0 : index
    %c0_561 = arith.constant 0 : index
    %714 = vector.load %arg5[%c7_559, %c0_560, %c0_561] : memref<8x8x128xf32, #tpu.memory_space<vmem>>, vector<1x8x128xf32>
    %715 = vector.shape_cast %714 : vector<1x8x128xf32> to vector<8x128xf32>
    %716 = vector.shape_cast %713 : vector<8x128xf32> to vector<1x8x128xf32>
    tpu.vector_store %arg5[%c7_559, %c0_560, %c0_561], %716 {strides = array<i32>} : memref<8x8x128xf32, #tpu.memory_space<vmem>>, vector<1x8x128xf32>,
    %c6_562 = arith.constant 6 : index
    %c0_563 = arith.constant 0 : index
    %c0_564 = arith.constant 0 : index
    %717 = vector.load %arg2[%c6_562, %c0_563, %c0_564] : memref<8x8x32xbf16, #tpu.memory_space<vmem>>, vector<1x8x32xbf16>
    %718 = vector.shape_cast %717 : vector<1x8x32xbf16> to vector<8x32xbf16>
    %c0_565 = arith.constant 0 : index
    %c0_566 = arith.constant 0 : index
    %c0_567 = arith.constant 0 : index
    %719 = vector.load %arg5[%c0_565, %c0_566, %c0_567] : memref<8x8x128xf32, #tpu.memory_space<vmem>>, vector<1x8x128xf32>
    %720 = vector.shape_cast %719 : vector<1x8x128xf32> to vector<8x128xf32>
    %c0_568 = arith.constant 0 : index
    %c0_569 = arith.constant 0 : index
    %c0_570 = arith.constant 0 : index
    %721 = vector.load %arg3[%c0_568, %c0_569, %c0_570] : memref<8x32x128xbf16, #tpu.memory_space<vmem>>, vector<1x32x128xbf16>
    %722 = vector.shape_cast %721 : vector<1x32x128xbf16> to vector<32x128xbf16>
    %cst_571 = arith.constant dense<0.000000e+00> : vector<8x128xf32>
    %723 = tpu.matmul %718, %722, %cst_571 {dimension_numbers = #tpu.dot_dimension_numbers<[1], [0], [0], [1], [0, 0, 1, 1], [], []>} : vector<8x32xbf16>, vector<32x128xbf16>, vector<8x128xf32> -> vector<8x128xf32>
    %724 = arith.maximumf %720, %0 : vector<8x128xf32>
    %725 = arith.maximumf %724, %0 : vector<8x128xf32>
    %cst_572 = arith.constant 0.857142865 : f32
    %726 = vector.broadcast %cst_572 : f32 to vector<8x128xf32>
    %727 = arith.mulf %725, %726 : vector<8x128xf32>
    %cst_573 = arith.constant 0.142857149 : f32
    %728 = vector.broadcast %cst_573 : f32 to vector<8x128xf32>
    %729 = arith.mulf %723, %728 : vector<8x128xf32>
    %730 = arith.addf %727, %729 : vector<8x128xf32>
    %c0_574 = arith.constant 0 : index
    %c0_575 = arith.constant 0 : index
    %c0_576 = arith.constant 0 : index
    %731 = vector.load %arg5[%c0_574, %c0_575, %c0_576] : memref<8x8x128xf32, #tpu.memory_space<vmem>>, vector<1x8x128xf32>
    %732 = vector.shape_cast %731 : vector<1x8x128xf32> to vector<8x128xf32>
    %733 = vector.shape_cast %730 : vector<8x128xf32> to vector<1x8x128xf32>
    tpu.vector_store %arg5[%c0_574, %c0_575, %c0_576], %733 {strides = array<i32>} : memref<8x8x128xf32, #tpu.memory_space<vmem>>, vector<1x8x128xf32>,
    %c1_577 = arith.constant 1 : index
    %c0_578 = arith.constant 0 : index
    %c0_579 = arith.constant 0 : index
    %734 = vector.load %arg5[%c1_577, %c0_578, %c0_579] : memref<8x8x128xf32, #tpu.memory_space<vmem>>, vector<1x8x128xf32>
    %735 = vector.shape_cast %734 : vector<1x8x128xf32> to vector<8x128xf32>
    %c1_580 = arith.constant 1 : index
    %c0_581 = arith.constant 0 : index
    %c0_582 = arith.constant 0 : index
    %736 = vector.load %arg3[%c1_580, %c0_581, %c0_582] : memref<8x32x128xbf16, #tpu.memory_space<vmem>>, vector<1x32x128xbf16>
    %737 = vector.shape_cast %736 : vector<1x32x128xbf16> to vector<32x128xbf16>
    %cst_583 = arith.constant dense<0.000000e+00> : vector<8x128xf32>
    %738 = tpu.matmul %718, %737, %cst_583 {dimension_numbers = #tpu.dot_dimension_numbers<[1], [0], [0], [1], [0, 0, 1, 1], [], []>} : vector<8x32xbf16>, vector<32x128xbf16>, vector<8x128xf32> -> vector<8x128xf32>
    %739 = arith.maximumf %735, %730 : vector<8x128xf32>
    %740 = arith.maximumf %739, %720 : vector<8x128xf32>
    %cst_584 = arith.constant 0.857142865 : f32
    %741 = vector.broadcast %cst_584 : f32 to vector<8x128xf32>
    %742 = arith.mulf %740, %741 : vector<8x128xf32>
    %cst_585 = arith.constant 0.142857149 : f32
    %743 = vector.broadcast %cst_585 : f32 to vector<8x128xf32>
    %744 = arith.mulf %738, %743 : vector<8x128xf32>
    %745 = arith.addf %742, %744 : vector<8x128xf32>
    %c1_586 = arith.constant 1 : index
    %c0_587 = arith.constant 0 : index
    %c0_588 = arith.constant 0 : index
    %746 = vector.load %arg5[%c1_586, %c0_587, %c0_588] : memref<8x8x128xf32, #tpu.memory_space<vmem>>, vector<1x8x128xf32>
    %747 = vector.shape_cast %746 : vector<1x8x128xf32> to vector<8x128xf32>
    %748 = vector.shape_cast %745 : vector<8x128xf32> to vector<1x8x128xf32>
    tpu.vector_store %arg5[%c1_586, %c0_587, %c0_588], %748 {strides = array<i32>} : memref<8x8x128xf32, #tpu.memory_space<vmem>>, vector<1x8x128xf32>,
    %c2_589 = arith.constant 2 : index
    %c0_590 = arith.constant 0 : index
    %c0_591 = arith.constant 0 : index
    %749 = vector.load %arg5[%c2_589, %c0_590, %c0_591] : memref<8x8x128xf32, #tpu.memory_space<vmem>>, vector<1x8x128xf32>
    %750 = vector.shape_cast %749 : vector<1x8x128xf32> to vector<8x128xf32>
    %c2_592 = arith.constant 2 : index
    %c0_593 = arith.constant 0 : index
    %c0_594 = arith.constant 0 : index
    %751 = vector.load %arg3[%c2_592, %c0_593, %c0_594] : memref<8x32x128xbf16, #tpu.memory_space<vmem>>, vector<1x32x128xbf16>
    %752 = vector.shape_cast %751 : vector<1x32x128xbf16> to vector<32x128xbf16>
    %cst_595 = arith.constant dense<0.000000e+00> : vector<8x128xf32>
    %753 = tpu.matmul %718, %752, %cst_595 {dimension_numbers = #tpu.dot_dimension_numbers<[1], [0], [0], [1], [0, 0, 1, 1], [], []>} : vector<8x32xbf16>, vector<32x128xbf16>, vector<8x128xf32> -> vector<8x128xf32>
    %754 = arith.maximumf %750, %745 : vector<8x128xf32>
    %755 = arith.maximumf %754, %735 : vector<8x128xf32>
    %cst_596 = arith.constant 0.857142865 : f32
    %756 = vector.broadcast %cst_596 : f32 to vector<8x128xf32>
    %757 = arith.mulf %755, %756 : vector<8x128xf32>
    %cst_597 = arith.constant 0.142857149 : f32
    %758 = vector.broadcast %cst_597 : f32 to vector<8x128xf32>
    %759 = arith.mulf %753, %758 : vector<8x128xf32>
    %760 = arith.addf %757, %759 : vector<8x128xf32>
    %c2_598 = arith.constant 2 : index
    %c0_599 = arith.constant 0 : index
    %c0_600 = arith.constant 0 : index
    %761 = vector.load %arg5[%c2_598, %c0_599, %c0_600] : memref<8x8x128xf32, #tpu.memory_space<vmem>>, vector<1x8x128xf32>
    %762 = vector.shape_cast %761 : vector<1x8x128xf32> to vector<8x128xf32>
    %763 = vector.shape_cast %760 : vector<8x128xf32> to vector<1x8x128xf32>
    tpu.vector_store %arg5[%c2_598, %c0_599, %c0_600], %763 {strides = array<i32>} : memref<8x8x128xf32, #tpu.memory_space<vmem>>, vector<1x8x128xf32>,
    %c3_601 = arith.constant 3 : index
    %c0_602 = arith.constant 0 : index
    %c0_603 = arith.constant 0 : index
    %764 = vector.load %arg5[%c3_601, %c0_602, %c0_603] : memref<8x8x128xf32, #tpu.memory_space<vmem>>, vector<1x8x128xf32>
    %765 = vector.shape_cast %764 : vector<1x8x128xf32> to vector<8x128xf32>
    %c3_604 = arith.constant 3 : index
    %c0_605 = arith.constant 0 : index
    %c0_606 = arith.constant 0 : index
    %766 = vector.load %arg3[%c3_604, %c0_605, %c0_606] : memref<8x32x128xbf16, #tpu.memory_space<vmem>>, vector<1x32x128xbf16>
    %767 = vector.shape_cast %766 : vector<1x32x128xbf16> to vector<32x128xbf16>
    %cst_607 = arith.constant dense<0.000000e+00> : vector<8x128xf32>
    %768 = tpu.matmul %718, %767, %cst_607 {dimension_numbers = #tpu.dot_dimension_numbers<[1], [0], [0], [1], [0, 0, 1, 1], [], []>} : vector<8x32xbf16>, vector<32x128xbf16>, vector<8x128xf32> -> vector<8x128xf32>
    %769 = arith.maximumf %765, %760 : vector<8x128xf32>
    %770 = arith.maximumf %769, %750 : vector<8x128xf32>
    %cst_608 = arith.constant 0.857142865 : f32
    %771 = vector.broadcast %cst_608 : f32 to vector<8x128xf32>
    %772 = arith.mulf %770, %771 : vector<8x128xf32>
    %cst_609 = arith.constant 0.142857149 : f32
    %773 = vector.broadcast %cst_609 : f32 to vector<8x128xf32>
    %774 = arith.mulf %768, %773 : vector<8x128xf32>
    %775 = arith.addf %772, %774 : vector<8x128xf32>
    %c3_610 = arith.constant 3 : index
    %c0_611 = arith.constant 0 : index
    %c0_612 = arith.constant 0 : index
    %776 = vector.load %arg5[%c3_610, %c0_611, %c0_612] : memref<8x8x128xf32, #tpu.memory_space<vmem>>, vector<1x8x128xf32>
    %777 = vector.shape_cast %776 : vector<1x8x128xf32> to vector<8x128xf32>
    %778 = vector.shape_cast %775 : vector<8x128xf32> to vector<1x8x128xf32>
    tpu.vector_store %arg5[%c3_610, %c0_611, %c0_612], %778 {strides = array<i32>} : memref<8x8x128xf32, #tpu.memory_space<vmem>>, vector<1x8x128xf32>,
    %c4_613 = arith.constant 4 : index
    %c0_614 = arith.constant 0 : index
    %c0_615 = arith.constant 0 : index
    %779 = vector.load %arg5[%c4_613, %c0_614, %c0_615] : memref<8x8x128xf32, #tpu.memory_space<vmem>>, vector<1x8x128xf32>
    %780 = vector.shape_cast %779 : vector<1x8x128xf32> to vector<8x128xf32>
    %c4_616 = arith.constant 4 : index
    %c0_617 = arith.constant 0 : index
    %c0_618 = arith.constant 0 : index
    %781 = vector.load %arg3[%c4_616, %c0_617, %c0_618] : memref<8x32x128xbf16, #tpu.memory_space<vmem>>, vector<1x32x128xbf16>
    %782 = vector.shape_cast %781 : vector<1x32x128xbf16> to vector<32x128xbf16>
    %cst_619 = arith.constant dense<0.000000e+00> : vector<8x128xf32>
    %783 = tpu.matmul %718, %782, %cst_619 {dimension_numbers = #tpu.dot_dimension_numbers<[1], [0], [0], [1], [0, 0, 1, 1], [], []>} : vector<8x32xbf16>, vector<32x128xbf16>, vector<8x128xf32> -> vector<8x128xf32>
    %784 = arith.maximumf %780, %775 : vector<8x128xf32>
    %785 = arith.maximumf %784, %765 : vector<8x128xf32>
    %cst_620 = arith.constant 0.857142865 : f32
    %786 = vector.broadcast %cst_620 : f32 to vector<8x128xf32>
    %787 = arith.mulf %785, %786 : vector<8x128xf32>
    %cst_621 = arith.constant 0.142857149 : f32
    %788 = vector.broadcast %cst_621 : f32 to vector<8x128xf32>
    %789 = arith.mulf %783, %788 : vector<8x128xf32>
    %790 = arith.addf %787, %789 : vector<8x128xf32>
    %c4_622 = arith.constant 4 : index
    %c0_623 = arith.constant 0 : index
    %c0_624 = arith.constant 0 : index
    %791 = vector.load %arg5[%c4_622, %c0_623, %c0_624] : memref<8x8x128xf32, #tpu.memory_space<vmem>>, vector<1x8x128xf32>
    %792 = vector.shape_cast %791 : vector<1x8x128xf32> to vector<8x128xf32>
    %793 = vector.shape_cast %790 : vector<8x128xf32> to vector<1x8x128xf32>
    tpu.vector_store %arg5[%c4_622, %c0_623, %c0_624], %793 {strides = array<i32>} : memref<8x8x128xf32, #tpu.memory_space<vmem>>, vector<1x8x128xf32>,
    %c5_625 = arith.constant 5 : index
    %c0_626 = arith.constant 0 : index
    %c0_627 = arith.constant 0 : index
    %794 = vector.load %arg5[%c5_625, %c0_626, %c0_627] : memref<8x8x128xf32, #tpu.memory_space<vmem>>, vector<1x8x128xf32>
    %795 = vector.shape_cast %794 : vector<1x8x128xf32> to vector<8x128xf32>
    %c5_628 = arith.constant 5 : index
    %c0_629 = arith.constant 0 : index
    %c0_630 = arith.constant 0 : index
    %796 = vector.load %arg3[%c5_628, %c0_629, %c0_630] : memref<8x32x128xbf16, #tpu.memory_space<vmem>>, vector<1x32x128xbf16>
    %797 = vector.shape_cast %796 : vector<1x32x128xbf16> to vector<32x128xbf16>
    %cst_631 = arith.constant dense<0.000000e+00> : vector<8x128xf32>
    %798 = tpu.matmul %718, %797, %cst_631 {dimension_numbers = #tpu.dot_dimension_numbers<[1], [0], [0], [1], [0, 0, 1, 1], [], []>} : vector<8x32xbf16>, vector<32x128xbf16>, vector<8x128xf32> -> vector<8x128xf32>
    %799 = arith.maximumf %795, %790 : vector<8x128xf32>
    %800 = arith.maximumf %799, %780 : vector<8x128xf32>
    %cst_632 = arith.constant 0.857142865 : f32
    %801 = vector.broadcast %cst_632 : f32 to vector<8x128xf32>
    %802 = arith.mulf %800, %801 : vector<8x128xf32>
    %cst_633 = arith.constant 0.142857149 : f32
    %803 = vector.broadcast %cst_633 : f32 to vector<8x128xf32>
    %804 = arith.mulf %798, %803 : vector<8x128xf32>
    %805 = arith.addf %802, %804 : vector<8x128xf32>
    %c5_634 = arith.constant 5 : index
    %c0_635 = arith.constant 0 : index
    %c0_636 = arith.constant 0 : index
    %806 = vector.load %arg5[%c5_634, %c0_635, %c0_636] : memref<8x8x128xf32, #tpu.memory_space<vmem>>, vector<1x8x128xf32>
    %807 = vector.shape_cast %806 : vector<1x8x128xf32> to vector<8x128xf32>
    %808 = vector.shape_cast %805 : vector<8x128xf32> to vector<1x8x128xf32>
    tpu.vector_store %arg5[%c5_634, %c0_635, %c0_636], %808 {strides = array<i32>} : memref<8x8x128xf32, #tpu.memory_space<vmem>>, vector<1x8x128xf32>,
    %c6_637 = arith.constant 6 : index
    %c0_638 = arith.constant 0 : index
    %c0_639 = arith.constant 0 : index
    %809 = vector.load %arg5[%c6_637, %c0_638, %c0_639] : memref<8x8x128xf32, #tpu.memory_space<vmem>>, vector<1x8x128xf32>
    %810 = vector.shape_cast %809 : vector<1x8x128xf32> to vector<8x128xf32>
    %c6_640 = arith.constant 6 : index
    %c0_641 = arith.constant 0 : index
    %c0_642 = arith.constant 0 : index
    %811 = vector.load %arg3[%c6_640, %c0_641, %c0_642] : memref<8x32x128xbf16, #tpu.memory_space<vmem>>, vector<1x32x128xbf16>
    %812 = vector.shape_cast %811 : vector<1x32x128xbf16> to vector<32x128xbf16>
    %cst_643 = arith.constant dense<0.000000e+00> : vector<8x128xf32>
    %813 = tpu.matmul %718, %812, %cst_643 {dimension_numbers = #tpu.dot_dimension_numbers<[1], [0], [0], [1], [0, 0, 1, 1], [], []>} : vector<8x32xbf16>, vector<32x128xbf16>, vector<8x128xf32> -> vector<8x128xf32>
    %814 = arith.maximumf %810, %805 : vector<8x128xf32>
    %815 = arith.maximumf %814, %795 : vector<8x128xf32>
    %cst_644 = arith.constant 0.857142865 : f32
    %816 = vector.broadcast %cst_644 : f32 to vector<8x128xf32>
    %817 = arith.mulf %815, %816 : vector<8x128xf32>
    %cst_645 = arith.constant 0.142857149 : f32
    %818 = vector.broadcast %cst_645 : f32 to vector<8x128xf32>
    %819 = arith.mulf %813, %818 : vector<8x128xf32>
    %820 = arith.addf %817, %819 : vector<8x128xf32>
    %c6_646 = arith.constant 6 : index
    %c0_647 = arith.constant 0 : index
    %c0_648 = arith.constant 0 : index
    %821 = vector.load %arg5[%c6_646, %c0_647, %c0_648] : memref<8x8x128xf32, #tpu.memory_space<vmem>>, vector<1x8x128xf32>
    %822 = vector.shape_cast %821 : vector<1x8x128xf32> to vector<8x128xf32>
    %823 = vector.shape_cast %820 : vector<8x128xf32> to vector<1x8x128xf32>
    tpu.vector_store %arg5[%c6_646, %c0_647, %c0_648], %823 {strides = array<i32>} : memref<8x8x128xf32, #tpu.memory_space<vmem>>, vector<1x8x128xf32>,
    %c7_649 = arith.constant 7 : index
    %c0_650 = arith.constant 0 : index
    %c0_651 = arith.constant 0 : index
    %824 = vector.load %arg5[%c7_649, %c0_650, %c0_651] : memref<8x8x128xf32, #tpu.memory_space<vmem>>, vector<1x8x128xf32>
    %825 = vector.shape_cast %824 : vector<1x8x128xf32> to vector<8x128xf32>
    %c7_652 = arith.constant 7 : index
    %c0_653 = arith.constant 0 : index
    %c0_654 = arith.constant 0 : index
    %826 = vector.load %arg3[%c7_652, %c0_653, %c0_654] : memref<8x32x128xbf16, #tpu.memory_space<vmem>>, vector<1x32x128xbf16>
    %827 = vector.shape_cast %826 : vector<1x32x128xbf16> to vector<32x128xbf16>
    %cst_655 = arith.constant dense<0.000000e+00> : vector<8x128xf32>
    %828 = tpu.matmul %718, %827, %cst_655 {dimension_numbers = #tpu.dot_dimension_numbers<[1], [0], [0], [1], [0, 0, 1, 1], [], []>} : vector<8x32xbf16>, vector<32x128xbf16>, vector<8x128xf32> -> vector<8x128xf32>
    %829 = arith.maximumf %825, %820 : vector<8x128xf32>
    %830 = arith.maximumf %829, %810 : vector<8x128xf32>
    %cst_656 = arith.constant 8.750000e-01 : f32
    %831 = vector.broadcast %cst_656 : f32 to vector<8x128xf32>
    %832 = arith.mulf %830, %831 : vector<8x128xf32>
    %cst_657 = arith.constant 1.250000e-01 : f32
    %833 = vector.broadcast %cst_657 : f32 to vector<8x128xf32>
    %834 = arith.mulf %828, %833 : vector<8x128xf32>
    %835 = arith.addf %832, %834 : vector<8x128xf32>
    %c7_658 = arith.constant 7 : index
    %c0_659 = arith.constant 0 : index
    %c0_660 = arith.constant 0 : index
    %836 = vector.load %arg5[%c7_658, %c0_659, %c0_660] : memref<8x8x128xf32, #tpu.memory_space<vmem>>, vector<1x8x128xf32>
    %837 = vector.shape_cast %836 : vector<1x8x128xf32> to vector<8x128xf32>
    %838 = vector.shape_cast %835 : vector<8x128xf32> to vector<1x8x128xf32>
    tpu.vector_store %arg5[%c7_658, %c0_659, %c0_660], %838 {strides = array<i32>} : memref<8x8x128xf32, #tpu.memory_space<vmem>>, vector<1x8x128xf32>,
    %c7_661 = arith.constant 7 : index
    %c0_662 = arith.constant 0 : index
    %c0_663 = arith.constant 0 : index
    %839 = vector.load %arg2[%c7_661, %c0_662, %c0_663] : memref<8x8x32xbf16, #tpu.memory_space<vmem>>, vector<1x8x32xbf16>
    %840 = vector.shape_cast %839 : vector<1x8x32xbf16> to vector<8x32xbf16>
    %c0_664 = arith.constant 0 : index
    %c0_665 = arith.constant 0 : index
    %c0_666 = arith.constant 0 : index
    %841 = vector.load %arg5[%c0_664, %c0_665, %c0_666] : memref<8x8x128xf32, #tpu.memory_space<vmem>>, vector<1x8x128xf32>
    %842 = vector.shape_cast %841 : vector<1x8x128xf32> to vector<8x128xf32>
    %c0_667 = arith.constant 0 : index
    %c0_668 = arith.constant 0 : index
    %c0_669 = arith.constant 0 : index
    %843 = vector.load %arg3[%c0_667, %c0_668, %c0_669] : memref<8x32x128xbf16, #tpu.memory_space<vmem>>, vector<1x32x128xbf16>
    %844 = vector.shape_cast %843 : vector<1x32x128xbf16> to vector<32x128xbf16>
    %cst_670 = arith.constant dense<0.000000e+00> : vector<8x128xf32>
    %845 = tpu.matmul %840, %844, %cst_670 {dimension_numbers = #tpu.dot_dimension_numbers<[1], [0], [0], [1], [0, 0, 1, 1], [], []>} : vector<8x32xbf16>, vector<32x128xbf16>, vector<8x128xf32> -> vector<8x128xf32>
    %846 = arith.maximumf %842, %0 : vector<8x128xf32>
    %847 = arith.maximumf %846, %0 : vector<8x128xf32>
    %cst_671 = arith.constant 8.750000e-01 : f32
    %848 = vector.broadcast %cst_671 : f32 to vector<8x128xf32>
    %849 = arith.mulf %847, %848 : vector<8x128xf32>
    %cst_672 = arith.constant 1.250000e-01 : f32
    %850 = vector.broadcast %cst_672 : f32 to vector<8x128xf32>
    %851 = arith.mulf %845, %850 : vector<8x128xf32>
    %852 = arith.addf %849, %851 : vector<8x128xf32>
    %c0_673 = arith.constant 0 : index
    %c0_674 = arith.constant 0 : index
    %c0_675 = arith.constant 0 : index
    %853 = vector.load %arg5[%c0_673, %c0_674, %c0_675] : memref<8x8x128xf32, #tpu.memory_space<vmem>>, vector<1x8x128xf32>
    %854 = vector.shape_cast %853 : vector<1x8x128xf32> to vector<8x128xf32>
    %855 = vector.shape_cast %852 : vector<8x128xf32> to vector<1x8x128xf32>
    tpu.vector_store %arg5[%c0_673, %c0_674, %c0_675], %855 {strides = array<i32>} : memref<8x8x128xf32, #tpu.memory_space<vmem>>, vector<1x8x128xf32>,
    %c1_676 = arith.constant 1 : index
    %c0_677 = arith.constant 0 : index
    %c0_678 = arith.constant 0 : index
    %856 = vector.load %arg5[%c1_676, %c0_677, %c0_678] : memref<8x8x128xf32, #tpu.memory_space<vmem>>, vector<1x8x128xf32>
    %857 = vector.shape_cast %856 : vector<1x8x128xf32> to vector<8x128xf32>
    %c1_679 = arith.constant 1 : index
    %c0_680 = arith.constant 0 : index
    %c0_681 = arith.constant 0 : index
    %858 = vector.load %arg3[%c1_679, %c0_680, %c0_681] : memref<8x32x128xbf16, #tpu.memory_space<vmem>>, vector<1x32x128xbf16>
    %859 = vector.shape_cast %858 : vector<1x32x128xbf16> to vector<32x128xbf16>
    %cst_682 = arith.constant dense<0.000000e+00> : vector<8x128xf32>
    %860 = tpu.matmul %840, %859, %cst_682 {dimension_numbers = #tpu.dot_dimension_numbers<[1], [0], [0], [1], [0, 0, 1, 1], [], []>} : vector<8x32xbf16>, vector<32x128xbf16>, vector<8x128xf32> -> vector<8x128xf32>
    %861 = arith.maximumf %857, %852 : vector<8x128xf32>
    %862 = arith.maximumf %861, %842 : vector<8x128xf32>
    %cst_683 = arith.constant 8.750000e-01 : f32
    %863 = vector.broadcast %cst_683 : f32 to vector<8x128xf32>
    %864 = arith.mulf %862, %863 : vector<8x128xf32>
    %cst_684 = arith.constant 1.250000e-01 : f32
    %865 = vector.broadcast %cst_684 : f32 to vector<8x128xf32>
    %866 = arith.mulf %860, %865 : vector<8x128xf32>
    %867 = arith.addf %864, %866 : vector<8x128xf32>
    %c1_685 = arith.constant 1 : index
    %c0_686 = arith.constant 0 : index
    %c0_687 = arith.constant 0 : index
    %868 = vector.load %arg5[%c1_685, %c0_686, %c0_687] : memref<8x8x128xf32, #tpu.memory_space<vmem>>, vector<1x8x128xf32>
    %869 = vector.shape_cast %868 : vector<1x8x128xf32> to vector<8x128xf32>
    %870 = vector.shape_cast %867 : vector<8x128xf32> to vector<1x8x128xf32>
    tpu.vector_store %arg5[%c1_685, %c0_686, %c0_687], %870 {strides = array<i32>} : memref<8x8x128xf32, #tpu.memory_space<vmem>>, vector<1x8x128xf32>,
    %c2_688 = arith.constant 2 : index
    %c0_689 = arith.constant 0 : index
    %c0_690 = arith.constant 0 : index
    %871 = vector.load %arg5[%c2_688, %c0_689, %c0_690] : memref<8x8x128xf32, #tpu.memory_space<vmem>>, vector<1x8x128xf32>
    %872 = vector.shape_cast %871 : vector<1x8x128xf32> to vector<8x128xf32>
    %c2_691 = arith.constant 2 : index
    %c0_692 = arith.constant 0 : index
    %c0_693 = arith.constant 0 : index
    %873 = vector.load %arg3[%c2_691, %c0_692, %c0_693] : memref<8x32x128xbf16, #tpu.memory_space<vmem>>, vector<1x32x128xbf16>
    %874 = vector.shape_cast %873 : vector<1x32x128xbf16> to vector<32x128xbf16>
    %cst_694 = arith.constant dense<0.000000e+00> : vector<8x128xf32>
    %875 = tpu.matmul %840, %874, %cst_694 {dimension_numbers = #tpu.dot_dimension_numbers<[1], [0], [0], [1], [0, 0, 1, 1], [], []>} : vector<8x32xbf16>, vector<32x128xbf16>, vector<8x128xf32> -> vector<8x128xf32>
    %876 = arith.maximumf %872, %867 : vector<8x128xf32>
    %877 = arith.maximumf %876, %857 : vector<8x128xf32>
    %cst_695 = arith.constant 8.750000e-01 : f32
    %878 = vector.broadcast %cst_695 : f32 to vector<8x128xf32>
    %879 = arith.mulf %877, %878 : vector<8x128xf32>
    %cst_696 = arith.constant 1.250000e-01 : f32
    %880 = vector.broadcast %cst_696 : f32 to vector<8x128xf32>
    %881 = arith.mulf %875, %880 : vector<8x128xf32>
    %882 = arith.addf %879, %881 : vector<8x128xf32>
    %c2_697 = arith.constant 2 : index
    %c0_698 = arith.constant 0 : index
    %c0_699 = arith.constant 0 : index
    %883 = vector.load %arg5[%c2_697, %c0_698, %c0_699] : memref<8x8x128xf32, #tpu.memory_space<vmem>>, vector<1x8x128xf32>
    %884 = vector.shape_cast %883 : vector<1x8x128xf32> to vector<8x128xf32>
    %885 = vector.shape_cast %882 : vector<8x128xf32> to vector<1x8x128xf32>
    tpu.vector_store %arg5[%c2_697, %c0_698, %c0_699], %885 {strides = array<i32>} : memref<8x8x128xf32, #tpu.memory_space<vmem>>, vector<1x8x128xf32>,
    %c3_700 = arith.constant 3 : index
    %c0_701 = arith.constant 0 : index
    %c0_702 = arith.constant 0 : index
    %886 = vector.load %arg5[%c3_700, %c0_701, %c0_702] : memref<8x8x128xf32, #tpu.memory_space<vmem>>, vector<1x8x128xf32>
    %887 = vector.shape_cast %886 : vector<1x8x128xf32> to vector<8x128xf32>
    %c3_703 = arith.constant 3 : index
    %c0_704 = arith.constant 0 : index
    %c0_705 = arith.constant 0 : index
    %888 = vector.load %arg3[%c3_703, %c0_704, %c0_705] : memref<8x32x128xbf16, #tpu.memory_space<vmem>>, vector<1x32x128xbf16>
    %889 = vector.shape_cast %888 : vector<1x32x128xbf16> to vector<32x128xbf16>
    %cst_706 = arith.constant dense<0.000000e+00> : vector<8x128xf32>
    %890 = tpu.matmul %840, %889, %cst_706 {dimension_numbers = #tpu.dot_dimension_numbers<[1], [0], [0], [1], [0, 0, 1, 1], [], []>} : vector<8x32xbf16>, vector<32x128xbf16>, vector<8x128xf32> -> vector<8x128xf32>
    %891 = arith.maximumf %887, %882 : vector<8x128xf32>
    %892 = arith.maximumf %891, %872 : vector<8x128xf32>
    %cst_707 = arith.constant 8.750000e-01 : f32
    %893 = vector.broadcast %cst_707 : f32 to vector<8x128xf32>
    %894 = arith.mulf %892, %893 : vector<8x128xf32>
    %cst_708 = arith.constant 1.250000e-01 : f32
    %895 = vector.broadcast %cst_708 : f32 to vector<8x128xf32>
    %896 = arith.mulf %890, %895 : vector<8x128xf32>
    %897 = arith.addf %894, %896 : vector<8x128xf32>
    %c3_709 = arith.constant 3 : index
    %c0_710 = arith.constant 0 : index
    %c0_711 = arith.constant 0 : index
    %898 = vector.load %arg5[%c3_709, %c0_710, %c0_711] : memref<8x8x128xf32, #tpu.memory_space<vmem>>, vector<1x8x128xf32>
    %899 = vector.shape_cast %898 : vector<1x8x128xf32> to vector<8x128xf32>
    %900 = vector.shape_cast %897 : vector<8x128xf32> to vector<1x8x128xf32>
    tpu.vector_store %arg5[%c3_709, %c0_710, %c0_711], %900 {strides = array<i32>} : memref<8x8x128xf32, #tpu.memory_space<vmem>>, vector<1x8x128xf32>,
    %c4_712 = arith.constant 4 : index
    %c0_713 = arith.constant 0 : index
    %c0_714 = arith.constant 0 : index
    %901 = vector.load %arg5[%c4_712, %c0_713, %c0_714] : memref<8x8x128xf32, #tpu.memory_space<vmem>>, vector<1x8x128xf32>
    %902 = vector.shape_cast %901 : vector<1x8x128xf32> to vector<8x128xf32>
    %c4_715 = arith.constant 4 : index
    %c0_716 = arith.constant 0 : index
    %c0_717 = arith.constant 0 : index
    %903 = vector.load %arg3[%c4_715, %c0_716, %c0_717] : memref<8x32x128xbf16, #tpu.memory_space<vmem>>, vector<1x32x128xbf16>
    %904 = vector.shape_cast %903 : vector<1x32x128xbf16> to vector<32x128xbf16>
    %cst_718 = arith.constant dense<0.000000e+00> : vector<8x128xf32>
    %905 = tpu.matmul %840, %904, %cst_718 {dimension_numbers = #tpu.dot_dimension_numbers<[1], [0], [0], [1], [0, 0, 1, 1], [], []>} : vector<8x32xbf16>, vector<32x128xbf16>, vector<8x128xf32> -> vector<8x128xf32>
    %906 = arith.maximumf %902, %897 : vector<8x128xf32>
    %907 = arith.maximumf %906, %887 : vector<8x128xf32>
    %cst_719 = arith.constant 8.750000e-01 : f32
    %908 = vector.broadcast %cst_719 : f32 to vector<8x128xf32>
    %909 = arith.mulf %907, %908 : vector<8x128xf32>
    %cst_720 = arith.constant 1.250000e-01 : f32
    %910 = vector.broadcast %cst_720 : f32 to vector<8x128xf32>
    %911 = arith.mulf %905, %910 : vector<8x128xf32>
    %912 = arith.addf %909, %911 : vector<8x128xf32>
    %c4_721 = arith.constant 4 : index
    %c0_722 = arith.constant 0 : index
    %c0_723 = arith.constant 0 : index
    %913 = vector.load %arg5[%c4_721, %c0_722, %c0_723] : memref<8x8x128xf32, #tpu.memory_space<vmem>>, vector<1x8x128xf32>
    %914 = vector.shape_cast %913 : vector<1x8x128xf32> to vector<8x128xf32>
    %915 = vector.shape_cast %912 : vector<8x128xf32> to vector<1x8x128xf32>
    tpu.vector_store %arg5[%c4_721, %c0_722, %c0_723], %915 {strides = array<i32>} : memref<8x8x128xf32, #tpu.memory_space<vmem>>, vector<1x8x128xf32>,
    %c5_724 = arith.constant 5 : index
    %c0_725 = arith.constant 0 : index
    %c0_726 = arith.constant 0 : index
    %916 = vector.load %arg5[%c5_724, %c0_725, %c0_726] : memref<8x8x128xf32, #tpu.memory_space<vmem>>, vector<1x8x128xf32>
    %917 = vector.shape_cast %916 : vector<1x8x128xf32> to vector<8x128xf32>
    %c5_727 = arith.constant 5 : index
    %c0_728 = arith.constant 0 : index
    %c0_729 = arith.constant 0 : index
    %918 = vector.load %arg3[%c5_727, %c0_728, %c0_729] : memref<8x32x128xbf16, #tpu.memory_space<vmem>>, vector<1x32x128xbf16>
    %919 = vector.shape_cast %918 : vector<1x32x128xbf16> to vector<32x128xbf16>
    %cst_730 = arith.constant dense<0.000000e+00> : vector<8x128xf32>
    %920 = tpu.matmul %840, %919, %cst_730 {dimension_numbers = #tpu.dot_dimension_numbers<[1], [0], [0], [1], [0, 0, 1, 1], [], []>} : vector<8x32xbf16>, vector<32x128xbf16>, vector<8x128xf32> -> vector<8x128xf32>
    %921 = arith.maximumf %917, %912 : vector<8x128xf32>
    %922 = arith.maximumf %921, %902 : vector<8x128xf32>
    %cst_731 = arith.constant 8.750000e-01 : f32
    %923 = vector.broadcast %cst_731 : f32 to vector<8x128xf32>
    %924 = arith.mulf %922, %923 : vector<8x128xf32>
    %cst_732 = arith.constant 1.250000e-01 : f32
    %925 = vector.broadcast %cst_732 : f32 to vector<8x128xf32>
    %926 = arith.mulf %920, %925 : vector<8x128xf32>
    %927 = arith.addf %924, %926 : vector<8x128xf32>
    %c5_733 = arith.constant 5 : index
    %c0_734 = arith.constant 0 : index
    %c0_735 = arith.constant 0 : index
    %928 = vector.load %arg5[%c5_733, %c0_734, %c0_735] : memref<8x8x128xf32, #tpu.memory_space<vmem>>, vector<1x8x128xf32>
    %929 = vector.shape_cast %928 : vector<1x8x128xf32> to vector<8x128xf32>
    %930 = vector.shape_cast %927 : vector<8x128xf32> to vector<1x8x128xf32>
    tpu.vector_store %arg5[%c5_733, %c0_734, %c0_735], %930 {strides = array<i32>} : memref<8x8x128xf32, #tpu.memory_space<vmem>>, vector<1x8x128xf32>,
    %c6_736 = arith.constant 6 : index
    %c0_737 = arith.constant 0 : index
    %c0_738 = arith.constant 0 : index
    %931 = vector.load %arg5[%c6_736, %c0_737, %c0_738] : memref<8x8x128xf32, #tpu.memory_space<vmem>>, vector<1x8x128xf32>
    %932 = vector.shape_cast %931 : vector<1x8x128xf32> to vector<8x128xf32>
    %c6_739 = arith.constant 6 : index
    %c0_740 = arith.constant 0 : index
    %c0_741 = arith.constant 0 : index
    %933 = vector.load %arg3[%c6_739, %c0_740, %c0_741] : memref<8x32x128xbf16, #tpu.memory_space<vmem>>, vector<1x32x128xbf16>
    %934 = vector.shape_cast %933 : vector<1x32x128xbf16> to vector<32x128xbf16>
    %cst_742 = arith.constant dense<0.000000e+00> : vector<8x128xf32>
    %935 = tpu.matmul %840, %934, %cst_742 {dimension_numbers = #tpu.dot_dimension_numbers<[1], [0], [0], [1], [0, 0, 1, 1], [], []>} : vector<8x32xbf16>, vector<32x128xbf16>, vector<8x128xf32> -> vector<8x128xf32>
    %936 = arith.maximumf %932, %927 : vector<8x128xf32>
    %937 = arith.maximumf %936, %917 : vector<8x128xf32>
    %cst_743 = arith.constant 8.750000e-01 : f32
    %938 = vector.broadcast %cst_743 : f32 to vector<8x128xf32>
    %939 = arith.mulf %937, %938 : vector<8x128xf32>
    %cst_744 = arith.constant 1.250000e-01 : f32
    %940 = vector.broadcast %cst_744 : f32 to vector<8x128xf32>
    %941 = arith.mulf %935, %940 : vector<8x128xf32>
    %942 = arith.addf %939, %941 : vector<8x128xf32>
    %c6_745 = arith.constant 6 : index
    %c0_746 = arith.constant 0 : index
    %c0_747 = arith.constant 0 : index
    %943 = vector.load %arg5[%c6_745, %c0_746, %c0_747] : memref<8x8x128xf32, #tpu.memory_space<vmem>>, vector<1x8x128xf32>
    %944 = vector.shape_cast %943 : vector<1x8x128xf32> to vector<8x128xf32>
    %945 = vector.shape_cast %942 : vector<8x128xf32> to vector<1x8x128xf32>
    tpu.vector_store %arg5[%c6_745, %c0_746, %c0_747], %945 {strides = array<i32>} : memref<8x8x128xf32, #tpu.memory_space<vmem>>, vector<1x8x128xf32>,
    %c7_748 = arith.constant 7 : index
    %c0_749 = arith.constant 0 : index
    %c0_750 = arith.constant 0 : index
    %946 = vector.load %arg5[%c7_748, %c0_749, %c0_750] : memref<8x8x128xf32, #tpu.memory_space<vmem>>, vector<1x8x128xf32>
    %947 = vector.shape_cast %946 : vector<1x8x128xf32> to vector<8x128xf32>
    %c7_751 = arith.constant 7 : index
    %c0_752 = arith.constant 0 : index
    %c0_753 = arith.constant 0 : index
    %948 = vector.load %arg3[%c7_751, %c0_752, %c0_753] : memref<8x32x128xbf16, #tpu.memory_space<vmem>>, vector<1x32x128xbf16>
    %949 = vector.shape_cast %948 : vector<1x32x128xbf16> to vector<32x128xbf16>
    %cst_754 = arith.constant dense<0.000000e+00> : vector<8x128xf32>
    %950 = tpu.matmul %840, %949, %cst_754 {dimension_numbers = #tpu.dot_dimension_numbers<[1], [0], [0], [1], [0, 0, 1, 1], [], []>} : vector<8x32xbf16>, vector<32x128xbf16>, vector<8x128xf32> -> vector<8x128xf32>
    %951 = arith.maximumf %947, %942 : vector<8x128xf32>
    %952 = arith.maximumf %951, %932 : vector<8x128xf32>
    %cst_755 = arith.constant 8.750000e-01 : f32
    %953 = vector.broadcast %cst_755 : f32 to vector<8x128xf32>
    %954 = arith.mulf %952, %953 : vector<8x128xf32>
    %cst_756 = arith.constant 1.250000e-01 : f32
    %955 = vector.broadcast %cst_756 : f32 to vector<8x128xf32>
    %956 = arith.mulf %950, %955 : vector<8x128xf32>
    %957 = arith.addf %954, %956 : vector<8x128xf32>
    %c7_757 = arith.constant 7 : index
    %c0_758 = arith.constant 0 : index
    %c0_759 = arith.constant 0 : index
    %958 = vector.load %arg5[%c7_757, %c0_758, %c0_759] : memref<8x8x128xf32, #tpu.memory_space<vmem>>, vector<1x8x128xf32>
    %959 = vector.shape_cast %958 : vector<1x8x128xf32> to vector<8x128xf32>
    %960 = vector.shape_cast %957 : vector<8x128xf32> to vector<1x8x128xf32>
    tpu.vector_store %arg5[%c7_757, %c0_758, %c0_759], %960 {strides = array<i32>} : memref<8x8x128xf32, #tpu.memory_space<vmem>>, vector<1x8x128xf32>,
    %c7_760 = arith.constant 7 : index
    %c0_761 = arith.constant 0 : index
    %c0_762 = arith.constant 0 : index
    %961 = vector.load %arg5[%c7_760, %c0_761, %c0_762] : memref<8x8x128xf32, #tpu.memory_space<vmem>>, vector<1x8x128xf32>
    %962 = vector.shape_cast %961 : vector<1x8x128xf32> to vector<8x128xf32>
    %c0_763 = arith.constant 0 : index
    %c0_764 = arith.constant 0 : index
    %963 = vector.load %arg4[%c0_763, %c0_764] : memref<8x128xf32, #tpu.memory_space<vmem>>, vector<8x128xf32>
    tpu.vector_store %arg4[%c0_763, %c0_764], %962 {strides = array<i32>} : memref<8x128xf32, #tpu.memory_space<vmem>>, vector<8x128xf32>,
    return
  }
  func.func @transform_0(%arg0: i32, %arg1: i32) -> (i32, i32, i32) {
    %c0_i32 = arith.constant 0 : i32
    %c0_i32_0 = arith.constant 0 : i32
    %c0_i32_1 = arith.constant 0 : i32
    return %c0_i32, %arg0, %c0_i32_0 : i32, i32, i32
  }
  func.func @transform_1(%arg0: i32, %arg1: i32) -> (i32, i32, i32) {
    %c0_i32 = arith.constant 0 : i32
    %c0_i32_0 = arith.constant 0 : i32
    %c0_i32_1 = arith.constant 0 : i32
    return %c0_i32, %c0_i32_0, %arg1 : i32, i32, i32
  }
  func.func @transform_2(%arg0: i32, %arg1: i32) -> (i32, i32) {
    %c0_i32 = arith.constant 0 : i32
    return %arg0, %arg1 : i32, i32
  }
}

</mosaic_0001>

<llo_original>
// kernel: tpu_custom_call.1
$region0: #{tpu_custom_call.1}
  #allocation0 [shape = 'u32[]', space=smem, size = 0x4, offset = 0x4, fixed_abs, tag = 'smem constant byte address 0x4 - core index']
  #allocation1 [shape = 'u32[144,128]{1,0:T(1,128)}', space=vmem, size = 0x12000, scoped, tag = 'internal scratch']
  #allocation2 [shape = 'f32[8,8,128]{2,1,0:T(8,128)}', space=vmem, size = 0x8000, scoped, tag = 'scratch operand']
  %s0 = inlined_call_operand.hbm [shape: bf16[8,8,32], index: 0, kind: input, shape index: {}]
  %s1 = inlined_call_operand.hbm [shape: bf16[8,32,128], index: 1, kind: input, shape index: {}]
  %s2 = inlined_call_operand.hbm [shape: f32[8,128], index: 2, kind: output, shape index: {}]
  %s3 = sld [smem:[#allocation0]]
  $region26: #{tpu_custom_call.1} parent=0
    _
  %s5 = ssub.s32 1, %s3
  %s6 = scalar_select 0, %s5, %s3
  $region1: #{tpu_custom_call.1} parent=0
    #allocation3 [shape = 'u8[16384]{0}', space=vmem, size = 0x4000, scoped, tag = 'input window, operand 0, single buffered']
    #allocation4 [shape = 's32[1]{0}', space=sflag, size = 0x4, scoped, tag = 'scoped memory for tpu_custom_call.1']
    #allocation5 [shape = 's32[1]{0}', space=sflag, size = 0x4, scoped, tag = 'scoped memory for tpu_custom_call.1']
    #allocation6 [shape = 'u8[65536]{0}', space=vmem, size = 0x10000, scoped, tag = 'input window, operand 1, single buffered']
    #allocation7 [shape = 's32[1]{0}', space=sflag, size = 0x4, scoped, tag = 'scoped memory for tpu_custom_call.1']
    #allocation8 [shape = 'u8[4096]{0}', space=vmem, size = 0x1000, scoped, tag = 'output window, operand 0, single buffered']
    %7 = vsyncpa [#allocation4], 0
    %8 = vsyncpa [#allocation7], 0
    %9 = vsyncpa [#allocation5], 0
    // Predicated region
    $region2: #{tpu_custom_call.1} parent=1 // pred_check
      _
    $region3: #{tpu_custom_call.1} parent=1 // pred_check_branch
      %11 = sbr.rel (0) target = $region5
    $region4: #{tpu_custom_call.1} parent=1 // pred_region
      %s13 = ssub.s32 512, 512
      %14 = vsyncadd [#allocation4], %s13
      %s15 = sshll.u32 [#allocation3], 4
      %s16 = int_to_ptr.vmem [resolvable:$true] %s15
      %21 = dma.hbm_to_vmem [thread:$0]  %s0, 512, %s16, [#allocation4], 64, 64, 4
    $region5: #{tpu_custom_call.1} parent=1 // pred_fallthru
      _
    // Predicated region
    $region6: #{tpu_custom_call.1} parent=1 // pred_check
      _
    $region7: #{tpu_custom_call.1} parent=1 // pred_check_branch
      %23 = sbr.rel (0) target = $region9
    $region8: #{tpu_custom_call.1} parent=1 // pred_region
      %s25 = ssub.s32 2048, 2048
      %26 = vsyncadd [#allocation7], %s25
      %s27 = sshll.u32 [#allocation6], 4
      %s28 = int_to_ptr.vmem [resolvable:$true] %s27
      %33 = dma.hbm_to_vmem [thread:$0]  %s1, 2048, %s28, [#allocation7], 64, 64, 4
    $region9: #{tpu_custom_call.1} parent=1 // pred_fallthru
      _
    // Predicated region
    $region10: #{tpu_custom_call.1} parent=1 // pred_check
      _
    $region11: #{tpu_custom_call.1} parent=1 // pred_check_branch
      %35 = sbr.rel (0) target = $region13
    $region12: #{tpu_custom_call.1} parent=1 // pred_region
      %36 = dma.done [#allocation4], 512
    $region13: #{tpu_custom_call.1} parent=1 // pred_fallthru
      _
    // Predicated region
    $region14: #{tpu_custom_call.1} parent=1 // pred_check
      _
    $region15: #{tpu_custom_call.1} parent=1 // pred_check_branch
      %38 = sbr.rel (0) target = $region17
    $region16: #{tpu_custom_call.1} parent=1 // pred_region
      %39 = dma.done [#allocation7], 2048
    $region17: #{tpu_custom_call.1} parent=1 // pred_fallthru
      _
    %v41 = vld [vmem:[#allocation3] sm:$0xf]
    %v42 = vld [vmem:[#allocation6] sm:$0xf]
    %v43 = vld [vmem:[#allocation6 + $0x4] sm:$0xf]
    %v44 = vld [vmem:[#allocation6 + $0x8] sm:$0xf]
    %v45 = vld [vmem:[#allocation6 + $0xc] sm:$0xf]
    %v50 = vunpack.c.l.b16 %v42
    %v51 = vunpack.c.l.b16 %v43
    %v52 = vunpack.c.l.b16 %v44
    %v53 = vunpack.c.l.b16 %v45
    %v54 = vpack.c.b16 %v51, %v50
    %v55 = vpack.c.b16 %v53, %v52
    %vm58 = vcmask 261120
    %v60 = vsel %vm58, %v41, 0
    %62 = vmatprep.subr.bf16.mxu0 0
    %63 = vmatpush1.bf16.msra.mxu0 0
    %64 = vmatprep.subr.bf16.mxu0 0
    %65 = vmatpush1.bf16.msra.mxu0 0
    %66 = vmatprep.subr.bf16.mxu0 0
    %67 = vmatpush1.bf16.msra.mxu0 0
    %68 = vmatprep.subr.bf16.mxu0 0
    %69 = vmatpush1.bf16.msra.mxu0 0
    %70 = vmatprep.subr.bf16.mxu0 0
    %71 = vmatpush1.bf16.msra.mxu0 0
    %72 = vmatprep.subr.bf16.mxu0 0
    %73 = vmatpush1.bf16.msra.mxu0 0
    %74 = vmatprep.subr.bf16.mxu0 0
    %75 = vmatpush1.bf16.msra.mxu0 %v55
    %76 = vmatprep.subr.bf16.mxu0 0
    %77 = vmatpush1.bf16.msra.mxu0 %v54
    %78 = vmatprep.subr.bf16.mxu0 0
    %79 = vmatpush2.bf16.msra.mxu0 0
    %80 = vmatprep.subr.bf16.mxu0 0
    %81 = vmatpush2.bf16.msra.mxu0 0
    %82 = vmatprep.subr.bf16.mxu0 0
    %83 = vmatpush2.bf16.msra.mxu0 0
    %84 = vmatprep.subr.bf16.mxu0 0
    %85 = vmatpush2.bf16.msra.mxu0 0
    %86 = vmatprep.subr.bf16.mxu0 0
    %87 = vmatpush2.bf16.msra.mxu0 0
    %88 = vmatprep.subr.bf16.mxu0 0
    %89 = vmatpush2.bf16.msra.mxu0 0
    %90 = vmatprep.subr.bf16.mxu0 0
    %91 = vmatpush2.bf16.msra.mxu0 0
    %92 = vmatprep.subr.bf16.mxu0 0
    %93 = vmatpush2.bf16.msra.mxu0 0
    %94 = vmatprep.mubr.bf16.mxu0 0
    %95 = vmatmul.mubr.bf16.gmra.mxu0 %v60
    %v96 = vpop.f32.mrf.mxu0
    %v97 = vadd.f32 0.0, %v96
    %v98 = vpop.f32.mrf.mxu0
    %v99 = vpop.f32.mrf.mxu0
    %v100 = vpop.f32.mrf.mxu0
    %101 = vdwg.mxu0
    %102 = vst [vmem:[#allocation2] sm:$0xff] %v97
    %s103 = scalar_lea.vmem [#allocation6], 16
    %v104 = vld [vmem:[%s103] sm:$0xf]
    %v105 = vld [vmem:[%s103 + $0x4] sm:$0xf]
    %v106 = vld [vmem:[%s103 + $0x8] sm:$0xf]
    %v107 = vld [vmem:[%s103 + $0xc] sm:$0xf]
    %v112 = vunpack.c.l.b16 %v104
    %v113 = vunpack.c.l.b16 %v105
    %v114 = vunpack.c.l.b16 %v106
    %v115 = vunpack.c.l.b16 %v107
    %v116 = vpack.c.b16 %v113, %v112
    %v117 = vpack.c.b16 %v115, %v114
    %120 = vmatprep.subr.bf16.mxu0 0
    %121 = vmatpush1.bf16.msra.mxu0 0
    %122 = vmatprep.subr.bf16.mxu0 0
    %123 = vmatpush1.bf16.msra.mxu0 0
    %124 = vmatprep.subr.bf16.mxu0 0
    %125 = vmatpush1.bf16.msra.mxu0 0
    %126 = vmatprep.subr.bf16.mxu0 0
    %127 = vmatpush1.bf16.msra.mxu0 0
    %128 = vmatprep.subr.bf16.mxu0 0
    %129 = vmatpush1.bf16.msra.mxu0 0
    %130 = vmatprep.subr.bf16.mxu0 0
    %131 = vmatpush1.bf16.msra.mxu0 0
    %132 = vmatprep.subr.bf16.mxu0 0
    %133 = vmatpush1.bf16.msra.mxu0 %v117
    %134 = vmatprep.subr.bf16.mxu0 0
    %135 = vmatpush1.bf16.msra.mxu0 %v116
    %136 = vmatprep.subr.bf16.mxu0 0
    %137 = vmatpush2.bf16.msra.mxu0 0
    %138 = vmatprep.subr.bf16.mxu0 0
    %139 = vmatpush2.bf16.msra.mxu0 0
    %140 = vmatprep.subr.bf16.mxu0 0
    %141 = vmatpush2.bf16.msra.mxu0 0
    %142 = vmatprep.subr.bf16.mxu0 0
    %143 = vmatpush2.bf16.msra.mxu0 0
    %144 = vmatprep.subr.bf16.mxu0 0
    %145 = vmatpush2.bf16.msra.mxu0 0
    %146 = vmatprep.subr.bf16.mxu0 0
    %147 = vmatpush2.bf16.msra.mxu0 0
    %148 = vmatprep.subr.bf16.mxu0 0
    %149 = vmatpush2.bf16.msra.mxu0 0
    %150 = vmatprep.subr.bf16.mxu0 0
    %151 = vmatpush2.bf16.msra.mxu0 0
    %152 = vmatprep.mubr.bf16.mxu0 0
    %153 = vmatmul.mubr.bf16.gmra.mxu0 %v60
    %v154 = vpop.f32.mrf.mxu0
    %v155 = vadd.f32 0.0, %v154
    %v156 = vpop.f32.mrf.mxu0
    %v157 = vpop.f32.mrf.mxu0
    %v158 = vpop.f32.mrf.mxu0
    %159 = vdwg.mxu0
    %v160 = vmax.f32 %v97, 0.0
    %v161 = vmax.f32 %v160, 0.0
    %v162 = vmul.f32 %v161, 0.5
    %v163 = vmul.f32 %v155, 0.5
    %v164 = vadd.f32 %v162, %v163
    %s165 = scalar_lea.vmem [#allocation2], 8
    %166 = vst [vmem:[%s165] sm:$0xff] %v164
    %s167 = scalar_lea.vmem [#allocation6], 32
    %v168 = vld [vmem:[%s167] sm:$0xf]
    %v169 = vld [vmem:[%s167 + $0x4] sm:$0xf]
    %v170 = vld [vmem:[%s167 + $0x8] sm:$0xf]
    %v171 = vld [vmem:[%s167 + $0xc] sm:$0xf]
    %v176 = vunpack.c.l.b16 %v168
    %v177 = vunpack.c.l.b16 %v169
    %v178 = vunpack.c.l.b16 %v170
    %v179 = vunpack.c.l.b16 %v171
    %v180 = vpack.c.b16 %v177, %v176
    %v181 = vpack.c.b16 %v179, %v178
    %184 = vmatprep.subr.bf16.mxu0 0
    %185 = vmatpush1.bf16.msra.mxu0 0
    %186 = vmatprep.subr.bf16.mxu0 0
    %187 = vmatpush1.bf16.msra.mxu0 0
    %188 = vmatprep.subr.bf16.mxu0 0
    %189 = vmatpush1.bf16.msra.mxu0 0
    %190 = vmatprep.subr.bf16.mxu0 0
    %191 = vmatpush1.bf16.msra.mxu0 0
    %192 = vmatprep.subr.bf16.mxu0 0
    %193 = vmatpush1.bf16.msra.mxu0 0
    %194 = vmatprep.subr.bf16.mxu0 0
    %195 = vmatpush1.bf16.msra.mxu0 0
    %196 = vmatprep.subr.bf16.mxu0 0
    %197 = vmatpush1.bf16.msra.mxu0 %v181
    %198 = vmatprep.subr.bf16.mxu0 0
    %199 = vmatpush1.bf16.msra.mxu0 %v180
    %200 = vmatprep.subr.bf16.mxu0 0
    %201 = vmatpush2.bf16.msra.mxu0 0
    %202 = vmatprep.subr.bf16.mxu0 0
    %203 = vmatpush2.bf16.msra.mxu0 0
    %204 = vmatprep.subr.bf16.mxu0 0
    %205 = vmatpush2.bf16.msra.mxu0 0
    %206 = vmatprep.subr.bf16.mxu0 0
    %207 = vmatpush2.bf16.msra.mxu0 0
    %208 = vmatprep.subr.bf16.mxu0 0
    %209 = vmatpush2.bf16.msra.mxu0 0
    %210 = vmatprep.subr.bf16.mxu0 0
    %211 = vmatpush2.bf16.msra.mxu0 0
    %212 = vmatprep.subr.bf16.mxu0 0
    %213 = vmatpush2.bf16.msra.mxu0 0
    %214 = vmatprep.subr.bf16.mxu0 0
    %215 = vmatpush2.bf16.msra.mxu0 0
    %216 = vmatprep.mubr.bf16.mxu0 0
    %217 = vmatmul.mubr.bf16.gmra.mxu0 %v60
    %v218 = vpop.f32.mrf.mxu0
    %v219 = vadd.f32 0.0, %v218
    %v220 = vpop.f32.mrf.mxu0
    %v221 = vpop.f32.mrf.mxu0
    %v222 = vpop.f32.mrf.mxu0
    %223 = vdwg.mxu0
    %v224 = vmax.f32 %v164, 0.0
    %v225 = vmax.f32 %v224, 0.0
    %v226 = vmul.f32 %v225, 0.6666667
    %v227 = vmul.f32 %v219, 0.33333334
    %v228 = vadd.f32 %v226, %v227
    %s229 = scalar_lea.vmem [#allocation2], 16
    %230 = vst [vmem:[%s229] sm:$0xff] %v228
    %s231 = scalar_lea.vmem [#allocation6], 48
    %v232 = vld [vmem:[%s231] sm:$0xf]
    %v233 = vld [vmem:[%s231 + $0x4] sm:$0xf]
    %v234 = vld [vmem:[%s231 + $0x8] sm:$0xf]
    %v235 = vld [vmem:[%s231 + $0xc] sm:$0xf]
    %v240 = vunpack.c.l.b16 %v232
    %v241 = vunpack.c.l.b16 %v233
    %v242 = vunpack.c.l.b16 %v234
    %v243 = vunpack.c.l.b16 %v235
    %v244 = vpack.c.b16 %v241, %v240
    %v245 = vpack.c.b16 %v243, %v242
    %248 = vmatprep.subr.bf16.mxu0 0
    %249 = vmatpush1.bf16.msra.mxu0 0
    %250 = vmatprep.subr.bf16.mxu0 0
    %251 = vmatpush1.bf16.msra.mxu0 0
    %252 = vmatprep.subr.bf16.mxu0 0
    %253 = vmatpush1.bf16.msra.mxu0 0
    %254 = vmatprep.subr.bf16.mxu0 0
    %255 = vmatpush1.bf16.msra.mxu0 0
    %256 = vmatprep.subr.bf16.mxu0 0
    %257 = vmatpush1.bf16.msra.mxu0 0
    %258 = vmatprep.subr.bf16.mxu0 0
    %259 = vmatpush1.bf16.msra.mxu0 0
    %260 = vmatprep.subr.bf16.mxu0 0
    %261 = vmatpush1.bf16.msra.mxu0 %v245
    %262 = vmatprep.subr.bf16.mxu0 0
    %263 = vmatpush1.bf16.msra.mxu0 %v244
    %264 = vmatprep.subr.bf16.mxu0 0
    %265 = vmatpush2.bf16.msra.mxu0 0
    %266 = vmatprep.subr.bf16.mxu0 0
    %267 = vmatpush2.bf16.msra.mxu0 0
    %268 = vmatprep.subr.bf16.mxu0 0
    %269 = vmatpush2.bf16.msra.mxu0 0
    %270 = vmatprep.subr.bf16.mxu0 0
    %271 = vmatpush2.bf16.msra.mxu0 0
    %272 = vmatprep.subr.bf16.mxu0 0
    %273 = vmatpush2.bf16.msra.mxu0 0
    %274 = vmatprep.subr.bf16.mxu0 0
    %275 = vmatpush2.bf16.msra.mxu0 0
    %276 = vmatprep.subr.bf16.mxu0 0
    %277 = vmatpush2.bf16.msra.mxu0 0
    %278 = vmatprep.subr.bf16.mxu0 0
    %279 = vmatpush2.bf16.msra.mxu0 0
    %280 = vmatprep.mubr.bf16.mxu0 0
    %281 = vmatmul.mubr.bf16.gmra.mxu0 %v60
    %v282 = vpop.f32.mrf.mxu0
    %v283 = vadd.f32 0.0, %v282
    %v284 = vpop.f32.mrf.mxu0
    %v285 = vpop.f32.mrf.mxu0
    %v286 = vpop.f32.mrf.mxu0
    %287 = vdwg.mxu0
    %v288 = vmax.f32 %v228, 0.0
    %v289 = vmax.f32 %v288, 0.0
    %v290 = vmul.f32 %v289, 0.75
    %v291 = vmul.f32 %v283, 0.25
    %v292 = vadd.f32 %v290, %v291
    %s293 = scalar_lea.vmem [#allocation2], 24
    %294 = vst [vmem:[%s293] sm:$0xff] %v292
    %s295 = scalar_lea.vmem [#allocation6], 64
    %v296 = vld [vmem:[%s295] sm:$0xf]
    %v297 = vld [vmem:[%s295 + $0x4] sm:$0xf]
    %v298 = vld [vmem:[%s295 + $0x8] sm:$0xf]
    %v299 = vld [vmem:[%s295 + $0xc] sm:$0xf]
    %v304 = vunpack.c.l.b16 %v296
    %v305 = vunpack.c.l.b16 %v297
    %v306 = vunpack.c.l.b16 %v298
    %v307 = vunpack.c.l.b16 %v299
    %v308 = vpack.c.b16 %v305, %v304
    %v309 = vpack.c.b16 %v307, %v306
    %312 = vmatprep.subr.bf16.mxu0 0
    %313 = vmatpush1.bf16.msra.mxu0 0
    %314 = vmatprep.subr.bf16.mxu0 0
    %315 = vmatpush1.bf16.msra.mxu0 0
    %316 = vmatprep.subr.bf16.mxu0 0
    %317 = vmatpush1.bf16.msra.mxu0 0
    %318 = vmatprep.subr.bf16.mxu0 0
    %319 = vmatpush1.bf16.msra.mxu0 0
    %320 = vmatprep.subr.bf16.mxu0 0
    %321 = vmatpush1.bf16.msra.mxu0 0
    %322 = vmatprep.subr.bf16.mxu0 0
    %323 = vmatpush1.bf16.msra.mxu0 0
    %324 = vmatprep.subr.bf16.mxu0 0
    %325 = vmatpush1.bf16.msra.mxu0 %v309
    %326 = vmatprep.subr.bf16.mxu0 0
    %327 = vmatpush1.bf16.msra.mxu0 %v308
    %328 = vmatprep.subr.bf16.mxu0 0
    %329 = vmatpush2.bf16.msra.mxu0 0
    %330 = vmatprep.subr.bf16.mxu0 0
    %331 = vmatpush2.bf16.msra.mxu0 0
    %332 = vmatprep.subr.bf16.mxu0 0
    %333 = vmatpush2.bf16.msra.mxu0 0
    %334 = vmatprep.subr.bf16.mxu0 0
    %335 = vmatpush2.bf16.msra.mxu0 0
    %336 = vmatprep.subr.bf16.mxu0 0
    %337 = vmatpush2.bf16.msra.mxu0 0
    %338 = vmatprep.subr.bf16.mxu0 0
    %339 = vmatpush2.bf16.msra.mxu0 0
    %340 = vmatprep.subr.bf16.mxu0 0
    %341 = vmatpush2.bf16.msra.mxu0 0
    %342 = vmatprep.subr.bf16.mxu0 0
    %343 = vmatpush2.bf16.msra.mxu0 0
    %344 = vmatprep.mubr.bf16.mxu0 0
    %345 = vmatmul.mubr.bf16.gmra.mxu0 %v60
    %v346 = vpop.f32.mrf.mxu0
    %v347 = vadd.f32 0.0, %v346
    %v348 = vpop.f32.mrf.mxu0
    %v349 = vpop.f32.mrf.mxu0
    %v350 = vpop.f32.mrf.mxu0
    %351 = vdwg.mxu0
    %v352 = vmax.f32 %v292, 0.0
    %v353 = vmax.f32 %v352, 0.0
    %v354 = vmul.f32 %v353, 0.8
    %v355 = vmul.f32 %v347, 0.2
    %v356 = vadd.f32 %v354, %v355
    %s357 = scalar_lea.vmem [#allocation2], 32
    %358 = vst [vmem:[%s357] sm:$0xff] %v356
    %s359 = scalar_lea.vmem [#allocation6], 80
    %v360 = vld [vmem:[%s359] sm:$0xf]
    %v361 = vld [vmem:[%s359 + $0x4] sm:$0xf]
    %v362 = vld [vmem:[%s359 + $0x8] sm:$0xf]
    %v363 = vld [vmem:[%s359 + $0xc] sm:$0xf]
    %v368 = vunpack.c.l.b16 %v360
    %v369 = vunpack.c.l.b16 %v361
    %v370 = vunpack.c.l.b16 %v362
    %v371 = vunpack.c.l.b16 %v363
    %v372 = vpack.c.b16 %v369, %v368
    %v373 = vpack.c.b16 %v371, %v370
    %376 = vmatprep.subr.bf16.mxu0 0
    %377 = vmatpush1.bf16.msra.mxu0 0
    %378 = vmatprep.subr.bf16.mxu0 0
    %379 = vmatpush1.bf16.msra.mxu0 0
    %380 = vmatprep.subr.bf16.mxu0 0
    %381 = vmatpush1.bf16.msra.mxu0 0
    %382 = vmatprep.subr.bf16.mxu0 0
    %383 = vmatpush1.bf16.msra.mxu0 0
    %384 = vmatprep.subr.bf16.mxu0 0
    %385 = vmatpush1.bf16.msra.mxu0 0
    %386 = vmatprep.subr.bf16.mxu0 0
    %387 = vmatpush1.bf16.msra.mxu0 0
    %388 = vmatprep.subr.bf16.mxu0 0
    %389 = vmatpush1.bf16.msra.mxu0 %v373
    %390 = vmatprep.subr.bf16.mxu0 0
    %391 = vmatpush1.bf16.msra.mxu0 %v372
    %392 = vmatprep.subr.bf16.mxu0 0
    %393 = vmatpush2.bf16.msra.mxu0 0
    %394 = vmatprep.subr.bf16.mxu0 0
    %395 = vmatpush2.bf16.msra.mxu0 0
    %396 = vmatprep.subr.bf16.mxu0 0
    %397 = vmatpush2.bf16.msra.mxu0 0
    %398 = vmatprep.subr.bf16.mxu0 0
    %399 = vmatpush2.bf16.msra.mxu0 0
    %400 = vmatprep.subr.bf16.mxu0 0
    %401 = vmatpush2.bf16.msra.mxu0 0
    %402 = vmatprep.subr.bf16.mxu0 0
    %403 = vmatpush2.bf16.msra.mxu0 0
    %404 = vmatprep.subr.bf16.mxu0 0
    %405 = vmatpush2.bf16.msra.mxu0 0
    %406 = vmatprep.subr.bf16.mxu0 0
    %407 = vmatpush2.bf16.msra.mxu0 0
    %408 = vmatprep.mubr.bf16.mxu0 0
    %409 = vmatmul.mubr.bf16.gmra.mxu0 %v60
    %v410 = vpop.f32.mrf.mxu0
    %v411 = vadd.f32 0.0, %v410
    %v412 = vpop.f32.mrf.mxu0
    %v413 = vpop.f32.mrf.mxu0
    %v414 = vpop.f32.mrf.mxu0
    %415 = vdwg.mxu0
    %v416 = vmax.f32 %v356, 0.0
    %v417 = vmax.f32 %v416, 0.0
    %v418 = vmul.f32 %v417, 0.8333333
    %v419 = vmul.f32 %v411, 0.16666667
    %v420 = vadd.f32 %v418, %v419
    %s421 = scalar_lea.vmem [#allocation2], 40
    %422 = vst [vmem:[%s421] sm:$0xff] %v420
    %s423 = scalar_lea.vmem [#allocation6], 96
    %v424 = vld [vmem:[%s423] sm:$0xf]
    %v425 = vld [vmem:[%s423 + $0x4] sm:$0xf]
    %v426 = vld [vmem:[%s423 + $0x8] sm:$0xf]
    %v427 = vld [vmem:[%s423 + $0xc] sm:$0xf]
    %v432 = vunpack.c.l.b16 %v424
    %v433 = vunpack.c.l.b16 %v425
    %v434 = vunpack.c.l.b16 %v426
    %v435 = vunpack.c.l.b16 %v427
    %v436 = vpack.c.b16 %v433, %v432
    %v437 = vpack.c.b16 %v435, %v434
    %440 = vmatprep.subr.bf16.mxu0 0
    %441 = vmatpush1.bf16.msra.mxu0 0
    %442 = vmatprep.subr.bf16.mxu0 0
    %443 = vmatpush1.bf16.msra.mxu0 0
    %444 = vmatprep.subr.bf16.mxu0 0
    %445 = vmatpush1.bf16.msra.mxu0 0
    %446 = vmatprep.subr.bf16.mxu0 0
    %447 = vmatpush1.bf16.msra.mxu0 0
    %448 = vmatprep.subr.bf16.mxu0 0
    %449 = vmatpush1.bf16.msra.mxu0 0
    %450 = vmatprep.subr.bf16.mxu0 0
    %451 = vmatpush1.bf16.msra.mxu0 0
    %452 = vmatprep.subr.bf16.mxu0 0
    %453 = vmatpush1.bf16.msra.mxu0 %v437
    %454 = vmatprep.subr.bf16.mxu0 0
    %455 = vmatpush1.bf16.msra.mxu0 %v436
    %456 = vmatprep.subr.bf16.mxu0 0
    %457 = vmatpush2.bf16.msra.mxu0 0
    %458 = vmatprep.subr.bf16.mxu0 0
    %459 = vmatpush2.bf16.msra.mxu0 0
    %460 = vmatprep.subr.bf16.mxu0 0
    %461 = vmatpush2.bf16.msra.mxu0 0
    %462 = vmatprep.subr.bf16.mxu0 0
    %463 = vmatpush2.bf16.msra.mxu0 0
    %464 = vmatprep.subr.bf16.mxu0 0
    %465 = vmatpush2.bf16.msra.mxu0 0
    %466 = vmatprep.subr.bf16.mxu0 0
    %467 = vmatpush2.bf16.msra.mxu0 0
    %468 = vmatprep.subr.bf16.mxu0 0
    %469 = vmatpush2.bf16.msra.mxu0 0
    %470 = vmatprep.subr.bf16.mxu0 0
    %471 = vmatpush2.bf16.msra.mxu0 0
    %472 = vmatprep.mubr.bf16.mxu0 0
    %473 = vmatmul.mubr.bf16.gmra.mxu0 %v60
    %v474 = vpop.f32.mrf.mxu0
    %v475 = vadd.f32 0.0, %v474
    %v476 = vpop.f32.mrf.mxu0
    %v477 = vpop.f32.mrf.mxu0
    %v478 = vpop.f32.mrf.mxu0
    %479 = vdwg.mxu0
    %v480 = vmax.f32 %v420, 0.0
    %v481 = vmax.f32 %v480, 0.0
    %v482 = vmul.f32 %v481, 0.85714287
    %v483 = vmul.f32 %v475, 0.14285715
    %v484 = vadd.f32 %v482, %v483
    %s485 = scalar_lea.vmem [#allocation2], 48
    %486 = vst [vmem:[%s485] sm:$0xff] %v484
    %s487 = scalar_lea.vmem [#allocation6], 112
    %v488 = vld [vmem:[%s487] sm:$0xf]
    %v489 = vld [vmem:[%s487 + $0x4] sm:$0xf]
    %v490 = vld [vmem:[%s487 + $0x8] sm:$0xf]
    %v491 = vld [vmem:[%s487 + $0xc] sm:$0xf]
    %v496 = vunpack.c.l.b16 %v488
    %v497 = vunpack.c.l.b16 %v489
    %v498 = vunpack.c.l.b16 %v490
    %v499 = vunpack.c.l.b16 %v491
    %v500 = vpack.c.b16 %v497, %v496
    %v501 = vpack.c.b16 %v499, %v498
    %504 = vmatprep.subr.bf16.mxu0 0
    %505 = vmatpush1.bf16.msra.mxu0 0
    %506 = vmatprep.subr.bf16.mxu0 0
    %507 = vmatpush1.bf16.msra.mxu0 0
    %508 = vmatprep.subr.bf16.mxu0 0
    %509 = vmatpush1.bf16.msra.mxu0 0
    %510 = vmatprep.subr.bf16.mxu0 0
    %511 = vmatpush1.bf16.msra.mxu0 0
    %512 = vmatprep.subr.bf16.mxu0 0
    %513 = vmatpush1.bf16.msra.mxu0 0
    %514 = vmatprep.subr.bf16.mxu0 0
    %515 = vmatpush1.bf16.msra.mxu0 0
    %516 = vmatprep.subr.bf16.mxu0 0
    %517 = vmatpush1.bf16.msra.mxu0 %v501
    %518 = vmatprep.subr.bf16.mxu0 0
    %519 = vmatpush1.bf16.msra.mxu0 %v500
    %520 = vmatprep.subr.bf16.mxu0 0
    %521 = vmatpush2.bf16.msra.mxu0 0
    %522 = vmatprep.subr.bf16.mxu0 0
    %523 = vmatpush2.bf16.msra.mxu0 0
    %524 = vmatprep.subr.bf16.mxu0 0
    %525 = vmatpush2.bf16.msra.mxu0 0
    %526 = vmatprep.subr.bf16.mxu0 0
    %527 = vmatpush2.bf16.msra.mxu0 0
    %528 = vmatprep.subr.bf16.mxu0 0
    %529 = vmatpush2.bf16.msra.mxu0 0
    %530 = vmatprep.subr.bf16.mxu0 0
    %531 = vmatpush2.bf16.msra.mxu0 0
    %532 = vmatprep.subr.bf16.mxu0 0
    %533 = vmatpush2.bf16.msra.mxu0 0
    %534 = vmatprep.subr.bf16.mxu0 0
    %535 = vmatpush2.bf16.msra.mxu0 0
    %536 = vmatprep.mubr.bf16.mxu0 0
    %537 = vmatmul.mubr.bf16.gmra.mxu0 %v60
    %v538 = vpop.f32.mrf.mxu0
    %v539 = vadd.f32 0.0, %v538
    %v540 = vpop.f32.mrf.mxu0
    %v541 = vpop.f32.mrf.mxu0
    %v542 = vpop.f32.mrf.mxu0
    %543 = vdwg.mxu0
    %v544 = vmax.f32 %v484, 0.0
    %v545 = vmax.f32 %v544, 0.0
    %v546 = vmul.f32 %v545, 0.875
    %v547 = vmul.f32 %v539, 0.125
    %v548 = vadd.f32 %v546, %v547
    %s549 = scalar_lea.vmem [#allocation2], 56
    %550 = vst [vmem:[%s549] sm:$0xff] %v548
    %s551 = scalar_lea.vmem [#allocation3], 4
    %v552 = vld [vmem:[%s551] sm:$0xf]
    %v553 = vld [vmem:[#allocation2] sm:$0xff]
    %v554 = vld [vmem:[#allocation6] sm:$0xf]
    %v555 = vld [vmem:[#allocation6 + $0x4] sm:$0xf]
    %v556 = vld [vmem:[#allocation6 + $0x8] sm:$0xf]
    %v557 = vld [vmem:[#allocation6 + $0xc] sm:$0xf]
    %v562 = vunpack.c.l.b16 %v554
    %v563 = vunpack.c.l.b16 %v555
    %v564 = vunpack.c.l.b16 %v556
    %v565 = vunpack.c.l.b16 %v557
    %v566 = vpack.c.b16 %v563, %v562
    %v567 = vpack.c.b16 %v565, %v564
    %v571 = vsel %vm58, %v552, 0
    %573 = vmatprep.subr.bf16.mxu0 0
    %574 = vmatpush1.bf16.msra.mxu0 0
    %575 = vmatprep.subr.bf16.mxu0 0
    %576 = vmatpush1.bf16.msra.mxu0 0
    %577 = vmatprep.subr.bf16.mxu0 0
    %578 = vmatpush1.bf16.msra.mxu0 0
    %579 = vmatprep.subr.bf16.mxu0 0
    %580 = vmatpush1.bf16.msra.mxu0 0
    %581 = vmatprep.subr.bf16.mxu0 0
    %582 = vmatpush1.bf16.msra.mxu0 0
    %583 = vmatprep.subr.bf16.mxu0 0
    %584 = vmatpush1.bf16.msra.mxu0 0
    %585 = vmatprep.subr.bf16.mxu0 0
    %586 = vmatpush1.bf16.msra.mxu0 %v567
    %587 = vmatprep.subr.bf16.mxu0 0
    %588 = vmatpush1.bf16.msra.mxu0 %v566
    %589 = vmatprep.subr.bf16.mxu0 0
    %590 = vmatpush2.bf16.msra.mxu0 0
    %591 = vmatprep.subr.bf16.mxu0 0
    %592 = vmatpush2.bf16.msra.mxu0 0
    %593 = vmatprep.subr.bf16.mxu0 0
    %594 = vmatpush2.bf16.msra.mxu0 0
    %595 = vmatprep.subr.bf16.mxu0 0
    %596 = vmatpush2.bf16.msra.mxu0 0
    %597 = vmatprep.subr.bf16.mxu0 0
    %598 = vmatpush2.bf16.msra.mxu0 0
    %599 = vmatprep.subr.bf16.mxu0 0
    %600 = vmatpush2.bf16.msra.mxu0 0
    %601 = vmatprep.subr.bf16.mxu0 0
    %602 = vmatpush2.bf16.msra.mxu0 0
    %603 = vmatprep.subr.bf16.mxu0 0
    %604 = vmatpush2.bf16.msra.mxu0 0
    %605 = vmatprep.mubr.bf16.mxu0 0
    %606 = vmatmul.mubr.bf16.gmra.mxu0 %v571
    %v607 = vpop.f32.mrf.mxu0
    %v608 = vadd.f32 0.0, %v607
    %v609 = vpop.f32.mrf.mxu0
    %v610 = vpop.f32.mrf.mxu0
    %v611 = vpop.f32.mrf.mxu0
    %612 = vdwg.mxu0
    %v613 = vmax.f32 %v553, 0.0
    %v614 = vmax.f32 %v613, 0.0
    %v615 = vmul.f32 %v614, 0.5
    %v616 = vmul.f32 %v608, 0.5
    %v617 = vadd.f32 %v615, %v616
    %618 = vst [vmem:[#allocation2] sm:$0xff] %v617
    %v619 = vld [vmem:[%s165] sm:$0xff]
    %v620 = vld [vmem:[%s103] sm:$0xf]
    %v621 = vld [vmem:[%s103 + $0x4] sm:$0xf]
    %v622 = vld [vmem:[%s103 + $0x8] sm:$0xf]
    %v623 = vld [vmem:[%s103 + $0xc] sm:$0xf]
    %v628 = vunpack.c.l.b16 %v620
    %v629 = vunpack.c.l.b16 %v621
    %v630 = vunpack.c.l.b16 %v622
    %v631 = vunpack.c.l.b16 %v623
    %v632 = vpack.c.b16 %v629, %v628
    %v633 = vpack.c.b16 %v631, %v630
    %636 = vmatprep.subr.bf16.mxu0 0
    %637 = vmatpush1.bf16.msra.mxu0 0
    %638 = vmatprep.subr.bf16.mxu0 0
    %639 = vmatpush1.bf16.msra.mxu0 0
    %640 = vmatprep.subr.bf16.mxu0 0
    %641 = vmatpush1.bf16.msra.mxu0 0
    %642 = vmatprep.subr.bf16.mxu0 0
    %643 = vmatpush1.bf16.msra.mxu0 0
    %644 = vmatprep.subr.bf16.mxu0 0
    %645 = vmatpush1.bf16.msra.mxu0 0
    %646 = vmatprep.subr.bf16.mxu0 0
    %647 = vmatpush1.bf16.msra.mxu0 0
    %648 = vmatprep.subr.bf16.mxu0 0
    %649 = vmatpush1.bf16.msra.mxu0 %v633
    %650 = vmatprep.subr.bf16.mxu0 0
    %651 = vmatpush1.bf16.msra.mxu0 %v632
    %652 = vmatprep.subr.bf16.mxu0 0
    %653 = vmatpush2.bf16.msra.mxu0 0
    %654 = vmatprep.subr.bf16.mxu0 0
    %655 = vmatpush2.bf16.msra.mxu0 0
    %656 = vmatprep.subr.bf16.mxu0 0
    %657 = vmatpush2.bf16.msra.mxu0 0
    %658 = vmatprep.subr.bf16.mxu0 0
    %659 = vmatpush2.bf16.msra.mxu0 0
    %660 = vmatprep.subr.bf16.mxu0 0
    %661 = vmatpush2.bf16.msra.mxu0 0
    %662 = vmatprep.subr.bf16.mxu0 0
    %663 = vmatpush2.bf16.msra.mxu0 0
    %664 = vmatprep.subr.bf16.mxu0 0
    %665 = vmatpush2.bf16.msra.mxu0 0
    %666 = vmatprep.subr.bf16.mxu0 0
    %667 = vmatpush2.bf16.msra.mxu0 0
    %668 = vmatprep.mubr.bf16.mxu0 0
    %669 = vmatmul.mubr.bf16.gmra.mxu0 %v571
    %v670 = vpop.f32.mrf.mxu0
    %v671 = vadd.f32 0.0, %v670
    %v672 = vpop.f32.mrf.mxu0
    %v673 = vpop.f32.mrf.mxu0
    %v674 = vpop.f32.mrf.mxu0
    %675 = vdwg.mxu0
    %v676 = vmax.f32 %v619, %v617
    %v677 = vmax.f32 %v676, %v553
    %v678 = vmul.f32 %v677, 0.5
    %v679 = vmul.f32 %v671, 0.5
    %v680 = vadd.f32 %v678, %v679
    %681 = vst [vmem:[%s165] sm:$0xff] %v680
    %v682 = vld [vmem:[%s229] sm:$0xff]
    %v683 = vld [vmem:[%s167] sm:$0xf]
    %v684 = vld [vmem:[%s167 + $0x4] sm:$0xf]
    %v685 = vld [vmem:[%s167 + $0x8] sm:$0xf]
    %v686 = vld [vmem:[%s167 + $0xc] sm:$0xf]
    %v691 = vunpack.c.l.b16 %v683
    %v692 = vunpack.c.l.b16 %v684
    %v693 = vunpack.c.l.b16 %v685
    %v694 = vunpack.c.l.b16 %v686
    %v695 = vpack.c.b16 %v692, %v691
    %v696 = vpack.c.b16 %v694, %v693
    %699 = vmatprep.subr.bf16.mxu0 0
    %700 = vmatpush1.bf16.msra.mxu0 0
    %701 = vmatprep.subr.bf16.mxu0 0
    %702 = vmatpush1.bf16.msra.mxu0 0
    %703 = vmatprep.subr.bf16.mxu0 0
    %704 = vmatpush1.bf16.msra.mxu0 0
    %705 = vmatprep.subr.bf16.mxu0 0
    %706 = vmatpush1.bf16.msra.mxu0 0
    %707 = vmatprep.subr.bf16.mxu0 0
    %708 = vmatpush1.bf16.msra.mxu0 0
    %709 = vmatprep.subr.bf16.mxu0 0
    %710 = vmatpush1.bf16.msra.mxu0 0
    %711 = vmatprep.subr.bf16.mxu0 0
    %712 = vmatpush1.bf16.msra.mxu0 %v696
    %713 = vmatprep.subr.bf16.mxu0 0
    %714 = vmatpush1.bf16.msra.mxu0 %v695
    %715 = vmatprep.subr.bf16.mxu0 0
    %716 = vmatpush2.bf16.msra.mxu0 0
    %717 = vmatprep.subr.bf16.mxu0 0
    %718 = vmatpush2.bf16.msra.mxu0 0
    %719 = vmatprep.subr.bf16.mxu0 0
    %720 = vmatpush2.bf16.msra.mxu0 0
    %721 = vmatprep.subr.bf16.mxu0 0
    %722 = vmatpush2.bf16.msra.mxu0 0
    %723 = vmatprep.subr.bf16.mxu0 0
    %724 = vmatpush2.bf16.msra.mxu0 0
    %725 = vmatprep.subr.bf16.mxu0 0
    %726 = vmatpush2.bf16.msra.mxu0 0
    %727 = vmatprep.subr.bf16.mxu0 0
    %728 = vmatpush2.bf16.msra.mxu0 0
    %729 = vmatprep.subr.bf16.mxu0 0
    %730 = vmatpush2.bf16.msra.mxu0 0
    %731 = vmatprep.mubr.bf16.mxu0 0
    %732 = vmatmul.mubr.bf16.gmra.mxu0 %v571
    %v733 = vpop.f32.mrf.mxu0
    %v734 = vadd.f32 0.0, %v733
    %v735 = vpop.f32.mrf.mxu0
    %v736 = vpop.f32.mrf.mxu0
    %v737 = vpop.f32.mrf.mxu0
    %738 = vdwg.mxu0
    %v739 = vmax.f32 %v682, %v680
    %v740 = vmax.f32 %v739, %v619
    %v741 = vmul.f32 %v740, 0.6666667
    %v742 = vmul.f32 %v734, 0.33333334
    %v743 = vadd.f32 %v741, %v742
    %744 = vst [vmem:[%s229] sm:$0xff] %v743
    %v745 = vld [vmem:[%s293] sm:$0xff]
    %v746 = vld [vmem:[%s231] sm:$0xf]
    %v747 = vld [vmem:[%s231 + $0x4] sm:$0xf]
    %v748 = vld [vmem:[%s231 + $0x8] sm:$0xf]
    %v749 = vld [vmem:[%s231 + $0xc] sm:$0xf]
    %v754 = vunpack.c.l.b16 %v746
    %v755 = vunpack.c.l.b16 %v747
    %v756 = vunpack.c.l.b16 %v748
    %v757 = vunpack.c.l.b16 %v749
    %v758 = vpack.c.b16 %v755, %v754
    %v759 = vpack.c.b16 %v757, %v756
    %762 = vmatprep.subr.bf16.mxu0 0
    %763 = vmatpush1.bf16.msra.mxu0 0
    %764 = vmatprep.subr.bf16.mxu0 0
    %765 = vmatpush1.bf16.msra.mxu0 0
    %766 = vmatprep.subr.bf16.mxu0 0
    %767 = vmatpush1.bf16.msra.mxu0 0
    %768 = vmatprep.subr.bf16.mxu0 0
    %769 = vmatpush1.bf16.msra.mxu0 0
    %770 = vmatprep.subr.bf16.mxu0 0
    %771 = vmatpush1.bf16.msra.mxu0 0
    %772 = vmatprep.subr.bf16.mxu0 0
    %773 = vmatpush1.bf16.msra.mxu0 0
    %774 = vmatprep.subr.bf16.mxu0 0
    %775 = vmatpush1.bf16.msra.mxu0 %v759
    %776 = vmatprep.subr.bf16.mxu0 0
    %777 = vmatpush1.bf16.msra.mxu0 %v758
    %778 = vmatprep.subr.bf16.mxu0 0
    %779 = vmatpush2.bf16.msra.mxu0 0
    %780 = vmatprep.subr.bf16.mxu0 0
    %781 = vmatpush2.bf16.msra.mxu0 0
    %782 = vmatprep.subr.bf16.mxu0 0
    %783 = vmatpush2.bf16.msra.mxu0 0
    %784 = vmatprep.subr.bf16.mxu0 0
    %785 = vmatpush2.bf16.msra.mxu0 0
    %786 = vmatprep.subr.bf16.mxu0 0
    %787 = vmatpush2.bf16.msra.mxu0 0
    %788 = vmatprep.subr.bf16.mxu0 0
    %789 = vmatpush2.bf16.msra.mxu0 0
    %790 = vmatprep.subr.bf16.mxu0 0
    %791 = vmatpush2.bf16.msra.mxu0 0
    %792 = vmatprep.subr.bf16.mxu0 0
    %793 = vmatpush2.bf16.msra.mxu0 0
    %794 = vmatprep.mubr.bf16.mxu0 0
    %795 = vmatmul.mubr.bf16.gmra.mxu0 %v571
    %v796 = vpop.f32.mrf.mxu0
    %v797 = vadd.f32 0.0, %v796
    %v798 = vpop.f32.mrf.mxu0
    %v799 = vpop.f32.mrf.mxu0
    %v800 = vpop.f32.mrf.mxu0
    %801 = vdwg.mxu0
    %v802 = vmax.f32 %v745, %v743
    %v803 = vmax.f32 %v802, %v682
    %v804 = vmul.f32 %v803, 0.75
    %v805 = vmul.f32 %v797, 0.25
    %v806 = vadd.f32 %v804, %v805
    %807 = vst [vmem:[%s293] sm:$0xff] %v806
    %v808 = vld [vmem:[%s357] sm:$0xff]
    %v809 = vld [vmem:[%s295] sm:$0xf]
    %v810 = vld [vmem:[%s295 + $0x4] sm:$0xf]
    %v811 = vld [vmem:[%s295 + $0x8] sm:$0xf]
    %v812 = vld [vmem:[%s295 + $0xc] sm:$0xf]
    %v817 = vunpack.c.l.b16 %v809
    %v818 = vunpack.c.l.b16 %v810
    %v819 = vunpack.c.l.b16 %v811
    %v820 = vunpack.c.l.b16 %v812
    %v821 = vpack.c.b16 %v818, %v817
    %v822 = vpack.c.b16 %v820, %v819
    %825 = vmatprep.subr.bf16.mxu0 0
    %826 = vmatpush1.bf16.msra.mxu0 0
    %827 = vmatprep.subr.bf16.mxu0 0
    %828 = vmatpush1.bf16.msra.mxu0 0
    %829 = vmatprep.subr.bf16.mxu0 0
    %830 = vmatpush1.bf16.msra.mxu0 0
    %831 = vmatprep.subr.bf16.mxu0 0
    %832 = vmatpush1.bf16.msra.mxu0 0
    %833 = vmatprep.subr.bf16.mxu0 0
    %834 = vmatpush1.bf16.msra.mxu0 0
    %835 = vmatprep.subr.bf16.mxu0 0
    %836 = vmatpush1.bf16.msra.mxu0 0
    %837 = vmatprep.subr.bf16.mxu0 0
    %838 = vmatpush1.bf16.msra.mxu0 %v822
    %839 = vmatprep.subr.bf16.mxu0 0
    %840 = vmatpush1.bf16.msra.mxu0 %v821
    %841 = vmatprep.subr.bf16.mxu0 0
    %842 = vmatpush2.bf16.msra.mxu0 0
    %843 = vmatprep.subr.bf16.mxu0 0
    %844 = vmatpush2.bf16.msra.mxu0 0
    %845 = vmatprep.subr.bf16.mxu0 0
    %846 = vmatpush2.bf16.msra.mxu0 0
    %847 = vmatprep.subr.bf16.mxu0 0
    %848 = vmatpush2.bf16.msra.mxu0 0
    %849 = vmatprep.subr.bf16.mxu0 0
    %850 = vmatpush2.bf16.msra.mxu0 0
    %851 = vmatprep.subr.bf16.mxu0 0
    %852 = vmatpush2.bf16.msra.mxu0 0
    %853 = vmatprep.subr.bf16.mxu0 0
    %854 = vmatpush2.bf16.msra.mxu0 0
    %855 = vmatprep.subr.bf16.mxu0 0
    %856 = vmatpush2.bf16.msra.mxu0 0
    %857 = vmatprep.mubr.bf16.mxu0 0
    %858 = vmatmul.mubr.bf16.gmra.mxu0 %v571
    %v859 = vpop.f32.mrf.mxu0
    %v860 = vadd.f32 0.0, %v859
    %v861 = vpop.f32.mrf.mxu0
    %v862 = vpop.f32.mrf.mxu0
    %v863 = vpop.f32.mrf.mxu0
    %864 = vdwg.mxu0
    %v865 = vmax.f32 %v808, %v806
    %v866 = vmax.f32 %v865, %v745
    %v867 = vmul.f32 %v866, 0.8
    %v868 = vmul.f32 %v860, 0.2
    %v869 = vadd.f32 %v867, %v868
    %870 = vst [vmem:[%s357] sm:$0xff] %v869
    %v871 = vld [vmem:[%s421] sm:$0xff]
    %v872 = vld [vmem:[%s359] sm:$0xf]
    %v873 = vld [vmem:[%s359 + $0x4] sm:$0xf]
    %v874 = vld [vmem:[%s359 + $0x8] sm:$0xf]
    %v875 = vld [vmem:[%s359 + $0xc] sm:$0xf]
    %v880 = vunpack.c.l.b16 %v872
    %v881 = vunpack.c.l.b16 %v873
    %v882 = vunpack.c.l.b16 %v874
    %v883 = vunpack.c.l.b16 %v875
    %v884 = vpack.c.b16 %v881, %v880
    %v885 = vpack.c.b16 %v883, %v882
    %888 = vmatprep.subr.bf16.mxu0 0
    %889 = vmatpush1.bf16.msra.mxu0 0
    %890 = vmatprep.subr.bf16.mxu0 0
    %891 = vmatpush1.bf16.msra.mxu0 0
    %892 = vmatprep.subr.bf16.mxu0 0
    %893 = vmatpush1.bf16.msra.mxu0 0
    %894 = vmatprep.subr.bf16.mxu0 0
    %895 = vmatpush1.bf16.msra.mxu0 0
    %896 = vmatprep.subr.bf16.mxu0 0
    %897 = vmatpush1.bf16.msra.mxu0 0
    %898 = vmatprep.subr.bf16.mxu0 0
    %899 = vmatpush1.bf16.msra.mxu0 0
    %900 = vmatprep.subr.bf16.mxu0 0
    %901 = vmatpush1.bf16.msra.mxu0 %v885
    %902 = vmatprep.subr.bf16.mxu0 0
    %903 = vmatpush1.bf16.msra.mxu0 %v884
    %904 = vmatprep.subr.bf16.mxu0 0
    %905 = vmatpush2.bf16.msra.mxu0 0
    %906 = vmatprep.subr.bf16.mxu0 0
    %907 = vmatpush2.bf16.msra.mxu0 0
    %908 = vmatprep.subr.bf16.mxu0 0
    %909 = vmatpush2.bf16.msra.mxu0 0
    %910 = vmatprep.subr.bf16.mxu0 0
    %911 = vmatpush2.bf16.msra.mxu0 0
    %912 = vmatprep.subr.bf16.mxu0 0
    %913 = vmatpush2.bf16.msra.mxu0 0
    %914 = vmatprep.subr.bf16.mxu0 0
    %915 = vmatpush2.bf16.msra.mxu0 0
    %916 = vmatprep.subr.bf16.mxu0 0
    %917 = vmatpush2.bf16.msra.mxu0 0
    %918 = vmatprep.subr.bf16.mxu0 0
    %919 = vmatpush2.bf16.msra.mxu0 0
    %920 = vmatprep.mubr.bf16.mxu0 0
    %921 = vmatmul.mubr.bf16.gmra.mxu0 %v571
    %v922 = vpop.f32.mrf.mxu0
    %v923 = vadd.f32 0.0, %v922
    %v924 = vpop.f32.mrf.mxu0
    %v925 = vpop.f32.mrf.mxu0
    %v926 = vpop.f32.mrf.mxu0
    %927 = vdwg.mxu0
    %v928 = vmax.f32 %v871, %v869
    %v929 = vmax.f32 %v928, %v808
    %v930 = vmul.f32 %v929, 0.8333333
    %v931 = vmul.f32 %v923, 0.16666667
    %v932 = vadd.f32 %v930, %v931
    %933 = vst [vmem:[%s421] sm:$0xff] %v932
    %v934 = vld [vmem:[%s485] sm:$0xff]
    %v935 = vld [vmem:[%s423] sm:$0xf]
    %v936 = vld [vmem:[%s423 + $0x4] sm:$0xf]
    %v937 = vld [vmem:[%s423 + $0x8] sm:$0xf]
    %v938 = vld [vmem:[%s423 + $0xc] sm:$0xf]
    %v943 = vunpack.c.l.b16 %v935
    %v944 = vunpack.c.l.b16 %v936
    %v945 = vunpack.c.l.b16 %v937
    %v946 = vunpack.c.l.b16 %v938
    %v947 = vpack.c.b16 %v944, %v943
    %v948 = vpack.c.b16 %v946, %v945
    %951 = vmatprep.subr.bf16.mxu0 0
    %952 = vmatpush1.bf16.msra.mxu0 0
    %953 = vmatprep.subr.bf16.mxu0 0
    %954 = vmatpush1.bf16.msra.mxu0 0
    %955 = vmatprep.subr.bf16.mxu0 0
    %956 = vmatpush1.bf16.msra.mxu0 0
    %957 = vmatprep.subr.bf16.mxu0 0
    %958 = vmatpush1.bf16.msra.mxu0 0
    %959 = vmatprep.subr.bf16.mxu0 0
    %960 = vmatpush1.bf16.msra.mxu0 0
    %961 = vmatprep.subr.bf16.mxu0 0
    %962 = vmatpush1.bf16.msra.mxu0 0
    %963 = vmatprep.subr.bf16.mxu0 0
    %964 = vmatpush1.bf16.msra.mxu0 %v948
    %965 = vmatprep.subr.bf16.mxu0 0
    %966 = vmatpush1.bf16.msra.mxu0 %v947
    %967 = vmatprep.subr.bf16.mxu0 0
    %968 = vmatpush2.bf16.msra.mxu0 0
    %969 = vmatprep.subr.bf16.mxu0 0
    %970 = vmatpush2.bf16.msra.mxu0 0
    %971 = vmatprep.subr.bf16.mxu0 0
    %972 = vmatpush2.bf16.msra.mxu0 0
    %973 = vmatprep.subr.bf16.mxu0 0
    %974 = vmatpush2.bf16.msra.mxu0 0
    %975 = vmatprep.subr.bf16.mxu0 0
    %976 = vmatpush2.bf16.msra.mxu0 0
    %977 = vmatprep.subr.bf16.mxu0 0
    %978 = vmatpush2.bf16.msra.mxu0 0
    %979 = vmatprep.subr.bf16.mxu0 0
    %980 = vmatpush2.bf16.msra.mxu0 0
    %981 = vmatprep.subr.bf16.mxu0 0
    %982 = vmatpush2.bf16.msra.mxu0 0
    %983 = vmatprep.mubr.bf16.mxu0 0
    %984 = vmatmul.mubr.bf16.gmra.mxu0 %v571
    %v985 = vpop.f32.mrf.mxu0
    %v986 = vadd.f32 0.0, %v985
    %v987 = vpop.f32.mrf.mxu0
    %v988 = vpop.f32.mrf.mxu0
    %v989 = vpop.f32.mrf.mxu0
    %990 = vdwg.mxu0
    %v991 = vmax.f32 %v934, %v932
    %v992 = vmax.f32 %v991, %v871
    %v993 = vmul.f32 %v992, 0.85714287
    %v994 = vmul.f32 %v986, 0.14285715
    %v995 = vadd.f32 %v993, %v994
    %996 = vst [vmem:[%s485] sm:$0xff] %v995
    %v997 = vld [vmem:[%s549] sm:$0xff]
    %v998 = vld [vmem:[%s487] sm:$0xf]
    %v999 = vld [vmem:[%s487 + $0x4] sm:$0xf]
    %v1000 = vld [vmem:[%s487 + $0x8] sm:$0xf]
    %v1001 = vld [vmem:[%s487 + $0xc] sm:$0xf]
    %v1006 = vunpack.c.l.b16 %v998
    %v1007 = vunpack.c.l.b16 %v999
    %v1008 = vunpack.c.l.b16 %v1000
    %v1009 = vunpack.c.l.b16 %v1001
    %v1010 = vpack.c.b16 %v1007, %v1006
    %v1011 = vpack.c.b16 %v1009, %v1008
    %1014 = vmatprep.subr.bf16.mxu0 0
    %1015 = vmatpush1.bf16.msra.mxu0 0
    %1016 = vmatprep.subr.bf16.mxu0 0
    %1017 = vmatpush1.bf16.msra.mxu0 0
    %1018 = vmatprep.subr.bf16.mxu0 0
    %1019 = vmatpush1.bf16.msra.mxu0 0
    %1020 = vmatprep.subr.bf16.mxu0 0
    %1021 = vmatpush1.bf16.msra.mxu0 0
    %1022 = vmatprep.subr.bf16.mxu0 0
    %1023 = vmatpush1.bf16.msra.mxu0 0
    %1024 = vmatprep.subr.bf16.mxu0 0
    %1025 = vmatpush1.bf16.msra.mxu0 0
    %1026 = vmatprep.subr.bf16.mxu0 0
    %1027 = vmatpush1.bf16.msra.mxu0 %v1011
    %1028 = vmatprep.subr.bf16.mxu0 0
    %1029 = vmatpush1.bf16.msra.mxu0 %v1010
    %1030 = vmatprep.subr.bf16.mxu0 0
    %1031 = vmatpush2.bf16.msra.mxu0 0
    %1032 = vmatprep.subr.bf16.mxu0 0
    %1033 = vmatpush2.bf16.msra.mxu0 0
    %1034 = vmatprep.subr.bf16.mxu0 0
    %1035 = vmatpush2.bf16.msra.mxu0 0
    %1036 = vmatprep.subr.bf16.mxu0 0
    %1037 = vmatpush2.bf16.msra.mxu0 0
    %1038 = vmatprep.subr.bf16.mxu0 0
    %1039 = vmatpush2.bf16.msra.mxu0 0
    %1040 = vmatprep.subr.bf16.mxu0 0
    %1041 = vmatpush2.bf16.msra.mxu0 0
    %1042 = vmatprep.subr.bf16.mxu0 0
    %1043 = vmatpush2.bf16.msra.mxu0 0
    %1044 = vmatprep.subr.bf16.mxu0 0
    %1045 = vmatpush2.bf16.msra.mxu0 0
    %1046 = vmatprep.mubr.bf16.mxu0 0
    %1047 = vmatmul.mubr.bf16.gmra.mxu0 %v571
    %v1048 = vpop.f32.mrf.mxu0
    %v1049 = vadd.f32 0.0, %v1048
    %v1050 = vpop.f32.mrf.mxu0
    %v1051 = vpop.f32.mrf.mxu0
    %v1052 = vpop.f32.mrf.mxu0
    %1053 = vdwg.mxu0
    %v1054 = vmax.f32 %v997, %v995
    %v1055 = vmax.f32 %v1054, %v934
    %v1056 = vmul.f32 %v1055, 0.875
    %v1057 = vmul.f32 %v1049, 0.125
    %v1058 = vadd.f32 %v1056, %v1057
    %1059 = vst [vmem:[%s549] sm:$0xff] %v1058
    %s1060 = scalar_lea.vmem [#allocation3], 8
    %v1061 = vld [vmem:[%s1060] sm:$0xf]
    %v1062 = vld [vmem:[#allocation2] sm:$0xff]
    %v1063 = vld [vmem:[#allocation6] sm:$0xf]
    %v1064 = vld [vmem:[#allocation6 + $0x4] sm:$0xf]
    %v1065 = vld [vmem:[#allocation6 + $0x8] sm:$0xf]
    %v1066 = vld [vmem:[#allocation6 + $0xc] sm:$0xf]
    %v1071 = vunpack.c.l.b16 %v1063
    %v1072 = vunpack.c.l.b16 %v1064
    %v1073 = vunpack.c.l.b16 %v1065
    %v1074 = vunpack.c.l.b16 %v1066
    %v1075 = vpack.c.b16 %v1072, %v1071
    %v1076 = vpack.c.b16 %v1074, %v1073
    %v1080 = vsel %vm58, %v1061, 0
    %1082 = vmatprep.subr.bf16.mxu0 0
    %1083 = vmatpush1.bf16.msra.mxu0 0
    %1084 = vmatprep.subr.bf16.mxu0 0
    %1085 = vmatpush1.bf16.msra.mxu0 0
    %1086 = vmatprep.subr.bf16.mxu0 0
    %1087 = vmatpush1.bf16.msra.mxu0 0
    %1088 = vmatprep.subr.bf16.mxu0 0
    %1089 = vmatpush1.bf16.msra.mxu0 0
    %1090 = vmatprep.subr.bf16.mxu0 0
    %1091 = vmatpush1.bf16.msra.mxu0 0
    %1092 = vmatprep.subr.bf16.mxu0 0
    %1093 = vmatpush1.bf16.msra.mxu0 0
    %1094 = vmatprep.subr.bf16.mxu0 0
    %1095 = vmatpush1.bf16.msra.mxu0 %v1076
    %1096 = vmatprep.subr.bf16.mxu0 0
    %1097 = vmatpush1.bf16.msra.mxu0 %v1075
    %1098 = vmatprep.subr.bf16.mxu0 0
    %1099 = vmatpush2.bf16.msra.mxu0 0
    %1100 = vmatprep.subr.bf16.mxu0 0
    %1101 = vmatpush2.bf16.msra.mxu0 0
    %1102 = vmatprep.subr.bf16.mxu0 0
    %1103 = vmatpush2.bf16.msra.mxu0 0
    %1104 = vmatprep.subr.bf16.mxu0 0
    %1105 = vmatpush2.bf16.msra.mxu0 0
    %1106 = vmatprep.subr.bf16.mxu0 0
    %1107 = vmatpush2.bf16.msra.mxu0 0
    %1108 = vmatprep.subr.bf16.mxu0 0
    %1109 = vmatpush2.bf16.msra.mxu0 0
    %1110 = vmatprep.subr.bf16.mxu0 0
    %1111 = vmatpush2.bf16.msra.mxu0 0
    %1112 = vmatprep.subr.bf16.mxu0 0
    %1113 = vmatpush2.bf16.msra.mxu0 0
    %1114 = vmatprep.mubr.bf16.mxu0 0
    %1115 = vmatmul.mubr.bf16.gmra.mxu0 %v1080
    %v1116 = vpop.f32.mrf.mxu0
    %v1117 = vadd.f32 0.0, %v1116
    %v1118 = vpop.f32.mrf.mxu0
    %v1119 = vpop.f32.mrf.mxu0
    %v1120 = vpop.f32.mrf.mxu0
    %1121 = vdwg.mxu0
    %v1122 = vmax.f32 %v1062, 0.0
    %v1123 = vmax.f32 %v1122, 0.0
    %v1124 = vmul.f32 %v1123, 0.6666667
    %v1125 = vmul.f32 %v1117, 0.33333334
    %v1126 = vadd.f32 %v1124, %v1125
    %1127 = vst [vmem:[#allocation2] sm:$0xff] %v1126
    %v1128 = vld [vmem:[%s165] sm:$0xff]
    %v1129 = vld [vmem:[%s103] sm:$0xf]
    %v1130 = vld [vmem:[%s103 + $0x4] sm:$0xf]
    %v1131 = vld [vmem:[%s103 + $0x8] sm:$0xf]
    %v1132 = vld [vmem:[%s103 + $0xc] sm:$0xf]
    %v1137 = vunpack.c.l.b16 %v1129
    %v1138 = vunpack.c.l.b16 %v1130
    %v1139 = vunpack.c.l.b16 %v1131
    %v1140 = vunpack.c.l.b16 %v1132
    %v1141 = vpack.c.b16 %v1138, %v1137
    %v1142 = vpack.c.b16 %v1140, %v1139
    %1145 = vmatprep.subr.bf16.mxu0 0
    %1146 = vmatpush1.bf16.msra.mxu0 0
    %1147 = vmatprep.subr.bf16.mxu0 0
    %1148 = vmatpush1.bf16.msra.mxu0 0
    %1149 = vmatprep.subr.bf16.mxu0 0
    %1150 = vmatpush1.bf16.msra.mxu0 0
    %1151 = vmatprep.subr.bf16.mxu0 0
    %1152 = vmatpush1.bf16.msra.mxu0 0
    %1153 = vmatprep.subr.bf16.mxu0 0
    %1154 = vmatpush1.bf16.msra.mxu0 0
    %1155 = vmatprep.subr.bf16.mxu0 0
    %1156 = vmatpush1.bf16.msra.mxu0 0
    %1157 = vmatprep.subr.bf16.mxu0 0
    %1158 = vmatpush1.bf16.msra.mxu0 %v1142
    %1159 = vmatprep.subr.bf16.mxu0 0
    %1160 = vmatpush1.bf16.msra.mxu0 %v1141
    %1161 = vmatprep.subr.bf16.mxu0 0
    %1162 = vmatpush2.bf16.msra.mxu0 0
    %1163 = vmatprep.subr.bf16.mxu0 0
    %1164 = vmatpush2.bf16.msra.mxu0 0
    %1165 = vmatprep.subr.bf16.mxu0 0
    %1166 = vmatpush2.bf16.msra.mxu0 0
    %1167 = vmatprep.subr.bf16.mxu0 0
    %1168 = vmatpush2.bf16.msra.mxu0 0
    %1169 = vmatprep.subr.bf16.mxu0 0
    %1170 = vmatpush2.bf16.msra.mxu0 0
    %1171 = vmatprep.subr.bf16.mxu0 0
    %1172 = vmatpush2.bf16.msra.mxu0 0
    %1173 = vmatprep.subr.bf16.mxu0 0
    %1174 = vmatpush2.bf16.msra.mxu0 0
    %1175 = vmatprep.subr.bf16.mxu0 0
    %1176 = vmatpush2.bf16.msra.mxu0 0
    %1177 = vmatprep.mubr.bf16.mxu0 0
    %1178 = vmatmul.mubr.bf16.gmra.mxu0 %v1080
    %v1179 = vpop.f32.mrf.mxu0
    %v1180 = vadd.f32 0.0, %v1179
    %v1181 = vpop.f32.mrf.mxu0
    %v1182 = vpop.f32.mrf.mxu0
    %v1183 = vpop.f32.mrf.mxu0
    %1184 = vdwg.mxu0
    %v1185 = vmax.f32 %v1128, %v1126
    %v1186 = vmax.f32 %v1185, %v1062
    %v1187 = vmul.f32 %v1186, 0.6666667
    %v1188 = vmul.f32 %v1180, 0.33333334
    %v1189 = vadd.f32 %v1187, %v1188
    %1190 = vst [vmem:[%s165] sm:$0xff] %v1189
    %v1191 = vld [vmem:[%s229] sm:$0xff]
    %v1192 = vld [vmem:[%s167] sm:$0xf]
    %v1193 = vld [vmem:[%s167 + $0x4] sm:$0xf]
    %v1194 = vld [vmem:[%s167 + $0x8] sm:$0xf]
    %v1195 = vld [vmem:[%s167 + $0xc] sm:$0xf]
    %v1200 = vunpack.c.l.b16 %v1192
    %v1201 = vunpack.c.l.b16 %v1193
    %v1202 = vunpack.c.l.b16 %v1194
    %v1203 = vunpack.c.l.b16 %v1195
    %v1204 = vpack.c.b16 %v1201, %v1200
    %v1205 = vpack.c.b16 %v1203, %v1202
    %1208 = vmatprep.subr.bf16.mxu0 0
    %1209 = vmatpush1.bf16.msra.mxu0 0
    %1210 = vmatprep.subr.bf16.mxu0 0
    %1211 = vmatpush1.bf16.msra.mxu0 0
    %1212 = vmatprep.subr.bf16.mxu0 0
    %1213 = vmatpush1.bf16.msra.mxu0 0
    %1214 = vmatprep.subr.bf16.mxu0 0
    %1215 = vmatpush1.bf16.msra.mxu0 0
    %1216 = vmatprep.subr.bf16.mxu0 0
    %1217 = vmatpush1.bf16.msra.mxu0 0
    %1218 = vmatprep.subr.bf16.mxu0 0
    %1219 = vmatpush1.bf16.msra.mxu0 0
    %1220 = vmatprep.subr.bf16.mxu0 0
    %1221 = vmatpush1.bf16.msra.mxu0 %v1205
    %1222 = vmatprep.subr.bf16.mxu0 0
    %1223 = vmatpush1.bf16.msra.mxu0 %v1204
    %1224 = vmatprep.subr.bf16.mxu0 0
    %1225 = vmatpush2.bf16.msra.mxu0 0
    %1226 = vmatprep.subr.bf16.mxu0 0
    %1227 = vmatpush2.bf16.msra.mxu0 0
    %1228 = vmatprep.subr.bf16.mxu0 0
    %1229 = vmatpush2.bf16.msra.mxu0 0
    %1230 = vmatprep.subr.bf16.mxu0 0
    %1231 = vmatpush2.bf16.msra.mxu0 0
    %1232 = vmatprep.subr.bf16.mxu0 0
    %1233 = vmatpush2.bf16.msra.mxu0 0
    %1234 = vmatprep.subr.bf16.mxu0 0
    %1235 = vmatpush2.bf16.msra.mxu0 0
    %1236 = vmatprep.subr.bf16.mxu0 0
    %1237 = vmatpush2.bf16.msra.mxu0 0
    %1238 = vmatprep.subr.bf16.mxu0 0
    %1239 = vmatpush2.bf16.msra.mxu0 0
    %1240 = vmatprep.mubr.bf16.mxu0 0
    %1241 = vmatmul.mubr.bf16.gmra.mxu0 %v1080
    %v1242 = vpop.f32.mrf.mxu0
    %v1243 = vadd.f32 0.0, %v1242
    %v1244 = vpop.f32.mrf.mxu0
    %v1245 = vpop.f32.mrf.mxu0
    %v1246 = vpop.f32.mrf.mxu0
    %1247 = vdwg.mxu0
    %v1248 = vmax.f32 %v1191, %v1189
    %v1249 = vmax.f32 %v1248, %v1128
    %v1250 = vmul.f32 %v1249, 0.6666667
    %v1251 = vmul.f32 %v1243, 0.33333334
    %v1252 = vadd.f32 %v1250, %v1251
    %1253 = vst [vmem:[%s229] sm:$0xff] %v1252
    %v1254 = vld [vmem:[%s293] sm:$0xff]
    %v1255 = vld [vmem:[%s231] sm:$0xf]
    %v1256 = vld [vmem:[%s231 + $0x4] sm:$0xf]
    %v1257 = vld [vmem:[%s231 + $0x8] sm:$0xf]
    %v1258 = vld [vmem:[%s231 + $0xc] sm:$0xf]
    %v1263 = vunpack.c.l.b16 %v1255
    %v1264 = vunpack.c.l.b16 %v1256
    %v1265 = vunpack.c.l.b16 %v1257
    %v1266 = vunpack.c.l.b16 %v1258
    %v1267 = vpack.c.b16 %v1264, %v1263
    %v1268 = vpack.c.b16 %v1266, %v1265
    %1271 = vmatprep.subr.bf16.mxu0 0
    %1272 = vmatpush1.bf16.msra.mxu0 0
    %1273 = vmatprep.subr.bf16.mxu0 0
    %1274 = vmatpush1.bf16.msra.mxu0 0
    %1275 = vmatprep.subr.bf16.mxu0 0
    %1276 = vmatpush1.bf16.msra.mxu0 0
    %1277 = vmatprep.subr.bf16.mxu0 0
    %1278 = vmatpush1.bf16.msra.mxu0 0
    %1279 = vmatprep.subr.bf16.mxu0 0
    %1280 = vmatpush1.bf16.msra.mxu0 0
    %1281 = vmatprep.subr.bf16.mxu0 0
    %1282 = vmatpush1.bf16.msra.mxu0 0
    %1283 = vmatprep.subr.bf16.mxu0 0
    %1284 = vmatpush1.bf16.msra.mxu0 %v1268
    %1285 = vmatprep.subr.bf16.mxu0 0
    %1286 = vmatpush1.bf16.msra.mxu0 %v1267
    %1287 = vmatprep.subr.bf16.mxu0 0
    %1288 = vmatpush2.bf16.msra.mxu0 0
    %1289 = vmatprep.subr.bf16.mxu0 0
    %1290 = vmatpush2.bf16.msra.mxu0 0
    %1291 = vmatprep.subr.bf16.mxu0 0
    %1292 = vmatpush2.bf16.msra.mxu0 0
    %1293 = vmatprep.subr.bf16.mxu0 0
    %1294 = vmatpush2.bf16.msra.mxu0 0
    %1295 = vmatprep.subr.bf16.mxu0 0
    %1296 = vmatpush2.bf16.msra.mxu0 0
    %1297 = vmatprep.subr.bf16.mxu0 0
    %1298 = vmatpush2.bf16.msra.mxu0 0
    %1299 = vmatprep.subr.bf16.mxu0 0
    %1300 = vmatpush2.bf16.msra.mxu0 0
    %1301 = vmatprep.subr.bf16.mxu0 0
    %1302 = vmatpush2.bf16.msra.mxu0 0
    %1303 = vmatprep.mubr.bf16.mxu0 0
    %1304 = vmatmul.mubr.bf16.gmra.mxu0 %v1080
    %v1305 = vpop.f32.mrf.mxu0
    %v1306 = vadd.f32 0.0, %v1305
    %v1307 = vpop.f32.mrf.mxu0
    %v1308 = vpop.f32.mrf.mxu0
    %v1309 = vpop.f32.mrf.mxu0
    %1310 = vdwg.mxu0
    %v1311 = vmax.f32 %v1254, %v1252
    %v1312 = vmax.f32 %v1311, %v1191
    %v1313 = vmul.f32 %v1312, 0.75
    %v1314 = vmul.f32 %v1306, 0.25
    %v1315 = vadd.f32 %v1313, %v1314
    %1316 = vst [vmem:[%s293] sm:$0xff] %v1315
    %v1317 = vld [vmem:[%s357] sm:$0xff]
    %v1318 = vld [vmem:[%s295] sm:$0xf]
    %v1319 = vld [vmem:[%s295 + $0x4] sm:$0xf]
    %v1320 = vld [vmem:[%s295 + $0x8] sm:$0xf]
    %v1321 = vld [vmem:[%s295 + $0xc] sm:$0xf]
    %v1326 = vunpack.c.l.b16 %v1318
    %v1327 = vunpack.c.l.b16 %v1319
    %v1328 = vunpack.c.l.b16 %v1320
    %v1329 = vunpack.c.l.b16 %v1321
    %v1330 = vpack.c.b16 %v1327, %v1326
    %v1331 = vpack.c.b16 %v1329, %v1328
    %1334 = vmatprep.subr.bf16.mxu0 0
    %1335 = vmatpush1.bf16.msra.mxu0 0
    %1336 = vmatprep.subr.bf16.mxu0 0
    %1337 = vmatpush1.bf16.msra.mxu0 0
    %1338 = vmatprep.subr.bf16.mxu0 0
    %1339 = vmatpush1.bf16.msra.mxu0 0
    %1340 = vmatprep.subr.bf16.mxu0 0
    %1341 = vmatpush1.bf16.msra.mxu0 0
    %1342 = vmatprep.subr.bf16.mxu0 0
    %1343 = vmatpush1.bf16.msra.mxu0 0
    %1344 = vmatprep.subr.bf16.mxu0 0
    %1345 = vmatpush1.bf16.msra.mxu0 0
    %1346 = vmatprep.subr.bf16.mxu0 0
    %1347 = vmatpush1.bf16.msra.mxu0 %v1331
    %1348 = vmatprep.subr.bf16.mxu0 0
    %1349 = vmatpush1.bf16.msra.mxu0 %v1330
    %1350 = vmatprep.subr.bf16.mxu0 0
    %1351 = vmatpush2.bf16.msra.mxu0 0
    %1352 = vmatprep.subr.bf16.mxu0 0
    %1353 = vmatpush2.bf16.msra.mxu0 0
    %1354 = vmatprep.subr.bf16.mxu0 0
    %1355 = vmatpush2.bf16.msra.mxu0 0
    %1356 = vmatprep.subr.bf16.mxu0 0
    %1357 = vmatpush2.bf16.msra.mxu0 0
    %1358 = vmatprep.subr.bf16.mxu0 0
    %1359 = vmatpush2.bf16.msra.mxu0 0
    %1360 = vmatprep.subr.bf16.mxu0 0
    %1361 = vmatpush2.bf16.msra.mxu0 0
    %1362 = vmatprep.subr.bf16.mxu0 0
    %1363 = vmatpush2.bf16.msra.mxu0 0
    %1364 = vmatprep.subr.bf16.mxu0 0
    %1365 = vmatpush2.bf16.msra.mxu0 0
    %1366 = vmatprep.mubr.bf16.mxu0 0
    %1367 = vmatmul.mubr.bf16.gmra.mxu0 %v1080
    %v1368 = vpop.f32.mrf.mxu0
    %v1369 = vadd.f32 0.0, %v1368
    %v1370 = vpop.f32.mrf.mxu0
    %v1371 = vpop.f32.mrf.mxu0
    %v1372 = vpop.f32.mrf.mxu0
    %1373 = vdwg.mxu0
    %v1374 = vmax.f32 %v1317, %v1315
    %v1375 = vmax.f32 %v1374, %v1254
    %v1376 = vmul.f32 %v1375, 0.8
    %v1377 = vmul.f32 %v1369, 0.2
    %v1378 = vadd.f32 %v1376, %v1377
    %1379 = vst [vmem:[%s357] sm:$0xff] %v1378
    %v1380 = vld [vmem:[%s421] sm:$0xff]
    %v1381 = vld [vmem:[%s359] sm:$0xf]
    %v1382 = vld [vmem:[%s359 + $0x4] sm:$0xf]
    %v1383 = vld [vmem:[%s359 + $0x8] sm:$0xf]
    %v1384 = vld [vmem:[%s359 + $0xc] sm:$0xf]
    %v1389 = vunpack.c.l.b16 %v1381
    %v1390 = vunpack.c.l.b16 %v1382
    %v1391 = vunpack.c.l.b16 %v1383
    %v1392 = vunpack.c.l.b16 %v1384
    %v1393 = vpack.c.b16 %v1390, %v1389
    %v1394 = vpack.c.b16 %v1392, %v1391
    %1397 = vmatprep.subr.bf16.mxu0 0
    %1398 = vmatpush1.bf16.msra.mxu0 0
    %1399 = vmatprep.subr.bf16.mxu0 0
    %1400 = vmatpush1.bf16.msra.mxu0 0
    %1401 = vmatprep.subr.bf16.mxu0 0
    %1402 = vmatpush1.bf16.msra.mxu0 0
    %1403 = vmatprep.subr.bf16.mxu0 0
    %1404 = vmatpush1.bf16.msra.mxu0 0
    %1405 = vmatprep.subr.bf16.mxu0 0
    %1406 = vmatpush1.bf16.msra.mxu0 0
    %1407 = vmatprep.subr.bf16.mxu0 0
    %1408 = vmatpush1.bf16.msra.mxu0 0
    %1409 = vmatprep.subr.bf16.mxu0 0
    %1410 = vmatpush1.bf16.msra.mxu0 %v1394
    %1411 = vmatprep.subr.bf16.mxu0 0
    %1412 = vmatpush1.bf16.msra.mxu0 %v1393
    %1413 = vmatprep.subr.bf16.mxu0 0
    %1414 = vmatpush2.bf16.msra.mxu0 0
    %1415 = vmatprep.subr.bf16.mxu0 0
    %1416 = vmatpush2.bf16.msra.mxu0 0
    %1417 = vmatprep.subr.bf16.mxu0 0
    %1418 = vmatpush2.bf16.msra.mxu0 0
    %1419 = vmatprep.subr.bf16.mxu0 0
    %1420 = vmatpush2.bf16.msra.mxu0 0
    %1421 = vmatprep.subr.bf16.mxu0 0
    %1422 = vmatpush2.bf16.msra.mxu0 0
    %1423 = vmatprep.subr.bf16.mxu0 0
    %1424 = vmatpush2.bf16.msra.mxu0 0
    %1425 = vmatprep.subr.bf16.mxu0 0
    %1426 = vmatpush2.bf16.msra.mxu0 0
    %1427 = vmatprep.subr.bf16.mxu0 0
    %1428 = vmatpush2.bf16.msra.mxu0 0
    %1429 = vmatprep.mubr.bf16.mxu0 0
    %1430 = vmatmul.mubr.bf16.gmra.mxu0 %v1080
    %v1431 = vpop.f32.mrf.mxu0
    %v1432 = vadd.f32 0.0, %v1431
    %v1433 = vpop.f32.mrf.mxu0
    %v1434 = vpop.f32.mrf.mxu0
    %v1435 = vpop.f32.mrf.mxu0
    %1436 = vdwg.mxu0
    %v1437 = vmax.f32 %v1380, %v1378
    %v1438 = vmax.f32 %v1437, %v1317
    %v1439 = vmul.f32 %v1438, 0.8333333
    %v1440 = vmul.f32 %v1432, 0.16666667
    %v1441 = vadd.f32 %v1439, %v1440
    %1442 = vst [vmem:[%s421] sm:$0xff] %v1441
    %v1443 = vld [vmem:[%s485] sm:$0xff]
    %v1444 = vld [vmem:[%s423] sm:$0xf]
    %v1445 = vld [vmem:[%s423 + $0x4] sm:$0xf]
    %v1446 = vld [vmem:[%s423 + $0x8] sm:$0xf]
    %v1447 = vld [vmem:[%s423 + $0xc] sm:$0xf]
    %v1452 = vunpack.c.l.b16 %v1444
    %v1453 = vunpack.c.l.b16 %v1445
    %v1454 = vunpack.c.l.b16 %v1446
    %v1455 = vunpack.c.l.b16 %v1447
    %v1456 = vpack.c.b16 %v1453, %v1452
    %v1457 = vpack.c.b16 %v1455, %v1454
    %1460 = vmatprep.subr.bf16.mxu0 0
    %1461 = vmatpush1.bf16.msra.mxu0 0
    %1462 = vmatprep.subr.bf16.mxu0 0
    %1463 = vmatpush1.bf16.msra.mxu0 0
    %1464 = vmatprep.subr.bf16.mxu0 0
    %1465 = vmatpush1.bf16.msra.mxu0 0
    %1466 = vmatprep.subr.bf16.mxu0 0
    %1467 = vmatpush1.bf16.msra.mxu0 0
    %1468 = vmatprep.subr.bf16.mxu0 0
    %1469 = vmatpush1.bf16.msra.mxu0 0
    %1470 = vmatprep.subr.bf16.mxu0 0
    %1471 = vmatpush1.bf16.msra.mxu0 0
    %1472 = vmatprep.subr.bf16.mxu0 0
    %1473 = vmatpush1.bf16.msra.mxu0 %v1457
    %1474 = vmatprep.subr.bf16.mxu0 0
    %1475 = vmatpush1.bf16.msra.mxu0 %v1456
    %1476 = vmatprep.subr.bf16.mxu0 0
    %1477 = vmatpush2.bf16.msra.mxu0 0
    %1478 = vmatprep.subr.bf16.mxu0 0
    %1479 = vmatpush2.bf16.msra.mxu0 0
    %1480 = vmatprep.subr.bf16.mxu0 0
    %1481 = vmatpush2.bf16.msra.mxu0 0
    %1482 = vmatprep.subr.bf16.mxu0 0
    %1483 = vmatpush2.bf16.msra.mxu0 0
    %1484 = vmatprep.subr.bf16.mxu0 0
    %1485 = vmatpush2.bf16.msra.mxu0 0
    %1486 = vmatprep.subr.bf16.mxu0 0
    %1487 = vmatpush2.bf16.msra.mxu0 0
    %1488 = vmatprep.subr.bf16.mxu0 0
    %1489 = vmatpush2.bf16.msra.mxu0 0
    %1490 = vmatprep.subr.bf16.mxu0 0
    %1491 = vmatpush2.bf16.msra.mxu0 0
    %1492 = vmatprep.mubr.bf16.mxu0 0
    %1493 = vmatmul.mubr.bf16.gmra.mxu0 %v1080
    %v1494 = vpop.f32.mrf.mxu0
    %v1495 = vadd.f32 0.0, %v1494
    %v1496 = vpop.f32.mrf.mxu0
    %v1497 = vpop.f32.mrf.mxu0
    %v1498 = vpop.f32.mrf.mxu0
    %1499 = vdwg.mxu0
    %v1500 = vmax.f32 %v1443, %v1441
    %v1501 = vmax.f32 %v1500, %v1380
    %v1502 = vmul.f32 %v1501, 0.85714287
    %v1503 = vmul.f32 %v1495, 0.14285715
    %v1504 = vadd.f32 %v1502, %v1503
    %1505 = vst [vmem:[%s485] sm:$0xff] %v1504
    %v1506 = vld [vmem:[%s549] sm:$0xff]
    %v1507 = vld [vmem:[%s487] sm:$0xf]
    %v1508 = vld [vmem:[%s487 + $0x4] sm:$0xf]
    %v1509 = vld [vmem:[%s487 + $0x8] sm:$0xf]
    %v1510 = vld [vmem:[%s487 + $0xc] sm:$0xf]
    %v1515 = vunpack.c.l.b16 %v1507
    %v1516 = vunpack.c.l.b16 %v1508
    %v1517 = vunpack.c.l.b16 %v1509
    %v1518 = vunpack.c.l.b16 %v1510
    %v1519 = vpack.c.b16 %v1516, %v1515
    %v1520 = vpack.c.b16 %v1518, %v1517
    %1523 = vmatprep.subr.bf16.mxu0 0
    %1524 = vmatpush1.bf16.msra.mxu0 0
    %1525 = vmatprep.subr.bf16.mxu0 0
    %1526 = vmatpush1.bf16.msra.mxu0 0
    %1527 = vmatprep.subr.bf16.mxu0 0
    %1528 = vmatpush1.bf16.msra.mxu0 0
    %1529 = vmatprep.subr.bf16.mxu0 0
    %1530 = vmatpush1.bf16.msra.mxu0 0
    %1531 = vmatprep.subr.bf16.mxu0 0
    %1532 = vmatpush1.bf16.msra.mxu0 0
    %1533 = vmatprep.subr.bf16.mxu0 0
    %1534 = vmatpush1.bf16.msra.mxu0 0
    %1535 = vmatprep.subr.bf16.mxu0 0
    %1536 = vmatpush1.bf16.msra.mxu0 %v1520
    %1537 = vmatprep.subr.bf16.mxu0 0
    %1538 = vmatpush1.bf16.msra.mxu0 %v1519
    %1539 = vmatprep.subr.bf16.mxu0 0
    %1540 = vmatpush2.bf16.msra.mxu0 0
    %1541 = vmatprep.subr.bf16.mxu0 0
    %1542 = vmatpush2.bf16.msra.mxu0 0
    %1543 = vmatprep.subr.bf16.mxu0 0
    %1544 = vmatpush2.bf16.msra.mxu0 0
    %1545 = vmatprep.subr.bf16.mxu0 0
    %1546 = vmatpush2.bf16.msra.mxu0 0
    %1547 = vmatprep.subr.bf16.mxu0 0
    %1548 = vmatpush2.bf16.msra.mxu0 0
    %1549 = vmatprep.subr.bf16.mxu0 0
    %1550 = vmatpush2.bf16.msra.mxu0 0
    %1551 = vmatprep.subr.bf16.mxu0 0
    %1552 = vmatpush2.bf16.msra.mxu0 0
    %1553 = vmatprep.subr.bf16.mxu0 0
    %1554 = vmatpush2.bf16.msra.mxu0 0
    %1555 = vmatprep.mubr.bf16.mxu0 0
    %1556 = vmatmul.mubr.bf16.gmra.mxu0 %v1080
    %v1557 = vpop.f32.mrf.mxu0
    %v1558 = vadd.f32 0.0, %v1557
    %v1559 = vpop.f32.mrf.mxu0
    %v1560 = vpop.f32.mrf.mxu0
    %v1561 = vpop.f32.mrf.mxu0
    %1562 = vdwg.mxu0
    %v1563 = vmax.f32 %v1506, %v1504
    %v1564 = vmax.f32 %v1563, %v1443
    %v1565 = vmul.f32 %v1564, 0.875
    %v1566 = vmul.f32 %v1558, 0.125
    %v1567 = vadd.f32 %v1565, %v1566
    %1568 = vst [vmem:[%s549] sm:$0xff] %v1567
    %s1569 = scalar_lea.vmem [#allocation3], 12
    %v1570 = vld [vmem:[%s1569] sm:$0xf]
    %v1571 = vld [vmem:[#allocation2] sm:$0xff]
    %v1572 = vld [vmem:[#allocation6] sm:$0xf]
    %v1573 = vld [vmem:[#allocation6 + $0x4] sm:$0xf]
    %v1574 = vld [vmem:[#allocation6 + $0x8] sm:$0xf]
    %v1575 = vld [vmem:[#allocation6 + $0xc] sm:$0xf]
    %v1580 = vunpack.c.l.b16 %v1572
    %v1581 = vunpack.c.l.b16 %v1573
    %v1582 = vunpack.c.l.b16 %v1574
    %v1583 = vunpack.c.l.b16 %v1575
    %v1584 = vpack.c.b16 %v1581, %v1580
    %v1585 = vpack.c.b16 %v1583, %v1582
    %v1589 = vsel %vm58, %v1570, 0
    %1591 = vmatprep.subr.bf16.mxu0 0
    %1592 = vmatpush1.bf16.msra.mxu0 0
    %1593 = vmatprep.subr.bf16.mxu0 0
    %1594 = vmatpush1.bf16.msra.mxu0 0
    %1595 = vmatprep.subr.bf16.mxu0 0
    %1596 = vmatpush1.bf16.msra.mxu0 0
    %1597 = vmatprep.subr.bf16.mxu0 0
    %1598 = vmatpush1.bf16.msra.mxu0 0
    %1599 = vmatprep.subr.bf16.mxu0 0
    %1600 = vmatpush1.bf16.msra.mxu0 0
    %1601 = vmatprep.subr.bf16.mxu0 0
    %1602 = vmatpush1.bf16.msra.mxu0 0
    %1603 = vmatprep.subr.bf16.mxu0 0
    %1604 = vmatpush1.bf16.msra.mxu0 %v1585
    %1605 = vmatprep.subr.bf16.mxu0 0
    %1606 = vmatpush1.bf16.msra.mxu0 %v1584
    %1607 = vmatprep.subr.bf16.mxu0 0
    %1608 = vmatpush2.bf16.msra.mxu0 0
    %1609 = vmatprep.subr.bf16.mxu0 0
    %1610 = vmatpush2.bf16.msra.mxu0 0
    %1611 = vmatprep.subr.bf16.mxu0 0
    %1612 = vmatpush2.bf16.msra.mxu0 0
    %1613 = vmatprep.subr.bf16.mxu0 0
    %1614 = vmatpush2.bf16.msra.mxu0 0
    %1615 = vmatprep.subr.bf16.mxu0 0
    %1616 = vmatpush2.bf16.msra.mxu0 0
    %1617 = vmatprep.subr.bf16.mxu0 0
    %1618 = vmatpush2.bf16.msra.mxu0 0
    %1619 = vmatprep.subr.bf16.mxu0 0
    %1620 = vmatpush2.bf16.msra.mxu0 0
    %1621 = vmatprep.subr.bf16.mxu0 0
    %1622 = vmatpush2.bf16.msra.mxu0 0
    %1623 = vmatprep.mubr.bf16.mxu0 0
    %1624 = vmatmul.mubr.bf16.gmra.mxu0 %v1589
    %v1625 = vpop.f32.mrf.mxu0
    %v1626 = vadd.f32 0.0, %v1625
    %v1627 = vpop.f32.mrf.mxu0
    %v1628 = vpop.f32.mrf.mxu0
    %v1629 = vpop.f32.mrf.mxu0
    %1630 = vdwg.mxu0
    %v1631 = vmax.f32 %v1571, 0.0
    %v1632 = vmax.f32 %v1631, 0.0
    %v1633 = vmul.f32 %v1632, 0.75
    %v1634 = vmul.f32 %v1626, 0.25
    %v1635 = vadd.f32 %v1633, %v1634
    %1636 = vst [vmem:[#allocation2] sm:$0xff] %v1635
    %v1637 = vld [vmem:[%s165] sm:$0xff]
    %v1638 = vld [vmem:[%s103] sm:$0xf]
    %v1639 = vld [vmem:[%s103 + $0x4] sm:$0xf]
    %v1640 = vld [vmem:[%s103 + $0x8] sm:$0xf]
    %v1641 = vld [vmem:[%s103 + $0xc] sm:$0xf]
    %v1646 = vunpack.c.l.b16 %v1638
    %v1647 = vunpack.c.l.b16 %v1639
    %v1648 = vunpack.c.l.b16 %v1640
    %v1649 = vunpack.c.l.b16 %v1641
    %v1650 = vpack.c.b16 %v1647, %v1646
    %v1651 = vpack.c.b16 %v1649, %v1648
    %1654 = vmatprep.subr.bf16.mxu0 0
    %1655 = vmatpush1.bf16.msra.mxu0 0
    %1656 = vmatprep.subr.bf16.mxu0 0
    %1657 = vmatpush1.bf16.msra.mxu0 0
    %1658 = vmatprep.subr.bf16.mxu0 0
    %1659 = vmatpush1.bf16.msra.mxu0 0
    %1660 = vmatprep.subr.bf16.mxu0 0
    %1661 = vmatpush1.bf16.msra.mxu0 0
    %1662 = vmatprep.subr.bf16.mxu0 0
    %1663 = vmatpush1.bf16.msra.mxu0 0
    %1664 = vmatprep.subr.bf16.mxu0 0
    %1665 = vmatpush1.bf16.msra.mxu0 0
    %1666 = vmatprep.subr.bf16.mxu0 0
    %1667 = vmatpush1.bf16.msra.mxu0 %v1651
    %1668 = vmatprep.subr.bf16.mxu0 0
    %1669 = vmatpush1.bf16.msra.mxu0 %v1650
    %1670 = vmatprep.subr.bf16.mxu0 0
    %1671 = vmatpush2.bf16.msra.mxu0 0
    %1672 = vmatprep.subr.bf16.mxu0 0
    %1673 = vmatpush2.bf16.msra.mxu0 0
    %1674 = vmatprep.subr.bf16.mxu0 0
    %1675 = vmatpush2.bf16.msra.mxu0 0
    %1676 = vmatprep.subr.bf16.mxu0 0
    %1677 = vmatpush2.bf16.msra.mxu0 0
    %1678 = vmatprep.subr.bf16.mxu0 0
    %1679 = vmatpush2.bf16.msra.mxu0 0
    %1680 = vmatprep.subr.bf16.mxu0 0
    %1681 = vmatpush2.bf16.msra.mxu0 0
    %1682 = vmatprep.subr.bf16.mxu0 0
    %1683 = vmatpush2.bf16.msra.mxu0 0
    %1684 = vmatprep.subr.bf16.mxu0 0
    %1685 = vmatpush2.bf16.msra.mxu0 0
    %1686 = vmatprep.mubr.bf16.mxu0 0
    %1687 = vmatmul.mubr.bf16.gmra.mxu0 %v1589
    %v1688 = vpop.f32.mrf.mxu0
    %v1689 = vadd.f32 0.0, %v1688
    %v1690 = vpop.f32.mrf.mxu0
    %v1691 = vpop.f32.mrf.mxu0
    %v1692 = vpop.f32.mrf.mxu0
    %1693 = vdwg.mxu0
    %v1694 = vmax.f32 %v1637, %v1635
    %v1695 = vmax.f32 %v1694, %v1571
    %v1696 = vmul.f32 %v1695, 0.75
    %v1697 = vmul.f32 %v1689, 0.25
    %v1698 = vadd.f32 %v1696, %v1697
    %1699 = vst [vmem:[%s165] sm:$0xff] %v1698
    %v1700 = vld [vmem:[%s229] sm:$0xff]
    %v1701 = vld [vmem:[%s167] sm:$0xf]
    %v1702 = vld [vmem:[%s167 + $0x4] sm:$0xf]
    %v1703 = vld [vmem:[%s167 + $0x8] sm:$0xf]
    %v1704 = vld [vmem:[%s167 + $0xc] sm:$0xf]
    %v1709 = vunpack.c.l.b16 %v1701
    %v1710 = vunpack.c.l.b16 %v1702
    %v1711 = vunpack.c.l.b16 %v1703
    %v1712 = vunpack.c.l.b16 %v1704
    %v1713 = vpack.c.b16 %v1710, %v1709
    %v1714 = vpack.c.b16 %v1712, %v1711
    %1717 = vmatprep.subr.bf16.mxu0 0
    %1718 = vmatpush1.bf16.msra.mxu0 0
    %1719 = vmatprep.subr.bf16.mxu0 0
    %1720 = vmatpush1.bf16.msra.mxu0 0
    %1721 = vmatprep.subr.bf16.mxu0 0
    %1722 = vmatpush1.bf16.msra.mxu0 0
    %1723 = vmatprep.subr.bf16.mxu0 0
    %1724 = vmatpush1.bf16.msra.mxu0 0
    %1725 = vmatprep.subr.bf16.mxu0 0
    %1726 = vmatpush1.bf16.msra.mxu0 0
    %1727 = vmatprep.subr.bf16.mxu0 0
    %1728 = vmatpush1.bf16.msra.mxu0 0
    %1729 = vmatprep.subr.bf16.mxu0 0
    %1730 = vmatpush1.bf16.msra.mxu0 %v1714
    %1731 = vmatprep.subr.bf16.mxu0 0
    %1732 = vmatpush1.bf16.msra.mxu0 %v1713
    %1733 = vmatprep.subr.bf16.mxu0 0
    %1734 = vmatpush2.bf16.msra.mxu0 0
    %1735 = vmatprep.subr.bf16.mxu0 0
    %1736 = vmatpush2.bf16.msra.mxu0 0
    %1737 = vmatprep.subr.bf16.mxu0 0
    %1738 = vmatpush2.bf16.msra.mxu0 0
    %1739 = vmatprep.subr.bf16.mxu0 0
    %1740 = vmatpush2.bf16.msra.mxu0 0
    %1741 = vmatprep.subr.bf16.mxu0 0
    %1742 = vmatpush2.bf16.msra.mxu0 0
    %1743 = vmatprep.subr.bf16.mxu0 0
    %1744 = vmatpush2.bf16.msra.mxu0 0
    %1745 = vmatprep.subr.bf16.mxu0 0
    %1746 = vmatpush2.bf16.msra.mxu0 0
    %1747 = vmatprep.subr.bf16.mxu0 0
    %1748 = vmatpush2.bf16.msra.mxu0 0
    %1749 = vmatprep.mubr.bf16.mxu0 0
    %1750 = vmatmul.mubr.bf16.gmra.mxu0 %v1589
    %v1751 = vpop.f32.mrf.mxu0
    %v1752 = vadd.f32 0.0, %v1751
    %v1753 = vpop.f32.mrf.mxu0
    %v1754 = vpop.f32.mrf.mxu0
    %v1755 = vpop.f32.mrf.mxu0
    %1756 = vdwg.mxu0
    %v1757 = vmax.f32 %v1700, %v1698
    %v1758 = vmax.f32 %v1757, %v1637
    %v1759 = vmul.f32 %v1758, 0.75
    %v1760 = vmul.f32 %v1752, 0.25
    %v1761 = vadd.f32 %v1759, %v1760
    %1762 = vst [vmem:[%s229] sm:$0xff] %v1761
    %v1763 = vld [vmem:[%s293] sm:$0xff]
    %v1764 = vld [vmem:[%s231] sm:$0xf]
    %v1765 = vld [vmem:[%s231 + $0x4] sm:$0xf]
    %v1766 = vld [vmem:[%s231 + $0x8] sm:$0xf]
    %v1767 = vld [vmem:[%s231 + $0xc] sm:$0xf]
    %v1772 = vunpack.c.l.b16 %v1764
    %v1773 = vunpack.c.l.b16 %v1765
    %v1774 = vunpack.c.l.b16 %v1766
    %v1775 = vunpack.c.l.b16 %v1767
    %v1776 = vpack.c.b16 %v1773, %v1772
    %v1777 = vpack.c.b16 %v1775, %v1774
    %1780 = vmatprep.subr.bf16.mxu0 0
    %1781 = vmatpush1.bf16.msra.mxu0 0
    %1782 = vmatprep.subr.bf16.mxu0 0
    %1783 = vmatpush1.bf16.msra.mxu0 0
    %1784 = vmatprep.subr.bf16.mxu0 0
    %1785 = vmatpush1.bf16.msra.mxu0 0
    %1786 = vmatprep.subr.bf16.mxu0 0
    %1787 = vmatpush1.bf16.msra.mxu0 0
    %1788 = vmatprep.subr.bf16.mxu0 0
    %1789 = vmatpush1.bf16.msra.mxu0 0
    %1790 = vmatprep.subr.bf16.mxu0 0
    %1791 = vmatpush1.bf16.msra.mxu0 0
    %1792 = vmatprep.subr.bf16.mxu0 0
    %1793 = vmatpush1.bf16.msra.mxu0 %v1777
    %1794 = vmatprep.subr.bf16.mxu0 0
    %1795 = vmatpush1.bf16.msra.mxu0 %v1776
    %1796 = vmatprep.subr.bf16.mxu0 0
    %1797 = vmatpush2.bf16.msra.mxu0 0
    %1798 = vmatprep.subr.bf16.mxu0 0
    %1799 = vmatpush2.bf16.msra.mxu0 0
    %1800 = vmatprep.subr.bf16.mxu0 0
    %1801 = vmatpush2.bf16.msra.mxu0 0
    %1802 = vmatprep.subr.bf16.mxu0 0
    %1803 = vmatpush2.bf16.msra.mxu0 0
    %1804 = vmatprep.subr.bf16.mxu0 0
    %1805 = vmatpush2.bf16.msra.mxu0 0
    %1806 = vmatprep.subr.bf16.mxu0 0
    %1807 = vmatpush2.bf16.msra.mxu0 0
    %1808 = vmatprep.subr.bf16.mxu0 0
    %1809 = vmatpush2.bf16.msra.mxu0 0
    %1810 = vmatprep.subr.bf16.mxu0 0
    %1811 = vmatpush2.bf16.msra.mxu0 0
    %1812 = vmatprep.mubr.bf16.mxu0 0
    %1813 = vmatmul.mubr.bf16.gmra.mxu0 %v1589
    %v1814 = vpop.f32.mrf.mxu0
    %v1815 = vadd.f32 0.0, %v1814
    %v1816 = vpop.f32.mrf.mxu0
    %v1817 = vpop.f32.mrf.mxu0
    %v1818 = vpop.f32.mrf.mxu0
    %1819 = vdwg.mxu0
    %v1820 = vmax.f32 %v1763, %v1761
    %v1821 = vmax.f32 %v1820, %v1700
    %v1822 = vmul.f32 %v1821, 0.75
    %v1823 = vmul.f32 %v1815, 0.25
    %v1824 = vadd.f32 %v1822, %v1823
    %1825 = vst [vmem:[%s293] sm:$0xff] %v1824
    %v1826 = vld [vmem:[%s357] sm:$0xff]
    %v1827 = vld [vmem:[%s295] sm:$0xf]
    %v1828 = vld [vmem:[%s295 + $0x4] sm:$0xf]
    %v1829 = vld [vmem:[%s295 + $0x8] sm:$0xf]
    %v1830 = vld [vmem:[%s295 + $0xc] sm:$0xf]
    %v1835 = vunpack.c.l.b16 %v1827
    %v1836 = vunpack.c.l.b16 %v1828
    %v1837 = vunpack.c.l.b16 %v1829
    %v1838 = vunpack.c.l.b16 %v1830
    %v1839 = vpack.c.b16 %v1836, %v1835
    %v1840 = vpack.c.b16 %v1838, %v1837
    %1843 = vmatprep.subr.bf16.mxu0 0
    %1844 = vmatpush1.bf16.msra.mxu0 0
    %1845 = vmatprep.subr.bf16.mxu0 0
    %1846 = vmatpush1.bf16.msra.mxu0 0
    %1847 = vmatprep.subr.bf16.mxu0 0
    %1848 = vmatpush1.bf16.msra.mxu0 0
    %1849 = vmatprep.subr.bf16.mxu0 0
    %1850 = vmatpush1.bf16.msra.mxu0 0
    %1851 = vmatprep.subr.bf16.mxu0 0
    %1852 = vmatpush1.bf16.msra.mxu0 0
    %1853 = vmatprep.subr.bf16.mxu0 0
    %1854 = vmatpush1.bf16.msra.mxu0 0
    %1855 = vmatprep.subr.bf16.mxu0 0
    %1856 = vmatpush1.bf16.msra.mxu0 %v1840
    %1857 = vmatprep.subr.bf16.mxu0 0
    %1858 = vmatpush1.bf16.msra.mxu0 %v1839
    %1859 = vmatprep.subr.bf16.mxu0 0
    %1860 = vmatpush2.bf16.msra.mxu0 0
    %1861 = vmatprep.subr.bf16.mxu0 0
    %1862 = vmatpush2.bf16.msra.mxu0 0
    %1863 = vmatprep.subr.bf16.mxu0 0
    %1864 = vmatpush2.bf16.msra.mxu0 0
    %1865 = vmatprep.subr.bf16.mxu0 0
    %1866 = vmatpush2.bf16.msra.mxu0 0
    %1867 = vmatprep.subr.bf16.mxu0 0
    %1868 = vmatpush2.bf16.msra.mxu0 0
    %1869 = vmatprep.subr.bf16.mxu0 0
    %1870 = vmatpush2.bf16.msra.mxu0 0
    %1871 = vmatprep.subr.bf16.mxu0 0
    %1872 = vmatpush2.bf16.msra.mxu0 0
    %1873 = vmatprep.subr.bf16.mxu0 0
    %1874 = vmatpush2.bf16.msra.mxu0 0
    %1875 = vmatprep.mubr.bf16.mxu0 0
    %1876 = vmatmul.mubr.bf16.gmra.mxu0 %v1589
    %v1877 = vpop.f32.mrf.mxu0
    %v1878 = vadd.f32 0.0, %v1877
    %v1879 = vpop.f32.mrf.mxu0
    %v1880 = vpop.f32.mrf.mxu0
    %v1881 = vpop.f32.mrf.mxu0
    %1882 = vdwg.mxu0
    %v1883 = vmax.f32 %v1826, %v1824
    %v1884 = vmax.f32 %v1883, %v1763
    %v1885 = vmul.f32 %v1884, 0.8
    %v1886 = vmul.f32 %v1878, 0.2
    %v1887 = vadd.f32 %v1885, %v1886
    %1888 = vst [vmem:[%s357] sm:$0xff] %v1887
    %v1889 = vld [vmem:[%s421] sm:$0xff]
    %v1890 = vld [vmem:[%s359] sm:$0xf]
    %v1891 = vld [vmem:[%s359 + $0x4] sm:$0xf]
    %v1892 = vld [vmem:[%s359 + $0x8] sm:$0xf]
    %v1893 = vld [vmem:[%s359 + $0xc] sm:$0xf]
    %v1898 = vunpack.c.l.b16 %v1890
    %v1899 = vunpack.c.l.b16 %v1891
    %v1900 = vunpack.c.l.b16 %v1892
    %v1901 = vunpack.c.l.b16 %v1893
    %v1902 = vpack.c.b16 %v1899, %v1898
    %v1903 = vpack.c.b16 %v1901, %v1900
    %1906 = vmatprep.subr.bf16.mxu0 0
    %1907 = vmatpush1.bf16.msra.mxu0 0
    %1908 = vmatprep.subr.bf16.mxu0 0
    %1909 = vmatpush1.bf16.msra.mxu0 0
    %1910 = vmatprep.subr.bf16.mxu0 0
    %1911 = vmatpush1.bf16.msra.mxu0 0
    %1912 = vmatprep.subr.bf16.mxu0 0
    %1913 = vmatpush1.bf16.msra.mxu0 0
    %1914 = vmatprep.subr.bf16.mxu0 0
    %1915 = vmatpush1.bf16.msra.mxu0 0
    %1916 = vmatprep.subr.bf16.mxu0 0
    %1917 = vmatpush1.bf16.msra.mxu0 0
    %1918 = vmatprep.subr.bf16.mxu0 0
    %1919 = vmatpush1.bf16.msra.mxu0 %v1903
    %1920 = vmatprep.subr.bf16.mxu0 0
    %1921 = vmatpush1.bf16.msra.mxu0 %v1902
    %1922 = vmatprep.subr.bf16.mxu0 0
    %1923 = vmatpush2.bf16.msra.mxu0 0
    %1924 = vmatprep.subr.bf16.mxu0 0
    %1925 = vmatpush2.bf16.msra.mxu0 0
    %1926 = vmatprep.subr.bf16.mxu0 0
    %1927 = vmatpush2.bf16.msra.mxu0 0
    %1928 = vmatprep.subr.bf16.mxu0 0
    %1929 = vmatpush2.bf16.msra.mxu0 0
    %1930 = vmatprep.subr.bf16.mxu0 0
    %1931 = vmatpush2.bf16.msra.mxu0 0
    %1932 = vmatprep.subr.bf16.mxu0 0
    %1933 = vmatpush2.bf16.msra.mxu0 0
    %1934 = vmatprep.subr.bf16.mxu0 0
    %1935 = vmatpush2.bf16.msra.mxu0 0
    %1936 = vmatprep.subr.bf16.mxu0 0
    %1937 = vmatpush2.bf16.msra.mxu0 0
    %1938 = vmatprep.mubr.bf16.mxu0 0
    %1939 = vmatmul.mubr.bf16.gmra.mxu0 %v1589
    %v1940 = vpop.f32.mrf.mxu0
    %v1941 = vadd.f32 0.0, %v1940
    %v1942 = vpop.f32.mrf.mxu0
    %v1943 = vpop.f32.mrf.mxu0
    %v1944 = vpop.f32.mrf.mxu0
    %1945 = vdwg.mxu0
    %v1946 = vmax.f32 %v1889, %v1887
    %v1947 = vmax.f32 %v1946, %v1826
    %v1948 = vmul.f32 %v1947, 0.8333333
    %v1949 = vmul.f32 %v1941, 0.16666667
    %v1950 = vadd.f32 %v1948, %v1949
    %1951 = vst [vmem:[%s421] sm:$0xff] %v1950
    %v1952 = vld [vmem:[%s485] sm:$0xff]
    %v1953 = vld [vmem:[%s423] sm:$0xf]
    %v1954 = vld [vmem:[%s423 + $0x4] sm:$0xf]
    %v1955 = vld [vmem:[%s423 + $0x8] sm:$0xf]
    %v1956 = vld [vmem:[%s423 + $0xc] sm:$0xf]
    %v1961 = vunpack.c.l.b16 %v1953
    %v1962 = vunpack.c.l.b16 %v1954
    %v1963 = vunpack.c.l.b16 %v1955
    %v1964 = vunpack.c.l.b16 %v1956
    %v1965 = vpack.c.b16 %v1962, %v1961
    %v1966 = vpack.c.b16 %v1964, %v1963
    %1969 = vmatprep.subr.bf16.mxu0 0
    %1970 = vmatpush1.bf16.msra.mxu0 0
    %1971 = vmatprep.subr.bf16.mxu0 0
    %1972 = vmatpush1.bf16.msra.mxu0 0
    %1973 = vmatprep.subr.bf16.mxu0 0
    %1974 = vmatpush1.bf16.msra.mxu0 0
    %1975 = vmatprep.subr.bf16.mxu0 0
    %1976 = vmatpush1.bf16.msra.mxu0 0
    %1977 = vmatprep.subr.bf16.mxu0 0
    %1978 = vmatpush1.bf16.msra.mxu0 0
    %1979 = vmatprep.subr.bf16.mxu0 0
    %1980 = vmatpush1.bf16.msra.mxu0 0
    %1981 = vmatprep.subr.bf16.mxu0 0
    %1982 = vmatpush1.bf16.msra.mxu0 %v1966
    %1983 = vmatprep.subr.bf16.mxu0 0
    %1984 = vmatpush1.bf16.msra.mxu0 %v1965
    %1985 = vmatprep.subr.bf16.mxu0 0
    %1986 = vmatpush2.bf16.msra.mxu0 0
    %1987 = vmatprep.subr.bf16.mxu0 0
    %1988 = vmatpush2.bf16.msra.mxu0 0
    %1989 = vmatprep.subr.bf16.mxu0 0
    %1990 = vmatpush2.bf16.msra.mxu0 0
    %1991 = vmatprep.subr.bf16.mxu0 0
    %1992 = vmatpush2.bf16.msra.mxu0 0
    %1993 = vmatprep.subr.bf16.mxu0 0
    %1994 = vmatpush2.bf16.msra.mxu0 0
    %1995 = vmatprep.subr.bf16.mxu0 0
    %1996 = vmatpush2.bf16.msra.mxu0 0
    %1997 = vmatprep.subr.bf16.mxu0 0
    %1998 = vmatpush2.bf16.msra.mxu0 0
    %1999 = vmatprep.subr.bf16.mxu0 0
    %2000 = vmatpush2.bf16.msra.mxu0 0
    %2001 = vmatprep.mubr.bf16.mxu0 0
    %2002 = vmatmul.mubr.bf16.gmra.mxu0 %v1589
    %v2003 = vpop.f32.mrf.mxu0
    %v2004 = vadd.f32 0.0, %v2003
    %v2005 = vpop.f32.mrf.mxu0
    %v2006 = vpop.f32.mrf.mxu0
    %v2007 = vpop.f32.mrf.mxu0
    %2008 = vdwg.mxu0
    %v2009 = vmax.f32 %v1952, %v1950
    %v2010 = vmax.f32 %v2009, %v1889
    %v2011 = vmul.f32 %v2010, 0.85714287
    %v2012 = vmul.f32 %v2004, 0.14285715
    %v2013 = vadd.f32 %v2011, %v2012
    %2014 = vst [vmem:[%s485] sm:$0xff] %v2013
    %v2015 = vld [vmem:[%s549] sm:$0xff]
    %v2016 = vld [vmem:[%s487] sm:$0xf]
    %v2017 = vld [vmem:[%s487 + $0x4] sm:$0xf]
    %v2018 = vld [vmem:[%s487 + $0x8] sm:$0xf]
    %v2019 = vld [vmem:[%s487 + $0xc] sm:$0xf]
    %v2024 = vunpack.c.l.b16 %v2016
    %v2025 = vunpack.c.l.b16 %v2017
    %v2026 = vunpack.c.l.b16 %v2018
    %v2027 = vunpack.c.l.b16 %v2019
    %v2028 = vpack.c.b16 %v2025, %v2024
    %v2029 = vpack.c.b16 %v2027, %v2026
    %2032 = vmatprep.subr.bf16.mxu0 0
    %2033 = vmatpush1.bf16.msra.mxu0 0
    %2034 = vmatprep.subr.bf16.mxu0 0
    %2035 = vmatpush1.bf16.msra.mxu0 0
    %2036 = vmatprep.subr.bf16.mxu0 0
    %2037 = vmatpush1.bf16.msra.mxu0 0
    %2038 = vmatprep.subr.bf16.mxu0 0
    %2039 = vmatpush1.bf16.msra.mxu0 0
    %2040 = vmatprep.subr.bf16.mxu0 0
    %2041 = vmatpush1.bf16.msra.mxu0 0
    %2042 = vmatprep.subr.bf16.mxu0 0
    %2043 = vmatpush1.bf16.msra.mxu0 0
    %2044 = vmatprep.subr.bf16.mxu0 0
    %2045 = vmatpush1.bf16.msra.mxu0 %v2029
    %2046 = vmatprep.subr.bf16.mxu0 0
    %2047 = vmatpush1.bf16.msra.mxu0 %v2028
    %2048 = vmatprep.subr.bf16.mxu0 0
    %2049 = vmatpush2.bf16.msra.mxu0 0
    %2050 = vmatprep.subr.bf16.mxu0 0
    %2051 = vmatpush2.bf16.msra.mxu0 0
    %2052 = vmatprep.subr.bf16.mxu0 0
    %2053 = vmatpush2.bf16.msra.mxu0 0
    %2054 = vmatprep.subr.bf16.mxu0 0
    %2055 = vmatpush2.bf16.msra.mxu0 0
    %2056 = vmatprep.subr.bf16.mxu0 0
    %2057 = vmatpush2.bf16.msra.mxu0 0
    %2058 = vmatprep.subr.bf16.mxu0 0
    %2059 = vmatpush2.bf16.msra.mxu0 0
    %2060 = vmatprep.subr.bf16.mxu0 0
    %2061 = vmatpush2.bf16.msra.mxu0 0
    %2062 = vmatprep.subr.bf16.mxu0 0
    %2063 = vmatpush2.bf16.msra.mxu0 0
    %2064 = vmatprep.mubr.bf16.mxu0 0
    %2065 = vmatmul.mubr.bf16.gmra.mxu0 %v1589
    %v2066 = vpop.f32.mrf.mxu0
    %v2067 = vadd.f32 0.0, %v2066
    %v2068 = vpop.f32.mrf.mxu0
    %v2069 = vpop.f32.mrf.mxu0
    %v2070 = vpop.f32.mrf.mxu0
    %2071 = vdwg.mxu0
    %v2072 = vmax.f32 %v2015, %v2013
    %v2073 = vmax.f32 %v2072, %v1952
    %v2074 = vmul.f32 %v2073, 0.875
    %v2075 = vmul.f32 %v2067, 0.125
    %v2076 = vadd.f32 %v2074, %v2075
    %2077 = vst [vmem:[%s549] sm:$0xff] %v2076
    %s2078 = scalar_lea.vmem [#allocation3], 16
    %v2079 = vld [vmem:[%s2078] sm:$0xf]
    %v2080 = vld [vmem:[#allocation2] sm:$0xff]
    %v2081 = vld [vmem:[#allocation6] sm:$0xf]
    %v2082 = vld [vmem:[#allocation6 + $0x4] sm:$0xf]
    %v2083 = vld [vmem:[#allocation6 + $0x8] sm:$0xf]
    %v2084 = vld [vmem:[#allocation6 + $0xc] sm:$0xf]
    %v2089 = vunpack.c.l.b16 %v2081
    %v2090 = vunpack.c.l.b16 %v2082
    %v2091 = vunpack.c.l.b16 %v2083
    %v2092 = vunpack.c.l.b16 %v2084
    %v2093 = vpack.c.b16 %v2090, %v2089
    %v2094 = vpack.c.b16 %v2092, %v2091
    %v2098 = vsel %vm58, %v2079, 0
    %2100 = vmatprep.subr.bf16.mxu0 0
    %2101 = vmatpush1.bf16.msra.mxu0 0
    %2102 = vmatprep.subr.bf16.mxu0 0
    %2103 = vmatpush1.bf16.msra.mxu0 0
    %2104 = vmatprep.subr.bf16.mxu0 0
    %2105 = vmatpush1.bf16.msra.mxu0 0
    %2106 = vmatprep.subr.bf16.mxu0 0
    %2107 = vmatpush1.bf16.msra.mxu0 0
    %2108 = vmatprep.subr.bf16.mxu0 0
    %2109 = vmatpush1.bf16.msra.mxu0 0
    %2110 = vmatprep.subr.bf16.mxu0 0
    %2111 = vmatpush1.bf16.msra.mxu0 0
    %2112 = vmatprep.subr.bf16.mxu0 0
    %2113 = vmatpush1.bf16.msra.mxu0 %v2094
    %2114 = vmatprep.subr.bf16.mxu0 0
    %2115 = vmatpush1.bf16.msra.mxu0 %v2093
    %2116 = vmatprep.subr.bf16.mxu0 0
    %2117 = vmatpush2.bf16.msra.mxu0 0
    %2118 = vmatprep.subr.bf16.mxu0 0
    %2119 = vmatpush2.bf16.msra.mxu0 0
    %2120 = vmatprep.subr.bf16.mxu0 0
    %2121 = vmatpush2.bf16.msra.mxu0 0
    %2122 = vmatprep.subr.bf16.mxu0 0
    %2123 = vmatpush2.bf16.msra.mxu0 0
    %2124 = vmatprep.subr.bf16.mxu0 0
    %2125 = vmatpush2.bf16.msra.mxu0 0
    %2126 = vmatprep.subr.bf16.mxu0 0
    %2127 = vmatpush2.bf16.msra.mxu0 0
    %2128 = vmatprep.subr.bf16.mxu0 0
    %2129 = vmatpush2.bf16.msra.mxu0 0
    %2130 = vmatprep.subr.bf16.mxu0 0
    %2131 = vmatpush2.bf16.msra.mxu0 0
    %2132 = vmatprep.mubr.bf16.mxu0 0
    %2133 = vmatmul.mubr.bf16.gmra.mxu0 %v2098
    %v2134 = vpop.f32.mrf.mxu0
    %v2135 = vadd.f32 0.0, %v2134
    %v2136 = vpop.f32.mrf.mxu0
    %v2137 = vpop.f32.mrf.mxu0
    %v2138 = vpop.f32.mrf.mxu0
    %2139 = vdwg.mxu0
    %v2140 = vmax.f32 %v2080, 0.0
    %v2141 = vmax.f32 %v2140, 0.0
    %v2142 = vmul.f32 %v2141, 0.8
    %v2143 = vmul.f32 %v2135, 0.2
    %v2144 = vadd.f32 %v2142, %v2143
    %2145 = vst [vmem:[#allocation2] sm:$0xff] %v2144
    %v2146 = vld [vmem:[%s165] sm:$0xff]
    %v2147 = vld [vmem:[%s103] sm:$0xf]
    %v2148 = vld [vmem:[%s103 + $0x4] sm:$0xf]
    %v2149 = vld [vmem:[%s103 + $0x8] sm:$0xf]
    %v2150 = vld [vmem:[%s103 + $0xc] sm:$0xf]
    %v2155 = vunpack.c.l.b16 %v2147
    %v2156 = vunpack.c.l.b16 %v2148
    %v2157 = vunpack.c.l.b16 %v2149
    %v2158 = vunpack.c.l.b16 %v2150
    %v2159 = vpack.c.b16 %v2156, %v2155
    %v2160 = vpack.c.b16 %v2158, %v2157
    %2163 = vmatprep.subr.bf16.mxu0 0
    %2164 = vmatpush1.bf16.msra.mxu0 0
    %2165 = vmatprep.subr.bf16.mxu0 0
    %2166 = vmatpush1.bf16.msra.mxu0 0
    %2167 = vmatprep.subr.bf16.mxu0 0
    %2168 = vmatpush1.bf16.msra.mxu0 0
    %2169 = vmatprep.subr.bf16.mxu0 0
    %2170 = vmatpush1.bf16.msra.mxu0 0
    %2171 = vmatprep.subr.bf16.mxu0 0
    %2172 = vmatpush1.bf16.msra.mxu0 0
    %2173 = vmatprep.subr.bf16.mxu0 0
    %2174 = vmatpush1.bf16.msra.mxu0 0
    %2175 = vmatprep.subr.bf16.mxu0 0
    %2176 = vmatpush1.bf16.msra.mxu0 %v2160
    %2177 = vmatprep.subr.bf16.mxu0 0
    %2178 = vmatpush1.bf16.msra.mxu0 %v2159
    %2179 = vmatprep.subr.bf16.mxu0 0
    %2180 = vmatpush2.bf16.msra.mxu0 0
    %2181 = vmatprep.subr.bf16.mxu0 0
    %2182 = vmatpush2.bf16.msra.mxu0 0
    %2183 = vmatprep.subr.bf16.mxu0 0
    %2184 = vmatpush2.bf16.msra.mxu0 0
    %2185 = vmatprep.subr.bf16.mxu0 0
    %2186 = vmatpush2.bf16.msra.mxu0 0
    %2187 = vmatprep.subr.bf16.mxu0 0
    %2188 = vmatpush2.bf16.msra.mxu0 0
    %2189 = vmatprep.subr.bf16.mxu0 0
    %2190 = vmatpush2.bf16.msra.mxu0 0
    %2191 = vmatprep.subr.bf16.mxu0 0
    %2192 = vmatpush2.bf16.msra.mxu0 0
    %2193 = vmatprep.subr.bf16.mxu0 0
    %2194 = vmatpush2.bf16.msra.mxu0 0
    %2195 = vmatprep.mubr.bf16.mxu0 0
    %2196 = vmatmul.mubr.bf16.gmra.mxu0 %v2098
    %v2197 = vpop.f32.mrf.mxu0
    %v2198 = vadd.f32 0.0, %v2197
    %v2199 = vpop.f32.mrf.mxu0
    %v2200 = vpop.f32.mrf.mxu0
    %v2201 = vpop.f32.mrf.mxu0
    %2202 = vdwg.mxu0
    %v2203 = vmax.f32 %v2146, %v2144
    %v2204 = vmax.f32 %v2203, %v2080
    %v2205 = vmul.f32 %v2204, 0.8
    %v2206 = vmul.f32 %v2198, 0.2
    %v2207 = vadd.f32 %v2205, %v2206
    %2208 = vst [vmem:[%s165] sm:$0xff] %v2207
    %v2209 = vld [vmem:[%s229] sm:$0xff]
    %v2210 = vld [vmem:[%s167] sm:$0xf]
    %v2211 = vld [vmem:[%s167 + $0x4] sm:$0xf]
    %v2212 = vld [vmem:[%s167 + $0x8] sm:$0xf]
    %v2213 = vld [vmem:[%s167 + $0xc] sm:$0xf]
    %v2218 = vunpack.c.l.b16 %v2210
    %v2219 = vunpack.c.l.b16 %v2211
    %v2220 = vunpack.c.l.b16 %v2212
    %v2221 = vunpack.c.l.b16 %v2213
    %v2222 = vpack.c.b16 %v2219, %v2218
    %v2223 = vpack.c.b16 %v2221, %v2220
    %2226 = vmatprep.subr.bf16.mxu0 0
    %2227 = vmatpush1.bf16.msra.mxu0 0
    %2228 = vmatprep.subr.bf16.mxu0 0
    %2229 = vmatpush1.bf16.msra.mxu0 0
    %2230 = vmatprep.subr.bf16.mxu0 0
    %2231 = vmatpush1.bf16.msra.mxu0 0
    %2232 = vmatprep.subr.bf16.mxu0 0
    %2233 = vmatpush1.bf16.msra.mxu0 0
    %2234 = vmatprep.subr.bf16.mxu0 0
    %2235 = vmatpush1.bf16.msra.mxu0 0
    %2236 = vmatprep.subr.bf16.mxu0 0
    %2237 = vmatpush1.bf16.msra.mxu0 0
    %2238 = vmatprep.subr.bf16.mxu0 0
    %2239 = vmatpush1.bf16.msra.mxu0 %v2223
    %2240 = vmatprep.subr.bf16.mxu0 0
    %2241 = vmatpush1.bf16.msra.mxu0 %v2222
    %2242 = vmatprep.subr.bf16.mxu0 0
    %2243 = vmatpush2.bf16.msra.mxu0 0
    %2244 = vmatprep.subr.bf16.mxu0 0
    %2245 = vmatpush2.bf16.msra.mxu0 0
    %2246 = vmatprep.subr.bf16.mxu0 0
    %2247 = vmatpush2.bf16.msra.mxu0 0
    %2248 = vmatprep.subr.bf16.mxu0 0
    %2249 = vmatpush2.bf16.msra.mxu0 0
    %2250 = vmatprep.subr.bf16.mxu0 0
    %2251 = vmatpush2.bf16.msra.mxu0 0
    %2252 = vmatprep.subr.bf16.mxu0 0
    %2253 = vmatpush2.bf16.msra.mxu0 0
    %2254 = vmatprep.subr.bf16.mxu0 0
    %2255 = vmatpush2.bf16.msra.mxu0 0
    %2256 = vmatprep.subr.bf16.mxu0 0
    %2257 = vmatpush2.bf16.msra.mxu0 0
    %2258 = vmatprep.mubr.bf16.mxu0 0
    %2259 = vmatmul.mubr.bf16.gmra.mxu0 %v2098
    %v2260 = vpop.f32.mrf.mxu0
    %v2261 = vadd.f32 0.0, %v2260
    %v2262 = vpop.f32.mrf.mxu0
    %v2263 = vpop.f32.mrf.mxu0
    %v2264 = vpop.f32.mrf.mxu0
    %2265 = vdwg.mxu0
    %v2266 = vmax.f32 %v2209, %v2207
    %v2267 = vmax.f32 %v2266, %v2146
    %v2268 = vmul.f32 %v2267, 0.8
    %v2269 = vmul.f32 %v2261, 0.2
    %v2270 = vadd.f32 %v2268, %v2269
    %2271 = vst [vmem:[%s229] sm:$0xff] %v2270
    %v2272 = vld [vmem:[%s293] sm:$0xff]
    %v2273 = vld [vmem:[%s231] sm:$0xf]
    %v2274 = vld [vmem:[%s231 + $0x4] sm:$0xf]
    %v2275 = vld [vmem:[%s231 + $0x8] sm:$0xf]
    %v2276 = vld [vmem:[%s231 + $0xc] sm:$0xf]
    %v2281 = vunpack.c.l.b16 %v2273
    %v2282 = vunpack.c.l.b16 %v2274
    %v2283 = vunpack.c.l.b16 %v2275
    %v2284 = vunpack.c.l.b16 %v2276
    %v2285 = vpack.c.b16 %v2282, %v2281
    %v2286 = vpack.c.b16 %v2284, %v2283
    %2289 = vmatprep.subr.bf16.mxu0 0
    %2290 = vmatpush1.bf16.msra.mxu0 0
    %2291 = vmatprep.subr.bf16.mxu0 0
    %2292 = vmatpush1.bf16.msra.mxu0 0
    %2293 = vmatprep.subr.bf16.mxu0 0
    %2294 = vmatpush1.bf16.msra.mxu0 0
    %2295 = vmatprep.subr.bf16.mxu0 0
    %2296 = vmatpush1.bf16.msra.mxu0 0
    %2297 = vmatprep.subr.bf16.mxu0 0
    %2298 = vmatpush1.bf16.msra.mxu0 0
    %2299 = vmatprep.subr.bf16.mxu0 0
    %2300 = vmatpush1.bf16.msra.mxu0 0
    %2301 = vmatprep.subr.bf16.mxu0 0
    %2302 = vmatpush1.bf16.msra.mxu0 %v2286
    %2303 = vmatprep.subr.bf16.mxu0 0
    %2304 = vmatpush1.bf16.msra.mxu0 %v2285
    %2305 = vmatprep.subr.bf16.mxu0 0
    %2306 = vmatpush2.bf16.msra.mxu0 0
    %2307 = vmatprep.subr.bf16.mxu0 0
    %2308 = vmatpush2.bf16.msra.mxu0 0
    %2309 = vmatprep.subr.bf16.mxu0 0
    %2310 = vmatpush2.bf16.msra.mxu0 0
    %2311 = vmatprep.subr.bf16.mxu0 0
    %2312 = vmatpush2.bf16.msra.mxu0 0
    %2313 = vmatprep.subr.bf16.mxu0 0
    %2314 = vmatpush2.bf16.msra.mxu0 0
    %2315 = vmatprep.subr.bf16.mxu0 0
    %2316 = vmatpush2.bf16.msra.mxu0 0
    %2317 = vmatprep.subr.bf16.mxu0 0
    %2318 = vmatpush2.bf16.msra.mxu0 0
    %2319 = vmatprep.subr.bf16.mxu0 0
    %2320 = vmatpush2.bf16.msra.mxu0 0
    %2321 = vmatprep.mubr.bf16.mxu0 0
    %2322 = vmatmul.mubr.bf16.gmra.mxu0 %v2098
    %v2323 = vpop.f32.mrf.mxu0
    %v2324 = vadd.f32 0.0, %v2323
    %v2325 = vpop.f32.mrf.mxu0
    %v2326 = vpop.f32.mrf.mxu0
    %v2327 = vpop.f32.mrf.mxu0
    %2328 = vdwg.mxu0
    %v2329 = vmax.f32 %v2272, %v2270
    %v2330 = vmax.f32 %v2329, %v2209
    %v2331 = vmul.f32 %v2330, 0.8
    %v2332 = vmul.f32 %v2324, 0.2
    %v2333 = vadd.f32 %v2331, %v2332
    %2334 = vst [vmem:[%s293] sm:$0xff] %v2333
    %v2335 = vld [vmem:[%s357] sm:$0xff]
    %v2336 = vld [vmem:[%s295] sm:$0xf]
    %v2337 = vld [vmem:[%s295 + $0x4] sm:$0xf]
    %v2338 = vld [vmem:[%s295 + $0x8] sm:$0xf]
    %v2339 = vld [vmem:[%s295 + $0xc] sm:$0xf]
    %v2344 = vunpack.c.l.b16 %v2336
    %v2345 = vunpack.c.l.b16 %v2337
    %v2346 = vunpack.c.l.b16 %v2338
    %v2347 = vunpack.c.l.b16 %v2339
    %v2348 = vpack.c.b16 %v2345, %v2344
    %v2349 = vpack.c.b16 %v2347, %v2346
    %2352 = vmatprep.subr.bf16.mxu0 0
    %2353 = vmatpush1.bf16.msra.mxu0 0
    %2354 = vmatprep.subr.bf16.mxu0 0
    %2355 = vmatpush1.bf16.msra.mxu0 0
    %2356 = vmatprep.subr.bf16.mxu0 0
    %2357 = vmatpush1.bf16.msra.mxu0 0
    %2358 = vmatprep.subr.bf16.mxu0 0
    %2359 = vmatpush1.bf16.msra.mxu0 0
    %2360 = vmatprep.subr.bf16.mxu0 0
    %2361 = vmatpush1.bf16.msra.mxu0 0
    %2362 = vmatprep.subr.bf16.mxu0 0
    %2363 = vmatpush1.bf16.msra.mxu0 0
    %2364 = vmatprep.subr.bf16.mxu0 0
    %2365 = vmatpush1.bf16.msra.mxu0 %v2349
    %2366 = vmatprep.subr.bf16.mxu0 0
    %2367 = vmatpush1.bf16.msra.mxu0 %v2348
    %2368 = vmatprep.subr.bf16.mxu0 0
    %2369 = vmatpush2.bf16.msra.mxu0 0
    %2370 = vmatprep.subr.bf16.mxu0 0
    %2371 = vmatpush2.bf16.msra.mxu0 0
    %2372 = vmatprep.subr.bf16.mxu0 0
    %2373 = vmatpush2.bf16.msra.mxu0 0
    %2374 = vmatprep.subr.bf16.mxu0 0
    %2375 = vmatpush2.bf16.msra.mxu0 0
    %2376 = vmatprep.subr.bf16.mxu0 0
    %2377 = vmatpush2.bf16.msra.mxu0 0
    %2378 = vmatprep.subr.bf16.mxu0 0
    %2379 = vmatpush2.bf16.msra.mxu0 0
    %2380 = vmatprep.subr.bf16.mxu0 0
    %2381 = vmatpush2.bf16.msra.mxu0 0
    %2382 = vmatprep.subr.bf16.mxu0 0
    %2383 = vmatpush2.bf16.msra.mxu0 0
    %2384 = vmatprep.mubr.bf16.mxu0 0
    %2385 = vmatmul.mubr.bf16.gmra.mxu0 %v2098
    %v2386 = vpop.f32.mrf.mxu0
    %v2387 = vadd.f32 0.0, %v2386
    %v2388 = vpop.f32.mrf.mxu0
    %v2389 = vpop.f32.mrf.mxu0
    %v2390 = vpop.f32.mrf.mxu0
    %2391 = vdwg.mxu0
    %v2392 = vmax.f32 %v2335, %v2333
    %v2393 = vmax.f32 %v2392, %v2272
    %v2394 = vmul.f32 %v2393, 0.8
    %v2395 = vmul.f32 %v2387, 0.2
    %v2396 = vadd.f32 %v2394, %v2395
    %2397 = vst [vmem:[%s357] sm:$0xff] %v2396
    %v2398 = vld [vmem:[%s421] sm:$0xff]
    %v2399 = vld [vmem:[%s359] sm:$0xf]
    %v2400 = vld [vmem:[%s359 + $0x4] sm:$0xf]
    %v2401 = vld [vmem:[%s359 + $0x8] sm:$0xf]
    %v2402 = vld [vmem:[%s359 + $0xc] sm:$0xf]
    %v2407 = vunpack.c.l.b16 %v2399
    %v2408 = vunpack.c.l.b16 %v2400
    %v2409 = vunpack.c.l.b16 %v2401
    %v2410 = vunpack.c.l.b16 %v2402
    %v2411 = vpack.c.b16 %v2408, %v2407
    %v2412 = vpack.c.b16 %v2410, %v2409
    %2415 = vmatprep.subr.bf16.mxu0 0
    %2416 = vmatpush1.bf16.msra.mxu0 0
    %2417 = vmatprep.subr.bf16.mxu0 0
    %2418 = vmatpush1.bf16.msra.mxu0 0
    %2419 = vmatprep.subr.bf16.mxu0 0
    %2420 = vmatpush1.bf16.msra.mxu0 0
    %2421 = vmatprep.subr.bf16.mxu0 0
    %2422 = vmatpush1.bf16.msra.mxu0 0
    %2423 = vmatprep.subr.bf16.mxu0 0
    %2424 = vmatpush1.bf16.msra.mxu0 0
    %2425 = vmatprep.subr.bf16.mxu0 0
    %2426 = vmatpush1.bf16.msra.mxu0 0
    %2427 = vmatprep.subr.bf16.mxu0 0
    %2428 = vmatpush1.bf16.msra.mxu0 %v2412
    %2429 = vmatprep.subr.bf16.mxu0 0
    %2430 = vmatpush1.bf16.msra.mxu0 %v2411
    %2431 = vmatprep.subr.bf16.mxu0 0
    %2432 = vmatpush2.bf16.msra.mxu0 0
    %2433 = vmatprep.subr.bf16.mxu0 0
    %2434 = vmatpush2.bf16.msra.mxu0 0
    %2435 = vmatprep.subr.bf16.mxu0 0
    %2436 = vmatpush2.bf16.msra.mxu0 0
    %2437 = vmatprep.subr.bf16.mxu0 0
    %2438 = vmatpush2.bf16.msra.mxu0 0
    %2439 = vmatprep.subr.bf16.mxu0 0
    %2440 = vmatpush2.bf16.msra.mxu0 0
    %2441 = vmatprep.subr.bf16.mxu0 0
    %2442 = vmatpush2.bf16.msra.mxu0 0
    %2443 = vmatprep.subr.bf16.mxu0 0
    %2444 = vmatpush2.bf16.msra.mxu0 0
    %2445 = vmatprep.subr.bf16.mxu0 0
    %2446 = vmatpush2.bf16.msra.mxu0 0
    %2447 = vmatprep.mubr.bf16.mxu0 0
    %2448 = vmatmul.mubr.bf16.gmra.mxu0 %v2098
    %v2449 = vpop.f32.mrf.mxu0
    %v2450 = vadd.f32 0.0, %v2449
    %v2451 = vpop.f32.mrf.mxu0
    %v2452 = vpop.f32.mrf.mxu0
    %v2453 = vpop.f32.mrf.mxu0
    %2454 = vdwg.mxu0
    %v2455 = vmax.f32 %v2398, %v2396
    %v2456 = vmax.f32 %v2455, %v2335
    %v2457 = vmul.f32 %v2456, 0.8333333
    %v2458 = vmul.f32 %v2450, 0.16666667
    %v2459 = vadd.f32 %v2457, %v2458
    %2460 = vst [vmem:[%s421] sm:$0xff] %v2459
    %v2461 = vld [vmem:[%s485] sm:$0xff]
    %v2462 = vld [vmem:[%s423] sm:$0xf]
    %v2463 = vld [vmem:[%s423 + $0x4] sm:$0xf]
    %v2464 = vld [vmem:[%s423 + $0x8] sm:$0xf]
    %v2465 = vld [vmem:[%s423 + $0xc] sm:$0xf]
    %v2470 = vunpack.c.l.b16 %v2462
    %v2471 = vunpack.c.l.b16 %v2463
    %v2472 = vunpack.c.l.b16 %v2464
    %v2473 = vunpack.c.l.b16 %v2465
    %v2474 = vpack.c.b16 %v2471, %v2470
    %v2475 = vpack.c.b16 %v2473, %v2472
    %2478 = vmatprep.subr.bf16.mxu0 0
    %2479 = vmatpush1.bf16.msra.mxu0 0
    %2480 = vmatprep.subr.bf16.mxu0 0
    %2481 = vmatpush1.bf16.msra.mxu0 0
    %2482 = vmatprep.subr.bf16.mxu0 0
    %2483 = vmatpush1.bf16.msra.mxu0 0
    %2484 = vmatprep.subr.bf16.mxu0 0
    %2485 = vmatpush1.bf16.msra.mxu0 0
    %2486 = vmatprep.subr.bf16.mxu0 0
    %2487 = vmatpush1.bf16.msra.mxu0 0
    %2488 = vmatprep.subr.bf16.mxu0 0
    %2489 = vmatpush1.bf16.msra.mxu0 0
    %2490 = vmatprep.subr.bf16.mxu0 0
    %2491 = vmatpush1.bf16.msra.mxu0 %v2475
    %2492 = vmatprep.subr.bf16.mxu0 0
    %2493 = vmatpush1.bf16.msra.mxu0 %v2474
    %2494 = vmatprep.subr.bf16.mxu0 0
    %2495 = vmatpush2.bf16.msra.mxu0 0
    %2496 = vmatprep.subr.bf16.mxu0 0
    %2497 = vmatpush2.bf16.msra.mxu0 0
    %2498 = vmatprep.subr.bf16.mxu0 0
    %2499 = vmatpush2.bf16.msra.mxu0 0
    %2500 = vmatprep.subr.bf16.mxu0 0
    %2501 = vmatpush2.bf16.msra.mxu0 0
    %2502 = vmatprep.subr.bf16.mxu0 0
    %2503 = vmatpush2.bf16.msra.mxu0 0
    %2504 = vmatprep.subr.bf16.mxu0 0
    %2505 = vmatpush2.bf16.msra.mxu0 0
    %2506 = vmatprep.subr.bf16.mxu0 0
    %2507 = vmatpush2.bf16.msra.mxu0 0
    %2508 = vmatprep.subr.bf16.mxu0 0
    %2509 = vmatpush2.bf16.msra.mxu0 0
    %2510 = vmatprep.mubr.bf16.mxu0 0
    %2511 = vmatmul.mubr.bf16.gmra.mxu0 %v2098
    %v2512 = vpop.f32.mrf.mxu0
    %v2513 = vadd.f32 0.0, %v2512
    %v2514 = vpop.f32.mrf.mxu0
    %v2515 = vpop.f32.mrf.mxu0
    %v2516 = vpop.f32.mrf.mxu0
    %2517 = vdwg.mxu0
    %v2518 = vmax.f32 %v2461, %v2459
    %v2519 = vmax.f32 %v2518, %v2398
    %v2520 = vmul.f32 %v2519, 0.85714287
    %v2521 = vmul.f32 %v2513, 0.14285715
    %v2522 = vadd.f32 %v2520, %v2521
    %2523 = vst [vmem:[%s485] sm:$0xff] %v2522
    %v2524 = vld [vmem:[%s549] sm:$0xff]
    %v2525 = vld [vmem:[%s487] sm:$0xf]
    %v2526 = vld [vmem:[%s487 + $0x4] sm:$0xf]
    %v2527 = vld [vmem:[%s487 + $0x8] sm:$0xf]
    %v2528 = vld [vmem:[%s487 + $0xc] sm:$0xf]
    %v2533 = vunpack.c.l.b16 %v2525
    %v2534 = vunpack.c.l.b16 %v2526
    %v2535 = vunpack.c.l.b16 %v2527
    %v2536 = vunpack.c.l.b16 %v2528
    %v2537 = vpack.c.b16 %v2534, %v2533
    %v2538 = vpack.c.b16 %v2536, %v2535
    %2541 = vmatprep.subr.bf16.mxu0 0
    %2542 = vmatpush1.bf16.msra.mxu0 0
    %2543 = vmatprep.subr.bf16.mxu0 0
    %2544 = vmatpush1.bf16.msra.mxu0 0
    %2545 = vmatprep.subr.bf16.mxu0 0
    %2546 = vmatpush1.bf16.msra.mxu0 0
    %2547 = vmatprep.subr.bf16.mxu0 0
    %2548 = vmatpush1.bf16.msra.mxu0 0
    %2549 = vmatprep.subr.bf16.mxu0 0
    %2550 = vmatpush1.bf16.msra.mxu0 0
    %2551 = vmatprep.subr.bf16.mxu0 0
    %2552 = vmatpush1.bf16.msra.mxu0 0
    %2553 = vmatprep.subr.bf16.mxu0 0
    %2554 = vmatpush1.bf16.msra.mxu0 %v2538
    %2555 = vmatprep.subr.bf16.mxu0 0
    %2556 = vmatpush1.bf16.msra.mxu0 %v2537
    %2557 = vmatprep.subr.bf16.mxu0 0
    %2558 = vmatpush2.bf16.msra.mxu0 0
    %2559 = vmatprep.subr.bf16.mxu0 0
    %2560 = vmatpush2.bf16.msra.mxu0 0
    %2561 = vmatprep.subr.bf16.mxu0 0
    %2562 = vmatpush2.bf16.msra.mxu0 0
    %2563 = vmatprep.subr.bf16.mxu0 0
    %2564 = vmatpush2.bf16.msra.mxu0 0
    %2565 = vmatprep.subr.bf16.mxu0 0
    %2566 = vmatpush2.bf16.msra.mxu0 0
    %2567 = vmatprep.subr.bf16.mxu0 0
    %2568 = vmatpush2.bf16.msra.mxu0 0
    %2569 = vmatprep.subr.bf16.mxu0 0
    %2570 = vmatpush2.bf16.msra.mxu0 0
    %2571 = vmatprep.subr.bf16.mxu0 0
    %2572 = vmatpush2.bf16.msra.mxu0 0
    %2573 = vmatprep.mubr.bf16.mxu0 0
    %2574 = vmatmul.mubr.bf16.gmra.mxu0 %v2098
    %v2575 = vpop.f32.mrf.mxu0
    %v2576 = vadd.f32 0.0, %v2575
    %v2577 = vpop.f32.mrf.mxu0
    %v2578 = vpop.f32.mrf.mxu0
    %v2579 = vpop.f32.mrf.mxu0
    %2580 = vdwg.mxu0
    %v2581 = vmax.f32 %v2524, %v2522
    %v2582 = vmax.f32 %v2581, %v2461
    %v2583 = vmul.f32 %v2582, 0.875
    %v2584 = vmul.f32 %v2576, 0.125
    %v2585 = vadd.f32 %v2583, %v2584
    %2586 = vst [vmem:[%s549] sm:$0xff] %v2585
    %s2587 = scalar_lea.vmem [#allocation3], 20
    %v2588 = vld [vmem:[%s2587] sm:$0xf]
    %v2589 = vld [vmem:[#allocation2] sm:$0xff]
    %v2590 = vld [vmem:[#allocation6] sm:$0xf]
    %v2591 = vld [vmem:[#allocation6 + $0x4] sm:$0xf]
    %v2592 = vld [vmem:[#allocation6 + $0x8] sm:$0xf]
    %v2593 = vld [vmem:[#allocation6 + $0xc] sm:$0xf]
    %v2598 = vunpack.c.l.b16 %v2590
    %v2599 = vunpack.c.l.b16 %v2591
    %v2600 = vunpack.c.l.b16 %v2592
    %v2601 = vunpack.c.l.b16 %v2593
    %v2602 = vpack.c.b16 %v2599, %v2598
    %v2603 = vpack.c.b16 %v2601, %v2600
    %v2607 = vsel %vm58, %v2588, 0
    %2609 = vmatprep.subr.bf16.mxu0 0
    %2610 = vmatpush1.bf16.msra.mxu0 0
    %2611 = vmatprep.subr.bf16.mxu0 0
    %2612 = vmatpush1.bf16.msra.mxu0 0
    %2613 = vmatprep.subr.bf16.mxu0 0
    %2614 = vmatpush1.bf16.msra.mxu0 0
    %2615 = vmatprep.subr.bf16.mxu0 0
    %2616 = vmatpush1.bf16.msra.mxu0 0
    %2617 = vmatprep.subr.bf16.mxu0 0
    %2618 = vmatpush1.bf16.msra.mxu0 0
    %2619 = vmatprep.subr.bf16.mxu0 0
    %2620 = vmatpush1.bf16.msra.mxu0 0
    %2621 = vmatprep.subr.bf16.mxu0 0
    %2622 = vmatpush1.bf16.msra.mxu0 %v2603
    %2623 = vmatprep.subr.bf16.mxu0 0
    %2624 = vmatpush1.bf16.msra.mxu0 %v2602
    %2625 = vmatprep.subr.bf16.mxu0 0
    %2626 = vmatpush2.bf16.msra.mxu0 0
    %2627 = vmatprep.subr.bf16.mxu0 0
    %2628 = vmatpush2.bf16.msra.mxu0 0
    %2629 = vmatprep.subr.bf16.mxu0 0
    %2630 = vmatpush2.bf16.msra.mxu0 0
    %2631 = vmatprep.subr.bf16.mxu0 0
    %2632 = vmatpush2.bf16.msra.mxu0 0
    %2633 = vmatprep.subr.bf16.mxu0 0
    %2634 = vmatpush2.bf16.msra.mxu0 0
    %2635 = vmatprep.subr.bf16.mxu0 0
    %2636 = vmatpush2.bf16.msra.mxu0 0
    %2637 = vmatprep.subr.bf16.mxu0 0
    %2638 = vmatpush2.bf16.msra.mxu0 0
    %2639 = vmatprep.subr.bf16.mxu0 0
    %2640 = vmatpush2.bf16.msra.mxu0 0
    %2641 = vmatprep.mubr.bf16.mxu0 0
    %2642 = vmatmul.mubr.bf16.gmra.mxu0 %v2607
    %v2643 = vpop.f32.mrf.mxu0
    %v2644 = vadd.f32 0.0, %v2643
    %v2645 = vpop.f32.mrf.mxu0
    %v2646 = vpop.f32.mrf.mxu0
    %v2647 = vpop.f32.mrf.mxu0
    %2648 = vdwg.mxu0
    %v2649 = vmax.f32 %v2589, 0.0
    %v2650 = vmax.f32 %v2649, 0.0
    %v2651 = vmul.f32 %v2650, 0.8333333
    %v2652 = vmul.f32 %v2644, 0.16666667
    %v2653 = vadd.f32 %v2651, %v2652
    %2654 = vst [vmem:[#allocation2] sm:$0xff] %v2653
    %v2655 = vld [vmem:[%s165] sm:$0xff]
    %v2656 = vld [vmem:[%s103] sm:$0xf]
    %v2657 = vld [vmem:[%s103 + $0x4] sm:$0xf]
    %v2658 = vld [vmem:[%s103 + $0x8] sm:$0xf]
    %v2659 = vld [vmem:[%s103 + $0xc] sm:$0xf]
    %v2664 = vunpack.c.l.b16 %v2656
    %v2665 = vunpack.c.l.b16 %v2657
    %v2666 = vunpack.c.l.b16 %v2658
    %v2667 = vunpack.c.l.b16 %v2659
    %v2668 = vpack.c.b16 %v2665, %v2664
    %v2669 = vpack.c.b16 %v2667, %v2666
    %2672 = vmatprep.subr.bf16.mxu0 0
    %2673 = vmatpush1.bf16.msra.mxu0 0
    %2674 = vmatprep.subr.bf16.mxu0 0
    %2675 = vmatpush1.bf16.msra.mxu0 0
    %2676 = vmatprep.subr.bf16.mxu0 0
    %2677 = vmatpush1.bf16.msra.mxu0 0
    %2678 = vmatprep.subr.bf16.mxu0 0
    %2679 = vmatpush1.bf16.msra.mxu0 0
    %2680 = vmatprep.subr.bf16.mxu0 0
    %2681 = vmatpush1.bf16.msra.mxu0 0
    %2682 = vmatprep.subr.bf16.mxu0 0
    %2683 = vmatpush1.bf16.msra.mxu0 0
    %2684 = vmatprep.subr.bf16.mxu0 0
    %2685 = vmatpush1.bf16.msra.mxu0 %v2669
    %2686 = vmatprep.subr.bf16.mxu0 0
    %2687 = vmatpush1.bf16.msra.mxu0 %v2668
    %2688 = vmatprep.subr.bf16.mxu0 0
    %2689 = vmatpush2.bf16.msra.mxu0 0
    %2690 = vmatprep.subr.bf16.mxu0 0
    %2691 = vmatpush2.bf16.msra.mxu0 0
    %2692 = vmatprep.subr.bf16.mxu0 0
    %2693 = vmatpush2.bf16.msra.mxu0 0
    %2694 = vmatprep.subr.bf16.mxu0 0
    %2695 = vmatpush2.bf16.msra.mxu0 0
    %2696 = vmatprep.subr.bf16.mxu0 0
    %2697 = vmatpush2.bf16.msra.mxu0 0
    %2698 = vmatprep.subr.bf16.mxu0 0
    %2699 = vmatpush2.bf16.msra.mxu0 0
    %2700 = vmatprep.subr.bf16.mxu0 0
    %2701 = vmatpush2.bf16.msra.mxu0 0
    %2702 = vmatprep.subr.bf16.mxu0 0
    %2703 = vmatpush2.bf16.msra.mxu0 0
    %2704 = vmatprep.mubr.bf16.mxu0 0
    %2705 = vmatmul.mubr.bf16.gmra.mxu0 %v2607
    %v2706 = vpop.f32.mrf.mxu0
    %v2707 = vadd.f32 0.0, %v2706
    %v2708 = vpop.f32.mrf.mxu0
    %v2709 = vpop.f32.mrf.mxu0
    %v2710 = vpop.f32.mrf.mxu0
    %2711 = vdwg.mxu0
    %v2712 = vmax.f32 %v2655, %v2653
    %v2713 = vmax.f32 %v2712, %v2589
    %v2714 = vmul.f32 %v2713, 0.8333333
    %v2715 = vmul.f32 %v2707, 0.16666667
    %v2716 = vadd.f32 %v2714, %v2715
    %2717 = vst [vmem:[%s165] sm:$0xff] %v2716
    %v2718 = vld [vmem:[%s229] sm:$0xff]
    %v2719 = vld [vmem:[%s167] sm:$0xf]
    %v2720 = vld [vmem:[%s167 + $0x4] sm:$0xf]
    %v2721 = vld [vmem:[%s167 + $0x8] sm:$0xf]
    %v2722 = vld [vmem:[%s167 + $0xc] sm:$0xf]
    %v2727 = vunpack.c.l.b16 %v2719
    %v2728 = vunpack.c.l.b16 %v2720
    %v2729 = vunpack.c.l.b16 %v2721
    %v2730 = vunpack.c.l.b16 %v2722
    %v2731 = vpack.c.b16 %v2728, %v2727
    %v2732 = vpack.c.b16 %v2730, %v2729
    %2735 = vmatprep.subr.bf16.mxu0 0
    %2736 = vmatpush1.bf16.msra.mxu0 0
    %2737 = vmatprep.subr.bf16.mxu0 0
    %2738 = vmatpush1.bf16.msra.mxu0 0
    %2739 = vmatprep.subr.bf16.mxu0 0
    %2740 = vmatpush1.bf16.msra.mxu0 0
    %2741 = vmatprep.subr.bf16.mxu0 0
    %2742 = vmatpush1.bf16.msra.mxu0 0
    %2743 = vmatprep.subr.bf16.mxu0 0
    %2744 = vmatpush1.bf16.msra.mxu0 0
    %2745 = vmatprep.subr.bf16.mxu0 0
    %2746 = vmatpush1.bf16.msra.mxu0 0
    %2747 = vmatprep.subr.bf16.mxu0 0
    %2748 = vmatpush1.bf16.msra.mxu0 %v2732
    %2749 = vmatprep.subr.bf16.mxu0 0
    %2750 = vmatpush1.bf16.msra.mxu0 %v2731
    %2751 = vmatprep.subr.bf16.mxu0 0
    %2752 = vmatpush2.bf16.msra.mxu0 0
    %2753 = vmatprep.subr.bf16.mxu0 0
    %2754 = vmatpush2.bf16.msra.mxu0 0
    %2755 = vmatprep.subr.bf16.mxu0 0
    %2756 = vmatpush2.bf16.msra.mxu0 0
    %2757 = vmatprep.subr.bf16.mxu0 0
    %2758 = vmatpush2.bf16.msra.mxu0 0
    %2759 = vmatprep.subr.bf16.mxu0 0
    %2760 = vmatpush2.bf16.msra.mxu0 0
    %2761 = vmatprep.subr.bf16.mxu0 0
    %2762 = vmatpush2.bf16.msra.mxu0 0
    %2763 = vmatprep.subr.bf16.mxu0 0
    %2764 = vmatpush2.bf16.msra.mxu0 0
    %2765 = vmatprep.subr.bf16.mxu0 0
    %2766 = vmatpush2.bf16.msra.mxu0 0
    %2767 = vmatprep.mubr.bf16.mxu0 0
    %2768 = vmatmul.mubr.bf16.gmra.mxu0 %v2607
    %v2769 = vpop.f32.mrf.mxu0
    %v2770 = vadd.f32 0.0, %v2769
    %v2771 = vpop.f32.mrf.mxu0
    %v2772 = vpop.f32.mrf.mxu0
    %v2773 = vpop.f32.mrf.mxu0
    %2774 = vdwg.mxu0
    %v2775 = vmax.f32 %v2718, %v2716
    %v2776 = vmax.f32 %v2775, %v2655
    %v2777 = vmul.f32 %v2776, 0.8333333
    %v2778 = vmul.f32 %v2770, 0.16666667
    %v2779 = vadd.f32 %v2777, %v2778
    %2780 = vst [vmem:[%s229] sm:$0xff] %v2779
    %v2781 = vld [vmem:[%s293] sm:$0xff]
    %v2782 = vld [vmem:[%s231] sm:$0xf]
    %v2783 = vld [vmem:[%s231 + $0x4] sm:$0xf]
    %v2784 = vld [vmem:[%s231 + $0x8] sm:$0xf]
    %v2785 = vld [vmem:[%s231 + $0xc] sm:$0xf]
    %v2790 = vunpack.c.l.b16 %v2782
    %v2791 = vunpack.c.l.b16 %v2783
    %v2792 = vunpack.c.l.b16 %v2784
    %v2793 = vunpack.c.l.b16 %v2785
    %v2794 = vpack.c.b16 %v2791, %v2790
    %v2795 = vpack.c.b16 %v2793, %v2792
    %2798 = vmatprep.subr.bf16.mxu0 0
    %2799 = vmatpush1.bf16.msra.mxu0 0
    %2800 = vmatprep.subr.bf16.mxu0 0
    %2801 = vmatpush1.bf16.msra.mxu0 0
    %2802 = vmatprep.subr.bf16.mxu0 0
    %2803 = vmatpush1.bf16.msra.mxu0 0
    %2804 = vmatprep.subr.bf16.mxu0 0
    %2805 = vmatpush1.bf16.msra.mxu0 0
    %2806 = vmatprep.subr.bf16.mxu0 0
    %2807 = vmatpush1.bf16.msra.mxu0 0
    %2808 = vmatprep.subr.bf16.mxu0 0
    %2809 = vmatpush1.bf16.msra.mxu0 0
    %2810 = vmatprep.subr.bf16.mxu0 0
    %2811 = vmatpush1.bf16.msra.mxu0 %v2795
    %2812 = vmatprep.subr.bf16.mxu0 0
    %2813 = vmatpush1.bf16.msra.mxu0 %v2794
    %2814 = vmatprep.subr.bf16.mxu0 0
    %2815 = vmatpush2.bf16.msra.mxu0 0
    %2816 = vmatprep.subr.bf16.mxu0 0
    %2817 = vmatpush2.bf16.msra.mxu0 0
    %2818 = vmatprep.subr.bf16.mxu0 0
    %2819 = vmatpush2.bf16.msra.mxu0 0
    %2820 = vmatprep.subr.bf16.mxu0 0
    %2821 = vmatpush2.bf16.msra.mxu0 0
    %2822 = vmatprep.subr.bf16.mxu0 0
    %2823 = vmatpush2.bf16.msra.mxu0 0
    %2824 = vmatprep.subr.bf16.mxu0 0
    %2825 = vmatpush2.bf16.msra.mxu0 0
    %2826 = vmatprep.subr.bf16.mxu0 0
    %2827 = vmatpush2.bf16.msra.mxu0 0
    %2828 = vmatprep.subr.bf16.mxu0 0
    %2829 = vmatpush2.bf16.msra.mxu0 0
    %2830 = vmatprep.mubr.bf16.mxu0 0
    %2831 = vmatmul.mubr.bf16.gmra.mxu0 %v2607
    %v2832 = vpop.f32.mrf.mxu0
    %v2833 = vadd.f32 0.0, %v2832
    %v2834 = vpop.f32.mrf.mxu0
    %v2835 = vpop.f32.mrf.mxu0
    %v2836 = vpop.f32.mrf.mxu0
    %2837 = vdwg.mxu0
    %v2838 = vmax.f32 %v2781, %v2779
    %v2839 = vmax.f32 %v2838, %v2718
    %v2840 = vmul.f32 %v2839, 0.8333333
    %v2841 = vmul.f32 %v2833, 0.16666667
    %v2842 = vadd.f32 %v2840, %v2841
    %2843 = vst [vmem:[%s293] sm:$0xff] %v2842
    %v2844 = vld [vmem:[%s357] sm:$0xff]
    %v2845 = vld [vmem:[%s295] sm:$0xf]
    %v2846 = vld [vmem:[%s295 + $0x4] sm:$0xf]
    %v2847 = vld [vmem:[%s295 + $0x8] sm:$0xf]
    %v2848 = vld [vmem:[%s295 + $0xc] sm:$0xf]
    %v2853 = vunpack.c.l.b16 %v2845
    %v2854 = vunpack.c.l.b16 %v2846
    %v2855 = vunpack.c.l.b16 %v2847
    %v2856 = vunpack.c.l.b16 %v2848
    %v2857 = vpack.c.b16 %v2854, %v2853
    %v2858 = vpack.c.b16 %v2856, %v2855
    %2861 = vmatprep.subr.bf16.mxu0 0
    %2862 = vmatpush1.bf16.msra.mxu0 0
    %2863 = vmatprep.subr.bf16.mxu0 0
    %2864 = vmatpush1.bf16.msra.mxu0 0
    %2865 = vmatprep.subr.bf16.mxu0 0
    %2866 = vmatpush1.bf16.msra.mxu0 0
    %2867 = vmatprep.subr.bf16.mxu0 0
    %2868 = vmatpush1.bf16.msra.mxu0 0
    %2869 = vmatprep.subr.bf16.mxu0 0
    %2870 = vmatpush1.bf16.msra.mxu0 0
    %2871 = vmatprep.subr.bf16.mxu0 0
    %2872 = vmatpush1.bf16.msra.mxu0 0
    %2873 = vmatprep.subr.bf16.mxu0 0
    %2874 = vmatpush1.bf16.msra.mxu0 %v2858
    %2875 = vmatprep.subr.bf16.mxu0 0
    %2876 = vmatpush1.bf16.msra.mxu0 %v2857
    %2877 = vmatprep.subr.bf16.mxu0 0
    %2878 = vmatpush2.bf16.msra.mxu0 0
    %2879 = vmatprep.subr.bf16.mxu0 0
    %2880 = vmatpush2.bf16.msra.mxu0 0
    %2881 = vmatprep.subr.bf16.mxu0 0
    %2882 = vmatpush2.bf16.msra.mxu0 0
    %2883 = vmatprep.subr.bf16.mxu0 0
    %2884 = vmatpush2.bf16.msra.mxu0 0
    %2885 = vmatprep.subr.bf16.mxu0 0
    %2886 = vmatpush2.bf16.msra.mxu0 0
    %2887 = vmatprep.subr.bf16.mxu0 0
    %2888 = vmatpush2.bf16.msra.mxu0 0
    %2889 = vmatprep.subr.bf16.mxu0 0
    %2890 = vmatpush2.bf16.msra.mxu0 0
    %2891 = vmatprep.subr.bf16.mxu0 0
    %2892 = vmatpush2.bf16.msra.mxu0 0
    %2893 = vmatprep.mubr.bf16.mxu0 0
    %2894 = vmatmul.mubr.bf16.gmra.mxu0 %v2607
    %v2895 = vpop.f32.mrf.mxu0
    %v2896 = vadd.f32 0.0, %v2895
    %v2897 = vpop.f32.mrf.mxu0
    %v2898 = vpop.f32.mrf.mxu0
    %v2899 = vpop.f32.mrf.mxu0
    %2900 = vdwg.mxu0
    %v2901 = vmax.f32 %v2844, %v2842
    %v2902 = vmax.f32 %v2901, %v2781
    %v2903 = vmul.f32 %v2902, 0.8333333
    %v2904 = vmul.f32 %v2896, 0.16666667
    %v2905 = vadd.f32 %v2903, %v2904
    %2906 = vst [vmem:[%s357] sm:$0xff] %v2905
    %v2907 = vld [vmem:[%s421] sm:$0xff]
    %v2908 = vld [vmem:[%s359] sm:$0xf]
    %v2909 = vld [vmem:[%s359 + $0x4] sm:$0xf]
    %v2910 = vld [vmem:[%s359 + $0x8] sm:$0xf]
    %v2911 = vld [vmem:[%s359 + $0xc] sm:$0xf]
    %v2916 = vunpack.c.l.b16 %v2908
    %v2917 = vunpack.c.l.b16 %v2909
    %v2918 = vunpack.c.l.b16 %v2910
    %v2919 = vunpack.c.l.b16 %v2911
    %v2920 = vpack.c.b16 %v2917, %v2916
    %v2921 = vpack.c.b16 %v2919, %v2918
    %2924 = vmatprep.subr.bf16.mxu0 0
    %2925 = vmatpush1.bf16.msra.mxu0 0
    %2926 = vmatprep.subr.bf16.mxu0 0
    %2927 = vmatpush1.bf16.msra.mxu0 0
    %2928 = vmatprep.subr.bf16.mxu0 0
    %2929 = vmatpush1.bf16.msra.mxu0 0
    %2930 = vmatprep.subr.bf16.mxu0 0
    %2931 = vmatpush1.bf16.msra.mxu0 0
    %2932 = vmatprep.subr.bf16.mxu0 0
    %2933 = vmatpush1.bf16.msra.mxu0 0
    %2934 = vmatprep.subr.bf16.mxu0 0
    %2935 = vmatpush1.bf16.msra.mxu0 0
    %2936 = vmatprep.subr.bf16.mxu0 0
    %2937 = vmatpush1.bf16.msra.mxu0 %v2921
    %2938 = vmatprep.subr.bf16.mxu0 0
    %2939 = vmatpush1.bf16.msra.mxu0 %v2920
    %2940 = vmatprep.subr.bf16.mxu0 0
    %2941 = vmatpush2.bf16.msra.mxu0 0
    %2942 = vmatprep.subr.bf16.mxu0 0
    %2943 = vmatpush2.bf16.msra.mxu0 0
    %2944 = vmatprep.subr.bf16.mxu0 0
    %2945 = vmatpush2.bf16.msra.mxu0 0
    %2946 = vmatprep.subr.bf16.mxu0 0
    %2947 = vmatpush2.bf16.msra.mxu0 0
    %2948 = vmatprep.subr.bf16.mxu0 0
    %2949 = vmatpush2.bf16.msra.mxu0 0
    %2950 = vmatprep.subr.bf16.mxu0 0
    %2951 = vmatpush2.bf16.msra.mxu0 0
    %2952 = vmatprep.subr.bf16.mxu0 0
    %2953 = vmatpush2.bf16.msra.mxu0 0
    %2954 = vmatprep.subr.bf16.mxu0 0
    %2955 = vmatpush2.bf16.msra.mxu0 0
    %2956 = vmatprep.mubr.bf16.mxu0 0
    %2957 = vmatmul.mubr.bf16.gmra.mxu0 %v2607
    %v2958 = vpop.f32.mrf.mxu0
    %v2959 = vadd.f32 0.0, %v2958
    %v2960 = vpop.f32.mrf.mxu0
    %v2961 = vpop.f32.mrf.mxu0
    %v2962 = vpop.f32.mrf.mxu0
    %2963 = vdwg.mxu0
    %v2964 = vmax.f32 %v2907, %v2905
    %v2965 = vmax.f32 %v2964, %v2844
    %v2966 = vmul.f32 %v2965, 0.8333333
    %v2967 = vmul.f32 %v2959, 0.16666667
    %v2968 = vadd.f32 %v2966, %v2967
    %2969 = vst [vmem:[%s421] sm:$0xff] %v2968
    %v2970 = vld [vmem:[%s485] sm:$0xff]
    %v2971 = vld [vmem:[%s423] sm:$0xf]
    %v2972 = vld [vmem:[%s423 + $0x4] sm:$0xf]
    %v2973 = vld [vmem:[%s423 + $0x8] sm:$0xf]
    %v2974 = vld [vmem:[%s423 + $0xc] sm:$0xf]
    %v2979 = vunpack.c.l.b16 %v2971
    %v2980 = vunpack.c.l.b16 %v2972
    %v2981 = vunpack.c.l.b16 %v2973
    %v2982 = vunpack.c.l.b16 %v2974
    %v2983 = vpack.c.b16 %v2980, %v2979
    %v2984 = vpack.c.b16 %v2982, %v2981
    %2987 = vmatprep.subr.bf16.mxu0 0
    %2988 = vmatpush1.bf16.msra.mxu0 0
    %2989 = vmatprep.subr.bf16.mxu0 0
    %2990 = vmatpush1.bf16.msra.mxu0 0
    %2991 = vmatprep.subr.bf16.mxu0 0
    %2992 = vmatpush1.bf16.msra.mxu0 0
    %2993 = vmatprep.subr.bf16.mxu0 0
    %2994 = vmatpush1.bf16.msra.mxu0 0
    %2995 = vmatprep.subr.bf16.mxu0 0
    %2996 = vmatpush1.bf16.msra.mxu0 0
    %2997 = vmatprep.subr.bf16.mxu0 0
    %2998 = vmatpush1.bf16.msra.mxu0 0
    %2999 = vmatprep.subr.bf16.mxu0 0
    %3000 = vmatpush1.bf16.msra.mxu0 %v2984
    %3001 = vmatprep.subr.bf16.mxu0 0
    %3002 = vmatpush1.bf16.msra.mxu0 %v2983
    %3003 = vmatprep.subr.bf16.mxu0 0
    %3004 = vmatpush2.bf16.msra.mxu0 0
    %3005 = vmatprep.subr.bf16.mxu0 0
    %3006 = vmatpush2.bf16.msra.mxu0 0
    %3007 = vmatprep.subr.bf16.mxu0 0
    %3008 = vmatpush2.bf16.msra.mxu0 0
    %3009 = vmatprep.subr.bf16.mxu0 0
    %3010 = vmatpush2.bf16.msra.mxu0 0
    %3011 = vmatprep.subr.bf16.mxu0 0
    %3012 = vmatpush2.bf16.msra.mxu0 0
    %3013 = vmatprep.subr.bf16.mxu0 0
    %3014 = vmatpush2.bf16.msra.mxu0 0
    %3015 = vmatprep.subr.bf16.mxu0 0
    %3016 = vmatpush2.bf16.msra.mxu0 0
    %3017 = vmatprep.subr.bf16.mxu0 0
    %3018 = vmatpush2.bf16.msra.mxu0 0
    %3019 = vmatprep.mubr.bf16.mxu0 0
    %3020 = vmatmul.mubr.bf16.gmra.mxu0 %v2607
    %v3021 = vpop.f32.mrf.mxu0
    %v3022 = vadd.f32 0.0, %v3021
    %v3023 = vpop.f32.mrf.mxu0
    %v3024 = vpop.f32.mrf.mxu0
    %v3025 = vpop.f32.mrf.mxu0
    %3026 = vdwg.mxu0
    %v3027 = vmax.f32 %v2970, %v2968
    %v3028 = vmax.f32 %v3027, %v2907
    %v3029 = vmul.f32 %v3028, 0.85714287
    %v3030 = vmul.f32 %v3022, 0.14285715
    %v3031 = vadd.f32 %v3029, %v3030
    %3032 = vst [vmem:[%s485] sm:$0xff] %v3031
    %v3033 = vld [vmem:[%s549] sm:$0xff]
    %v3034 = vld [vmem:[%s487] sm:$0xf]
    %v3035 = vld [vmem:[%s487 + $0x4] sm:$0xf]
    %v3036 = vld [vmem:[%s487 + $0x8] sm:$0xf]
    %v3037 = vld [vmem:[%s487 + $0xc] sm:$0xf]
    %v3042 = vunpack.c.l.b16 %v3034
    %v3043 = vunpack.c.l.b16 %v3035
    %v3044 = vunpack.c.l.b16 %v3036
    %v3045 = vunpack.c.l.b16 %v3037
    %v3046 = vpack.c.b16 %v3043, %v3042
    %v3047 = vpack.c.b16 %v3045, %v3044
    %3050 = vmatprep.subr.bf16.mxu0 0
    %3051 = vmatpush1.bf16.msra.mxu0 0
    %3052 = vmatprep.subr.bf16.mxu0 0
    %3053 = vmatpush1.bf16.msra.mxu0 0
    %3054 = vmatprep.subr.bf16.mxu0 0
    %3055 = vmatpush1.bf16.msra.mxu0 0
    %3056 = vmatprep.subr.bf16.mxu0 0
    %3057 = vmatpush1.bf16.msra.mxu0 0
    %3058 = vmatprep.subr.bf16.mxu0 0
    %3059 = vmatpush1.bf16.msra.mxu0 0
    %3060 = vmatprep.subr.bf16.mxu0 0
    %3061 = vmatpush1.bf16.msra.mxu0 0
    %3062 = vmatprep.subr.bf16.mxu0 0
    %3063 = vmatpush1.bf16.msra.mxu0 %v3047
    %3064 = vmatprep.subr.bf16.mxu0 0
    %3065 = vmatpush1.bf16.msra.mxu0 %v3046
    %3066 = vmatprep.subr.bf16.mxu0 0
    %3067 = vmatpush2.bf16.msra.mxu0 0
    %3068 = vmatprep.subr.bf16.mxu0 0
    %3069 = vmatpush2.bf16.msra.mxu0 0
    %3070 = vmatprep.subr.bf16.mxu0 0
    %3071 = vmatpush2.bf16.msra.mxu0 0
    %3072 = vmatprep.subr.bf16.mxu0 0
    %3073 = vmatpush2.bf16.msra.mxu0 0
    %3074 = vmatprep.subr.bf16.mxu0 0
    %3075 = vmatpush2.bf16.msra.mxu0 0
    %3076 = vmatprep.subr.bf16.mxu0 0
    %3077 = vmatpush2.bf16.msra.mxu0 0
    %3078 = vmatprep.subr.bf16.mxu0 0
    %3079 = vmatpush2.bf16.msra.mxu0 0
    %3080 = vmatprep.subr.bf16.mxu0 0
    %3081 = vmatpush2.bf16.msra.mxu0 0
    %3082 = vmatprep.mubr.bf16.mxu0 0
    %3083 = vmatmul.mubr.bf16.gmra.mxu0 %v2607
    %v3084 = vpop.f32.mrf.mxu0
    %v3085 = vadd.f32 0.0, %v3084
    %v3086 = vpop.f32.mrf.mxu0
    %v3087 = vpop.f32.mrf.mxu0
    %v3088 = vpop.f32.mrf.mxu0
    %3089 = vdwg.mxu0
    %v3090 = vmax.f32 %v3033, %v3031
    %v3091 = vmax.f32 %v3090, %v2970
    %v3092 = vmul.f32 %v3091, 0.875
    %v3093 = vmul.f32 %v3085, 0.125
    %v3094 = vadd.f32 %v3092, %v3093
    %3095 = vst [vmem:[%s549] sm:$0xff] %v3094
    %s3096 = scalar_lea.vmem [#allocation3], 24
    %v3097 = vld [vmem:[%s3096] sm:$0xf]
    %v3098 = vld [vmem:[#allocation2] sm:$0xff]
    %v3099 = vld [vmem:[#allocation6] sm:$0xf]
    %v3100 = vld [vmem:[#allocation6 + $0x4] sm:$0xf]
    %v3101 = vld [vmem:[#allocation6 + $0x8] sm:$0xf]
    %v3102 = vld [vmem:[#allocation6 + $0xc] sm:$0xf]
    %v3107 = vunpack.c.l.b16 %v3099
    %v3108 = vunpack.c.l.b16 %v3100
    %v3109 = vunpack.c.l.b16 %v3101
    %v3110 = vunpack.c.l.b16 %v3102
    %v3111 = vpack.c.b16 %v3108, %v3107
    %v3112 = vpack.c.b16 %v3110, %v3109
    %v3116 = vsel %vm58, %v3097, 0
    %3118 = vmatprep.subr.bf16.mxu0 0
    %3119 = vmatpush1.bf16.msra.mxu0 0
    %3120 = vmatprep.subr.bf16.mxu0 0
    %3121 = vmatpush1.bf16.msra.mxu0 0
    %3122 = vmatprep.subr.bf16.mxu0 0
    %3123 = vmatpush1.bf16.msra.mxu0 0
    %3124 = vmatprep.subr.bf16.mxu0 0
    %3125 = vmatpush1.bf16.msra.mxu0 0
    %3126 = vmatprep.subr.bf16.mxu0 0
    %3127 = vmatpush1.bf16.msra.mxu0 0
    %3128 = vmatprep.subr.bf16.mxu0 0
    %3129 = vmatpush1.bf16.msra.mxu0 0
    %3130 = vmatprep.subr.bf16.mxu0 0
    %3131 = vmatpush1.bf16.msra.mxu0 %v3112
    %3132 = vmatprep.subr.bf16.mxu0 0
    %3133 = vmatpush1.bf16.msra.mxu0 %v3111
    %3134 = vmatprep.subr.bf16.mxu0 0
    %3135 = vmatpush2.bf16.msra.mxu0 0
    %3136 = vmatprep.subr.bf16.mxu0 0
    %3137 = vmatpush2.bf16.msra.mxu0 0
    %3138 = vmatprep.subr.bf16.mxu0 0
    %3139 = vmatpush2.bf16.msra.mxu0 0
    %3140 = vmatprep.subr.bf16.mxu0 0
    %3141 = vmatpush2.bf16.msra.mxu0 0
    %3142 = vmatprep.subr.bf16.mxu0 0
    %3143 = vmatpush2.bf16.msra.mxu0 0
    %3144 = vmatprep.subr.bf16.mxu0 0
    %3145 = vmatpush2.bf16.msra.mxu0 0
    %3146 = vmatprep.subr.bf16.mxu0 0
    %3147 = vmatpush2.bf16.msra.mxu0 0
    %3148 = vmatprep.subr.bf16.mxu0 0
    %3149 = vmatpush2.bf16.msra.mxu0 0
    %3150 = vmatprep.mubr.bf16.mxu0 0
    %3151 = vmatmul.mubr.bf16.gmra.mxu0 %v3116
    %v3152 = vpop.f32.mrf.mxu0
    %v3153 = vadd.f32 0.0, %v3152
    %v3154 = vpop.f32.mrf.mxu0
    %v3155 = vpop.f32.mrf.mxu0
    %v3156 = vpop.f32.mrf.mxu0
    %3157 = vdwg.mxu0
    %v3158 = vmax.f32 %v3098, 0.0
    %v3159 = vmax.f32 %v3158, 0.0
    %v3160 = vmul.f32 %v3159, 0.85714287
    %v3161 = vmul.f32 %v3153, 0.14285715
    %v3162 = vadd.f32 %v3160, %v3161
    %3163 = vst [vmem:[#allocation2] sm:$0xff] %v3162
    %v3164 = vld [vmem:[%s165] sm:$0xff]
    %v3165 = vld [vmem:[%s103] sm:$0xf]
    %v3166 = vld [vmem:[%s103 + $0x4] sm:$0xf]
    %v3167 = vld [vmem:[%s103 + $0x8] sm:$0xf]
    %v3168 = vld [vmem:[%s103 + $0xc] sm:$0xf]
    %v3173 = vunpack.c.l.b16 %v3165
    %v3174 = vunpack.c.l.b16 %v3166
    %v3175 = vunpack.c.l.b16 %v3167
    %v3176 = vunpack.c.l.b16 %v3168
    %v3177 = vpack.c.b16 %v3174, %v3173
    %v3178 = vpack.c.b16 %v3176, %v3175
    %3181 = vmatprep.subr.bf16.mxu0 0
    %3182 = vmatpush1.bf16.msra.mxu0 0
    %3183 = vmatprep.subr.bf16.mxu0 0
    %3184 = vmatpush1.bf16.msra.mxu0 0
    %3185 = vmatprep.subr.bf16.mxu0 0
    %3186 = vmatpush1.bf16.msra.mxu0 0
    %3187 = vmatprep.subr.bf16.mxu0 0
    %3188 = vmatpush1.bf16.msra.mxu0 0
    %3189 = vmatprep.subr.bf16.mxu0 0
    %3190 = vmatpush1.bf16.msra.mxu0 0
    %3191 = vmatprep.subr.bf16.mxu0 0
    %3192 = vmatpush1.bf16.msra.mxu0 0
    %3193 = vmatprep.subr.bf16.mxu0 0
    %3194 = vmatpush1.bf16.msra.mxu0 %v3178
    %3195 = vmatprep.subr.bf16.mxu0 0
    %3196 = vmatpush1.bf16.msra.mxu0 %v3177
    %3197 = vmatprep.subr.bf16.mxu0 0
    %3198 = vmatpush2.bf16.msra.mxu0 0
    %3199 = vmatprep.subr.bf16.mxu0 0
    %3200 = vmatpush2.bf16.msra.mxu0 0
    %3201 = vmatprep.subr.bf16.mxu0 0
    %3202 = vmatpush2.bf16.msra.mxu0 0
    %3203 = vmatprep.subr.bf16.mxu0 0
    %3204 = vmatpush2.bf16.msra.mxu0 0
    %3205 = vmatprep.subr.bf16.mxu0 0
    %3206 = vmatpush2.bf16.msra.mxu0 0
    %3207 = vmatprep.subr.bf16.mxu0 0
    %3208 = vmatpush2.bf16.msra.mxu0 0
    %3209 = vmatprep.subr.bf16.mxu0 0
    %3210 = vmatpush2.bf16.msra.mxu0 0
    %3211 = vmatprep.subr.bf16.mxu0 0
    %3212 = vmatpush2.bf16.msra.mxu0 0
    %3213 = vmatprep.mubr.bf16.mxu0 0
    %3214 = vmatmul.mubr.bf16.gmra.mxu0 %v3116
    %v3215 = vpop.f32.mrf.mxu0
    %v3216 = vadd.f32 0.0, %v3215
    %v3217 = vpop.f32.mrf.mxu0
    %v3218 = vpop.f32.mrf.mxu0
    %v3219 = vpop.f32.mrf.mxu0
    %3220 = vdwg.mxu0
    %v3221 = vmax.f32 %v3164, %v3162
    %v3222 = vmax.f32 %v3221, %v3098
    %v3223 = vmul.f32 %v3222, 0.85714287
    %v3224 = vmul.f32 %v3216, 0.14285715
    %v3225 = vadd.f32 %v3223, %v3224
    %3226 = vst [vmem:[%s165] sm:$0xff] %v3225
    %v3227 = vld [vmem:[%s229] sm:$0xff]
    %v3228 = vld [vmem:[%s167] sm:$0xf]
    %v3229 = vld [vmem:[%s167 + $0x4] sm:$0xf]
    %v3230 = vld [vmem:[%s167 + $0x8] sm:$0xf]
    %v3231 = vld [vmem:[%s167 + $0xc] sm:$0xf]
    %v3236 = vunpack.c.l.b16 %v3228
    %v3237 = vunpack.c.l.b16 %v3229
    %v3238 = vunpack.c.l.b16 %v3230
    %v3239 = vunpack.c.l.b16 %v3231
    %v3240 = vpack.c.b16 %v3237, %v3236
    %v3241 = vpack.c.b16 %v3239, %v3238
    %3244 = vmatprep.subr.bf16.mxu0 0
    %3245 = vmatpush1.bf16.msra.mxu0 0
    %3246 = vmatprep.subr.bf16.mxu0 0
    %3247 = vmatpush1.bf16.msra.mxu0 0
    %3248 = vmatprep.subr.bf16.mxu0 0
    %3249 = vmatpush1.bf16.msra.mxu0 0
    %3250 = vmatprep.subr.bf16.mxu0 0
    %3251 = vmatpush1.bf16.msra.mxu0 0
    %3252 = vmatprep.subr.bf16.mxu0 0
    %3253 = vmatpush1.bf16.msra.mxu0 0
    %3254 = vmatprep.subr.bf16.mxu0 0
    %3255 = vmatpush1.bf16.msra.mxu0 0
    %3256 = vmatprep.subr.bf16.mxu0 0
    %3257 = vmatpush1.bf16.msra.mxu0 %v3241
    %3258 = vmatprep.subr.bf16.mxu0 0
    %3259 = vmatpush1.bf16.msra.mxu0 %v3240
    %3260 = vmatprep.subr.bf16.mxu0 0
    %3261 = vmatpush2.bf16.msra.mxu0 0
    %3262 = vmatprep.subr.bf16.mxu0 0
    %3263 = vmatpush2.bf16.msra.mxu0 0
    %3264 = vmatprep.subr.bf16.mxu0 0
    %3265 = vmatpush2.bf16.msra.mxu0 0
    %3266 = vmatprep.subr.bf16.mxu0 0
    %3267 = vmatpush2.bf16.msra.mxu0 0
    %3268 = vmatprep.subr.bf16.mxu0 0
    %3269 = vmatpush2.bf16.msra.mxu0 0
    %3270 = vmatprep.subr.bf16.mxu0 0
    %3271 = vmatpush2.bf16.msra.mxu0 0
    %3272 = vmatprep.subr.bf16.mxu0 0
    %3273 = vmatpush2.bf16.msra.mxu0 0
    %3274 = vmatprep.subr.bf16.mxu0 0
    %3275 = vmatpush2.bf16.msra.mxu0 0
    %3276 = vmatprep.mubr.bf16.mxu0 0
    %3277 = vmatmul.mubr.bf16.gmra.mxu0 %v3116
    %v3278 = vpop.f32.mrf.mxu0
    %v3279 = vadd.f32 0.0, %v3278
    %v3280 = vpop.f32.mrf.mxu0
    %v3281 = vpop.f32.mrf.mxu0
    %v3282 = vpop.f32.mrf.mxu0
    %3283 = vdwg.mxu0
    %v3284 = vmax.f32 %v3227, %v3225
    %v3285 = vmax.f32 %v3284, %v3164
    %v3286 = vmul.f32 %v3285, 0.85714287
    %v3287 = vmul.f32 %v3279, 0.14285715
    %v3288 = vadd.f32 %v3286, %v3287
    %3289 = vst [vmem:[%s229] sm:$0xff] %v3288
    %v3290 = vld [vmem:[%s293] sm:$0xff]
    %v3291 = vld [vmem:[%s231] sm:$0xf]
    %v3292 = vld [vmem:[%s231 + $0x4] sm:$0xf]
    %v3293 = vld [vmem:[%s231 + $0x8] sm:$0xf]
    %v3294 = vld [vmem:[%s231 + $0xc] sm:$0xf]
    %v3299 = vunpack.c.l.b16 %v3291
    %v3300 = vunpack.c.l.b16 %v3292
    %v3301 = vunpack.c.l.b16 %v3293
    %v3302 = vunpack.c.l.b16 %v3294
    %v3303 = vpack.c.b16 %v3300, %v3299
    %v3304 = vpack.c.b16 %v3302, %v3301
    %3307 = vmatprep.subr.bf16.mxu0 0
    %3308 = vmatpush1.bf16.msra.mxu0 0
    %3309 = vmatprep.subr.bf16.mxu0 0
    %3310 = vmatpush1.bf16.msra.mxu0 0
    %3311 = vmatprep.subr.bf16.mxu0 0
    %3312 = vmatpush1.bf16.msra.mxu0 0
    %3313 = vmatprep.subr.bf16.mxu0 0
    %3314 = vmatpush1.bf16.msra.mxu0 0
    %3315 = vmatprep.subr.bf16.mxu0 0
    %3316 = vmatpush1.bf16.msra.mxu0 0
    %3317 = vmatprep.subr.bf16.mxu0 0
    %3318 = vmatpush1.bf16.msra.mxu0 0
    %3319 = vmatprep.subr.bf16.mxu0 0
    %3320 = vmatpush1.bf16.msra.mxu0 %v3304
    %3321 = vmatprep.subr.bf16.mxu0 0
    %3322 = vmatpush1.bf16.msra.mxu0 %v3303
    %3323 = vmatprep.subr.bf16.mxu0 0
    %3324 = vmatpush2.bf16.msra.mxu0 0
    %3325 = vmatprep.subr.bf16.mxu0 0
    %3326 = vmatpush2.bf16.msra.mxu0 0
    %3327 = vmatprep.subr.bf16.mxu0 0
    %3328 = vmatpush2.bf16.msra.mxu0 0
    %3329 = vmatprep.subr.bf16.mxu0 0
    %3330 = vmatpush2.bf16.msra.mxu0 0
    %3331 = vmatprep.subr.bf16.mxu0 0
    %3332 = vmatpush2.bf16.msra.mxu0 0
    %3333 = vmatprep.subr.bf16.mxu0 0
    %3334 = vmatpush2.bf16.msra.mxu0 0
    %3335 = vmatprep.subr.bf16.mxu0 0
    %3336 = vmatpush2.bf16.msra.mxu0 0
    %3337 = vmatprep.subr.bf16.mxu0 0
    %3338 = vmatpush2.bf16.msra.mxu0 0
    %3339 = vmatprep.mubr.bf16.mxu0 0
    %3340 = vmatmul.mubr.bf16.gmra.mxu0 %v3116
    %v3341 = vpop.f32.mrf.mxu0
    %v3342 = vadd.f32 0.0, %v3341
    %v3343 = vpop.f32.mrf.mxu0
    %v3344 = vpop.f32.mrf.mxu0
    %v3345 = vpop.f32.mrf.mxu0
    %3346 = vdwg.mxu0
    %v3347 = vmax.f32 %v3290, %v3288
    %v3348 = vmax.f32 %v3347, %v3227
    %v3349 = vmul.f32 %v3348, 0.85714287
    %v3350 = vmul.f32 %v3342, 0.14285715
    %v3351 = vadd.f32 %v3349, %v3350
    %3352 = vst [vmem:[%s293] sm:$0xff] %v3351
    %v3353 = vld [vmem:[%s357] sm:$0xff]
    %v3354 = vld [vmem:[%s295] sm:$0xf]
    %v3355 = vld [vmem:[%s295 + $0x4] sm:$0xf]
    %v3356 = vld [vmem:[%s295 + $0x8] sm:$0xf]
    %v3357 = vld [vmem:[%s295 + $0xc] sm:$0xf]
    %v3362 = vunpack.c.l.b16 %v3354
    %v3363 = vunpack.c.l.b16 %v3355
    %v3364 = vunpack.c.l.b16 %v3356
    %v3365 = vunpack.c.l.b16 %v3357
    %v3366 = vpack.c.b16 %v3363, %v3362
    %v3367 = vpack.c.b16 %v3365, %v3364
    %3370 = vmatprep.subr.bf16.mxu0 0
    %3371 = vmatpush1.bf16.msra.mxu0 0
    %3372 = vmatprep.subr.bf16.mxu0 0
    %3373 = vmatpush1.bf16.msra.mxu0 0
    %3374 = vmatprep.subr.bf16.mxu0 0
    %3375 = vmatpush1.bf16.msra.mxu0 0
    %3376 = vmatprep.subr.bf16.mxu0 0
    %3377 = vmatpush1.bf16.msra.mxu0 0
    %3378 = vmatprep.subr.bf16.mxu0 0
    %3379 = vmatpush1.bf16.msra.mxu0 0
    %3380 = vmatprep.subr.bf16.mxu0 0
    %3381 = vmatpush1.bf16.msra.mxu0 0
    %3382 = vmatprep.subr.bf16.mxu0 0
    %3383 = vmatpush1.bf16.msra.mxu0 %v3367
    %3384 = vmatprep.subr.bf16.mxu0 0
    %3385 = vmatpush1.bf16.msra.mxu0 %v3366
    %3386 = vmatprep.subr.bf16.mxu0 0
    %3387 = vmatpush2.bf16.msra.mxu0 0
    %3388 = vmatprep.subr.bf16.mxu0 0
    %3389 = vmatpush2.bf16.msra.mxu0 0
    %3390 = vmatprep.subr.bf16.mxu0 0
    %3391 = vmatpush2.bf16.msra.mxu0 0
    %3392 = vmatprep.subr.bf16.mxu0 0
    %3393 = vmatpush2.bf16.msra.mxu0 0
    %3394 = vmatprep.subr.bf16.mxu0 0
    %3395 = vmatpush2.bf16.msra.mxu0 0
    %3396 = vmatprep.subr.bf16.mxu0 0
    %3397 = vmatpush2.bf16.msra.mxu0 0
    %3398 = vmatprep.subr.bf16.mxu0 0
    %3399 = vmatpush2.bf16.msra.mxu0 0
    %3400 = vmatprep.subr.bf16.mxu0 0
    %3401 = vmatpush2.bf16.msra.mxu0 0
    %3402 = vmatprep.mubr.bf16.mxu0 0
    %3403 = vmatmul.mubr.bf16.gmra.mxu0 %v3116
    %v3404 = vpop.f32.mrf.mxu0
    %v3405 = vadd.f32 0.0, %v3404
    %v3406 = vpop.f32.mrf.mxu0
    %v3407 = vpop.f32.mrf.mxu0
    %v3408 = vpop.f32.mrf.mxu0
    %3409 = vdwg.mxu0
    %v3410 = vmax.f32 %v3353, %v3351
    %v3411 = vmax.f32 %v3410, %v3290
    %v3412 = vmul.f32 %v3411, 0.85714287
    %v3413 = vmul.f32 %v3405, 0.14285715
    %v3414 = vadd.f32 %v3412, %v3413
    %3415 = vst [vmem:[%s357] sm:$0xff] %v3414
    %v3416 = vld [vmem:[%s421] sm:$0xff]
    %v3417 = vld [vmem:[%s359] sm:$0xf]
    %v3418 = vld [vmem:[%s359 + $0x4] sm:$0xf]
    %v3419 = vld [vmem:[%s359 + $0x8] sm:$0xf]
    %v3420 = vld [vmem:[%s359 + $0xc] sm:$0xf]
    %v3425 = vunpack.c.l.b16 %v3417
    %v3426 = vunpack.c.l.b16 %v3418
    %v3427 = vunpack.c.l.b16 %v3419
    %v3428 = vunpack.c.l.b16 %v3420
    %v3429 = vpack.c.b16 %v3426, %v3425
    %v3430 = vpack.c.b16 %v3428, %v3427
    %3433 = vmatprep.subr.bf16.mxu0 0
    %3434 = vmatpush1.bf16.msra.mxu0 0
    %3435 = vmatprep.subr.bf16.mxu0 0
    %3436 = vmatpush1.bf16.msra.mxu0 0
    %3437 = vmatprep.subr.bf16.mxu0 0
    %3438 = vmatpush1.bf16.msra.mxu0 0
    %3439 = vmatprep.subr.bf16.mxu0 0
    %3440 = vmatpush1.bf16.msra.mxu0 0
    %3441 = vmatprep.subr.bf16.mxu0 0
    %3442 = vmatpush1.bf16.msra.mxu0 0
    %3443 = vmatprep.subr.bf16.mxu0 0
    %3444 = vmatpush1.bf16.msra.mxu0 0
    %3445 = vmatprep.subr.bf16.mxu0 0
    %3446 = vmatpush1.bf16.msra.mxu0 %v3430
    %3447 = vmatprep.subr.bf16.mxu0 0
    %3448 = vmatpush1.bf16.msra.mxu0 %v3429
    %3449 = vmatprep.subr.bf16.mxu0 0
    %3450 = vmatpush2.bf16.msra.mxu0 0
    %3451 = vmatprep.subr.bf16.mxu0 0
    %3452 = vmatpush2.bf16.msra.mxu0 0
    %3453 = vmatprep.subr.bf16.mxu0 0
    %3454 = vmatpush2.bf16.msra.mxu0 0
    %3455 = vmatprep.subr.bf16.mxu0 0
    %3456 = vmatpush2.bf16.msra.mxu0 0
    %3457 = vmatprep.subr.bf16.mxu0 0
    %3458 = vmatpush2.bf16.msra.mxu0 0
    %3459 = vmatprep.subr.bf16.mxu0 0
    %3460 = vmatpush2.bf16.msra.mxu0 0
    %3461 = vmatprep.subr.bf16.mxu0 0
    %3462 = vmatpush2.bf16.msra.mxu0 0
    %3463 = vmatprep.subr.bf16.mxu0 0
    %3464 = vmatpush2.bf16.msra.mxu0 0
    %3465 = vmatprep.mubr.bf16.mxu0 0
    %3466 = vmatmul.mubr.bf16.gmra.mxu0 %v3116
    %v3467 = vpop.f32.mrf.mxu0
    %v3468 = vadd.f32 0.0, %v3467
    %v3469 = vpop.f32.mrf.mxu0
    %v3470 = vpop.f32.mrf.mxu0
    %v3471 = vpop.f32.mrf.mxu0
    %3472 = vdwg.mxu0
    %v3473 = vmax.f32 %v3416, %v3414
    %v3474 = vmax.f32 %v3473, %v3353
    %v3475 = vmul.f32 %v3474, 0.85714287
    %v3476 = vmul.f32 %v3468, 0.14285715
    %v3477 = vadd.f32 %v3475, %v3476
    %3478 = vst [vmem:[%s421] sm:$0xff] %v3477
    %v3479 = vld [vmem:[%s485] sm:$0xff]
    %v3480 = vld [vmem:[%s423] sm:$0xf]
    %v3481 = vld [vmem:[%s423 + $0x4] sm:$0xf]
    %v3482 = vld [vmem:[%s423 + $0x8] sm:$0xf]
    %v3483 = vld [vmem:[%s423 + $0xc] sm:$0xf]
    %v3488 = vunpack.c.l.b16 %v3480
    %v3489 = vunpack.c.l.b16 %v3481
    %v3490 = vunpack.c.l.b16 %v3482
    %v3491 = vunpack.c.l.b16 %v3483
    %v3492 = vpack.c.b16 %v3489, %v3488
    %v3493 = vpack.c.b16 %v3491, %v3490
    %3496 = vmatprep.subr.bf16.mxu0 0
    %3497 = vmatpush1.bf16.msra.mxu0 0
    %3498 = vmatprep.subr.bf16.mxu0 0
    %3499 = vmatpush1.bf16.msra.mxu0 0
    %3500 = vmatprep.subr.bf16.mxu0 0
    %3501 = vmatpush1.bf16.msra.mxu0 0
    %3502 = vmatprep.subr.bf16.mxu0 0
    %3503 = vmatpush1.bf16.msra.mxu0 0
    %3504 = vmatprep.subr.bf16.mxu0 0
    %3505 = vmatpush1.bf16.msra.mxu0 0
    %3506 = vmatprep.subr.bf16.mxu0 0
    %3507 = vmatpush1.bf16.msra.mxu0 0
    %3508 = vmatprep.subr.bf16.mxu0 0
    %3509 = vmatpush1.bf16.msra.mxu0 %v3493
    %3510 = vmatprep.subr.bf16.mxu0 0
    %3511 = vmatpush1.bf16.msra.mxu0 %v3492
    %3512 = vmatprep.subr.bf16.mxu0 0
    %3513 = vmatpush2.bf16.msra.mxu0 0
    %3514 = vmatprep.subr.bf16.mxu0 0
    %3515 = vmatpush2.bf16.msra.mxu0 0
    %3516 = vmatprep.subr.bf16.mxu0 0
    %3517 = vmatpush2.bf16.msra.mxu0 0
    %3518 = vmatprep.subr.bf16.mxu0 0
    %3519 = vmatpush2.bf16.msra.mxu0 0
    %3520 = vmatprep.subr.bf16.mxu0 0
    %3521 = vmatpush2.bf16.msra.mxu0 0
    %3522 = vmatprep.subr.bf16.mxu0 0
    %3523 = vmatpush2.bf16.msra.mxu0 0
    %3524 = vmatprep.subr.bf16.mxu0 0
    %3525 = vmatpush2.bf16.msra.mxu0 0
    %3526 = vmatprep.subr.bf16.mxu0 0
    %3527 = vmatpush2.bf16.msra.mxu0 0
    %3528 = vmatprep.mubr.bf16.mxu0 0
    %3529 = vmatmul.mubr.bf16.gmra.mxu0 %v3116
    %v3530 = vpop.f32.mrf.mxu0
    %v3531 = vadd.f32 0.0, %v3530
    %v3532 = vpop.f32.mrf.mxu0
    %v3533 = vpop.f32.mrf.mxu0
    %v3534 = vpop.f32.mrf.mxu0
    %3535 = vdwg.mxu0
    %v3536 = vmax.f32 %v3479, %v3477
    %v3537 = vmax.f32 %v3536, %v3416
    %v3538 = vmul.f32 %v3537, 0.85714287
    %v3539 = vmul.f32 %v3531, 0.14285715
    %v3540 = vadd.f32 %v3538, %v3539
    %3541 = vst [vmem:[%s485] sm:$0xff] %v3540
    %v3542 = vld [vmem:[%s549] sm:$0xff]
    %v3543 = vld [vmem:[%s487] sm:$0xf]
    %v3544 = vld [vmem:[%s487 + $0x4] sm:$0xf]
    %v3545 = vld [vmem:[%s487 + $0x8] sm:$0xf]
    %v3546 = vld [vmem:[%s487 + $0xc] sm:$0xf]
    %v3551 = vunpack.c.l.b16 %v3543
    %v3552 = vunpack.c.l.b16 %v3544
    %v3553 = vunpack.c.l.b16 %v3545
    %v3554 = vunpack.c.l.b16 %v3546
    %v3555 = vpack.c.b16 %v3552, %v3551
    %v3556 = vpack.c.b16 %v3554, %v3553
    %3559 = vmatprep.subr.bf16.mxu0 0
    %3560 = vmatpush1.bf16.msra.mxu0 0
    %3561 = vmatprep.subr.bf16.mxu0 0
    %3562 = vmatpush1.bf16.msra.mxu0 0
    %3563 = vmatprep.subr.bf16.mxu0 0
    %3564 = vmatpush1.bf16.msra.mxu0 0
    %3565 = vmatprep.subr.bf16.mxu0 0
    %3566 = vmatpush1.bf16.msra.mxu0 0
    %3567 = vmatprep.subr.bf16.mxu0 0
    %3568 = vmatpush1.bf16.msra.mxu0 0
    %3569 = vmatprep.subr.bf16.mxu0 0
    %3570 = vmatpush1.bf16.msra.mxu0 0
    %3571 = vmatprep.subr.bf16.mxu0 0
    %3572 = vmatpush1.bf16.msra.mxu0 %v3556
    %3573 = vmatprep.subr.bf16.mxu0 0
    %3574 = vmatpush1.bf16.msra.mxu0 %v3555
    %3575 = vmatprep.subr.bf16.mxu0 0
    %3576 = vmatpush2.bf16.msra.mxu0 0
    %3577 = vmatprep.subr.bf16.mxu0 0
    %3578 = vmatpush2.bf16.msra.mxu0 0
    %3579 = vmatprep.subr.bf16.mxu0 0
    %3580 = vmatpush2.bf16.msra.mxu0 0
    %3581 = vmatprep.subr.bf16.mxu0 0
    %3582 = vmatpush2.bf16.msra.mxu0 0
    %3583 = vmatprep.subr.bf16.mxu0 0
    %3584 = vmatpush2.bf16.msra.mxu0 0
    %3585 = vmatprep.subr.bf16.mxu0 0
    %3586 = vmatpush2.bf16.msra.mxu0 0
    %3587 = vmatprep.subr.bf16.mxu0 0
    %3588 = vmatpush2.bf16.msra.mxu0 0
    %3589 = vmatprep.subr.bf16.mxu0 0
    %3590 = vmatpush2.bf16.msra.mxu0 0
    %3591 = vmatprep.mubr.bf16.mxu0 0
    %3592 = vmatmul.mubr.bf16.gmra.mxu0 %v3116
    %v3593 = vpop.f32.mrf.mxu0
    %v3594 = vadd.f32 0.0, %v3593
    %v3595 = vpop.f32.mrf.mxu0
    %v3596 = vpop.f32.mrf.mxu0
    %v3597 = vpop.f32.mrf.mxu0
    %3598 = vdwg.mxu0
    %v3599 = vmax.f32 %v3542, %v3540
    %v3600 = vmax.f32 %v3599, %v3479
    %v3601 = vmul.f32 %v3600, 0.875
    %v3602 = vmul.f32 %v3594, 0.125
    %v3603 = vadd.f32 %v3601, %v3602
    %3604 = vst [vmem:[%s549] sm:$0xff] %v3603
    %s3605 = scalar_lea.vmem [#allocation3], 28
    %v3606 = vld [vmem:[%s3605] sm:$0xf]
    %v3607 = vld [vmem:[#allocation2] sm:$0xff]
    %v3608 = vld [vmem:[#allocation6] sm:$0xf]
    %v3609 = vld [vmem:[#allocation6 + $0x4] sm:$0xf]
    %v3610 = vld [vmem:[#allocation6 + $0x8] sm:$0xf]
    %v3611 = vld [vmem:[#allocation6 + $0xc] sm:$0xf]
    %v3616 = vunpack.c.l.b16 %v3608
    %v3617 = vunpack.c.l.b16 %v3609
    %v3618 = vunpack.c.l.b16 %v3610
    %v3619 = vunpack.c.l.b16 %v3611
    %v3620 = vpack.c.b16 %v3617, %v3616
    %v3621 = vpack.c.b16 %v3619, %v3618
    %v3625 = vsel %vm58, %v3606, 0
    %3627 = vmatprep.subr.bf16.mxu0 0
    %3628 = vmatpush1.bf16.msra.mxu0 0
    %3629 = vmatprep.subr.bf16.mxu0 0
    %3630 = vmatpush1.bf16.msra.mxu0 0
    %3631 = vmatprep.subr.bf16.mxu0 0
    %3632 = vmatpush1.bf16.msra.mxu0 0
    %3633 = vmatprep.subr.bf16.mxu0 0
    %3634 = vmatpush1.bf16.msra.mxu0 0
    %3635 = vmatprep.subr.bf16.mxu0 0
    %3636 = vmatpush1.bf16.msra.mxu0 0
    %3637 = vmatprep.subr.bf16.mxu0 0
    %3638 = vmatpush1.bf16.msra.mxu0 0
    %3639 = vmatprep.subr.bf16.mxu0 0
    %3640 = vmatpush1.bf16.msra.mxu0 %v3621
    %3641 = vmatprep.subr.bf16.mxu0 0
    %3642 = vmatpush1.bf16.msra.mxu0 %v3620
    %3643 = vmatprep.subr.bf16.mxu0 0
    %3644 = vmatpush2.bf16.msra.mxu0 0
    %3645 = vmatprep.subr.bf16.mxu0 0
    %3646 = vmatpush2.bf16.msra.mxu0 0
    %3647 = vmatprep.subr.bf16.mxu0 0
    %3648 = vmatpush2.bf16.msra.mxu0 0
    %3649 = vmatprep.subr.bf16.mxu0 0
    %3650 = vmatpush2.bf16.msra.mxu0 0
    %3651 = vmatprep.subr.bf16.mxu0 0
    %3652 = vmatpush2.bf16.msra.mxu0 0
    %3653 = vmatprep.subr.bf16.mxu0 0
    %3654 = vmatpush2.bf16.msra.mxu0 0
    %3655 = vmatprep.subr.bf16.mxu0 0
    %3656 = vmatpush2.bf16.msra.mxu0 0
    %3657 = vmatprep.subr.bf16.mxu0 0
    %3658 = vmatpush2.bf16.msra.mxu0 0
    %3659 = vmatprep.mubr.bf16.mxu0 0
    %3660 = vmatmul.mubr.bf16.gmra.mxu0 %v3625
    %v3661 = vpop.f32.mrf.mxu0
    %v3662 = vadd.f32 0.0, %v3661
    %v3663 = vpop.f32.mrf.mxu0
    %v3664 = vpop.f32.mrf.mxu0
    %v3665 = vpop.f32.mrf.mxu0
    %3666 = vdwg.mxu0
    %v3667 = vmax.f32 %v3607, 0.0
    %v3668 = vmax.f32 %v3667, 0.0
    %v3669 = vmul.f32 %v3668, 0.875
    %v3670 = vmul.f32 %v3662, 0.125
    %v3671 = vadd.f32 %v3669, %v3670
    %3672 = vst [vmem:[#allocation2] sm:$0xff] %v3671
    %v3673 = vld [vmem:[%s165] sm:$0xff]
    %v3674 = vld [vmem:[%s103] sm:$0xf]
    %v3675 = vld [vmem:[%s103 + $0x4] sm:$0xf]
    %v3676 = vld [vmem:[%s103 + $0x8] sm:$0xf]
    %v3677 = vld [vmem:[%s103 + $0xc] sm:$0xf]
    %v3682 = vunpack.c.l.b16 %v3674
    %v3683 = vunpack.c.l.b16 %v3675
    %v3684 = vunpack.c.l.b16 %v3676
    %v3685 = vunpack.c.l.b16 %v3677
    %v3686 = vpack.c.b16 %v3683, %v3682
    %v3687 = vpack.c.b16 %v3685, %v3684
    %3690 = vmatprep.subr.bf16.mxu0 0
    %3691 = vmatpush1.bf16.msra.mxu0 0
    %3692 = vmatprep.subr.bf16.mxu0 0
    %3693 = vmatpush1.bf16.msra.mxu0 0
    %3694 = vmatprep.subr.bf16.mxu0 0
    %3695 = vmatpush1.bf16.msra.mxu0 0
    %3696 = vmatprep.subr.bf16.mxu0 0
    %3697 = vmatpush1.bf16.msra.mxu0 0
    %3698 = vmatprep.subr.bf16.mxu0 0
    %3699 = vmatpush1.bf16.msra.mxu0 0
    %3700 = vmatprep.subr.bf16.mxu0 0
    %3701 = vmatpush1.bf16.msra.mxu0 0
    %3702 = vmatprep.subr.bf16.mxu0 0
    %3703 = vmatpush1.bf16.msra.mxu0 %v3687
    %3704 = vmatprep.subr.bf16.mxu0 0
    %3705 = vmatpush1.bf16.msra.mxu0 %v3686
    %3706 = vmatprep.subr.bf16.mxu0 0
    %3707 = vmatpush2.bf16.msra.mxu0 0
    %3708 = vmatprep.subr.bf16.mxu0 0
    %3709 = vmatpush2.bf16.msra.mxu0 0
    %3710 = vmatprep.subr.bf16.mxu0 0
    %3711 = vmatpush2.bf16.msra.mxu0 0
    %3712 = vmatprep.subr.bf16.mxu0 0
    %3713 = vmatpush2.bf16.msra.mxu0 0
    %3714 = vmatprep.subr.bf16.mxu0 0
    %3715 = vmatpush2.bf16.msra.mxu0 0
    %3716 = vmatprep.subr.bf16.mxu0 0
    %3717 = vmatpush2.bf16.msra.mxu0 0
    %3718 = vmatprep.subr.bf16.mxu0 0
    %3719 = vmatpush2.bf16.msra.mxu0 0
    %3720 = vmatprep.subr.bf16.mxu0 0
    %3721 = vmatpush2.bf16.msra.mxu0 0
    %3722 = vmatprep.mubr.bf16.mxu0 0
    %3723 = vmatmul.mubr.bf16.gmra.mxu0 %v3625
    %v3724 = vpop.f32.mrf.mxu0
    %v3725 = vadd.f32 0.0, %v3724
    %v3726 = vpop.f32.mrf.mxu0
    %v3727 = vpop.f32.mrf.mxu0
    %v3728 = vpop.f32.mrf.mxu0
    %3729 = vdwg.mxu0
    %v3730 = vmax.f32 %v3673, %v3671
    %v3731 = vmax.f32 %v3730, %v3607
    %v3732 = vmul.f32 %v3731, 0.875
    %v3733 = vmul.f32 %v3725, 0.125
    %v3734 = vadd.f32 %v3732, %v3733
    %3735 = vst [vmem:[%s165] sm:$0xff] %v3734
    %v3736 = vld [vmem:[%s229] sm:$0xff]
    %v3737 = vld [vmem:[%s167] sm:$0xf]
    %v3738 = vld [vmem:[%s167 + $0x4] sm:$0xf]
    %v3739 = vld [vmem:[%s167 + $0x8] sm:$0xf]
    %v3740 = vld [vmem:[%s167 + $0xc] sm:$0xf]
    %v3745 = vunpack.c.l.b16 %v3737
    %v3746 = vunpack.c.l.b16 %v3738
    %v3747 = vunpack.c.l.b16 %v3739
    %v3748 = vunpack.c.l.b16 %v3740
    %v3749 = vpack.c.b16 %v3746, %v3745
    %v3750 = vpack.c.b16 %v3748, %v3747
    %3753 = vmatprep.subr.bf16.mxu0 0
    %3754 = vmatpush1.bf16.msra.mxu0 0
    %3755 = vmatprep.subr.bf16.mxu0 0
    %3756 = vmatpush1.bf16.msra.mxu0 0
    %3757 = vmatprep.subr.bf16.mxu0 0
    %3758 = vmatpush1.bf16.msra.mxu0 0
    %3759 = vmatprep.subr.bf16.mxu0 0
    %3760 = vmatpush1.bf16.msra.mxu0 0
    %3761 = vmatprep.subr.bf16.mxu0 0
    %3762 = vmatpush1.bf16.msra.mxu0 0
    %3763 = vmatprep.subr.bf16.mxu0 0
    %3764 = vmatpush1.bf16.msra.mxu0 0
    %3765 = vmatprep.subr.bf16.mxu0 0
    %3766 = vmatpush1.bf16.msra.mxu0 %v3750
    %3767 = vmatprep.subr.bf16.mxu0 0
    %3768 = vmatpush1.bf16.msra.mxu0 %v3749
    %3769 = vmatprep.subr.bf16.mxu0 0
    %3770 = vmatpush2.bf16.msra.mxu0 0
    %3771 = vmatprep.subr.bf16.mxu0 0
    %3772 = vmatpush2.bf16.msra.mxu0 0
    %3773 = vmatprep.subr.bf16.mxu0 0
    %3774 = vmatpush2.bf16.msra.mxu0 0
    %3775 = vmatprep.subr.bf16.mxu0 0
    %3776 = vmatpush2.bf16.msra.mxu0 0
    %3777 = vmatprep.subr.bf16.mxu0 0
    %3778 = vmatpush2.bf16.msra.mxu0 0
    %3779 = vmatprep.subr.bf16.mxu0 0
    %3780 = vmatpush2.bf16.msra.mxu0 0
    %3781 = vmatprep.subr.bf16.mxu0 0
    %3782 = vmatpush2.bf16.msra.mxu0 0
    %3783 = vmatprep.subr.bf16.mxu0 0
    %3784 = vmatpush2.bf16.msra.mxu0 0
    %3785 = vmatprep.mubr.bf16.mxu0 0
    %3786 = vmatmul.mubr.bf16.gmra.mxu0 %v3625
    %v3787 = vpop.f32.mrf.mxu0
    %v3788 = vadd.f32 0.0, %v3787
    %v3789 = vpop.f32.mrf.mxu0
    %v3790 = vpop.f32.mrf.mxu0
    %v3791 = vpop.f32.mrf.mxu0
    %3792 = vdwg.mxu0
    %v3793 = vmax.f32 %v3736, %v3734
    %v3794 = vmax.f32 %v3793, %v3673
    %v3795 = vmul.f32 %v3794, 0.875
    %v3796 = vmul.f32 %v3788, 0.125
    %v3797 = vadd.f32 %v3795, %v3796
    %3798 = vst [vmem:[%s229] sm:$0xff] %v3797
    %v3799 = vld [vmem:[%s293] sm:$0xff]
    %v3800 = vld [vmem:[%s231] sm:$0xf]
    %v3801 = vld [vmem:[%s231 + $0x4] sm:$0xf]
    %v3802 = vld [vmem:[%s231 + $0x8] sm:$0xf]
    %v3803 = vld [vmem:[%s231 + $0xc] sm:$0xf]
    %v3808 = vunpack.c.l.b16 %v3800
    %v3809 = vunpack.c.l.b16 %v3801
    %v3810 = vunpack.c.l.b16 %v3802
    %v3811 = vunpack.c.l.b16 %v3803
    %v3812 = vpack.c.b16 %v3809, %v3808
    %v3813 = vpack.c.b16 %v3811, %v3810
    %3816 = vmatprep.subr.bf16.mxu0 0
    %3817 = vmatpush1.bf16.msra.mxu0 0
    %3818 = vmatprep.subr.bf16.mxu0 0
    %3819 = vmatpush1.bf16.msra.mxu0 0
    %3820 = vmatprep.subr.bf16.mxu0 0
    %3821 = vmatpush1.bf16.msra.mxu0 0
    %3822 = vmatprep.subr.bf16.mxu0 0
    %3823 = vmatpush1.bf16.msra.mxu0 0
    %3824 = vmatprep.subr.bf16.mxu0 0
    %3825 = vmatpush1.bf16.msra.mxu0 0
    %3826 = vmatprep.subr.bf16.mxu0 0
    %3827 = vmatpush1.bf16.msra.mxu0 0
    %3828 = vmatprep.subr.bf16.mxu0 0
    %3829 = vmatpush1.bf16.msra.mxu0 %v3813
    %3830 = vmatprep.subr.bf16.mxu0 0
    %3831 = vmatpush1.bf16.msra.mxu0 %v3812
    %3832 = vmatprep.subr.bf16.mxu0 0
    %3833 = vmatpush2.bf16.msra.mxu0 0
    %3834 = vmatprep.subr.bf16.mxu0 0
    %3835 = vmatpush2.bf16.msra.mxu0 0
    %3836 = vmatprep.subr.bf16.mxu0 0
    %3837 = vmatpush2.bf16.msra.mxu0 0
    %3838 = vmatprep.subr.bf16.mxu0 0
    %3839 = vmatpush2.bf16.msra.mxu0 0
    %3840 = vmatprep.subr.bf16.mxu0 0
    %3841 = vmatpush2.bf16.msra.mxu0 0
    %3842 = vmatprep.subr.bf16.mxu0 0
    %3843 = vmatpush2.bf16.msra.mxu0 0
    %3844 = vmatprep.subr.bf16.mxu0 0
    %3845 = vmatpush2.bf16.msra.mxu0 0
    %3846 = vmatprep.subr.bf16.mxu0 0
    %3847 = vmatpush2.bf16.msra.mxu0 0
    %3848 = vmatprep.mubr.bf16.mxu0 0
    %3849 = vmatmul.mubr.bf16.gmra.mxu0 %v3625
    %v3850 = vpop.f32.mrf.mxu0
    %v3851 = vadd.f32 0.0, %v3850
    %v3852 = vpop.f32.mrf.mxu0
    %v3853 = vpop.f32.mrf.mxu0
    %v3854 = vpop.f32.mrf.mxu0
    %3855 = vdwg.mxu0
    %v3856 = vmax.f32 %v3799, %v3797
    %v3857 = vmax.f32 %v3856, %v3736
    %v3858 = vmul.f32 %v3857, 0.875
    %v3859 = vmul.f32 %v3851, 0.125
    %v3860 = vadd.f32 %v3858, %v3859
    %3861 = vst [vmem:[%s293] sm:$0xff] %v3860
    %v3862 = vld [vmem:[%s357] sm:$0xff]
    %v3863 = vld [vmem:[%s295] sm:$0xf]
    %v3864 = vld [vmem:[%s295 + $0x4] sm:$0xf]
    %v3865 = vld [vmem:[%s295 + $0x8] sm:$0xf]
    %v3866 = vld [vmem:[%s295 + $0xc] sm:$0xf]
    %v3871 = vunpack.c.l.b16 %v3863
    %v3872 = vunpack.c.l.b16 %v3864
    %v3873 = vunpack.c.l.b16 %v3865
    %v3874 = vunpack.c.l.b16 %v3866
    %v3875 = vpack.c.b16 %v3872, %v3871
    %v3876 = vpack.c.b16 %v3874, %v3873
    %3879 = vmatprep.subr.bf16.mxu0 0
    %3880 = vmatpush1.bf16.msra.mxu0 0
    %3881 = vmatprep.subr.bf16.mxu0 0
    %3882 = vmatpush1.bf16.msra.mxu0 0
    %3883 = vmatprep.subr.bf16.mxu0 0
    %3884 = vmatpush1.bf16.msra.mxu0 0
    %3885 = vmatprep.subr.bf16.mxu0 0
    %3886 = vmatpush1.bf16.msra.mxu0 0
    %3887 = vmatprep.subr.bf16.mxu0 0
    %3888 = vmatpush1.bf16.msra.mxu0 0
    %3889 = vmatprep.subr.bf16.mxu0 0
    %3890 = vmatpush1.bf16.msra.mxu0 0
    %3891 = vmatprep.subr.bf16.mxu0 0
    %3892 = vmatpush1.bf16.msra.mxu0 %v3876
    %3893 = vmatprep.subr.bf16.mxu0 0
    %3894 = vmatpush1.bf16.msra.mxu0 %v3875
    %3895 = vmatprep.subr.bf16.mxu0 0
    %3896 = vmatpush2.bf16.msra.mxu0 0
    %3897 = vmatprep.subr.bf16.mxu0 0
    %3898 = vmatpush2.bf16.msra.mxu0 0
    %3899 = vmatprep.subr.bf16.mxu0 0
    %3900 = vmatpush2.bf16.msra.mxu0 0
    %3901 = vmatprep.subr.bf16.mxu0 0
    %3902 = vmatpush2.bf16.msra.mxu0 0
    %3903 = vmatprep.subr.bf16.mxu0 0
    %3904 = vmatpush2.bf16.msra.mxu0 0
    %3905 = vmatprep.subr.bf16.mxu0 0
    %3906 = vmatpush2.bf16.msra.mxu0 0
    %3907 = vmatprep.subr.bf16.mxu0 0
    %3908 = vmatpush2.bf16.msra.mxu0 0
    %3909 = vmatprep.subr.bf16.mxu0 0
    %3910 = vmatpush2.bf16.msra.mxu0 0
    %3911 = vmatprep.mubr.bf16.mxu0 0
    %3912 = vmatmul.mubr.bf16.gmra.mxu0 %v3625
    %v3913 = vpop.f32.mrf.mxu0
    %v3914 = vadd.f32 0.0, %v3913
    %v3915 = vpop.f32.mrf.mxu0
    %v3916 = vpop.f32.mrf.mxu0
    %v3917 = vpop.f32.mrf.mxu0
    %3918 = vdwg.mxu0
    %v3919 = vmax.f32 %v3862, %v3860
    %v3920 = vmax.f32 %v3919, %v3799
    %v3921 = vmul.f32 %v3920, 0.875
    %v3922 = vmul.f32 %v3914, 0.125
    %v3923 = vadd.f32 %v3921, %v3922
    %3924 = vst [vmem:[%s357] sm:$0xff] %v3923
    %v3925 = vld [vmem:[%s421] sm:$0xff]
    %v3926 = vld [vmem:[%s359] sm:$0xf]
    %v3927 = vld [vmem:[%s359 + $0x4] sm:$0xf]
    %v3928 = vld [vmem:[%s359 + $0x8] sm:$0xf]
    %v3929 = vld [vmem:[%s359 + $0xc] sm:$0xf]
    %v3934 = vunpack.c.l.b16 %v3926
    %v3935 = vunpack.c.l.b16 %v3927
    %v3936 = vunpack.c.l.b16 %v3928
    %v3937 = vunpack.c.l.b16 %v3929
    %v3938 = vpack.c.b16 %v3935, %v3934
    %v3939 = vpack.c.b16 %v3937, %v3936
    %3942 = vmatprep.subr.bf16.mxu0 0
    %3943 = vmatpush1.bf16.msra.mxu0 0
    %3944 = vmatprep.subr.bf16.mxu0 0
    %3945 = vmatpush1.bf16.msra.mxu0 0
    %3946 = vmatprep.subr.bf16.mxu0 0
    %3947 = vmatpush1.bf16.msra.mxu0 0
    %3948 = vmatprep.subr.bf16.mxu0 0
    %3949 = vmatpush1.bf16.msra.mxu0 0
    %3950 = vmatprep.subr.bf16.mxu0 0
    %3951 = vmatpush1.bf16.msra.mxu0 0
    %3952 = vmatprep.subr.bf16.mxu0 0
    %3953 = vmatpush1.bf16.msra.mxu0 0
    %3954 = vmatprep.subr.bf16.mxu0 0
    %3955 = vmatpush1.bf16.msra.mxu0 %v3939
    %3956 = vmatprep.subr.bf16.mxu0 0
    %3957 = vmatpush1.bf16.msra.mxu0 %v3938
    %3958 = vmatprep.subr.bf16.mxu0 0
    %3959 = vmatpush2.bf16.msra.mxu0 0
    %3960 = vmatprep.subr.bf16.mxu0 0
    %3961 = vmatpush2.bf16.msra.mxu0 0
    %3962 = vmatprep.subr.bf16.mxu0 0
    %3963 = vmatpush2.bf16.msra.mxu0 0
    %3964 = vmatprep.subr.bf16.mxu0 0
    %3965 = vmatpush2.bf16.msra.mxu0 0
    %3966 = vmatprep.subr.bf16.mxu0 0
    %3967 = vmatpush2.bf16.msra.mxu0 0
    %3968 = vmatprep.subr.bf16.mxu0 0
    %3969 = vmatpush2.bf16.msra.mxu0 0
    %3970 = vmatprep.subr.bf16.mxu0 0
    %3971 = vmatpush2.bf16.msra.mxu0 0
    %3972 = vmatprep.subr.bf16.mxu0 0
    %3973 = vmatpush2.bf16.msra.mxu0 0
    %3974 = vmatprep.mubr.bf16.mxu0 0
    %3975 = vmatmul.mubr.bf16.gmra.mxu0 %v3625
    %v3976 = vpop.f32.mrf.mxu0
    %v3977 = vadd.f32 0.0, %v3976
    %v3978 = vpop.f32.mrf.mxu0
    %v3979 = vpop.f32.mrf.mxu0
    %v3980 = vpop.f32.mrf.mxu0
    %3981 = vdwg.mxu0
    %v3982 = vmax.f32 %v3925, %v3923
    %v3983 = vmax.f32 %v3982, %v3862
    %v3984 = vmul.f32 %v3983, 0.875
    %v3985 = vmul.f32 %v3977, 0.125
    %v3986 = vadd.f32 %v3984, %v3985
    %3987 = vst [vmem:[%s421] sm:$0xff] %v3986
    %v3988 = vld [vmem:[%s485] sm:$0xff]
    %v3989 = vld [vmem:[%s423] sm:$0xf]
    %v3990 = vld [vmem:[%s423 + $0x4] sm:$0xf]
    %v3991 = vld [vmem:[%s423 + $0x8] sm:$0xf]
    %v3992 = vld [vmem:[%s423 + $0xc] sm:$0xf]
    %v3997 = vunpack.c.l.b16 %v3989
    %v3998 = vunpack.c.l.b16 %v3990
    %v3999 = vunpack.c.l.b16 %v3991
    %v4000 = vunpack.c.l.b16 %v3992
    %v4001 = vpack.c.b16 %v3998, %v3997
    %v4002 = vpack.c.b16 %v4000, %v3999
    %4005 = vmatprep.subr.bf16.mxu0 0
    %4006 = vmatpush1.bf16.msra.mxu0 0
    %4007 = vmatprep.subr.bf16.mxu0 0
    %4008 = vmatpush1.bf16.msra.mxu0 0
    %4009 = vmatprep.subr.bf16.mxu0 0
    %4010 = vmatpush1.bf16.msra.mxu0 0
    %4011 = vmatprep.subr.bf16.mxu0 0
    %4012 = vmatpush1.bf16.msra.mxu0 0
    %4013 = vmatprep.subr.bf16.mxu0 0
    %4014 = vmatpush1.bf16.msra.mxu0 0
    %4015 = vmatprep.subr.bf16.mxu0 0
    %4016 = vmatpush1.bf16.msra.mxu0 0
    %4017 = vmatprep.subr.bf16.mxu0 0
    %4018 = vmatpush1.bf16.msra.mxu0 %v4002
    %4019 = vmatprep.subr.bf16.mxu0 0
    %4020 = vmatpush1.bf16.msra.mxu0 %v4001
    %4021 = vmatprep.subr.bf16.mxu0 0
    %4022 = vmatpush2.bf16.msra.mxu0 0
    %4023 = vmatprep.subr.bf16.mxu0 0
    %4024 = vmatpush2.bf16.msra.mxu0 0
    %4025 = vmatprep.subr.bf16.mxu0 0
    %4026 = vmatpush2.bf16.msra.mxu0 0
    %4027 = vmatprep.subr.bf16.mxu0 0
    %4028 = vmatpush2.bf16.msra.mxu0 0
    %4029 = vmatprep.subr.bf16.mxu0 0
    %4030 = vmatpush2.bf16.msra.mxu0 0
    %4031 = vmatprep.subr.bf16.mxu0 0
    %4032 = vmatpush2.bf16.msra.mxu0 0
    %4033 = vmatprep.subr.bf16.mxu0 0
    %4034 = vmatpush2.bf16.msra.mxu0 0
    %4035 = vmatprep.subr.bf16.mxu0 0
    %4036 = vmatpush2.bf16.msra.mxu0 0
    %4037 = vmatprep.mubr.bf16.mxu0 0
    %4038 = vmatmul.mubr.bf16.gmra.mxu0 %v3625
    %v4039 = vpop.f32.mrf.mxu0
    %v4040 = vadd.f32 0.0, %v4039
    %v4041 = vpop.f32.mrf.mxu0
    %v4042 = vpop.f32.mrf.mxu0
    %v4043 = vpop.f32.mrf.mxu0
    %4044 = vdwg.mxu0
    %v4045 = vmax.f32 %v3988, %v3986
    %v4046 = vmax.f32 %v4045, %v3925
    %v4047 = vmul.f32 %v4046, 0.875
    %v4048 = vmul.f32 %v4040, 0.125
    %v4049 = vadd.f32 %v4047, %v4048
    %4050 = vst [vmem:[%s485] sm:$0xff] %v4049
    %v4051 = vld [vmem:[%s549] sm:$0xff]
    %v4052 = vld [vmem:[%s487] sm:$0xf]
    %v4053 = vld [vmem:[%s487 + $0x4] sm:$0xf]
    %v4054 = vld [vmem:[%s487 + $0x8] sm:$0xf]
    %v4055 = vld [vmem:[%s487 + $0xc] sm:$0xf]
    %v4060 = vunpack.c.l.b16 %v4052
    %v4061 = vunpack.c.l.b16 %v4053
    %v4062 = vunpack.c.l.b16 %v4054
    %v4063 = vunpack.c.l.b16 %v4055
    %v4064 = vpack.c.b16 %v4061, %v4060
    %v4065 = vpack.c.b16 %v4063, %v4062
    %4068 = vmatprep.subr.bf16.mxu0 0
    %4069 = vmatpush1.bf16.msra.mxu0 0
    %4070 = vmatprep.subr.bf16.mxu0 0
    %4071 = vmatpush1.bf16.msra.mxu0 0
    %4072 = vmatprep.subr.bf16.mxu0 0
    %4073 = vmatpush1.bf16.msra.mxu0 0
    %4074 = vmatprep.subr.bf16.mxu0 0
    %4075 = vmatpush1.bf16.msra.mxu0 0
    %4076 = vmatprep.subr.bf16.mxu0 0
    %4077 = vmatpush1.bf16.msra.mxu0 0
    %4078 = vmatprep.subr.bf16.mxu0 0
    %4079 = vmatpush1.bf16.msra.mxu0 0
    %4080 = vmatprep.subr.bf16.mxu0 0
    %4081 = vmatpush1.bf16.msra.mxu0 %v4065
    %4082 = vmatprep.subr.bf16.mxu0 0
    %4083 = vmatpush1.bf16.msra.mxu0 %v4064
    %4084 = vmatprep.subr.bf16.mxu0 0
    %4085 = vmatpush2.bf16.msra.mxu0 0
    %4086 = vmatprep.subr.bf16.mxu0 0
    %4087 = vmatpush2.bf16.msra.mxu0 0
    %4088 = vmatprep.subr.bf16.mxu0 0
    %4089 = vmatpush2.bf16.msra.mxu0 0
    %4090 = vmatprep.subr.bf16.mxu0 0
    %4091 = vmatpush2.bf16.msra.mxu0 0
    %4092 = vmatprep.subr.bf16.mxu0 0
    %4093 = vmatpush2.bf16.msra.mxu0 0
    %4094 = vmatprep.subr.bf16.mxu0 0
    %4095 = vmatpush2.bf16.msra.mxu0 0
    %4096 = vmatprep.subr.bf16.mxu0 0
    %4097 = vmatpush2.bf16.msra.mxu0 0
    %4098 = vmatprep.subr.bf16.mxu0 0
    %4099 = vmatpush2.bf16.msra.mxu0 0
    %4100 = vmatprep.mubr.bf16.mxu0 0
    %4101 = vmatmul.mubr.bf16.gmra.mxu0 %v3625
    %v4102 = vpop.f32.mrf.mxu0
    %v4103 = vadd.f32 0.0, %v4102
    %v4104 = vpop.f32.mrf.mxu0
    %v4105 = vpop.f32.mrf.mxu0
    %v4106 = vpop.f32.mrf.mxu0
    %4107 = vdwg.mxu0
    %v4108 = vmax.f32 %v4051, %v4049
    %v4109 = vmax.f32 %v4108, %v3988
    %v4110 = vmul.f32 %v4109, 0.875
    %v4111 = vmul.f32 %v4103, 0.125
    %v4112 = vadd.f32 %v4110, %v4111
    %4113 = vst [vmem:[%s549] sm:$0xff] %v4112
    %v4114 = vld [vmem:[%s549] sm:$0xff]
    %4115 = vst [vmem:[#allocation8] sm:$0xff] %v4114
    // Predicated region
    $region18: #{tpu_custom_call.1} parent=1 // pred_check
      _
    $region19: #{tpu_custom_call.1} parent=1 // pred_check_branch
      %4117 = sbr.rel (0) target = $region21
    $region20: #{tpu_custom_call.1} parent=1 // pred_region
      %s4119 = ssub.s32 128, 128
      %4120 = vsyncadd [#allocation5], %s4119
      %s4122 = sshll.u32 [#allocation8], 4
      %s4123 = int_to_ptr.vmem [resolvable:$true] %s4122
      %4125 = dma.vmem_to_hbm [thread:$0]  %s4123, 128, %s2, [#allocation5]
    $region21: #{tpu_custom_call.1} parent=1 // pred_fallthru
      _
    // Predicated region
    $region22: #{tpu_custom_call.1} parent=1 // pred_check
      _
    $region23: #{tpu_custom_call.1} parent=1 // pred_check_branch
      %4127 = sbr.rel (0) target = $region25
    $region24: #{tpu_custom_call.1} parent=1 // pred_region
      %4128 = dma.done [#allocation5], 128
    $region25: #{tpu_custom_call.1} parent=1 // pred_fallthru
      _
    %4129 = vsyncpa [#allocation4], 1
    %4130 = vsyncpa [#allocation7], 1
    %4131 = vsyncpa [#allocation5], 1

</llo_original>
